<compile_context>
chip_gen: v5e
topology: v5e:2x2
jax: 0.10.0
libtpu: 0.0.40
codegen_flags: <defaults>
</compile_context>

<pallas_src>
import functools

import jax
import jax.numpy as jnp
from jax.experimental import pallas as pl
from jax.experimental.pallas import tpu as pltpu

MXU_DTYPE = jnp.bfloat16   # matmul operand dtype (f32 accumulation on the MXU)
ACT_DTYPE = jnp.bfloat16   # inter-kernel activation storage dtype
NEG_BIG = 1e30             # finite "-inf" used for max-pool padding


# ----------------------------- Pallas kernels ------------------------------
# In-kernel layout: flat 2-D slabs (rows, C) per image, channels on lanes.
# Stride-2 ops use a parity-decomposed padded map (4 planes of lp rows each),
# so every 3x3/s2 tap is a contiguous row window.  Stride-1 ops use a padded
# row-major map with one margin row per side, so every 3x3/s1 tap is a row
# window shifted by (kh-1)*wp + (kw-1).


def stem_pool_kernel(taps_ref, mask_ref, w_ref, b_ref, o_ref, stem_scr,
                     *, lp, wp2, m2):
    """conv1 3x3/s2 (+folded BN+ReLU) as ONE (rows,27)x(27,c0) matmul, fused
    with the following 3x3/s2 max-pool.  The wrapper pre-arranges the 27
    im2col taps directly in the max-pool's parity-slab row order, so the pool
    taps are plain row windows of the stem output held in VMEM scratch."""
    stem = jnp.dot(taps_ref[0], w_ref[...], preferred_element_type=jnp.float32)
    stem = jnp.maximum(stem + b_ref[...], 0.0)
    m = mask_ref[...]
    stem_scr[...] = stem * m - (1.0 - m) * NEG_BIG      # pad rows -> -1e30
    res = None
    for kh in range(3):
        for kw in range(3):
            start = (2 * (kh % 2) + (kw % 2)) * lp + (kh // 2) * wp2 + (kw // 2)
            tap = stem_scr[start:start + m2, :]
            res = tap if res is None else jnp.maximum(res, tap)
    o_ref[0] = res.astype(o_ref.dtype)


def stage_kernel(x_ps_ref, pmask_ref, s1mask_ref,
                 b1_dw_w, b1_dw_b, pw1_w, pw1_b, dw_w, dw_b, w1i, w2i, b_i,
                 s_sel, s1_pw1_w, s1_pw1_b, s1_dw_w, s1_dw_b, s1_w2, s1_b,
                 o_ref, y1s2_scr, xslab_scr, y1s1_scr,
                 *, lp, wp2, m2, ho, wo, wp1, m1, n_s1):
    """One whole ShuffleNetV2 stage: stride-2 InvertedResidual followed by
    n_s1 stride-1 InvertedResiduals, all intermediates VMEM-resident.
    channel_shuffle is folded into column-interleaved final-1x1 weights, so
    every block output is produced in true channel order, lane-dense."""
    cin = x_ps_ref.shape[-1]
    bfc = dw_b.shape[-1]

    # -------- stride-2 block --------
    # branch2 pw1 (+BN+ReLU) on the parity slab, pad rows masked back to 0.
    y1 = jnp.dot(x_ps_ref[0], pw1_w[...], preferred_element_type=jnp.float32)
    y1 = jnp.maximum(y1 + pw1_b[...], 0.0)
    y1s2_scr[...] = y1 * pmask_ref[...]

    # branch1 dw3x3/s2 on the raw input; branch2 dw3x3/s2 on y1 (VPU, f32).
    acc1 = jnp.zeros((m2, cin), jnp.float32)
    acc2 = jnp.zeros((m2, bfc), jnp.float32)
    for kh in range(3):
        for kw in range(3):
            start = (2 * (kh % 2) + (kw % 2)) * lp + (kh // 2) * wp2 + (kw // 2)
            acc1 = acc1 + x_ps_ref[0, start:start + m2, :].astype(jnp.float32) \
                * b1_dw_w[kh * 3 + kw]
            acc2 = acc2 + y1s2_scr[start:start + m2, :] * dw_w[kh * 3 + kw]
    acc1 = acc1 + b1_dw_b[...]
    acc2 = acc2 + dw_b[...]

    # Fused final 1x1 of BOTH branches; columns pre-interleaved at init so the
    # result is already channel_shuffle'd (true order), lane-dense.
    out2 = jnp.maximum(
        jnp.dot(acc1.astype(MXU_DTYPE), w1i[...], preferred_element_type=jnp.float32)
        + jnp.dot(acc2.astype(MXU_DTYPE), w2i[...], preferred_element_type=jnp.float32)
        + b_i[...], 0.0)                               # (m2, cout)

    # Scatter the s2 output into the zero-initialised stride-1 padded slab.
    xslab_scr[...] = jnp.zeros(xslab_scr.shape, xslab_scr.dtype)
    for oi in range(ho):
        dst = (oi + 1) * wp1 + 2
        xslab_scr[dst:dst + wo, :] = out2[oi * wp2:oi * wp2 + wo, :]

    # -------- stride-1 blocks --------
    base = wp1 + 1                         # window start: padded-grid row 1
    for r in range(n_s1):
        pw1_w_r = s1_pw1_w[r]
        pw1_b_r = s1_pw1_b[r]
        dw_w_r = s1_dw_w[r]
        dw_b_r = s1_dw_b[r]
        w2_r = s1_w2[r]
        b_r = s1_b[r]

        # branch2 pw1 (x2 selection folded into zero rows of pw1_w_r) + mask.
        y1f = jnp.dot(xslab_scr[...].astype(MXU_DTYPE), pw1_w_r,
                      preferred_element_type=jnp.float32)
        y1f = jnp.maximum(y1f + pw1_b_r, 0.0)
        y1s1_scr[...] = y1f * s1mask_ref[...]

        # dw3x3/s1 (VPU, f32).
        acc = jnp.zeros((m1, bfc), jnp.float32)
        for kh in range(3):
            for kw in range(3):
                start = base + (kh - 1) * wp1 + (kw - 1)
                acc = acc + y1s1_scr[start:start + m1, :] * dw_w_r[kh * 3 + kw]
        acc = acc + dw_b_r

        # Fused final 1x1 + x1 passthrough (selection matrix) + shuffle, in
        # true channel order.  ReLU on passthrough lanes is a no-op (>=0).
        xwin = xslab_scr[base:base + m1, :]
        outr = jnp.maximum(
            jnp.dot(xwin.astype(MXU_DTYPE), s_sel[...],
                    preferred_element_type=jnp.float32)
            + jnp.dot(acc.astype(MXU_DTYPE), w2_r,
                      preferred_element_type=jnp.float32)
            + b_r, 0.0)
        # Write back with pad columns re-zeroed so the next block's dw sees
        # true zero padding.
        xslab_scr[base:base + m1, :] = outr * s1mask_ref[base:base + m1, :]

    o_ref[0] = xslab_scr[base:base + m1, :].astype(o_ref.dtype)


def head_kernel(x_ref, w5, b5, fc_w, fc_b, o_ref, *, inv_hw):
    """conv5 1x1 (+BN+ReLU) + global average pool + final FC (lane-padded)."""
    y = jnp.dot(x_ref[0], w5[...], preferred_element_type=jnp.float32)
    y = jnp.maximum(y + b5[...], 0.0)
    pooled = jnp.sum(y, axis=0, keepdims=True) * inv_hw           # (1, C5)
    o_ref[0] = jnp.dot(pooled, fc_w[...],
                       preferred_element_type=jnp.float32) + fc_b[...]


# ----------------------------- pallas_call glue -----------------------------

def _batch_map(ndim_tail, i):
    return (i,) + (0,) * ndim_tail


def _bcast_map(ndim, i):
    return (0,) * ndim


def _pcall(kernel, n, out_tail, out_dtype, x_batched, shared=(), scratch=()):
    """Run `kernel` with a parallel grid over the batch axis of `x_batched`."""
    in_specs = [pl.BlockSpec((1,) + tuple(x_batched.shape[1:]),
                             functools.partial(_batch_map, x_batched.ndim - 1))]
    for s in shared:
        in_specs.append(pl.BlockSpec(tuple(s.shape),
                                     functools.partial(_bcast_map, s.ndim)))
    out_shape = jax.ShapeDtypeStruct((n,) + tuple(out_tail), out_dtype)
    out_spec = pl.BlockSpec((1,) + tuple(out_tail),
                            functools.partial(_batch_map, len(out_tail)))
    return pl.pallas_call(
        kernel,
        out_shape=out_shape,
        grid=(n,),
        in_specs=in_specs,
        out_specs=out_spec,
        scratch_shapes=list(scratch),
        compiler_params=pltpu.CompilerParams(
            dimension_semantics=("parallel",),
            vmem_limit_bytes=32 * 1024 * 1024),
    )(x_batched, *shared)


# ----------------------------- host-side layout ------------------------------

def _parity_slab(x):
    """Pad by 1, split into 4 row/col-parity planes, flatten rows (+1 pad row
    per plane) so every 3x3/stride-2 tap is a contiguous row window."""
    n, h, w, c = x.shape
    assert h % 2 == 0 and w % 2 == 0
    xp = jnp.pad(x, ((0, 0), (1, 1), (1, 1), (0, 0)))
    hp2, wp2 = (h + 2) // 2, (w + 2) // 2
    xp = xp.reshape(n, hp2, 2, wp2, 2, c).transpose(0, 2, 4, 1, 3, 5)
    slab = xp.reshape(n, 4, hp2 * wp2, c)
    slab = jnp.pad(slab, ((0, 0), (0, 0), (0, 1), (0, 0)))
    lp = hp2 * wp2 + 1
    return slab.reshape(n, 4 * lp, c), wp2, lp


def _parity_mask(h, w):
    """1.0 at parity-slab rows mapping to interior pixels, else 0."""
    hp2, wp2 = (h + 2) // 2, (w + 2) // 2
    planes = []
    for a in range(2):
        for b in range(2):
            mi = (2 * jnp.arange(hp2) + a >= 1) & (2 * jnp.arange(hp2) + a <= h)
            mj = (2 * jnp.arange(wp2) + b >= 1) & (2 * jnp.arange(wp2) + b <= w)
            m = (mi[:, None] & mj[None, :]).astype(jnp.float32)
            planes.append(jnp.pad(m.reshape(hp2 * wp2, 1), ((0, 1), (0, 0))))
    return jnp.concatenate(planes, axis=0)              # (4*lp, 1)


def _s1_mask(h, w):
    """Interior indicator for the flat padded stride-1 slab (with margins)."""
    hp, wp = h + 2, w + 2
    mi = (jnp.arange(hp) >= 1) & (jnp.arange(hp) <= h)
    mj = (jnp.arange(wp) >= 1) & (jnp.arange(wp) <= w)
    m = (mi[:, None] & mj[None, :]).astype(jnp.float32).reshape(hp * wp, 1)
    return jnp.pad(m, ((1, 1), (0, 0)))                 # (hp*wp + 2, 1)


def _stem_prep(x):
    """im2col the 3x3/s2 stem taps and lay the rows out directly in the
    max-pool's parity-slab order (one-time XLA prep, tiny)."""
    n, h, w, _ = x.shape
    hs, ws = h // 2, w // 2                   # stem output spatial dims
    assert hs % 2 == 0 and ws % 2 == 0
    xp = jnp.pad(x, ((0, 0), (1, 1), (1, 1), (0, 0)))
    cols = []
    for kh in range(3):
        for kw in range(3):
            cols.append(xp[:, kh:kh + 2 * hs:2, kw:kw + 2 * ws:2, :])
    t = jnp.concatenate(cols, axis=-1)                   # (n, hs, ws, 27)
    tp = jnp.pad(t, ((0, 0), (1, 1), (1, 1), (0, 0)))
    hp2, wp2 = (hs + 2) // 2, (ws + 2) // 2
    tp = tp.reshape(n, hp2, 2, wp2, 2, 27).transpose(0, 2, 4, 1, 3, 5)
    slab = tp.reshape(n, 4, hp2 * wp2, 27)
    slab = jnp.pad(slab, ((0, 0), (0, 0), (0, 1), (0, 0)))
    lp = hp2 * wp2 + 1
    mask = _parity_mask(hs, ws)
    return slab.reshape(n, 4 * lp, 27).astype(ACT_DTYPE), mask, lp, wp2, hs, ws


# ------------------------- parameter initialization -------------------------
# BatchNorm runs in inference mode; its scale is folded into conv/depthwise
# weights and its shift kept as a per-channel bias.  The final 1x1 convs of
# both branches get their columns interleaved so the block output is already
# channel-shuffled.

def _bn_fold(key, c):
    k1, k2, k3, k4 = jax.random.split(key, 4)
    gamma = 1.0 + 0.1 * jax.random.normal(k1, (c,), jnp.float32)
    beta = 0.1 * jax.random.normal(k2, (c,), jnp.float32)
    mean = 0.1 * jax.random.normal(k3, (c,), jnp.float32)
    var = jax.random.uniform(k4, (c,), jnp.float32, 0.5, 1.5)
    scale = gamma / jnp.sqrt(var + 1e-5)
    bias = beta - mean * scale
    return scale.reshape(1, c), bias.reshape(1, c)


def _conv_w(key, shape, fan_in):
    return jax.random.normal(key, shape, jnp.float32) / jnp.sqrt(float(fan_in))


def _init_block_s2(key, input_c, output_c):
    bfc = output_c // 2
    ks = jax.random.split(key, 10)
    p = {}
    s, b = _bn_fold(ks[1], input_c)
    p['b1_dw_w'] = _conv_w(ks[0], (9, 1, input_c), 9.0) * s
    p['b1_dw_b'] = b
    s1, b1 = _bn_fold(ks[3], bfc)
    b1_pw = _conv_w(ks[2], (input_c, bfc), input_c) * s1
    s2, b2 = _bn_fold(ks[5], bfc)
    p['pw1_w'] = (_conv_w(ks[4], (input_c, bfc), input_c) * s2).astype(MXU_DTYPE)
    p['pw1_b'] = b2
    s3, b3 = _bn_fold(ks[7], bfc)
    p['dw_w'] = _conv_w(ks[6], (9, 1, bfc), 9.0) * s3
    p['dw_b'] = b3
    s4, b4 = _bn_fold(ks[9], bfc)
    pw2 = _conv_w(ks[8], (bfc, bfc), bfc) * s4
    # channel_shuffle folded: out[2i] = branch1_i, out[2i+1] = branch2_i.
    w1i = jnp.zeros((input_c, output_c), jnp.float32).at[:, 0::2].set(b1_pw)
    w2i = jnp.zeros((bfc, output_c), jnp.float32).at[:, 1::2].set(pw2)
    bi = jnp.zeros((1, output_c), jnp.float32).at[:, 0::2].set(b1).at[:, 1::2].set(b4)
    p['w1i'] = w1i.astype(MXU_DTYPE)
    p['w2i'] = w2i.astype(MXU_DTYPE)
    p['b_i'] = bi
    return p


def _init_block_s1(key, channels):
    bfc = channels // 2
    ks = jax.random.split(key, 6)
    s1, b1 = _bn_fold(ks[1], bfc)
    pw1 = _conv_w(ks[0], (bfc, bfc), bfc) * s1
    s2, b2 = _bn_fold(ks[3], bfc)
    dw = _conv_w(ks[2], (9, 1, bfc), 9.0) * s2
    s3, b3 = _bn_fold(ks[5], bfc)
    pw2 = _conv_w(ks[4], (bfc, bfc), bfc) * s3
    # x2 = true channels [bfc, 2*bfc): fold the split into zero rows of pw1.
    pw1_full = jnp.zeros((channels, bfc), jnp.float32).at[bfc:, :].set(pw1)
    w2i = jnp.zeros((bfc, channels), jnp.float32).at[:, 1::2].set(pw2)
    bi = jnp.zeros((1, channels), jnp.float32).at[:, 1::2].set(b3)
    return {'pw1_w': pw1_full.astype(MXU_DTYPE), 'pw1_b': b1,
            'dw_w': dw, 'dw_b': b2,
            'w2i': w2i.astype(MXU_DTYPE), 'b_i': bi}


def _init_stage(key, input_c, output_c, repeats):
    assert repeats >= 2, "stage fusion expects >=1 stride-1 block per stage"
    keys = jax.random.split(key, repeats)
    p = _init_block_s2(keys[0], input_c, output_c)
    s1s = [_init_block_s1(keys[r], output_c) for r in range(1, repeats)]
    bfc = output_c // 2
    # x1 passthrough + concat + shuffle folded into one selection matrix.
    p['s_sel'] = (jnp.zeros((output_c, output_c), jnp.float32)
                  .at[jnp.arange(bfc), 2 * jnp.arange(bfc)].set(1.0)
                  ).astype(MXU_DTYPE)
    p['s1_pw1_w'] = jnp.stack([b['pw1_w'] for b in s1s])
    p['s1_pw1_b'] = jnp.stack([b['pw1_b'] for b in s1s])
    p['s1_dw_w'] = jnp.stack([b['dw_w'] for b in s1s])
    p['s1_dw_b'] = jnp.stack([b['dw_b'] for b in s1s])
    p['s1_w2'] = jnp.stack([b['w2i'] for b in s1s])
    p['s1_b'] = jnp.stack([b['b_i'] for b in s1s])
    return p


def init_shufflenet_v2(key, stages_repeats, stages_out_channels, num_classes):
    assert len(stages_repeats) == 3 and len(stages_out_channels) == 5
    keys = jax.random.split(key, 8)
    params = {'num_classes': num_classes}
    c0 = stages_out_channels[0]
    s, b = _bn_fold(keys[1], c0)
    # stem weight rows ordered (kh, kw, cin) to match the host-side im2col.
    params['conv1'] = {'w': (_conv_w(keys[0], (27, c0), 27.0) * s).astype(MXU_DTYPE),
                       'b': b}
    in_c = c0
    for si, (name, rep, out_c) in enumerate(zip(
            ('stage2', 'stage3', 'stage4'), stages_repeats,
            stages_out_channels[1:4])):
        params[name] = _init_stage(keys[2 + si], in_c, out_c, rep)
        in_c = out_c
    c5 = stages_out_channels[-1]
    s, b = _bn_fold(keys[6], c5)
    params['conv5'] = {'w': (_conv_w(keys[5], (in_c, c5), in_c) * s).astype(MXU_DTYPE),
                       'b': b}
    kf1, kf2 = jax.random.split(keys[7])
    ncp = max(128, ((num_classes + 127) // 128) * 128)   # lane-dense FC output
    fc_w = jnp.zeros((c5, ncp), jnp.float32).at[:, :num_classes].set(
        _conv_w(kf1, (c5, num_classes), c5))
    fc_b = jnp.zeros((1, ncp), jnp.float32).at[:, :num_classes].set(
        0.01 * jax.random.normal(kf2, (1, num_classes), jnp.float32))
    params['fc'] = {'w': fc_w, 'b': fc_b}
    return params


# --------------------------------- forward ----------------------------------

def _stage_forward(x, p, h, w):
    n = x.shape[0]
    slab, wp2, lp = _parity_slab(x)
    pmask = _parity_mask(h, w)
    ho, wo = h // 2, w // 2
    m2 = ho * wp2
    wp1 = wo + 2
    s1_rows = (ho + 2) * wp1 + 2
    m1 = ho * wp1
    s1mask = _s1_mask(ho, wo)
    cout = p['b_i'].shape[-1]
    bfc = cout // 2
    n_s1 = p['s1_pw1_w'].shape[0]
    out = _pcall(
        functools.partial(stage_kernel, lp=lp, wp2=wp2, m2=m2, ho=ho, wo=wo,
                          wp1=wp1, m1=m1, n_s1=n_s1),
        n, (m1, cout), ACT_DTYPE, slab,
        (pmask, s1mask,
         p['b1_dw_w'], p['b1_dw_b'], p['pw1_w'], p['pw1_b'],
         p['dw_w'], p['dw_b'], p['w1i'], p['w2i'], p['b_i'],
         p['s_sel'], p['s1_pw1_w'], p['s1_pw1_b'], p['s1_dw_w'], p['s1_dw_b'],
         p['s1_w2'], p['s1_b']),
        scratch=(pltpu.VMEM((4 * lp, bfc), jnp.float32),
                 pltpu.VMEM((s1_rows, cout), jnp.float32),
                 pltpu.VMEM((s1_rows, bfc), jnp.float32)))
    xo = out.reshape(n, ho, wp1, cout)[:, :, 1:wo + 1, :]
    return xo, ho, wo


def shufflenet_v2_forward(params, x_nchw):
    x = jnp.transpose(x_nchw, (0, 2, 3, 1)).astype(jnp.float32)  # NCHW -> NHWC
    n = x.shape[0]

    # Fused stem (one im2col matmul) + 3x3/s2 max-pool.
    taps, mask0, lp0, wp20, hs, ws = _stem_prep(x)
    hp, wpp = hs // 2, ws // 2
    m20 = hp * wp20
    c0 = params['conv1']['b'].shape[-1]
    out = _pcall(functools.partial(stem_pool_kernel, lp=lp0, wp2=wp20, m2=m20),
                 n, (m20, c0), ACT_DTYPE, taps,
                 (mask0, params['conv1']['w'], params['conv1']['b']),
                 scratch=(pltpu.VMEM((4 * lp0, c0), jnp.float32),))
    x = out.reshape(n, hp, wp20, c0)[:, :, :wpp, :]
    h, w = hp, wpp

    # One fused kernel per stage (s2 block + all s1 blocks, VMEM-resident).
    for name in ('stage2', 'stage3', 'stage4'):
        x, h, w = _stage_forward(x, params[name], h, w)

    # conv5 + BN + ReLU + global average pool + FC, fused.
    n, hh, ww, c4 = x.shape
    xf = x.reshape(n, hh * ww, c4)
    ncp = params['fc']['w'].shape[-1]
    out = _pcall(functools.partial(head_kernel, inv_hw=1.0 / float(hh * ww)),
                 n, (1, ncp), jnp.float32, xf,
                 (params['conv5']['w'], params['conv5']['b'],
                  params['fc']['w'], params['fc']['b']))
    return out.reshape(n, ncp)[:, :params['num_classes']]


# ----------------------------------- main -----------------------------------

if __name__ == "__main__":
    key = jax.random.PRNGKey(0)
    k_in, k_p = jax.random.split(key)

    # Small config: stages_repeats=[2,2,2], stages_out_channels=[8,16,32,64,128]
    stages_repeats = [2, 2, 2]
    stages_out_channels = [8, 16, 32, 64, 128]
    num_classes = 10

    x = jax.random.normal(k_in, (2, 3, 32, 32), jnp.float32)  # NCHW, like PyTorch
    params = init_shufflenet_v2(k_p, stages_repeats, stages_out_channels,
                                num_classes)

    fwd = jax.jit(lambda inp: shufflenet_v2_forward(params, inp))
    out = jax.block_until_ready(fwd(x))
    assert out.shape == (2, num_classes), out.shape
    assert bool(jnp.all(jnp.isfinite(out)))
    print("KERNEL_OK")
</pallas_src>

<mosaic_0001>
module attributes {stable_mosaic.version = 11 : i64} {
  func.func @stem_pool_kernel(%arg0: i32, %arg1: memref<1x328x27xbf16, #tpu.memory_space<vmem>>, %arg2: memref<328x1xf32, #tpu.memory_space<vmem>>, %arg3: memref<27x8xbf16, #tpu.memory_space<vmem>>, %arg4: memref<1x8xf32, #tpu.memory_space<vmem>>, %arg5: memref<1x72x8xbf16, #tpu.memory_space<vmem>>, %arg6: memref<328x8xf32, #tpu.memory_space<vmem>>) attributes {dimension_semantics = [#tpu.dimension_semantics<parallel>], iteration_bounds = array<i64: 2>, scalar_prefetch = 0 : i64, scratch_operands = 1 : i64, tpu.core_type = #tpu.core_type<tc>, window_params = [{transform_indices = @transform_0, window_bounds = array<i64: 1, 328, 27>}, {pipeline_mode = #tpu.pipeline_mode<synchronous>, transform_indices = @transform_1, window_bounds = array<i64: 328, 1>}, {pipeline_mode = #tpu.pipeline_mode<synchronous>, transform_indices = @transform_2, window_bounds = array<i64: 27, 8>}, {pipeline_mode = #tpu.pipeline_mode<synchronous>, transform_indices = @transform_3, window_bounds = array<i64: 1, 8>}, {transform_indices = @transform_4, window_bounds = array<i64: 1, 72, 8>}]} {
    %c0 = arith.constant 0 : index
    %c0_0 = arith.constant 0 : index
    %c0_1 = arith.constant 0 : index
    %0 = vector.load %arg1[%c0, %c0_0, %c0_1] : memref<1x328x27xbf16, #tpu.memory_space<vmem>>, vector<1x328x27xbf16>
    %1 = vector.shape_cast %0 : vector<1x328x27xbf16> to vector<328x27xbf16>
    %c0_2 = arith.constant 0 : index
    %c0_3 = arith.constant 0 : index
    %2 = vector.load %arg3[%c0_2, %c0_3] : memref<27x8xbf16, #tpu.memory_space<vmem>>, vector<27x8xbf16>
    %cst = arith.constant dense<0.000000e+00> : vector<328x8xf32>
    %3 = tpu.matmul %1, %2, %cst {dimension_numbers = #tpu.dot_dimension_numbers<[1], [0], [0], [1], [0, 0, 1, 1], [], []>} : vector<328x27xbf16>, vector<27x8xbf16>, vector<328x8xf32> -> vector<328x8xf32>
    %c0_4 = arith.constant 0 : index
    %c0_5 = arith.constant 0 : index
    %4 = vector.load %arg4[%c0_4, %c0_5] : memref<1x8xf32, #tpu.memory_space<vmem>>, vector<1x8xf32>
    %5 = vector.broadcast %4 : vector<1x8xf32> to vector<328x8xf32>
    %6 = arith.addf %3, %5 : vector<328x8xf32>
    %cst_6 = arith.constant 0.000000e+00 : f32
    %7 = vector.broadcast %cst_6 : f32 to vector<328x8xf32>
    %8 = arith.maximumf %6, %7 : vector<328x8xf32>
    %c0_7 = arith.constant 0 : index
    %c0_8 = arith.constant 0 : index
    %9 = vector.load %arg2[%c0_7, %c0_8] : memref<328x1xf32, #tpu.memory_space<vmem>>, vector<328x1xf32>
    %10 = vector.broadcast %9 : vector<328x1xf32> to vector<328x8xf32>
    %11 = arith.mulf %8, %10 : vector<328x8xf32>
    %cst_9 = arith.constant 1.000000e+00 : f32
    %12 = vector.broadcast %cst_9 : f32 to vector<328x1xf32>
    %13 = arith.subf %12, %9 : vector<328x1xf32>
    %cst_10 = arith.constant 1.000000e+30 : f32
    %14 = vector.broadcast %cst_10 : f32 to vector<328x1xf32>
    %15 = arith.mulf %13, %14 : vector<328x1xf32>
    %16 = vector.broadcast %15 : vector<328x1xf32> to vector<328x8xf32>
    %17 = arith.subf %11, %16 : vector<328x8xf32>
    %c0_11 = arith.constant 0 : index
    %c0_12 = arith.constant 0 : index
    %18 = vector.load %arg6[%c0_11, %c0_12] : memref<328x8xf32, #tpu.memory_space<vmem>>, vector<328x8xf32>
    tpu.vector_store %arg6[%c0_11, %c0_12], %17 {strides = array<i32>} : memref<328x8xf32, #tpu.memory_space<vmem>>, vector<328x8xf32>,
    %c0_13 = arith.constant 0 : index
    %c0_14 = arith.constant 0 : index
    %19 = vector.load %arg6[%c0_13, %c0_14] : memref<328x8xf32, #tpu.memory_space<vmem>>, vector<72x8xf32>
    %c82 = arith.constant 82 : index
    %c0_15 = arith.constant 0 : index
    %20 = vector.load %arg6[%c82, %c0_15] : memref<328x8xf32, #tpu.memory_space<vmem>>, vector<72x8xf32>
    %21 = arith.maximumf %19, %20 : vector<72x8xf32>
    %c1 = arith.constant 1 : index
    %c0_16 = arith.constant 0 : index
    %22 = vector.load %arg6[%c1, %c0_16] : memref<328x8xf32, #tpu.memory_space<vmem>>, vector<72x8xf32>
    %23 = arith.maximumf %21, %22 : vector<72x8xf32>
    %c164 = arith.constant 164 : index
    %c0_17 = arith.constant 0 : index
    %24 = vector.load %arg6[%c164, %c0_17] : memref<328x8xf32, #tpu.memory_space<vmem>>, vector<72x8xf32>
    %25 = arith.maximumf %23, %24 : vector<72x8xf32>
    %c246 = arith.constant 246 : index
    %c0_18 = arith.constant 0 : index
    %26 = vector.load %arg6[%c246, %c0_18] : memref<328x8xf32, #tpu.memory_space<vmem>>, vector<72x8xf32>
    %27 = arith.maximumf %25, %26 : vector<72x8xf32>
    %c165 = arith.constant 165 : index
    %c0_19 = arith.constant 0 : index
    %28 = vector.load %arg6[%c165, %c0_19] : memref<328x8xf32, #tpu.memory_space<vmem>>, vector<72x8xf32>
    %29 = arith.maximumf %27, %28 : vector<72x8xf32>
    %c9 = arith.constant 9 : index
    %c0_20 = arith.constant 0 : index
    %30 = vector.load %arg6[%c9, %c0_20] : memref<328x8xf32, #tpu.memory_space<vmem>>, vector<72x8xf32>
    %31 = arith.maximumf %29, %30 : vector<72x8xf32>
    %c91 = arith.constant 91 : index
    %c0_21 = arith.constant 0 : index
    %32 = vector.load %arg6[%c91, %c0_21] : memref<328x8xf32, #tpu.memory_space<vmem>>, vector<72x8xf32>
    %33 = arith.maximumf %31, %32 : vector<72x8xf32>
    %c10 = arith.constant 10 : index
    %c0_22 = arith.constant 0 : index
    %34 = vector.load %arg6[%c10, %c0_22] : memref<328x8xf32, #tpu.memory_space<vmem>>, vector<72x8xf32>
    %35 = arith.maximumf %33, %34 : vector<72x8xf32>
    %36 = arith.truncf %35 : vector<72x8xf32> to vector<72x8xbf16>
    %c0_23 = arith.constant 0 : index
    %c0_24 = arith.constant 0 : index
    %c0_25 = arith.constant 0 : index
    %37 = vector.load %arg5[%c0_23, %c0_24, %c0_25] : memref<1x72x8xbf16, #tpu.memory_space<vmem>>, vector<1x72x8xbf16>
    %38 = vector.shape_cast %37 : vector<1x72x8xbf16> to vector<72x8xbf16>
    %39 = vector.shape_cast %36 : vector<72x8xbf16> to vector<1x72x8xbf16>
    tpu.vector_store %arg5[%c0_23, %c0_24, %c0_25], %39 {strides = array<i32>} : memref<1x72x8xbf16, #tpu.memory_space<vmem>>, vector<1x72x8xbf16>,
    return
  }
  func.func @transform_0(%arg0: i32) -> (i32, i32, i32) {
    %c0_i32 = arith.constant 0 : i32
    %c0_i32_0 = arith.constant 0 : i32
    %c0_i32_1 = arith.constant 0 : i32
    return %arg0, %c0_i32, %c0_i32_0 : i32, i32, i32
  }
  func.func @transform_1(%arg0: i32) -> (i32, i32) {
    %c0_i32 = arith.constant 0 : i32
    %c0_i32_0 = arith.constant 0 : i32
    %c0_i32_1 = arith.constant 0 : i32
    return %c0_i32, %c0_i32_0 : i32, i32
  }
  func.func @transform_2(%arg0: i32) -> (i32, i32) {
    %c0_i32 = arith.constant 0 : i32
    %c0_i32_0 = arith.constant 0 : i32
    %c0_i32_1 = arith.constant 0 : i32
    return %c0_i32, %c0_i32_0 : i32, i32
  }
  func.func @transform_3(%arg0: i32) -> (i32, i32) {
    %c0_i32 = arith.constant 0 : i32
    %c0_i32_0 = arith.constant 0 : i32
    %c0_i32_1 = arith.constant 0 : i32
    return %c0_i32, %c0_i32_0 : i32, i32
  }
  func.func @transform_4(%arg0: i32) -> (i32, i32, i32) {
    %c0_i32 = arith.constant 0 : i32
    %c0_i32_0 = arith.constant 0 : i32
    %c0_i32_1 = arith.constant 0 : i32
    return %arg0, %c0_i32, %c0_i32_0 : i32, i32, i32
  }
}

module attributes {stable_mosaic.version = 11 : i64} {
  func.func @stage_kernel(%arg0: i32, %arg1: memref<1x104x8xbf16, #tpu.memory_space<vmem>>, %arg2: memref<104x1xf32, #tpu.memory_space<vmem>>, %arg3: memref<38x1xf32, #tpu.memory_space<vmem>>, %arg4: memref<9x1x8xf32, #tpu.memory_space<vmem>>, %arg5: memref<1x8xf32, #tpu.memory_space<vmem>>, %arg6: memref<8x8xbf16, #tpu.memory_space<vmem>>, %arg7: memref<1x8xf32, #tpu.memory_space<vmem>>, %arg8: memref<9x1x8xf32, #tpu.memory_space<vmem>>, %arg9: memref<1x8xf32, #tpu.memory_space<vmem>>, %arg10: memref<8x16xbf16, #tpu.memory_space<vmem>>, %arg11: memref<8x16xbf16, #tpu.memory_space<vmem>>, %arg12: memref<1x16xf32, #tpu.memory_space<vmem>>, %arg13: memref<16x16xbf16, #tpu.memory_space<vmem>>, %arg14: memref<1x16x8xbf16, #tpu.memory_space<vmem>>, %arg15: memref<1x1x8xf32, #tpu.memory_space<vmem>>, %arg16: memref<1x9x1x8xf32, #tpu.memory_space<vmem>>, %arg17: memref<1x1x8xf32, #tpu.memory_space<vmem>>, %arg18: memref<1x8x16xbf16, #tpu.memory_space<vmem>>, %arg19: memref<1x1x16xf32, #tpu.memory_space<vmem>>, %arg20: memref<1x24x16xbf16, #tpu.memory_space<vmem>>, %arg21: memref<104x8xf32, #tpu.memory_space<vmem>>, %arg22: memref<38x16xf32, #tpu.memory_space<vmem>>, %arg23: memref<38x8xf32, #tpu.memory_space<vmem>>) attributes {dimension_semantics = [#tpu.dimension_semantics<parallel>], iteration_bounds = array<i64: 2>, scalar_prefetch = 0 : i64, scratch_operands = 3 : i64, tpu.core_type = #tpu.core_type<tc>, window_params = [{transform_indices = @transform_0, window_bounds = array<i64: 1, 104, 8>}, {pipeline_mode = #tpu.pipeline_mode<synchronous>, transform_indices = @transform_1, window_bounds = array<i64: 104, 1>}, {pipeline_mode = #tpu.pipeline_mode<synchronous>, transform_indices = @transform_2, window_bounds = array<i64: 38, 1>}, {pipeline_mode = #tpu.pipeline_mode<synchronous>, transform_indices = @transform_3, window_bounds = array<i64: 9, 1, 8>}, {pipeline_mode = #tpu.pipeline_mode<synchronous>, transform_indices = @transform_4, window_bounds = array<i64: 1, 8>}, {pipeline_mode = #tpu.pipeline_mode<synchronous>, transform_indices = @transform_5, window_bounds = array<i64: 8, 8>}, {pipeline_mode = #tpu.pipeline_mode<synchronous>, transform_indices = @transform_6, window_bounds = array<i64: 1, 8>}, {pipeline_mode = #tpu.pipeline_mode<synchronous>, transform_indices = @transform_7, window_bounds = array<i64: 9, 1, 8>}, {pipeline_mode = #tpu.pipeline_mode<synchronous>, transform_indices = @transform_8, window_bounds = array<i64: 1, 8>}, {pipeline_mode = #tpu.pipeline_mode<synchronous>, transform_indices = @transform_9, window_bounds = array<i64: 8, 16>}, {pipeline_mode = #tpu.pipeline_mode<synchronous>, transform_indices = @transform_10, window_bounds = array<i64: 8, 16>}, {pipeline_mode = #tpu.pipeline_mode<synchronous>, transform_indices = @transform_11, window_bounds = array<i64: 1, 16>}, {pipeline_mode = #tpu.pipeline_mode<synchronous>, transform_indices = @transform_12, window_bounds = array<i64: 16, 16>}, {pipeline_mode = #tpu.pipeline_mode<synchronous>, transform_indices = @transform_13, window_bounds = array<i64: 1, 16, 8>}, {pipeline_mode = #tpu.pipeline_mode<synchronous>, transform_indices = @transform_14, window_bounds = array<i64: 1, 1, 8>}, {pipeline_mode = #tpu.pipeline_mode<synchronous>, transform_indices = @transform_15, window_bounds = array<i64: 1, 9, 1, 8>}, {pipeline_mode = #tpu.pipeline_mode<synchronous>, transform_indices = @transform_16, window_bounds = array<i64: 1, 1, 8>}, {pipeline_mode = #tpu.pipeline_mode<synchronous>, transform_indices = @transform_17, window_bounds = array<i64: 1, 8, 16>}, {pipeline_mode = #tpu.pipeline_mode<synchronous>, transform_indices = @transform_18, window_bounds = array<i64: 1, 1, 16>}, {transform_indices = @transform_19, window_bounds = array<i64: 1, 24, 16>}]} {
    %c0 = arith.constant 0 : index
    %c0_0 = arith.constant 0 : index
    %c0_1 = arith.constant 0 : index
    %0 = vector.load %arg1[%c0, %c0_0, %c0_1] : memref<1x104x8xbf16, #tpu.memory_space<vmem>>, vector<1x104x8xbf16>
    %1 = vector.shape_cast %0 : vector<1x104x8xbf16> to vector<104x8xbf16>
    %c0_2 = arith.constant 0 : index
    %c0_3 = arith.constant 0 : index
    %2 = vector.load %arg6[%c0_2, %c0_3] : memref<8x8xbf16, #tpu.memory_space<vmem>>, vector<8x8xbf16>
    %cst = arith.constant dense<0.000000e+00> : vector<104x8xf32>
    %3 = tpu.matmul %1, %2, %cst {dimension_numbers = #tpu.dot_dimension_numbers<[1], [0], [0], [1], [0, 0, 1, 1], [], []>} : vector<104x8xbf16>, vector<8x8xbf16>, vector<104x8xf32> -> vector<104x8xf32>
    %c0_4 = arith.constant 0 : index
    %c0_5 = arith.constant 0 : index
    %4 = vector.load %arg7[%c0_4, %c0_5] : memref<1x8xf32, #tpu.memory_space<vmem>>, vector<1x8xf32>
    %5 = vector.broadcast %4 : vector<1x8xf32> to vector<104x8xf32>
    %6 = arith.addf %3, %5 : vector<104x8xf32>
    %cst_6 = arith.constant 0.000000e+00 : f32
    %7 = vector.broadcast %cst_6 : f32 to vector<104x8xf32>
    %8 = arith.maximumf %6, %7 : vector<104x8xf32>
    %c0_7 = arith.constant 0 : index
    %c0_8 = arith.constant 0 : index
    %9 = vector.load %arg2[%c0_7, %c0_8] : memref<104x1xf32, #tpu.memory_space<vmem>>, vector<104x1xf32>
    %10 = vector.broadcast %9 : vector<104x1xf32> to vector<104x8xf32>
    %11 = arith.mulf %8, %10 : vector<104x8xf32>
    %c0_9 = arith.constant 0 : index
    %c0_10 = arith.constant 0 : index
    %12 = vector.load %arg21[%c0_9, %c0_10] : memref<104x8xf32, #tpu.memory_space<vmem>>, vector<104x8xf32>
    tpu.vector_store %arg21[%c0_9, %c0_10], %11 {strides = array<i32>} : memref<104x8xf32, #tpu.memory_space<vmem>>, vector<104x8xf32>,
    %cst_11 = arith.constant 0.000000e+00 : f32
    %13 = vector.broadcast %cst_11 : f32 to vector<20x8xf32>
    %cst_12 = arith.constant 0.000000e+00 : f32
    %14 = vector.broadcast %cst_12 : f32 to vector<20x8xf32>
    %c0_13 = arith.constant 0 : index
    %c0_14 = arith.constant 0 : index
    %c0_15 = arith.constant 0 : index
    %15 = vector.load %arg1[%c0_13, %c0_14, %c0_15] : memref<1x104x8xbf16, #tpu.memory_space<vmem>>, vector<1x20x8xbf16>
    %16 = vector.shape_cast %15 : vector<1x20x8xbf16> to vector<20x8xbf16>
    %17 = arith.extf %16 : vector<20x8xbf16> to vector<20x8xf32>
    %c0_16 = arith.constant 0 : index
    %c0_17 = arith.constant 0 : index
    %c0_18 = arith.constant 0 : index
    %18 = vector.load %arg4[%c0_16, %c0_17, %c0_18] : memref<9x1x8xf32, #tpu.memory_space<vmem>>, vector<1x1x8xf32>
    %19 = vector.shape_cast %18 : vector<1x1x8xf32> to vector<1x8xf32>
    %20 = vector.broadcast %19 : vector<1x8xf32> to vector<20x8xf32>
    %21 = arith.mulf %17, %20 : vector<20x8xf32>
    %22 = arith.addf %13, %21 : vector<20x8xf32>
    %c0_19 = arith.constant 0 : index
    %c0_20 = arith.constant 0 : index
    %23 = vector.load %arg21[%c0_19, %c0_20] : memref<104x8xf32, #tpu.memory_space<vmem>>, vector<20x8xf32>
    %c0_21 = arith.constant 0 : index
    %c0_22 = arith.constant 0 : index
    %c0_23 = arith.constant 0 : index
    %24 = vector.load %arg8[%c0_21, %c0_22, %c0_23] : memref<9x1x8xf32, #tpu.memory_space<vmem>>, vector<1x1x8xf32>
    %25 = vector.shape_cast %24 : vector<1x1x8xf32> to vector<1x8xf32>
    %26 = vector.broadcast %25 : vector<1x8xf32> to vector<20x8xf32>
    %27 = arith.mulf %23, %26 : vector<20x8xf32>
    %28 = arith.addf %14, %27 : vector<20x8xf32>
    %c0_24 = arith.constant 0 : index
    %c26 = arith.constant 26 : index
    %c0_25 = arith.constant 0 : index
    %29 = vector.load %arg1[%c0_24, %c26, %c0_25] : memref<1x104x8xbf16, #tpu.memory_space<vmem>>, vector<1x20x8xbf16>
    %30 = vector.shape_cast %29 : vector<1x20x8xbf16> to vector<20x8xbf16>
    %31 = arith.extf %30 : vector<20x8xbf16> to vector<20x8xf32>
    %c1 = arith.constant 1 : index
    %c0_26 = arith.constant 0 : index
    %c0_27 = arith.constant 0 : index
    %32 = vector.load %arg4[%c1, %c0_26, %c0_27] : memref<9x1x8xf32, #tpu.memory_space<vmem>>, vector<1x1x8xf32>
    %33 = vector.shape_cast %32 : vector<1x1x8xf32> to vector<1x8xf32>
    %34 = vector.broadcast %33 : vector<1x8xf32> to vector<20x8xf32>
    %35 = arith.mulf %31, %34 : vector<20x8xf32>
    %36 = arith.addf %22, %35 : vector<20x8xf32>
    %c26_28 = arith.constant 26 : index
    %c0_29 = arith.constant 0 : index
    %37 = vector.load %arg21[%c26_28, %c0_29] : memref<104x8xf32, #tpu.memory_space<vmem>>, vector<20x8xf32>
    %c1_30 = arith.constant 1 : index
    %c0_31 = arith.constant 0 : index
    %c0_32 = arith.constant 0 : index
    %38 = vector.load %arg8[%c1_30, %c0_31, %c0_32] : memref<9x1x8xf32, #tpu.memory_space<vmem>>, vector<1x1x8xf32>
    %39 = vector.shape_cast %38 : vector<1x1x8xf32> to vector<1x8xf32>
    %40 = vector.broadcast %39 : vector<1x8xf32> to vector<20x8xf32>
    %41 = arith.mulf %37, %40 : vector<20x8xf32>
    %42 = arith.addf %28, %41 : vector<20x8xf32>
    %c0_33 = arith.constant 0 : index
    %c1_34 = arith.constant 1 : index
    %c0_35 = arith.constant 0 : index
    %43 = vector.load %arg1[%c0_33, %c1_34, %c0_35] : memref<1x104x8xbf16, #tpu.memory_space<vmem>>, vector<1x20x8xbf16>
    %44 = vector.shape_cast %43 : vector<1x20x8xbf16> to vector<20x8xbf16>
    %45 = arith.extf %44 : vector<20x8xbf16> to vector<20x8xf32>
    %c2 = arith.constant 2 : index
    %c0_36 = arith.constant 0 : index
    %c0_37 = arith.constant 0 : index
    %46 = vector.load %arg4[%c2, %c0_36, %c0_37] : memref<9x1x8xf32, #tpu.memory_space<vmem>>, vector<1x1x8xf32>
    %47 = vector.shape_cast %46 : vector<1x1x8xf32> to vector<1x8xf32>
    %48 = vector.broadcast %47 : vector<1x8xf32> to vector<20x8xf32>
    %49 = arith.mulf %45, %48 : vector<20x8xf32>
    %50 = arith.addf %36, %49 : vector<20x8xf32>
    %c1_38 = arith.constant 1 : index
    %c0_39 = arith.constant 0 : index
    %51 = vector.load %arg21[%c1_38, %c0_39] : memref<104x8xf32, #tpu.memory_space<vmem>>, vector<20x8xf32>
    %c2_40 = arith.constant 2 : index
    %c0_41 = arith.constant 0 : index
    %c0_42 = arith.constant 0 : index
    %52 = vector.load %arg8[%c2_40, %c0_41, %c0_42] : memref<9x1x8xf32, #tpu.memory_space<vmem>>, vector<1x1x8xf32>
    %53 = vector.shape_cast %52 : vector<1x1x8xf32> to vector<1x8xf32>
    %54 = vector.broadcast %53 : vector<1x8xf32> to vector<20x8xf32>
    %55 = arith.mulf %51, %54 : vector<20x8xf32>
    %56 = arith.addf %42, %55 : vector<20x8xf32>
    %c0_43 = arith.constant 0 : index
    %c52 = arith.constant 52 : index
    %c0_44 = arith.constant 0 : index
    %57 = vector.load %arg1[%c0_43, %c52, %c0_44] : memref<1x104x8xbf16, #tpu.memory_space<vmem>>, vector<1x20x8xbf16>
    %58 = vector.shape_cast %57 : vector<1x20x8xbf16> to vector<20x8xbf16>
    %59 = arith.extf %58 : vector<20x8xbf16> to vector<20x8xf32>
    %c3 = arith.constant 3 : index
    %c0_45 = arith.constant 0 : index
    %c0_46 = arith.constant 0 : index
    %60 = vector.load %arg4[%c3, %c0_45, %c0_46] : memref<9x1x8xf32, #tpu.memory_space<vmem>>, vector<1x1x8xf32>
    %61 = vector.shape_cast %60 : vector<1x1x8xf32> to vector<1x8xf32>
    %62 = vector.broadcast %61 : vector<1x8xf32> to vector<20x8xf32>
    %63 = arith.mulf %59, %62 : vector<20x8xf32>
    %64 = arith.addf %50, %63 : vector<20x8xf32>
    %c52_47 = arith.constant 52 : index
    %c0_48 = arith.constant 0 : index
    %65 = vector.load %arg21[%c52_47, %c0_48] : memref<104x8xf32, #tpu.memory_space<vmem>>, vector<20x8xf32>
    %c3_49 = arith.constant 3 : index
    %c0_50 = arith.constant 0 : index
    %c0_51 = arith.constant 0 : index
    %66 = vector.load %arg8[%c3_49, %c0_50, %c0_51] : memref<9x1x8xf32, #tpu.memory_space<vmem>>, vector<1x1x8xf32>
    %67 = vector.shape_cast %66 : vector<1x1x8xf32> to vector<1x8xf32>
    %68 = vector.broadcast %67 : vector<1x8xf32> to vector<20x8xf32>
    %69 = arith.mulf %65, %68 : vector<20x8xf32>
    %70 = arith.addf %56, %69 : vector<20x8xf32>
    %c0_52 = arith.constant 0 : index
    %c78 = arith.constant 78 : index
    %c0_53 = arith.constant 0 : index
    %71 = vector.load %arg1[%c0_52, %c78, %c0_53] : memref<1x104x8xbf16, #tpu.memory_space<vmem>>, vector<1x20x8xbf16>
    %72 = vector.shape_cast %71 : vector<1x20x8xbf16> to vector<20x8xbf16>
    %73 = arith.extf %72 : vector<20x8xbf16> to vector<20x8xf32>
    %c4 = arith.constant 4 : index
    %c0_54 = arith.constant 0 : index
    %c0_55 = arith.constant 0 : index
    %74 = vector.load %arg4[%c4, %c0_54, %c0_55] : memref<9x1x8xf32, #tpu.memory_space<vmem>>, vector<1x1x8xf32>
    %75 = vector.shape_cast %74 : vector<1x1x8xf32> to vector<1x8xf32>
    %76 = vector.broadcast %75 : vector<1x8xf32> to vector<20x8xf32>
    %77 = arith.mulf %73, %76 : vector<20x8xf32>
    %78 = arith.addf %64, %77 : vector<20x8xf32>
    %c78_56 = arith.constant 78 : index
    %c0_57 = arith.constant 0 : index
    %79 = vector.load %arg21[%c78_56, %c0_57] : memref<104x8xf32, #tpu.memory_space<vmem>>, vector<20x8xf32>
    %c4_58 = arith.constant 4 : index
    %c0_59 = arith.constant 0 : index
    %c0_60 = arith.constant 0 : index
    %80 = vector.load %arg8[%c4_58, %c0_59, %c0_60] : memref<9x1x8xf32, #tpu.memory_space<vmem>>, vector<1x1x8xf32>
    %81 = vector.shape_cast %80 : vector<1x1x8xf32> to vector<1x8xf32>
    %82 = vector.broadcast %81 : vector<1x8xf32> to vector<20x8xf32>
    %83 = arith.mulf %79, %82 : vector<20x8xf32>
    %84 = arith.addf %70, %83 : vector<20x8xf32>
    %c0_61 = arith.constant 0 : index
    %c53 = arith.constant 53 : index
    %c0_62 = arith.constant 0 : index
    %85 = vector.load %arg1[%c0_61, %c53, %c0_62] : memref<1x104x8xbf16, #tpu.memory_space<vmem>>, vector<1x20x8xbf16>
    %86 = vector.shape_cast %85 : vector<1x20x8xbf16> to vector<20x8xbf16>
    %87 = arith.extf %86 : vector<20x8xbf16> to vector<20x8xf32>
    %c5 = arith.constant 5 : index
    %c0_63 = arith.constant 0 : index
    %c0_64 = arith.constant 0 : index
    %88 = vector.load %arg4[%c5, %c0_63, %c0_64] : memref<9x1x8xf32, #tpu.memory_space<vmem>>, vector<1x1x8xf32>
    %89 = vector.shape_cast %88 : vector<1x1x8xf32> to vector<1x8xf32>
    %90 = vector.broadcast %89 : vector<1x8xf32> to vector<20x8xf32>
    %91 = arith.mulf %87, %90 : vector<20x8xf32>
    %92 = arith.addf %78, %91 : vector<20x8xf32>
    %c53_65 = arith.constant 53 : index
    %c0_66 = arith.constant 0 : index
    %93 = vector.load %arg21[%c53_65, %c0_66] : memref<104x8xf32, #tpu.memory_space<vmem>>, vector<20x8xf32>
    %c5_67 = arith.constant 5 : index
    %c0_68 = arith.constant 0 : index
    %c0_69 = arith.constant 0 : index
    %94 = vector.load %arg8[%c5_67, %c0_68, %c0_69] : memref<9x1x8xf32, #tpu.memory_space<vmem>>, vector<1x1x8xf32>
    %95 = vector.shape_cast %94 : vector<1x1x8xf32> to vector<1x8xf32>
    %96 = vector.broadcast %95 : vector<1x8xf32> to vector<20x8xf32>
    %97 = arith.mulf %93, %96 : vector<20x8xf32>
    %98 = arith.addf %84, %97 : vector<20x8xf32>
    %c0_70 = arith.constant 0 : index
    %c5_71 = arith.constant 5 : index
    %c0_72 = arith.constant 0 : index
    %99 = vector.load %arg1[%c0_70, %c5_71, %c0_72] : memref<1x104x8xbf16, #tpu.memory_space<vmem>>, vector<1x20x8xbf16>
    %100 = vector.shape_cast %99 : vector<1x20x8xbf16> to vector<20x8xbf16>
    %101 = arith.extf %100 : vector<20x8xbf16> to vector<20x8xf32>
    %c6 = arith.constant 6 : index
    %c0_73 = arith.constant 0 : index
    %c0_74 = arith.constant 0 : index
    %102 = vector.load %arg4[%c6, %c0_73, %c0_74] : memref<9x1x8xf32, #tpu.memory_space<vmem>>, vector<1x1x8xf32>
    %103 = vector.shape_cast %102 : vector<1x1x8xf32> to vector<1x8xf32>
    %104 = vector.broadcast %103 : vector<1x8xf32> to vector<20x8xf32>
    %105 = arith.mulf %101, %104 : vector<20x8xf32>
    %106 = arith.addf %92, %105 : vector<20x8xf32>
    %c5_75 = arith.constant 5 : index
    %c0_76 = arith.constant 0 : index
    %107 = vector.load %arg21[%c5_75, %c0_76] : memref<104x8xf32, #tpu.memory_space<vmem>>, vector<20x8xf32>
    %c6_77 = arith.constant 6 : index
    %c0_78 = arith.constant 0 : index
    %c0_79 = arith.constant 0 : index
    %108 = vector.load %arg8[%c6_77, %c0_78, %c0_79] : memref<9x1x8xf32, #tpu.memory_space<vmem>>, vector<1x1x8xf32>
    %109 = vector.shape_cast %108 : vector<1x1x8xf32> to vector<1x8xf32>
    %110 = vector.broadcast %109 : vector<1x8xf32> to vector<20x8xf32>
    %111 = arith.mulf %107, %110 : vector<20x8xf32>
    %112 = arith.addf %98, %111 : vector<20x8xf32>
    %c0_80 = arith.constant 0 : index
    %c31 = arith.constant 31 : index
    %c0_81 = arith.constant 0 : index
    %113 = vector.load %arg1[%c0_80, %c31, %c0_81] : memref<1x104x8xbf16, #tpu.memory_space<vmem>>, vector<1x20x8xbf16>
    %114 = vector.shape_cast %113 : vector<1x20x8xbf16> to vector<20x8xbf16>
    %115 = arith.extf %114 : vector<20x8xbf16> to vector<20x8xf32>
    %c7 = arith.constant 7 : index
    %c0_82 = arith.constant 0 : index
    %c0_83 = arith.constant 0 : index
    %116 = vector.load %arg4[%c7, %c0_82, %c0_83] : memref<9x1x8xf32, #tpu.memory_space<vmem>>, vector<1x1x8xf32>
    %117 = vector.shape_cast %116 : vector<1x1x8xf32> to vector<1x8xf32>
    %118 = vector.broadcast %117 : vector<1x8xf32> to vector<20x8xf32>
    %119 = arith.mulf %115, %118 : vector<20x8xf32>
    %120 = arith.addf %106, %119 : vector<20x8xf32>
    %c31_84 = arith.constant 31 : index
    %c0_85 = arith.constant 0 : index
    %121 = vector.load %arg21[%c31_84, %c0_85] : memref<104x8xf32, #tpu.memory_space<vmem>>, vector<20x8xf32>
    %c7_86 = arith.constant 7 : index
    %c0_87 = arith.constant 0 : index
    %c0_88 = arith.constant 0 : index
    %122 = vector.load %arg8[%c7_86, %c0_87, %c0_88] : memref<9x1x8xf32, #tpu.memory_space<vmem>>, vector<1x1x8xf32>
    %123 = vector.shape_cast %122 : vector<1x1x8xf32> to vector<1x8xf32>
    %124 = vector.broadcast %123 : vector<1x8xf32> to vector<20x8xf32>
    %125 = arith.mulf %121, %124 : vector<20x8xf32>
    %126 = arith.addf %112, %125 : vector<20x8xf32>
    %c0_89 = arith.constant 0 : index
    %c6_90 = arith.constant 6 : index
    %c0_91 = arith.constant 0 : index
    %127 = vector.load %arg1[%c0_89, %c6_90, %c0_91] : memref<1x104x8xbf16, #tpu.memory_space<vmem>>, vector<1x20x8xbf16>
    %128 = vector.shape_cast %127 : vector<1x20x8xbf16> to vector<20x8xbf16>
    %129 = arith.extf %128 : vector<20x8xbf16> to vector<20x8xf32>
    %c8 = arith.constant 8 : index
    %c0_92 = arith.constant 0 : index
    %c0_93 = arith.constant 0 : index
    %130 = vector.load %arg4[%c8, %c0_92, %c0_93] : memref<9x1x8xf32, #tpu.memory_space<vmem>>, vector<1x1x8xf32>
    %131 = vector.shape_cast %130 : vector<1x1x8xf32> to vector<1x8xf32>
    %132 = vector.broadcast %131 : vector<1x8xf32> to vector<20x8xf32>
    %133 = arith.mulf %129, %132 : vector<20x8xf32>
    %134 = arith.addf %120, %133 : vector<20x8xf32>
    %c6_94 = arith.constant 6 : index
    %c0_95 = arith.constant 0 : index
    %135 = vector.load %arg21[%c6_94, %c0_95] : memref<104x8xf32, #tpu.memory_space<vmem>>, vector<20x8xf32>
    %c8_96 = arith.constant 8 : index
    %c0_97 = arith.constant 0 : index
    %c0_98 = arith.constant 0 : index
    %136 = vector.load %arg8[%c8_96, %c0_97, %c0_98] : memref<9x1x8xf32, #tpu.memory_space<vmem>>, vector<1x1x8xf32>
    %137 = vector.shape_cast %136 : vector<1x1x8xf32> to vector<1x8xf32>
    %138 = vector.broadcast %137 : vector<1x8xf32> to vector<20x8xf32>
    %139 = arith.mulf %135, %138 : vector<20x8xf32>
    %140 = arith.addf %126, %139 : vector<20x8xf32>
    %c0_99 = arith.constant 0 : index
    %c0_100 = arith.constant 0 : index
    %141 = vector.load %arg5[%c0_99, %c0_100] : memref<1x8xf32, #tpu.memory_space<vmem>>, vector<1x8xf32>
    %142 = vector.broadcast %141 : vector<1x8xf32> to vector<20x8xf32>
    %143 = arith.addf %134, %142 : vector<20x8xf32>
    %c0_101 = arith.constant 0 : index
    %c0_102 = arith.constant 0 : index
    %144 = vector.load %arg9[%c0_101, %c0_102] : memref<1x8xf32, #tpu.memory_space<vmem>>, vector<1x8xf32>
    %145 = vector.broadcast %144 : vector<1x8xf32> to vector<20x8xf32>
    %146 = arith.addf %140, %145 : vector<20x8xf32>
    %147 = arith.truncf %143 : vector<20x8xf32> to vector<20x8xbf16>
    %c0_103 = arith.constant 0 : index
    %c0_104 = arith.constant 0 : index
    %148 = vector.load %arg10[%c0_103, %c0_104] : memref<8x16xbf16, #tpu.memory_space<vmem>>, vector<8x16xbf16>
    %cst_105 = arith.constant dense<0.000000e+00> : vector<20x16xf32>
    %149 = tpu.matmul %147, %148, %cst_105 {dimension_numbers = #tpu.dot_dimension_numbers<[1], [0], [0], [1], [0, 0, 1, 1], [], []>} : vector<20x8xbf16>, vector<8x16xbf16>, vector<20x16xf32> -> vector<20x16xf32>
    %150 = arith.truncf %146 : vector<20x8xf32> to vector<20x8xbf16>
    %c0_106 = arith.constant 0 : index
    %c0_107 = arith.constant 0 : index
    %151 = vector.load %arg11[%c0_106, %c0_107] : memref<8x16xbf16, #tpu.memory_space<vmem>>, vector<8x16xbf16>
    %cst_108 = arith.constant dense<0.000000e+00> : vector<20x16xf32>
    %152 = tpu.matmul %150, %151, %cst_108 {dimension_numbers = #tpu.dot_dimension_numbers<[1], [0], [0], [1], [0, 0, 1, 1], [], []>} : vector<20x8xbf16>, vector<8x16xbf16>, vector<20x16xf32> -> vector<20x16xf32>
    %153 = arith.addf %149, %152 : vector<20x16xf32>
    %c0_109 = arith.constant 0 : index
    %c0_110 = arith.constant 0 : index
    %154 = vector.load %arg12[%c0_109, %c0_110] : memref<1x16xf32, #tpu.memory_space<vmem>>, vector<1x16xf32>
    %155 = vector.broadcast %154 : vector<1x16xf32> to vector<20x16xf32>
    %156 = arith.addf %153, %155 : vector<20x16xf32>
    %cst_111 = arith.constant 0.000000e+00 : f32
    %157 = vector.broadcast %cst_111 : f32 to vector<20x16xf32>
    %158 = arith.maximumf %156, %157 : vector<20x16xf32>
    %cst_112 = arith.constant 0.000000e+00 : f32
    %159 = vector.broadcast %cst_112 : f32 to vector<38x16xf32>
    %c0_113 = arith.constant 0 : index
    %c0_114 = arith.constant 0 : index
    %160 = vector.load %arg22[%c0_113, %c0_114] : memref<38x16xf32, #tpu.memory_space<vmem>>, vector<38x16xf32>
    tpu.vector_store %arg22[%c0_113, %c0_114], %159 {strides = array<i32>} : memref<38x16xf32, #tpu.memory_space<vmem>>, vector<38x16xf32>,
    %161 = vector.extract_strided_slice %158 {offsets = [0, 0], sizes = [4, 16], strides = [1, 1]} : vector<20x16xf32> to vector<4x16xf32>
    %c8_115 = arith.constant 8 : index
    %c0_116 = arith.constant 0 : index
    %162 = vector.load %arg22[%c8_115, %c0_116] : memref<38x16xf32, #tpu.memory_space<vmem>>, vector<4x16xf32>
    tpu.vector_store %arg22[%c8_115, %c0_116], %161 {strides = array<i32>} : memref<38x16xf32, #tpu.memory_space<vmem>>, vector<4x16xf32>,
    %163 = vector.extract_strided_slice %158 {offsets = [5, 0], sizes = [4, 16], strides = [1, 1]} : vector<20x16xf32> to vector<4x16xf32>
    %c14 = arith.constant 14 : index
    %c0_117 = arith.constant 0 : index
    %164 = vector.load %arg22[%c14, %c0_117] : memref<38x16xf32, #tpu.memory_space<vmem>>, vector<4x16xf32>
    tpu.vector_store %arg22[%c14, %c0_117], %163 {strides = array<i32>} : memref<38x16xf32, #tpu.memory_space<vmem>>, vector<4x16xf32>,
    %165 = vector.extract_strided_slice %158 {offsets = [10, 0], sizes = [4, 16], strides = [1, 1]} : vector<20x16xf32> to vector<4x16xf32>
    %c20 = arith.constant 20 : index
    %c0_118 = arith.constant 0 : index
    %166 = vector.load %arg22[%c20, %c0_118] : memref<38x16xf32, #tpu.memory_space<vmem>>, vector<4x16xf32>
    tpu.vector_store %arg22[%c20, %c0_118], %165 {strides = array<i32>} : memref<38x16xf32, #tpu.memory_space<vmem>>, vector<4x16xf32>,
    %167 = vector.extract_strided_slice %158 {offsets = [15, 0], sizes = [4, 16], strides = [1, 1]} : vector<20x16xf32> to vector<4x16xf32>
    %c26_119 = arith.constant 26 : index
    %c0_120 = arith.constant 0 : index
    %168 = vector.load %arg22[%c26_119, %c0_120] : memref<38x16xf32, #tpu.memory_space<vmem>>, vector<4x16xf32>
    tpu.vector_store %arg22[%c26_119, %c0_120], %167 {strides = array<i32>} : memref<38x16xf32, #tpu.memory_space<vmem>>, vector<4x16xf32>,
    %c0_121 = arith.constant 0 : index
    %c0_122 = arith.constant 0 : index
    %c0_123 = arith.constant 0 : index
    %169 = vector.load %arg14[%c0_121, %c0_122, %c0_123] : memref<1x16x8xbf16, #tpu.memory_space<vmem>>, vector<1x16x8xbf16>
    %170 = vector.shape_cast %169 : vector<1x16x8xbf16> to vector<16x8xbf16>
    %c0_124 = arith.constant 0 : index
    %c0_125 = arith.constant 0 : index
    %c0_126 = arith.constant 0 : index
    %171 = vector.load %arg15[%c0_124, %c0_125, %c0_126] : memref<1x1x8xf32, #tpu.memory_space<vmem>>, vector<1x1x8xf32>
    %172 = vector.shape_cast %171 : vector<1x1x8xf32> to vector<1x8xf32>
    %c0_127 = arith.constant 0 : index
    %c0_128 = arith.constant 0 : index
    %c0_129 = arith.constant 0 : index
    %c0_130 = arith.constant 0 : index
    %173 = vector.load %arg16[%c0_127, %c0_128, %c0_129, %c0_130] : memref<1x9x1x8xf32, #tpu.memory_space<vmem>>, vector<1x9x1x8xf32>
    %174 = vector.shape_cast %173 : vector<1x9x1x8xf32> to vector<9x1x8xf32>
    %c0_131 = arith.constant 0 : index
    %c0_132 = arith.constant 0 : index
    %c0_133 = arith.constant 0 : index
    %175 = vector.load %arg17[%c0_131, %c0_132, %c0_133] : memref<1x1x8xf32, #tpu.memory_space<vmem>>, vector<1x1x8xf32>
    %176 = vector.shape_cast %175 : vector<1x1x8xf32> to vector<1x8xf32>
    %c0_134 = arith.constant 0 : index
    %c0_135 = arith.constant 0 : index
    %c0_136 = arith.constant 0 : index
    %177 = vector.load %arg18[%c0_134, %c0_135, %c0_136] : memref<1x8x16xbf16, #tpu.memory_space<vmem>>, vector<1x8x16xbf16>
    %178 = vector.shape_cast %177 : vector<1x8x16xbf16> to vector<8x16xbf16>
    %c0_137 = arith.constant 0 : index
    %c0_138 = arith.constant 0 : index
    %c0_139 = arith.constant 0 : index
    %179 = vector.load %arg19[%c0_137, %c0_138, %c0_139] : memref<1x1x16xf32, #tpu.memory_space<vmem>>, vector<1x1x16xf32>
    %180 = vector.shape_cast %179 : vector<1x1x16xf32> to vector<1x16xf32>
    %c0_140 = arith.constant 0 : index
    %c0_141 = arith.constant 0 : index
    %181 = vector.load %arg22[%c0_140, %c0_141] : memref<38x16xf32, #tpu.memory_space<vmem>>, vector<38x16xf32>
    %182 = arith.truncf %181 : vector<38x16xf32> to vector<38x16xbf16>
    %cst_142 = arith.constant dense<0.000000e+00> : vector<38x8xf32>
    %183 = tpu.matmul %182, %170, %cst_142 {dimension_numbers = #tpu.dot_dimension_numbers<[1], [0], [0], [1], [0, 0, 1, 1], [], []>} : vector<38x16xbf16>, vector<16x8xbf16>, vector<38x8xf32> -> vector<38x8xf32>
    %184 = vector.broadcast %172 : vector<1x8xf32> to vector<38x8xf32>
    %185 = arith.addf %183, %184 : vector<38x8xf32>
    %cst_143 = arith.constant 0.000000e+00 : f32
    %186 = vector.broadcast %cst_143 : f32 to vector<38x8xf32>
    %187 = arith.maximumf %185, %186 : vector<38x8xf32>
    %c0_144 = arith.constant 0 : index
    %c0_145 = arith.constant 0 : index
    %188 = vector.load %arg3[%c0_144, %c0_145] : memref<38x1xf32, #tpu.memory_space<vmem>>, vector<38x1xf32>
    %189 = vector.broadcast %188 : vector<38x1xf32> to vector<38x8xf32>
    %190 = arith.mulf %187, %189 : vector<38x8xf32>
    %c0_146 = arith.constant 0 : index
    %c0_147 = arith.constant 0 : index
    %191 = vector.load %arg23[%c0_146, %c0_147] : memref<38x8xf32, #tpu.memory_space<vmem>>, vector<38x8xf32>
    tpu.vector_store %arg23[%c0_146, %c0_147], %190 {strides = array<i32>} : memref<38x8xf32, #tpu.memory_space<vmem>>, vector<38x8xf32>,
    %cst_148 = arith.constant 0.000000e+00 : f32
    %192 = vector.broadcast %cst_148 : f32 to vector<24x8xf32>
    %c0_149 = arith.constant 0 : index
    %c0_150 = arith.constant 0 : index
    %193 = vector.load %arg23[%c0_149, %c0_150] : memref<38x8xf32, #tpu.memory_space<vmem>>, vector<24x8xf32>
    %194 = vector.extract_strided_slice %174 {offsets = [0, 0, 0], sizes = [1, 1, 8], strides = [1, 1, 1]} : vector<9x1x8xf32> to vector<1x1x8xf32>
    %195 = vector.shape_cast %194 : vector<1x1x8xf32> to vector<1x8xf32>
    %196 = vector.broadcast %195 : vector<1x8xf32> to vector<24x8xf32>
    %197 = arith.mulf %193, %196 : vector<24x8xf32>
    %198 = arith.addf %192, %197 : vector<24x8xf32>
    %c1_151 = arith.constant 1 : index
    %c0_152 = arith.constant 0 : index
    %199 = vector.load %arg23[%c1_151, %c0_152] : memref<38x8xf32, #tpu.memory_space<vmem>>, vector<24x8xf32>
    %200 = vector.extract_strided_slice %174 {offsets = [1, 0, 0], sizes = [1, 1, 8], strides = [1, 1, 1]} : vector<9x1x8xf32> to vector<1x1x8xf32>
    %201 = vector.shape_cast %200 : vector<1x1x8xf32> to vector<1x8xf32>
    %202 = vector.broadcast %201 : vector<1x8xf32> to vector<24x8xf32>
    %203 = arith.mulf %199, %202 : vector<24x8xf32>
    %204 = arith.addf %198, %203 : vector<24x8xf32>
    %c2_153 = arith.constant 2 : index
    %c0_154 = arith.constant 0 : index
    %205 = vector.load %arg23[%c2_153, %c0_154] : memref<38x8xf32, #tpu.memory_space<vmem>>, vector<24x8xf32>
    %206 = vector.extract_strided_slice %174 {offsets = [2, 0, 0], sizes = [1, 1, 8], strides = [1, 1, 1]} : vector<9x1x8xf32> to vector<1x1x8xf32>
    %207 = vector.shape_cast %206 : vector<1x1x8xf32> to vector<1x8xf32>
    %208 = vector.broadcast %207 : vector<1x8xf32> to vector<24x8xf32>
    %209 = arith.mulf %205, %208 : vector<24x8xf32>
    %210 = arith.addf %204, %209 : vector<24x8xf32>
    %c6_155 = arith.constant 6 : index
    %c0_156 = arith.constant 0 : index
    %211 = vector.load %arg23[%c6_155, %c0_156] : memref<38x8xf32, #tpu.memory_space<vmem>>, vector<24x8xf32>
    %212 = vector.extract_strided_slice %174 {offsets = [3, 0, 0], sizes = [1, 1, 8], strides = [1, 1, 1]} : vector<9x1x8xf32> to vector<1x1x8xf32>
    %213 = vector.shape_cast %212 : vector<1x1x8xf32> to vector<1x8xf32>
    %214 = vector.broadcast %213 : vector<1x8xf32> to vector<24x8xf32>
    %215 = arith.mulf %211, %214 : vector<24x8xf32>
    %216 = arith.addf %210, %215 : vector<24x8xf32>
    %c7_157 = arith.constant 7 : index
    %c0_158 = arith.constant 0 : index
    %217 = vector.load %arg23[%c7_157, %c0_158] : memref<38x8xf32, #tpu.memory_space<vmem>>, vector<24x8xf32>
    %218 = vector.extract_strided_slice %174 {offsets = [4, 0, 0], sizes = [1, 1, 8], strides = [1, 1, 1]} : vector<9x1x8xf32> to vector<1x1x8xf32>
    %219 = vector.shape_cast %218 : vector<1x1x8xf32> to vector<1x8xf32>
    %220 = vector.broadcast %219 : vector<1x8xf32> to vector<24x8xf32>
    %221 = arith.mulf %217, %220 : vector<24x8xf32>
    %222 = arith.addf %216, %221 : vector<24x8xf32>
    %c8_159 = arith.constant 8 : index
    %c0_160 = arith.constant 0 : index
    %223 = vector.load %arg23[%c8_159, %c0_160] : memref<38x8xf32, #tpu.memory_space<vmem>>, vector<24x8xf32>
    %224 = vector.extract_strided_slice %174 {offsets = [5, 0, 0], sizes = [1, 1, 8], strides = [1, 1, 1]} : vector<9x1x8xf32> to vector<1x1x8xf32>
    %225 = vector.shape_cast %224 : vector<1x1x8xf32> to vector<1x8xf32>
    %226 = vector.broadcast %225 : vector<1x8xf32> to vector<24x8xf32>
    %227 = arith.mulf %223, %226 : vector<24x8xf32>
    %228 = arith.addf %222, %227 : vector<24x8xf32>
    %c12 = arith.constant 12 : index
    %c0_161 = arith.constant 0 : index
    %229 = vector.load %arg23[%c12, %c0_161] : memref<38x8xf32, #tpu.memory_space<vmem>>, vector<24x8xf32>
    %230 = vector.extract_strided_slice %174 {offsets = [6, 0, 0], sizes = [1, 1, 8], strides = [1, 1, 1]} : vector<9x1x8xf32> to vector<1x1x8xf32>
    %231 = vector.shape_cast %230 : vector<1x1x8xf32> to vector<1x8xf32>
    %232 = vector.broadcast %231 : vector<1x8xf32> to vector<24x8xf32>
    %233 = arith.mulf %229, %232 : vector<24x8xf32>
    %234 = arith.addf %228, %233 : vector<24x8xf32>
    %c13 = arith.constant 13 : index
    %c0_162 = arith.constant 0 : index
    %235 = vector.load %arg23[%c13, %c0_162] : memref<38x8xf32, #tpu.memory_space<vmem>>, vector<24x8xf32>
    %236 = vector.extract_strided_slice %174 {offsets = [7, 0, 0], sizes = [1, 1, 8], strides = [1, 1, 1]} : vector<9x1x8xf32> to vector<1x1x8xf32>
    %237 = vector.shape_cast %236 : vector<1x1x8xf32> to vector<1x8xf32>
    %238 = vector.broadcast %237 : vector<1x8xf32> to vector<24x8xf32>
    %239 = arith.mulf %235, %238 : vector<24x8xf32>
    %240 = arith.addf %234, %239 : vector<24x8xf32>
    %c14_163 = arith.constant 14 : index
    %c0_164 = arith.constant 0 : index
    %241 = vector.load %arg23[%c14_163, %c0_164] : memref<38x8xf32, #tpu.memory_space<vmem>>, vector<24x8xf32>
    %242 = vector.extract_strided_slice %174 {offsets = [8, 0, 0], sizes = [1, 1, 8], strides = [1, 1, 1]} : vector<9x1x8xf32> to vector<1x1x8xf32>
    %243 = vector.shape_cast %242 : vector<1x1x8xf32> to vector<1x8xf32>
    %244 = vector.broadcast %243 : vector<1x8xf32> to vector<24x8xf32>
    %245 = arith.mulf %241, %244 : vector<24x8xf32>
    %246 = arith.addf %240, %245 : vector<24x8xf32>
    %247 = vector.broadcast %176 : vector<1x8xf32> to vector<24x8xf32>
    %248 = arith.addf %246, %247 : vector<24x8xf32>
    %c7_165 = arith.constant 7 : index
    %c0_166 = arith.constant 0 : index
    %249 = vector.load %arg22[%c7_165, %c0_166] : memref<38x16xf32, #tpu.memory_space<vmem>>, vector<24x16xf32>
    %250 = arith.truncf %249 : vector<24x16xf32> to vector<24x16xbf16>
    %c0_167 = arith.constant 0 : index
    %c0_168 = arith.constant 0 : index
    %251 = vector.load %arg13[%c0_167, %c0_168] : memref<16x16xbf16, #tpu.memory_space<vmem>>, vector<16x16xbf16>
    %cst_169 = arith.constant dense<0.000000e+00> : vector<24x16xf32>
    %252 = tpu.matmul %250, %251, %cst_169 {dimension_numbers = #tpu.dot_dimension_numbers<[1], [0], [0], [1], [0, 0, 1, 1], [], []>} : vector<24x16xbf16>, vector<16x16xbf16>, vector<24x16xf32> -> vector<24x16xf32>
    %253 = arith.truncf %248 : vector<24x8xf32> to vector<24x8xbf16>
    %cst_170 = arith.constant dense<0.000000e+00> : vector<24x16xf32>
    %254 = tpu.matmul %253, %178, %cst_170 {dimension_numbers = #tpu.dot_dimension_numbers<[1], [0], [0], [1], [0, 0, 1, 1], [], []>} : vector<24x8xbf16>, vector<8x16xbf16>, vector<24x16xf32> -> vector<24x16xf32>
    %255 = arith.addf %252, %254 : vector<24x16xf32>
    %256 = vector.broadcast %180 : vector<1x16xf32> to vector<24x16xf32>
    %257 = arith.addf %255, %256 : vector<24x16xf32>
    %cst_171 = arith.constant 0.000000e+00 : f32
    %258 = vector.broadcast %cst_171 : f32 to vector<24x16xf32>
    %259 = arith.maximumf %257, %258 : vector<24x16xf32>
    %c7_172 = arith.constant 7 : index
    %c0_173 = arith.constant 0 : index
    %260 = vector.load %arg3[%c7_172, %c0_173] : memref<38x1xf32, #tpu.memory_space<vmem>>, vector<24x1xf32>
    %261 = vector.broadcast %260 : vector<24x1xf32> to vector<24x16xf32>
    %262 = arith.mulf %259, %261 : vector<24x16xf32>
    %c7_174 = arith.constant 7 : index
    %c0_175 = arith.constant 0 : index
    %263 = vector.load %arg22[%c7_174, %c0_175] : memref<38x16xf32, #tpu.memory_space<vmem>>, vector<24x16xf32>
    tpu.vector_store %arg22[%c7_174, %c0_175], %262 {strides = array<i32>} : memref<38x16xf32, #tpu.memory_space<vmem>>, vector<24x16xf32>,
    %c7_176 = arith.constant 7 : index
    %c0_177 = arith.constant 0 : index
    %264 = vector.load %arg22[%c7_176, %c0_177] : memref<38x16xf32, #tpu.memory_space<vmem>>, vector<24x16xf32>
    %265 = arith.truncf %264 : vector<24x16xf32> to vector<24x16xbf16>
    %c0_178 = arith.constant 0 : index
    %c0_179 = arith.constant 0 : index
    %c0_180 = arith.constant 0 : index
    %266 = vector.load %arg20[%c0_178, %c0_179, %c0_180] : memref<1x24x16xbf16, #tpu.memory_space<vmem>>, vector<1x24x16xbf16>
    %267 = vector.shape_cast %266 : vector<1x24x16xbf16> to vector<24x16xbf16>
    %268 = vector.shape_cast %265 : vector<24x16xbf16> to vector<1x24x16xbf16>
    tpu.vector_store %arg20[%c0_178, %c0_179, %c0_180], %268 {strides = array<i32>} : memref<1x24x16xbf16, #tpu.memory_space<vmem>>, vector<1x24x16xbf16>,
    return
  }
  func.func @transform_0(%arg0: i32) -> (i32, i32, i32) {
    %c0_i32 = arith.constant 0 : i32
    %c0_i32_0 = arith.constant 0 : i32
    %c0_i32_1 = arith.constant 0 : i32
    return %arg0, %c0_i32, %c0_i32_0 : i32, i32, i32
  }
  func.func @transform_1(%arg0: i32) -> (i32, i32) {
    %c0_i32 = arith.constant 0 : i32
    %c0_i32_0 = arith.constant 0 : i32
    %c0_i32_1 = arith.constant 0 : i32
    return %c0_i32, %c0_i32_0 : i32, i32
  }
  func.func @transform_2(%arg0: i32) -> (i32, i32) {
    %c0_i32 = arith.constant 0 : i32
    %c0_i32_0 = arith.constant 0 : i32
    %c0_i32_1 = arith.constant 0 : i32
    return %c0_i32, %c0_i32_0 : i32, i32
  }
  func.func @transform_3(%arg0: i32) -> (i32, i32, i32) {
    %c0_i32 = arith.constant 0 : i32
    %c0_i32_0 = arith.constant 0 : i32
    %c0_i32_1 = arith.constant 0 : i32
    %c0_i32_2 = arith.constant 0 : i32
    return %c0_i32, %c0_i32_0, %c0_i32_1 : i32, i32, i32
  }
  func.func @transform_4(%arg0: i32) -> (i32, i32) {
    %c0_i32 = arith.constant 0 : i32
    %c0_i32_0 = arith.constant 0 : i32
    %c0_i32_1 = arith.constant 0 : i32
    return %c0_i32, %c0_i32_0 : i32, i32
  }
  func.func @transform_5(%arg0: i32) -> (i32, i32) {
    %c0_i32 = arith.constant 0 : i32
    %c0_i32_0 = arith.constant 0 : i32
    %c0_i32_1 = arith.constant 0 : i32
    return %c0_i32, %c0_i32_0 : i32, i32
  }
  func.func @transform_6(%arg0: i32) -> (i32, i32) {
    %c0_i32 = arith.constant 0 : i32
    %c0_i32_0 = arith.constant 0 : i32
    %c0_i32_1 = arith.constant 0 : i32
    return %c0_i32, %c0_i32_0 : i32, i32
  }
  func.func @transform_7(%arg0: i32) -> (i32, i32, i32) {
    %c0_i32 = arith.constant 0 : i32
    %c0_i32_0 = arith.constant 0 : i32
    %c0_i32_1 = arith.constant 0 : i32
    %c0_i32_2 = arith.constant 0 : i32
    return %c0_i32, %c0_i32_0, %c0_i32_1 : i32, i32, i32
  }
  func.func @transform_8(%arg0: i32) -> (i32, i32) {
    %c0_i32 = arith.constant 0 : i32
    %c0_i32_0 = arith.constant 0 : i32
    %c0_i32_1 = arith.constant 0 : i32
    return %c0_i32, %c0_i32_0 : i32, i32
  }
  func.func @transform_9(%arg0: i32) -> (i32, i32) {
    %c0_i32 = arith.constant 0 : i32
    %c0_i32_0 = arith.constant 0 : i32
    %c0_i32_1 = arith.constant 0 : i32
    return %c0_i32, %c0_i32_0 : i32, i32
  }
  func.func @transform_10(%arg0: i32) -> (i32, i32) {
    %c0_i32 = arith.constant 0 : i32
    %c0_i32_0 = arith.constant 0 : i32
    %c0_i32_1 = arith.constant 0 : i32
    return %c0_i32, %c0_i32_0 : i32, i32
  }
  func.func @transform_11(%arg0: i32) -> (i32, i32) {
    %c0_i32 = arith.constant 0 : i32
    %c0_i32_0 = arith.constant 0 : i32
    %c0_i32_1 = arith.constant 0 : i32
    return %c0_i32, %c0_i32_0 : i32, i32
  }
  func.func @transform_12(%arg0: i32) -> (i32, i32) {
    %c0_i32 = arith.constant 0 : i32
    %c0_i32_0 = arith.constant 0 : i32
    %c0_i32_1 = arith.constant 0 : i32
    return %c0_i32, %c0_i32_0 : i32, i32
  }
  func.func @transform_13(%arg0: i32) -> (i32, i32, i32) {
    %c0_i32 = arith.constant 0 : i32
    %c0_i32_0 = arith.constant 0 : i32
    %c0_i32_1 = arith.constant 0 : i32
    %c0_i32_2 = arith.constant 0 : i32
    return %c0_i32, %c0_i32_0, %c0_i32_1 : i32, i32, i32
  }
  func.func @transform_14(%arg0: i32) -> (i32, i32, i32) {
    %c0_i32 = arith.constant 0 : i32
    %c0_i32_0 = arith.constant 0 : i32
    %c0_i32_1 = arith.constant 0 : i32
    %c0_i32_2 = arith.constant 0 : i32
    return %c0_i32, %c0_i32_0, %c0_i32_1 : i32, i32, i32
  }
  func.func @transform_15(%arg0: i32) -> (i32, i32, i32, i32) {
    %c0_i32 = arith.constant 0 : i32
    %c0_i32_0 = arith.constant 0 : i32
    %c0_i32_1 = arith.constant 0 : i32
    %c0_i32_2 = arith.constant 0 : i32
    %c0_i32_3 = arith.constant 0 : i32
    return %c0_i32, %c0_i32_0, %c0_i32_1, %c0_i32_2 : i32, i32, i32, i32
  }
  func.func @transform_16(%arg0: i32) -> (i32, i32, i32) {
    %c0_i32 = arith.constant 0 : i32
    %c0_i32_0 = arith.constant 0 : i32
    %c0_i32_1 = arith.constant 0 : i32
    %c0_i32_2 = arith.constant 0 : i32
    return %c0_i32, %c0_i32_0, %c0_i32_1 : i32, i32, i32
  }
  func.func @transform_17(%arg0: i32) -> (i32, i32, i32) {
    %c0_i32 = arith.constant 0 : i32
    %c0_i32_0 = arith.constant 0 : i32
    %c0_i32_1 = arith.constant 0 : i32
    %c0_i32_2 = arith.constant 0 : i32
    return %c0_i32, %c0_i32_0, %c0_i32_1 : i32, i32, i32
  }
  func.func @transform_18(%arg0: i32) -> (i32, i32, i32) {
    %c0_i32 = arith.constant 0 : i32
    %c0_i32_0 = arith.constant 0 : i32
    %c0_i32_1 = arith.constant 0 : i32
    %c0_i32_2 = arith.constant 0 : i32
    return %c0_i32, %c0_i32_0, %c0_i32_1 : i32, i32, i32
  }
  func.func @transform_19(%arg0: i32) -> (i32, i32, i32) {
    %c0_i32 = arith.constant 0 : i32
    %c0_i32_0 = arith.constant 0 : i32
    %c0_i32_1 = arith.constant 0 : i32
    return %arg0, %c0_i32, %c0_i32_0 : i32, i32, i32
  }
}

module attributes {stable_mosaic.version = 11 : i64} {
  func.func @stage_kernel(%arg0: i32, %arg1: memref<1x40x16xbf16, #tpu.memory_space<vmem>>, %arg2: memref<40x1xf32, #tpu.memory_space<vmem>>, %arg3: memref<18x1xf32, #tpu.memory_space<vmem>>, %arg4: memref<9x1x16xf32, #tpu.memory_space<vmem>>, %arg5: memref<1x16xf32, #tpu.memory_space<vmem>>, %arg6: memref<16x16xbf16, #tpu.memory_space<vmem>>, %arg7: memref<1x16xf32, #tpu.memory_space<vmem>>, %arg8: memref<9x1x16xf32, #tpu.memory_space<vmem>>, %arg9: memref<1x16xf32, #tpu.memory_space<vmem>>, %arg10: memref<16x32xbf16, #tpu.memory_space<vmem>>, %arg11: memref<16x32xbf16, #tpu.memory_space<vmem>>, %arg12: memref<1x32xf32, #tpu.memory_space<vmem>>, %arg13: memref<32x32xbf16, #tpu.memory_space<vmem>>, %arg14: memref<1x32x16xbf16, #tpu.memory_space<vmem>>, %arg15: memref<1x1x16xf32, #tpu.memory_space<vmem>>, %arg16: memref<1x9x1x16xf32, #tpu.memory_space<vmem>>, %arg17: memref<1x1x16xf32, #tpu.memory_space<vmem>>, %arg18: memref<1x16x32xbf16, #tpu.memory_space<vmem>>, %arg19: memref<1x1x32xf32, #tpu.memory_space<vmem>>, %arg20: memref<1x8x32xbf16, #tpu.memory_space<vmem>>, %arg21: memref<40x16xf32, #tpu.memory_space<vmem>>, %arg22: memref<18x32xf32, #tpu.memory_space<vmem>>, %arg23: memref<18x16xf32, #tpu.memory_space<vmem>>) attributes {dimension_semantics = [#tpu.dimension_semantics<parallel>], iteration_bounds = array<i64: 2>, scalar_prefetch = 0 : i64, scratch_operands = 3 : i64, tpu.core_type = #tpu.core_type<tc>, window_params = [{transform_indices = @transform_0, window_bounds = array<i64: 1, 40, 16>}, {pipeline_mode = #tpu.pipeline_mode<synchronous>, transform_indices = @transform_1, window_bounds = array<i64: 40, 1>}, {pipeline_mode = #tpu.pipeline_mode<synchronous>, transform_indices = @transform_2, window_bounds = array<i64: 18, 1>}, {pipeline_mode = #tpu.pipeline_mode<synchronous>, transform_indices = @transform_3, window_bounds = array<i64: 9, 1, 16>}, {pipeline_mode = #tpu.pipeline_mode<synchronous>, transform_indices = @transform_4, window_bounds = array<i64: 1, 16>}, {pipeline_mode = #tpu.pipeline_mode<synchronous>, transform_indices = @transform_5, window_bounds = array<i64: 16, 16>}, {pipeline_mode = #tpu.pipeline_mode<synchronous>, transform_indices = @transform_6, window_bounds = array<i64: 1, 16>}, {pipeline_mode = #tpu.pipeline_mode<synchronous>, transform_indices = @transform_7, window_bounds = array<i64: 9, 1, 16>}, {pipeline_mode = #tpu.pipeline_mode<synchronous>, transform_indices = @transform_8, window_bounds = array<i64: 1, 16>}, {pipeline_mode = #tpu.pipeline_mode<synchronous>, transform_indices = @transform_9, window_bounds = array<i64: 16, 32>}, {pipeline_mode = #tpu.pipeline_mode<synchronous>, transform_indices = @transform_10, window_bounds = array<i64: 16, 32>}, {pipeline_mode = #tpu.pipeline_mode<synchronous>, transform_indices = @transform_11, window_bounds = array<i64: 1, 32>}, {pipeline_mode = #tpu.pipeline_mode<synchronous>, transform_indices = @transform_12, window_bounds = array<i64: 32, 32>}, {pipeline_mode = #tpu.pipeline_mode<synchronous>, transform_indices = @transform_13, window_bounds = array<i64: 1, 32, 16>}, {pipeline_mode = #tpu.pipeline_mode<synchronous>, transform_indices = @transform_14, window_bounds = array<i64: 1, 1, 16>}, {pipeline_mode = #tpu.pipeline_mode<synchronous>, transform_indices = @transform_15, window_bounds = array<i64: 1, 9, 1, 16>}, {pipeline_mode = #tpu.pipeline_mode<synchronous>, transform_indices = @transform_16, window_bounds = array<i64: 1, 1, 16>}, {pipeline_mode = #tpu.pipeline_mode<synchronous>, transform_indices = @transform_17, window_bounds = array<i64: 1, 16, 32>}, {pipeline_mode = #tpu.pipeline_mode<synchronous>, transform_indices = @transform_18, window_bounds = array<i64: 1, 1, 32>}, {transform_indices = @transform_19, window_bounds = array<i64: 1, 8, 32>}]} {
    %c0 = arith.constant 0 : index
    %c0_0 = arith.constant 0 : index
    %c0_1 = arith.constant 0 : index
    %0 = vector.load %arg1[%c0, %c0_0, %c0_1] : memref<1x40x16xbf16, #tpu.memory_space<vmem>>, vector<1x40x16xbf16>
    %1 = vector.shape_cast %0 : vector<1x40x16xbf16> to vector<40x16xbf16>
    %c0_2 = arith.constant 0 : index
    %c0_3 = arith.constant 0 : index
    %2 = vector.load %arg6[%c0_2, %c0_3] : memref<16x16xbf16, #tpu.memory_space<vmem>>, vector<16x16xbf16>
    %cst = arith.constant dense<0.000000e+00> : vector<40x16xf32>
    %3 = tpu.matmul %1, %2, %cst {dimension_numbers = #tpu.dot_dimension_numbers<[1], [0], [0], [1], [0, 0, 1, 1], [], []>} : vector<40x16xbf16>, vector<16x16xbf16>, vector<40x16xf32> -> vector<40x16xf32>
    %c0_4 = arith.constant 0 : index
    %c0_5 = arith.constant 0 : index
    %4 = vector.load %arg7[%c0_4, %c0_5] : memref<1x16xf32, #tpu.memory_space<vmem>>, vector<1x16xf32>
    %5 = vector.broadcast %4 : vector<1x16xf32> to vector<40x16xf32>
    %6 = arith.addf %3, %5 : vector<40x16xf32>
    %cst_6 = arith.constant 0.000000e+00 : f32
    %7 = vector.broadcast %cst_6 : f32 to vector<40x16xf32>
    %8 = arith.maximumf %6, %7 : vector<40x16xf32>
    %c0_7 = arith.constant 0 : index
    %c0_8 = arith.constant 0 : index
    %9 = vector.load %arg2[%c0_7, %c0_8] : memref<40x1xf32, #tpu.memory_space<vmem>>, vector<40x1xf32>
    %10 = vector.broadcast %9 : vector<40x1xf32> to vector<40x16xf32>
    %11 = arith.mulf %8, %10 : vector<40x16xf32>
    %c0_9 = arith.constant 0 : index
    %c0_10 = arith.constant 0 : index
    %12 = vector.load %arg21[%c0_9, %c0_10] : memref<40x16xf32, #tpu.memory_space<vmem>>, vector<40x16xf32>
    tpu.vector_store %arg21[%c0_9, %c0_10], %11 {strides = array<i32>} : memref<40x16xf32, #tpu.memory_space<vmem>>, vector<40x16xf32>,
    %cst_11 = arith.constant 0.000000e+00 : f32
    %13 = vector.broadcast %cst_11 : f32 to vector<6x16xf32>
    %cst_12 = arith.constant 0.000000e+00 : f32
    %14 = vector.broadcast %cst_12 : f32 to vector<6x16xf32>
    %c0_13 = arith.constant 0 : index
    %c0_14 = arith.constant 0 : index
    %c0_15 = arith.constant 0 : index
    %15 = vector.load %arg1[%c0_13, %c0_14, %c0_15] : memref<1x40x16xbf16, #tpu.memory_space<vmem>>, vector<1x6x16xbf16>
    %16 = vector.shape_cast %15 : vector<1x6x16xbf16> to vector<6x16xbf16>
    %17 = arith.extf %16 : vector<6x16xbf16> to vector<6x16xf32>
    %c0_16 = arith.constant 0 : index
    %c0_17 = arith.constant 0 : index
    %c0_18 = arith.constant 0 : index
    %18 = vector.load %arg4[%c0_16, %c0_17, %c0_18] : memref<9x1x16xf32, #tpu.memory_space<vmem>>, vector<1x1x16xf32>
    %19 = vector.shape_cast %18 : vector<1x1x16xf32> to vector<1x16xf32>
    %20 = vector.broadcast %19 : vector<1x16xf32> to vector<6x16xf32>
    %21 = arith.mulf %17, %20 : vector<6x16xf32>
    %22 = arith.addf %13, %21 : vector<6x16xf32>
    %c0_19 = arith.constant 0 : index
    %c0_20 = arith.constant 0 : index
    %23 = vector.load %arg21[%c0_19, %c0_20] : memref<40x16xf32, #tpu.memory_space<vmem>>, vector<6x16xf32>
    %c0_21 = arith.constant 0 : index
    %c0_22 = arith.constant 0 : index
    %c0_23 = arith.constant 0 : index
    %24 = vector.load %arg8[%c0_21, %c0_22, %c0_23] : memref<9x1x16xf32, #tpu.memory_space<vmem>>, vector<1x1x16xf32>
    %25 = vector.shape_cast %24 : vector<1x1x16xf32> to vector<1x16xf32>
    %26 = vector.broadcast %25 : vector<1x16xf32> to vector<6x16xf32>
    %27 = arith.mulf %23, %26 : vector<6x16xf32>
    %28 = arith.addf %14, %27 : vector<6x16xf32>
    %c0_24 = arith.constant 0 : index
    %c10 = arith.constant 10 : index
    %c0_25 = arith.constant 0 : index
    %29 = vector.load %arg1[%c0_24, %c10, %c0_25] : memref<1x40x16xbf16, #tpu.memory_space<vmem>>, vector<1x6x16xbf16>
    %30 = vector.shape_cast %29 : vector<1x6x16xbf16> to vector<6x16xbf16>
    %31 = arith.extf %30 : vector<6x16xbf16> to vector<6x16xf32>
    %c1 = arith.constant 1 : index
    %c0_26 = arith.constant 0 : index
    %c0_27 = arith.constant 0 : index
    %32 = vector.load %arg4[%c1, %c0_26, %c0_27] : memref<9x1x16xf32, #tpu.memory_space<vmem>>, vector<1x1x16xf32>
    %33 = vector.shape_cast %32 : vector<1x1x16xf32> to vector<1x16xf32>
    %34 = vector.broadcast %33 : vector<1x16xf32> to vector<6x16xf32>
    %35 = arith.mulf %31, %34 : vector<6x16xf32>
    %36 = arith.addf %22, %35 : vector<6x16xf32>
    %c10_28 = arith.constant 10 : index
    %c0_29 = arith.constant 0 : index
    %37 = vector.load %arg21[%c10_28, %c0_29] : memref<40x16xf32, #tpu.memory_space<vmem>>, vector<6x16xf32>
    %c1_30 = arith.constant 1 : index
    %c0_31 = arith.constant 0 : index
    %c0_32 = arith.constant 0 : index
    %38 = vector.load %arg8[%c1_30, %c0_31, %c0_32] : memref<9x1x16xf32, #tpu.memory_space<vmem>>, vector<1x1x16xf32>
    %39 = vector.shape_cast %38 : vector<1x1x16xf32> to vector<1x16xf32>
    %40 = vector.broadcast %39 : vector<1x16xf32> to vector<6x16xf32>
    %41 = arith.mulf %37, %40 : vector<6x16xf32>
    %42 = arith.addf %28, %41 : vector<6x16xf32>
    %c0_33 = arith.constant 0 : index
    %c1_34 = arith.constant 1 : index
    %c0_35 = arith.constant 0 : index
    %43 = vector.load %arg1[%c0_33, %c1_34, %c0_35] : memref<1x40x16xbf16, #tpu.memory_space<vmem>>, vector<1x6x16xbf16>
    %44 = vector.shape_cast %43 : vector<1x6x16xbf16> to vector<6x16xbf16>
    %45 = arith.extf %44 : vector<6x16xbf16> to vector<6x16xf32>
    %c2 = arith.constant 2 : index
    %c0_36 = arith.constant 0 : index
    %c0_37 = arith.constant 0 : index
    %46 = vector.load %arg4[%c2, %c0_36, %c0_37] : memref<9x1x16xf32, #tpu.memory_space<vmem>>, vector<1x1x16xf32>
    %47 = vector.shape_cast %46 : vector<1x1x16xf32> to vector<1x16xf32>
    %48 = vector.broadcast %47 : vector<1x16xf32> to vector<6x16xf32>
    %49 = arith.mulf %45, %48 : vector<6x16xf32>
    %50 = arith.addf %36, %49 : vector<6x16xf32>
    %c1_38 = arith.constant 1 : index
    %c0_39 = arith.constant 0 : index
    %51 = vector.load %arg21[%c1_38, %c0_39] : memref<40x16xf32, #tpu.memory_space<vmem>>, vector<6x16xf32>
    %c2_40 = arith.constant 2 : index
    %c0_41 = arith.constant 0 : index
    %c0_42 = arith.constant 0 : index
    %52 = vector.load %arg8[%c2_40, %c0_41, %c0_42] : memref<9x1x16xf32, #tpu.memory_space<vmem>>, vector<1x1x16xf32>
    %53 = vector.shape_cast %52 : vector<1x1x16xf32> to vector<1x16xf32>
    %54 = vector.broadcast %53 : vector<1x16xf32> to vector<6x16xf32>
    %55 = arith.mulf %51, %54 : vector<6x16xf32>
    %56 = arith.addf %42, %55 : vector<6x16xf32>
    %c0_43 = arith.constant 0 : index
    %c20 = arith.constant 20 : index
    %c0_44 = arith.constant 0 : index
    %57 = vector.load %arg1[%c0_43, %c20, %c0_44] : memref<1x40x16xbf16, #tpu.memory_space<vmem>>, vector<1x6x16xbf16>
    %58 = vector.shape_cast %57 : vector<1x6x16xbf16> to vector<6x16xbf16>
    %59 = arith.extf %58 : vector<6x16xbf16> to vector<6x16xf32>
    %c3 = arith.constant 3 : index
    %c0_45 = arith.constant 0 : index
    %c0_46 = arith.constant 0 : index
    %60 = vector.load %arg4[%c3, %c0_45, %c0_46] : memref<9x1x16xf32, #tpu.memory_space<vmem>>, vector<1x1x16xf32>
    %61 = vector.shape_cast %60 : vector<1x1x16xf32> to vector<1x16xf32>
    %62 = vector.broadcast %61 : vector<1x16xf32> to vector<6x16xf32>
    %63 = arith.mulf %59, %62 : vector<6x16xf32>
    %64 = arith.addf %50, %63 : vector<6x16xf32>
    %c20_47 = arith.constant 20 : index
    %c0_48 = arith.constant 0 : index
    %65 = vector.load %arg21[%c20_47, %c0_48] : memref<40x16xf32, #tpu.memory_space<vmem>>, vector<6x16xf32>
    %c3_49 = arith.constant 3 : index
    %c0_50 = arith.constant 0 : index
    %c0_51 = arith.constant 0 : index
    %66 = vector.load %arg8[%c3_49, %c0_50, %c0_51] : memref<9x1x16xf32, #tpu.memory_space<vmem>>, vector<1x1x16xf32>
    %67 = vector.shape_cast %66 : vector<1x1x16xf32> to vector<1x16xf32>
    %68 = vector.broadcast %67 : vector<1x16xf32> to vector<6x16xf32>
    %69 = arith.mulf %65, %68 : vector<6x16xf32>
    %70 = arith.addf %56, %69 : vector<6x16xf32>
    %c0_52 = arith.constant 0 : index
    %c30 = arith.constant 30 : index
    %c0_53 = arith.constant 0 : index
    %71 = vector.load %arg1[%c0_52, %c30, %c0_53] : memref<1x40x16xbf16, #tpu.memory_space<vmem>>, vector<1x6x16xbf16>
    %72 = vector.shape_cast %71 : vector<1x6x16xbf16> to vector<6x16xbf16>
    %73 = arith.extf %72 : vector<6x16xbf16> to vector<6x16xf32>
    %c4 = arith.constant 4 : index
    %c0_54 = arith.constant 0 : index
    %c0_55 = arith.constant 0 : index
    %74 = vector.load %arg4[%c4, %c0_54, %c0_55] : memref<9x1x16xf32, #tpu.memory_space<vmem>>, vector<1x1x16xf32>
    %75 = vector.shape_cast %74 : vector<1x1x16xf32> to vector<1x16xf32>
    %76 = vector.broadcast %75 : vector<1x16xf32> to vector<6x16xf32>
    %77 = arith.mulf %73, %76 : vector<6x16xf32>
    %78 = arith.addf %64, %77 : vector<6x16xf32>
    %c30_56 = arith.constant 30 : index
    %c0_57 = arith.constant 0 : index
    %79 = vector.load %arg21[%c30_56, %c0_57] : memref<40x16xf32, #tpu.memory_space<vmem>>, vector<6x16xf32>
    %c4_58 = arith.constant 4 : index
    %c0_59 = arith.constant 0 : index
    %c0_60 = arith.constant 0 : index
    %80 = vector.load %arg8[%c4_58, %c0_59, %c0_60] : memref<9x1x16xf32, #tpu.memory_space<vmem>>, vector<1x1x16xf32>
    %81 = vector.shape_cast %80 : vector<1x1x16xf32> to vector<1x16xf32>
    %82 = vector.broadcast %81 : vector<1x16xf32> to vector<6x16xf32>
    %83 = arith.mulf %79, %82 : vector<6x16xf32>
    %84 = arith.addf %70, %83 : vector<6x16xf32>
    %c0_61 = arith.constant 0 : index
    %c21 = arith.constant 21 : index
    %c0_62 = arith.constant 0 : index
    %85 = vector.load %arg1[%c0_61, %c21, %c0_62] : memref<1x40x16xbf16, #tpu.memory_space<vmem>>, vector<1x6x16xbf16>
    %86 = vector.shape_cast %85 : vector<1x6x16xbf16> to vector<6x16xbf16>
    %87 = arith.extf %86 : vector<6x16xbf16> to vector<6x16xf32>
    %c5 = arith.constant 5 : index
    %c0_63 = arith.constant 0 : index
    %c0_64 = arith.constant 0 : index
    %88 = vector.load %arg4[%c5, %c0_63, %c0_64] : memref<9x1x16xf32, #tpu.memory_space<vmem>>, vector<1x1x16xf32>
    %89 = vector.shape_cast %88 : vector<1x1x16xf32> to vector<1x16xf32>
    %90 = vector.broadcast %89 : vector<1x16xf32> to vector<6x16xf32>
    %91 = arith.mulf %87, %90 : vector<6x16xf32>
    %92 = arith.addf %78, %91 : vector<6x16xf32>
    %c21_65 = arith.constant 21 : index
    %c0_66 = arith.constant 0 : index
    %93 = vector.load %arg21[%c21_65, %c0_66] : memref<40x16xf32, #tpu.memory_space<vmem>>, vector<6x16xf32>
    %c5_67 = arith.constant 5 : index
    %c0_68 = arith.constant 0 : index
    %c0_69 = arith.constant 0 : index
    %94 = vector.load %arg8[%c5_67, %c0_68, %c0_69] : memref<9x1x16xf32, #tpu.memory_space<vmem>>, vector<1x1x16xf32>
    %95 = vector.shape_cast %94 : vector<1x1x16xf32> to vector<1x16xf32>
    %96 = vector.broadcast %95 : vector<1x16xf32> to vector<6x16xf32>
    %97 = arith.mulf %93, %96 : vector<6x16xf32>
    %98 = arith.addf %84, %97 : vector<6x16xf32>
    %c0_70 = arith.constant 0 : index
    %c3_71 = arith.constant 3 : index
    %c0_72 = arith.constant 0 : index
    %99 = vector.load %arg1[%c0_70, %c3_71, %c0_72] : memref<1x40x16xbf16, #tpu.memory_space<vmem>>, vector<1x6x16xbf16>
    %100 = vector.shape_cast %99 : vector<1x6x16xbf16> to vector<6x16xbf16>
    %101 = arith.extf %100 : vector<6x16xbf16> to vector<6x16xf32>
    %c6 = arith.constant 6 : index
    %c0_73 = arith.constant 0 : index
    %c0_74 = arith.constant 0 : index
    %102 = vector.load %arg4[%c6, %c0_73, %c0_74] : memref<9x1x16xf32, #tpu.memory_space<vmem>>, vector<1x1x16xf32>
    %103 = vector.shape_cast %102 : vector<1x1x16xf32> to vector<1x16xf32>
    %104 = vector.broadcast %103 : vector<1x16xf32> to vector<6x16xf32>
    %105 = arith.mulf %101, %104 : vector<6x16xf32>
    %106 = arith.addf %92, %105 : vector<6x16xf32>
    %c3_75 = arith.constant 3 : index
    %c0_76 = arith.constant 0 : index
    %107 = vector.load %arg21[%c3_75, %c0_76] : memref<40x16xf32, #tpu.memory_space<vmem>>, vector<6x16xf32>
    %c6_77 = arith.constant 6 : index
    %c0_78 = arith.constant 0 : index
    %c0_79 = arith.constant 0 : index
    %108 = vector.load %arg8[%c6_77, %c0_78, %c0_79] : memref<9x1x16xf32, #tpu.memory_space<vmem>>, vector<1x1x16xf32>
    %109 = vector.shape_cast %108 : vector<1x1x16xf32> to vector<1x16xf32>
    %110 = vector.broadcast %109 : vector<1x16xf32> to vector<6x16xf32>
    %111 = arith.mulf %107, %110 : vector<6x16xf32>
    %112 = arith.addf %98, %111 : vector<6x16xf32>
    %c0_80 = arith.constant 0 : index
    %c13 = arith.constant 13 : index
    %c0_81 = arith.constant 0 : index
    %113 = vector.load %arg1[%c0_80, %c13, %c0_81] : memref<1x40x16xbf16, #tpu.memory_space<vmem>>, vector<1x6x16xbf16>
    %114 = vector.shape_cast %113 : vector<1x6x16xbf16> to vector<6x16xbf16>
    %115 = arith.extf %114 : vector<6x16xbf16> to vector<6x16xf32>
    %c7 = arith.constant 7 : index
    %c0_82 = arith.constant 0 : index
    %c0_83 = arith.constant 0 : index
    %116 = vector.load %arg4[%c7, %c0_82, %c0_83] : memref<9x1x16xf32, #tpu.memory_space<vmem>>, vector<1x1x16xf32>
    %117 = vector.shape_cast %116 : vector<1x1x16xf32> to vector<1x16xf32>
    %118 = vector.broadcast %117 : vector<1x16xf32> to vector<6x16xf32>
    %119 = arith.mulf %115, %118 : vector<6x16xf32>
    %120 = arith.addf %106, %119 : vector<6x16xf32>
    %c13_84 = arith.constant 13 : index
    %c0_85 = arith.constant 0 : index
    %121 = vector.load %arg21[%c13_84, %c0_85] : memref<40x16xf32, #tpu.memory_space<vmem>>, vector<6x16xf32>
    %c7_86 = arith.constant 7 : index
    %c0_87 = arith.constant 0 : index
    %c0_88 = arith.constant 0 : index
    %122 = vector.load %arg8[%c7_86, %c0_87, %c0_88] : memref<9x1x16xf32, #tpu.memory_space<vmem>>, vector<1x1x16xf32>
    %123 = vector.shape_cast %122 : vector<1x1x16xf32> to vector<1x16xf32>
    %124 = vector.broadcast %123 : vector<1x16xf32> to vector<6x16xf32>
    %125 = arith.mulf %121, %124 : vector<6x16xf32>
    %126 = arith.addf %112, %125 : vector<6x16xf32>
    %c0_89 = arith.constant 0 : index
    %c4_90 = arith.constant 4 : index
    %c0_91 = arith.constant 0 : index
    %127 = vector.load %arg1[%c0_89, %c4_90, %c0_91] : memref<1x40x16xbf16, #tpu.memory_space<vmem>>, vector<1x6x16xbf16>
    %128 = vector.shape_cast %127 : vector<1x6x16xbf16> to vector<6x16xbf16>
    %129 = arith.extf %128 : vector<6x16xbf16> to vector<6x16xf32>
    %c8 = arith.constant 8 : index
    %c0_92 = arith.constant 0 : index
    %c0_93 = arith.constant 0 : index
    %130 = vector.load %arg4[%c8, %c0_92, %c0_93] : memref<9x1x16xf32, #tpu.memory_space<vmem>>, vector<1x1x16xf32>
    %131 = vector.shape_cast %130 : vector<1x1x16xf32> to vector<1x16xf32>
    %132 = vector.broadcast %131 : vector<1x16xf32> to vector<6x16xf32>
    %133 = arith.mulf %129, %132 : vector<6x16xf32>
    %134 = arith.addf %120, %133 : vector<6x16xf32>
    %c4_94 = arith.constant 4 : index
    %c0_95 = arith.constant 0 : index
    %135 = vector.load %arg21[%c4_94, %c0_95] : memref<40x16xf32, #tpu.memory_space<vmem>>, vector<6x16xf32>
    %c8_96 = arith.constant 8 : index
    %c0_97 = arith.constant 0 : index
    %c0_98 = arith.constant 0 : index
    %136 = vector.load %arg8[%c8_96, %c0_97, %c0_98] : memref<9x1x16xf32, #tpu.memory_space<vmem>>, vector<1x1x16xf32>
    %137 = vector.shape_cast %136 : vector<1x1x16xf32> to vector<1x16xf32>
    %138 = vector.broadcast %137 : vector<1x16xf32> to vector<6x16xf32>
    %139 = arith.mulf %135, %138 : vector<6x16xf32>
    %140 = arith.addf %126, %139 : vector<6x16xf32>
    %c0_99 = arith.constant 0 : index
    %c0_100 = arith.constant 0 : index
    %141 = vector.load %arg5[%c0_99, %c0_100] : memref<1x16xf32, #tpu.memory_space<vmem>>, vector<1x16xf32>
    %142 = vector.broadcast %141 : vector<1x16xf32> to vector<6x16xf32>
    %143 = arith.addf %134, %142 : vector<6x16xf32>
    %c0_101 = arith.constant 0 : index
    %c0_102 = arith.constant 0 : index
    %144 = vector.load %arg9[%c0_101, %c0_102] : memref<1x16xf32, #tpu.memory_space<vmem>>, vector<1x16xf32>
    %145 = vector.broadcast %144 : vector<1x16xf32> to vector<6x16xf32>
    %146 = arith.addf %140, %145 : vector<6x16xf32>
    %147 = arith.truncf %143 : vector<6x16xf32> to vector<6x16xbf16>
    %c0_103 = arith.constant 0 : index
    %c0_104 = arith.constant 0 : index
    %148 = vector.load %arg10[%c0_103, %c0_104] : memref<16x32xbf16, #tpu.memory_space<vmem>>, vector<16x32xbf16>
    %cst_105 = arith.constant dense<0.000000e+00> : vector<6x32xf32>
    %149 = tpu.matmul %147, %148, %cst_105 {dimension_numbers = #tpu.dot_dimension_numbers<[1], [0], [0], [1], [0, 0, 1, 1], [], []>} : vector<6x16xbf16>, vector<16x32xbf16>, vector<6x32xf32> -> vector<6x32xf32>
    %150 = arith.truncf %146 : vector<6x16xf32> to vector<6x16xbf16>
    %c0_106 = arith.constant 0 : index
    %c0_107 = arith.constant 0 : index
    %151 = vector.load %arg11[%c0_106, %c0_107] : memref<16x32xbf16, #tpu.memory_space<vmem>>, vector<16x32xbf16>
    %cst_108 = arith.constant dense<0.000000e+00> : vector<6x32xf32>
    %152 = tpu.matmul %150, %151, %cst_108 {dimension_numbers = #tpu.dot_dimension_numbers<[1], [0], [0], [1], [0, 0, 1, 1], [], []>} : vector<6x16xbf16>, vector<16x32xbf16>, vector<6x32xf32> -> vector<6x32xf32>
    %153 = arith.addf %149, %152 : vector<6x32xf32>
    %c0_109 = arith.constant 0 : index
    %c0_110 = arith.constant 0 : index
    %154 = vector.load %arg12[%c0_109, %c0_110] : memref<1x32xf32, #tpu.memory_space<vmem>>, vector<1x32xf32>
    %155 = vector.broadcast %154 : vector<1x32xf32> to vector<6x32xf32>
    %156 = arith.addf %153, %155 : vector<6x32xf32>
    %cst_111 = arith.constant 0.000000e+00 : f32
    %157 = vector.broadcast %cst_111 : f32 to vector<6x32xf32>
    %158 = arith.maximumf %156, %157 : vector<6x32xf32>
    %cst_112 = arith.constant 0.000000e+00 : f32
    %159 = vector.broadcast %cst_112 : f32 to vector<18x32xf32>
    %c0_113 = arith.constant 0 : index
    %c0_114 = arith.constant 0 : index
    %160 = vector.load %arg22[%c0_113, %c0_114] : memref<18x32xf32, #tpu.memory_space<vmem>>, vector<18x32xf32>
    tpu.vector_store %arg22[%c0_113, %c0_114], %159 {strides = array<i32>} : memref<18x32xf32, #tpu.memory_space<vmem>>, vector<18x32xf32>,
    %161 = vector.extract_strided_slice %158 {offsets = [0, 0], sizes = [2, 32], strides = [1, 1]} : vector<6x32xf32> to vector<2x32xf32>
    %c6_115 = arith.constant 6 : index
    %c0_116 = arith.constant 0 : index
    %162 = vector.load %arg22[%c6_115, %c0_116] : memref<18x32xf32, #tpu.memory_space<vmem>>, vector<2x32xf32>
    tpu.vector_store %arg22[%c6_115, %c0_116], %161 {strides = array<i32>} : memref<18x32xf32, #tpu.memory_space<vmem>>, vector<2x32xf32>,
    %163 = vector.extract_strided_slice %158 {offsets = [3, 0], sizes = [2, 32], strides = [1, 1]} : vector<6x32xf32> to vector<2x32xf32>
    %c10_117 = arith.constant 10 : index
    %c0_118 = arith.constant 0 : index
    %164 = vector.load %arg22[%c10_117, %c0_118] : memref<18x32xf32, #tpu.memory_space<vmem>>, vector<2x32xf32>
    tpu.vector_store %arg22[%c10_117, %c0_118], %163 {strides = array<i32>} : memref<18x32xf32, #tpu.memory_space<vmem>>, vector<2x32xf32>,
    %c0_119 = arith.constant 0 : index
    %c0_120 = arith.constant 0 : index
    %c0_121 = arith.constant 0 : index
    %165 = vector.load %arg14[%c0_119, %c0_120, %c0_121] : memref<1x32x16xbf16, #tpu.memory_space<vmem>>, vector<1x32x16xbf16>
    %166 = vector.shape_cast %165 : vector<1x32x16xbf16> to vector<32x16xbf16>
    %c0_122 = arith.constant 0 : index
    %c0_123 = arith.constant 0 : index
    %c0_124 = arith.constant 0 : index
    %167 = vector.load %arg15[%c0_122, %c0_123, %c0_124] : memref<1x1x16xf32, #tpu.memory_space<vmem>>, vector<1x1x16xf32>
    %168 = vector.shape_cast %167 : vector<1x1x16xf32> to vector<1x16xf32>
    %c0_125 = arith.constant 0 : index
    %c0_126 = arith.constant 0 : index
    %c0_127 = arith.constant 0 : index
    %c0_128 = arith.constant 0 : index
    %169 = vector.load %arg16[%c0_125, %c0_126, %c0_127, %c0_128] : memref<1x9x1x16xf32, #tpu.memory_space<vmem>>, vector<1x9x1x16xf32>
    %170 = vector.shape_cast %169 : vector<1x9x1x16xf32> to vector<9x1x16xf32>
    %c0_129 = arith.constant 0 : index
    %c0_130 = arith.constant 0 : index
    %c0_131 = arith.constant 0 : index
    %171 = vector.load %arg17[%c0_129, %c0_130, %c0_131] : memref<1x1x16xf32, #tpu.memory_space<vmem>>, vector<1x1x16xf32>
    %172 = vector.shape_cast %171 : vector<1x1x16xf32> to vector<1x16xf32>
    %c0_132 = arith.constant 0 : index
    %c0_133 = arith.constant 0 : index
    %c0_134 = arith.constant 0 : index
    %173 = vector.load %arg18[%c0_132, %c0_133, %c0_134] : memref<1x16x32xbf16, #tpu.memory_space<vmem>>, vector<1x16x32xbf16>
    %174 = vector.shape_cast %173 : vector<1x16x32xbf16> to vector<16x32xbf16>
    %c0_135 = arith.constant 0 : index
    %c0_136 = arith.constant 0 : index
    %c0_137 = arith.constant 0 : index
    %175 = vector.load %arg19[%c0_135, %c0_136, %c0_137] : memref<1x1x32xf32, #tpu.memory_space<vmem>>, vector<1x1x32xf32>
    %176 = vector.shape_cast %175 : vector<1x1x32xf32> to vector<1x32xf32>
    %c0_138 = arith.constant 0 : index
    %c0_139 = arith.constant 0 : index
    %177 = vector.load %arg22[%c0_138, %c0_139] : memref<18x32xf32, #tpu.memory_space<vmem>>, vector<18x32xf32>
    %178 = arith.truncf %177 : vector<18x32xf32> to vector<18x32xbf16>
    %cst_140 = arith.constant dense<0.000000e+00> : vector<18x16xf32>
    %179 = tpu.matmul %178, %166, %cst_140 {dimension_numbers = #tpu.dot_dimension_numbers<[1], [0], [0], [1], [0, 0, 1, 1], [], []>} : vector<18x32xbf16>, vector<32x16xbf16>, vector<18x16xf32> -> vector<18x16xf32>
    %180 = vector.broadcast %168 : vector<1x16xf32> to vector<18x16xf32>
    %181 = arith.addf %179, %180 : vector<18x16xf32>
    %cst_141 = arith.constant 0.000000e+00 : f32
    %182 = vector.broadcast %cst_141 : f32 to vector<18x16xf32>
    %183 = arith.maximumf %181, %182 : vector<18x16xf32>
    %c0_142 = arith.constant 0 : index
    %c0_143 = arith.constant 0 : index
    %184 = vector.load %arg3[%c0_142, %c0_143] : memref<18x1xf32, #tpu.memory_space<vmem>>, vector<18x1xf32>
    %185 = vector.broadcast %184 : vector<18x1xf32> to vector<18x16xf32>
    %186 = arith.mulf %183, %185 : vector<18x16xf32>
    %c0_144 = arith.constant 0 : index
    %c0_145 = arith.constant 0 : index
    %187 = vector.load %arg23[%c0_144, %c0_145] : memref<18x16xf32, #tpu.memory_space<vmem>>, vector<18x16xf32>
    tpu.vector_store %arg23[%c0_144, %c0_145], %186 {strides = array<i32>} : memref<18x16xf32, #tpu.memory_space<vmem>>, vector<18x16xf32>,
    %cst_146 = arith.constant 0.000000e+00 : f32
    %188 = vector.broadcast %cst_146 : f32 to vector<8x16xf32>
    %c0_147 = arith.constant 0 : index
    %c0_148 = arith.constant 0 : index
    %189 = vector.load %arg23[%c0_147, %c0_148] : memref<18x16xf32, #tpu.memory_space<vmem>>, vector<8x16xf32>
    %190 = vector.extract_strided_slice %170 {offsets = [0, 0, 0], sizes = [1, 1, 16], strides = [1, 1, 1]} : vector<9x1x16xf32> to vector<1x1x16xf32>
    %191 = vector.shape_cast %190 : vector<1x1x16xf32> to vector<1x16xf32>
    %192 = vector.broadcast %191 : vector<1x16xf32> to vector<8x16xf32>
    %193 = arith.mulf %189, %192 : vector<8x16xf32>
    %194 = arith.addf %188, %193 : vector<8x16xf32>
    %c1_149 = arith.constant 1 : index
    %c0_150 = arith.constant 0 : index
    %195 = vector.load %arg23[%c1_149, %c0_150] : memref<18x16xf32, #tpu.memory_space<vmem>>, vector<8x16xf32>
    %196 = vector.extract_strided_slice %170 {offsets = [1, 0, 0], sizes = [1, 1, 16], strides = [1, 1, 1]} : vector<9x1x16xf32> to vector<1x1x16xf32>
    %197 = vector.shape_cast %196 : vector<1x1x16xf32> to vector<1x16xf32>
    %198 = vector.broadcast %197 : vector<1x16xf32> to vector<8x16xf32>
    %199 = arith.mulf %195, %198 : vector<8x16xf32>
    %200 = arith.addf %194, %199 : vector<8x16xf32>
    %c2_151 = arith.constant 2 : index
    %c0_152 = arith.constant 0 : index
    %201 = vector.load %arg23[%c2_151, %c0_152] : memref<18x16xf32, #tpu.memory_space<vmem>>, vector<8x16xf32>
    %202 = vector.extract_strided_slice %170 {offsets = [2, 0, 0], sizes = [1, 1, 16], strides = [1, 1, 1]} : vector<9x1x16xf32> to vector<1x1x16xf32>
    %203 = vector.shape_cast %202 : vector<1x1x16xf32> to vector<1x16xf32>
    %204 = vector.broadcast %203 : vector<1x16xf32> to vector<8x16xf32>
    %205 = arith.mulf %201, %204 : vector<8x16xf32>
    %206 = arith.addf %200, %205 : vector<8x16xf32>
    %c4_153 = arith.constant 4 : index
    %c0_154 = arith.constant 0 : index
    %207 = vector.load %arg23[%c4_153, %c0_154] : memref<18x16xf32, #tpu.memory_space<vmem>>, vector<8x16xf32>
    %208 = vector.extract_strided_slice %170 {offsets = [3, 0, 0], sizes = [1, 1, 16], strides = [1, 1, 1]} : vector<9x1x16xf32> to vector<1x1x16xf32>
    %209 = vector.shape_cast %208 : vector<1x1x16xf32> to vector<1x16xf32>
    %210 = vector.broadcast %209 : vector<1x16xf32> to vector<8x16xf32>
    %211 = arith.mulf %207, %210 : vector<8x16xf32>
    %212 = arith.addf %206, %211 : vector<8x16xf32>
    %c5_155 = arith.constant 5 : index
    %c0_156 = arith.constant 0 : index
    %213 = vector.load %arg23[%c5_155, %c0_156] : memref<18x16xf32, #tpu.memory_space<vmem>>, vector<8x16xf32>
    %214 = vector.extract_strided_slice %170 {offsets = [4, 0, 0], sizes = [1, 1, 16], strides = [1, 1, 1]} : vector<9x1x16xf32> to vector<1x1x16xf32>
    %215 = vector.shape_cast %214 : vector<1x1x16xf32> to vector<1x16xf32>
    %216 = vector.broadcast %215 : vector<1x16xf32> to vector<8x16xf32>
    %217 = arith.mulf %213, %216 : vector<8x16xf32>
    %218 = arith.addf %212, %217 : vector<8x16xf32>
    %c6_157 = arith.constant 6 : index
    %c0_158 = arith.constant 0 : index
    %219 = vector.load %arg23[%c6_157, %c0_158] : memref<18x16xf32, #tpu.memory_space<vmem>>, vector<8x16xf32>
    %220 = vector.extract_strided_slice %170 {offsets = [5, 0, 0], sizes = [1, 1, 16], strides = [1, 1, 1]} : vector<9x1x16xf32> to vector<1x1x16xf32>
    %221 = vector.shape_cast %220 : vector<1x1x16xf32> to vector<1x16xf32>
    %222 = vector.broadcast %221 : vector<1x16xf32> to vector<8x16xf32>
    %223 = arith.mulf %219, %222 : vector<8x16xf32>
    %224 = arith.addf %218, %223 : vector<8x16xf32>
    %c8_159 = arith.constant 8 : index
    %c0_160 = arith.constant 0 : index
    %225 = vector.load %arg23[%c8_159, %c0_160] : memref<18x16xf32, #tpu.memory_space<vmem>>, vector<8x16xf32>
    %226 = vector.extract_strided_slice %170 {offsets = [6, 0, 0], sizes = [1, 1, 16], strides = [1, 1, 1]} : vector<9x1x16xf32> to vector<1x1x16xf32>
    %227 = vector.shape_cast %226 : vector<1x1x16xf32> to vector<1x16xf32>
    %228 = vector.broadcast %227 : vector<1x16xf32> to vector<8x16xf32>
    %229 = arith.mulf %225, %228 : vector<8x16xf32>
    %230 = arith.addf %224, %229 : vector<8x16xf32>
    %c9 = arith.constant 9 : index
    %c0_161 = arith.constant 0 : index
    %231 = vector.load %arg23[%c9, %c0_161] : memref<18x16xf32, #tpu.memory_space<vmem>>, vector<8x16xf32>
    %232 = vector.extract_strided_slice %170 {offsets = [7, 0, 0], sizes = [1, 1, 16], strides = [1, 1, 1]} : vector<9x1x16xf32> to vector<1x1x16xf32>
    %233 = vector.shape_cast %232 : vector<1x1x16xf32> to vector<1x16xf32>
    %234 = vector.broadcast %233 : vector<1x16xf32> to vector<8x16xf32>
    %235 = arith.mulf %231, %234 : vector<8x16xf32>
    %236 = arith.addf %230, %235 : vector<8x16xf32>
    %c10_162 = arith.constant 10 : index
    %c0_163 = arith.constant 0 : index
    %237 = vector.load %arg23[%c10_162, %c0_163] : memref<18x16xf32, #tpu.memory_space<vmem>>, vector<8x16xf32>
    %238 = vector.extract_strided_slice %170 {offsets = [8, 0, 0], sizes = [1, 1, 16], strides = [1, 1, 1]} : vector<9x1x16xf32> to vector<1x1x16xf32>
    %239 = vector.shape_cast %238 : vector<1x1x16xf32> to vector<1x16xf32>
    %240 = vector.broadcast %239 : vector<1x16xf32> to vector<8x16xf32>
    %241 = arith.mulf %237, %240 : vector<8x16xf32>
    %242 = arith.addf %236, %241 : vector<8x16xf32>
    %243 = vector.broadcast %172 : vector<1x16xf32> to vector<8x16xf32>
    %244 = arith.addf %242, %243 : vector<8x16xf32>
    %c5_164 = arith.constant 5 : index
    %c0_165 = arith.constant 0 : index
    %245 = vector.load %arg22[%c5_164, %c0_165] : memref<18x32xf32, #tpu.memory_space<vmem>>, vector<8x32xf32>
    %246 = arith.truncf %245 : vector<8x32xf32> to vector<8x32xbf16>
    %c0_166 = arith.constant 0 : index
    %c0_167 = arith.constant 0 : index
    %247 = vector.load %arg13[%c0_166, %c0_167] : memref<32x32xbf16, #tpu.memory_space<vmem>>, vector<32x32xbf16>
    %cst_168 = arith.constant dense<0.000000e+00> : vector<8x32xf32>
    %248 = tpu.matmul %246, %247, %cst_168 {dimension_numbers = #tpu.dot_dimension_numbers<[1], [0], [0], [1], [0, 0, 1, 1], [], []>} : vector<8x32xbf16>, vector<32x32xbf16>, vector<8x32xf32> -> vector<8x32xf32>
    %249 = arith.truncf %244 : vector<8x16xf32> to vector<8x16xbf16>
    %cst_169 = arith.constant dense<0.000000e+00> : vector<8x32xf32>
    %250 = tpu.matmul %249, %174, %cst_169 {dimension_numbers = #tpu.dot_dimension_numbers<[1], [0], [0], [1], [0, 0, 1, 1], [], []>} : vector<8x16xbf16>, vector<16x32xbf16>, vector<8x32xf32> -> vector<8x32xf32>
    %251 = arith.addf %248, %250 : vector<8x32xf32>
    %252 = vector.broadcast %176 : vector<1x32xf32> to vector<8x32xf32>
    %253 = arith.addf %251, %252 : vector<8x32xf32>
    %cst_170 = arith.constant 0.000000e+00 : f32
    %254 = vector.broadcast %cst_170 : f32 to vector<8x32xf32>
    %255 = arith.maximumf %253, %254 : vector<8x32xf32>
    %c5_171 = arith.constant 5 : index
    %c0_172 = arith.constant 0 : index
    %256 = vector.load %arg3[%c5_171, %c0_172] : memref<18x1xf32, #tpu.memory_space<vmem>>, vector<8x1xf32>
    %257 = vector.broadcast %256 : vector<8x1xf32> to vector<8x32xf32>
    %258 = arith.mulf %255, %257 : vector<8x32xf32>
    %c5_173 = arith.constant 5 : index
    %c0_174 = arith.constant 0 : index
    %259 = vector.load %arg22[%c5_173, %c0_174] : memref<18x32xf32, #tpu.memory_space<vmem>>, vector<8x32xf32>
    tpu.vector_store %arg22[%c5_173, %c0_174], %258 {strides = array<i32>} : memref<18x32xf32, #tpu.memory_space<vmem>>, vector<8x32xf32>,
    %c5_175 = arith.constant 5 : index
    %c0_176 = arith.constant 0 : index
    %260 = vector.load %arg22[%c5_175, %c0_176] : memref<18x32xf32, #tpu.memory_space<vmem>>, vector<8x32xf32>
    %261 = arith.truncf %260 : vector<8x32xf32> to vector<8x32xbf16>
    %c0_177 = arith.constant 0 : index
    %c0_178 = arith.constant 0 : index
    %c0_179 = arith.constant 0 : index
    %262 = vector.load %arg20[%c0_177, %c0_178, %c0_179] : memref<1x8x32xbf16, #tpu.memory_space<vmem>>, vector<1x8x32xbf16>
    %263 = vector.shape_cast %262 : vector<1x8x32xbf16> to vector<8x32xbf16>
    %264 = vector.shape_cast %261 : vector<8x32xbf16> to vector<1x8x32xbf16>
    tpu.vector_store %arg20[%c0_177, %c0_178, %c0_179], %264 {strides = array<i32>} : memref<1x8x32xbf16, #tpu.memory_space<vmem>>, vector<1x8x32xbf16>,
    return
  }
  func.func @transform_0(%arg0: i32) -> (i32, i32, i32) {
    %c0_i32 = arith.constant 0 : i32
    %c0_i32_0 = arith.constant 0 : i32
    %c0_i32_1 = arith.constant 0 : i32
    return %arg0, %c0_i32, %c0_i32_0 : i32, i32, i32
  }
  func.func @transform_1(%arg0: i32) -> (i32, i32) {
    %c0_i32 = arith.constant 0 : i32
    %c0_i32_0 = arith.constant 0 : i32
    %c0_i32_1 = arith.constant 0 : i32
    return %c0_i32, %c0_i32_0 : i32, i32
  }
  func.func @transform_2(%arg0: i32) -> (i32, i32) {
    %c0_i32 = arith.constant 0 : i32
    %c0_i32_0 = arith.constant 0 : i32
    %c0_i32_1 = arith.constant 0 : i32
    return %c0_i32, %c0_i32_0 : i32, i32
  }
  func.func @transform_3(%arg0: i32) -> (i32, i32, i32) {
    %c0_i32 = arith.constant 0 : i32
    %c0_i32_0 = arith.constant 0 : i32
    %c0_i32_1 = arith.constant 0 : i32
    %c0_i32_2 = arith.constant 0 : i32
    return %c0_i32, %c0_i32_0, %c0_i32_1 : i32, i32, i32
  }
  func.func @transform_4(%arg0: i32) -> (i32, i32) {
    %c0_i32 = arith.constant 0 : i32
    %c0_i32_0 = arith.constant 0 : i32
    %c0_i32_1 = arith.constant 0 : i32
    return %c0_i32, %c0_i32_0 : i32, i32
  }
  func.func @transform_5(%arg0: i32) -> (i32, i32) {
    %c0_i32 = arith.constant 0 : i32
    %c0_i32_0 = arith.constant 0 : i32
    %c0_i32_1 = arith.constant 0 : i32
    return %c0_i32, %c0_i32_0 : i32, i32
  }
  func.func @transform_6(%arg0: i32) -> (i32, i32) {
    %c0_i32 = arith.constant 0 : i32
    %c0_i32_0 = arith.constant 0 : i32
    %c0_i32_1 = arith.constant 0 : i32
    return %c0_i32, %c0_i32_0 : i32, i32
  }
  func.func @transform_7(%arg0: i32) -> (i32, i32, i32) {
    %c0_i32 = arith.constant 0 : i32
    %c0_i32_0 = arith.constant 0 : i32
    %c0_i32_1 = arith.constant 0 : i32
    %c0_i32_2 = arith.constant 0 : i32
    return %c0_i32, %c0_i32_0, %c0_i32_1 : i32, i32, i32
  }
  func.func @transform_8(%arg0: i32) -> (i32, i32) {
    %c0_i32 = arith.constant 0 : i32
    %c0_i32_0 = arith.constant 0 : i32
    %c0_i32_1 = arith.constant 0 : i32
    return %c0_i32, %c0_i32_0 : i32, i32
  }
  func.func @transform_9(%arg0: i32) -> (i32, i32) {
    %c0_i32 = arith.constant 0 : i32
    %c0_i32_0 = arith.constant 0 : i32
    %c0_i32_1 = arith.constant 0 : i32
    return %c0_i32, %c0_i32_0 : i32, i32
  }
  func.func @transform_10(%arg0: i32) -> (i32, i32) {
    %c0_i32 = arith.constant 0 : i32
    %c0_i32_0 = arith.constant 0 : i32
    %c0_i32_1 = arith.constant 0 : i32
    return %c0_i32, %c0_i32_0 : i32, i32
  }
  func.func @transform_11(%arg0: i32) -> (i32, i32) {
    %c0_i32 = arith.constant 0 : i32
    %c0_i32_0 = arith.constant 0 : i32
    %c0_i32_1 = arith.constant 0 : i32
    return %c0_i32, %c0_i32_0 : i32, i32
  }
  func.func @transform_12(%arg0: i32) -> (i32, i32) {
    %c0_i32 = arith.constant 0 : i32
    %c0_i32_0 = arith.constant 0 : i32
    %c0_i32_1 = arith.constant 0 : i32
    return %c0_i32, %c0_i32_0 : i32, i32
  }
  func.func @transform_13(%arg0: i32) -> (i32, i32, i32) {
    %c0_i32 = arith.constant 0 : i32
    %c0_i32_0 = arith.constant 0 : i32
    %c0_i32_1 = arith.constant 0 : i32
    %c0_i32_2 = arith.constant 0 : i32
    return %c0_i32, %c0_i32_0, %c0_i32_1 : i32, i32, i32
  }
  func.func @transform_14(%arg0: i32) -> (i32, i32, i32) {
    %c0_i32 = arith.constant 0 : i32
    %c0_i32_0 = arith.constant 0 : i32
    %c0_i32_1 = arith.constant 0 : i32
    %c0_i32_2 = arith.constant 0 : i32
    return %c0_i32, %c0_i32_0, %c0_i32_1 : i32, i32, i32
  }
  func.func @transform_15(%arg0: i32) -> (i32, i32, i32, i32) {
    %c0_i32 = arith.constant 0 : i32
    %c0_i32_0 = arith.constant 0 : i32
    %c0_i32_1 = arith.constant 0 : i32
    %c0_i32_2 = arith.constant 0 : i32
    %c0_i32_3 = arith.constant 0 : i32
    return %c0_i32, %c0_i32_0, %c0_i32_1, %c0_i32_2 : i32, i32, i32, i32
  }
  func.func @transform_16(%arg0: i32) -> (i32, i32, i32) {
    %c0_i32 = arith.constant 0 : i32
    %c0_i32_0 = arith.constant 0 : i32
    %c0_i32_1 = arith.constant 0 : i32
    %c0_i32_2 = arith.constant 0 : i32
    return %c0_i32, %c0_i32_0, %c0_i32_1 : i32, i32, i32
  }
  func.func @transform_17(%arg0: i32) -> (i32, i32, i32) {
    %c0_i32 = arith.constant 0 : i32
    %c0_i32_0 = arith.constant 0 : i32
    %c0_i32_1 = arith.constant 0 : i32
    %c0_i32_2 = arith.constant 0 : i32
    return %c0_i32, %c0_i32_0, %c0_i32_1 : i32, i32, i32
  }
  func.func @transform_18(%arg0: i32) -> (i32, i32, i32) {
    %c0_i32 = arith.constant 0 : i32
    %c0_i32_0 = arith.constant 0 : i32
    %c0_i32_1 = arith.constant 0 : i32
    %c0_i32_2 = arith.constant 0 : i32
    return %c0_i32, %c0_i32_0, %c0_i32_1 : i32, i32, i32
  }
  func.func @transform_19(%arg0: i32) -> (i32, i32, i32) {
    %c0_i32 = arith.constant 0 : i32
    %c0_i32_0 = arith.constant 0 : i32
    %c0_i32_1 = arith.constant 0 : i32
    return %arg0, %c0_i32, %c0_i32_0 : i32, i32, i32
  }
}

module attributes {stable_mosaic.version = 11 : i64} {
  func.func @stage_kernel(%arg0: i32, %arg1: memref<1x20x32xbf16, #tpu.memory_space<vmem>>, %arg2: memref<20x1xf32, #tpu.memory_space<vmem>>, %arg3: memref<11x1xf32, #tpu.memory_space<vmem>>, %arg4: memref<9x1x32xf32, #tpu.memory_space<vmem>>, %arg5: memref<1x32xf32, #tpu.memory_space<vmem>>, %arg6: memref<32x32xbf16, #tpu.memory_space<vmem>>, %arg7: memref<1x32xf32, #tpu.memory_space<vmem>>, %arg8: memref<9x1x32xf32, #tpu.memory_space<vmem>>, %arg9: memref<1x32xf32, #tpu.memory_space<vmem>>, %arg10: memref<32x64xbf16, #tpu.memory_space<vmem>>, %arg11: memref<32x64xbf16, #tpu.memory_space<vmem>>, %arg12: memref<1x64xf32, #tpu.memory_space<vmem>>, %arg13: memref<64x64xbf16, #tpu.memory_space<vmem>>, %arg14: memref<1x64x32xbf16, #tpu.memory_space<vmem>>, %arg15: memref<1x1x32xf32, #tpu.memory_space<vmem>>, %arg16: memref<1x9x1x32xf32, #tpu.memory_space<vmem>>, %arg17: memref<1x1x32xf32, #tpu.memory_space<vmem>>, %arg18: memref<1x32x64xbf16, #tpu.memory_space<vmem>>, %arg19: memref<1x1x64xf32, #tpu.memory_space<vmem>>, %arg20: memref<1x3x64xbf16, #tpu.memory_space<vmem>>, %arg21: memref<20x32xf32, #tpu.memory_space<vmem>>, %arg22: memref<11x64xf32, #tpu.memory_space<vmem>>, %arg23: memref<11x32xf32, #tpu.memory_space<vmem>>) attributes {dimension_semantics = [#tpu.dimension_semantics<parallel>], iteration_bounds = array<i64: 2>, scalar_prefetch = 0 : i64, scratch_operands = 3 : i64, tpu.core_type = #tpu.core_type<tc>, window_params = [{transform_indices = @transform_0, window_bounds = array<i64: 1, 20, 32>}, {pipeline_mode = #tpu.pipeline_mode<synchronous>, transform_indices = @transform_1, window_bounds = array<i64: 20, 1>}, {pipeline_mode = #tpu.pipeline_mode<synchronous>, transform_indices = @transform_2, window_bounds = array<i64: 11, 1>}, {pipeline_mode = #tpu.pipeline_mode<synchronous>, transform_indices = @transform_3, window_bounds = array<i64: 9, 1, 32>}, {pipeline_mode = #tpu.pipeline_mode<synchronous>, transform_indices = @transform_4, window_bounds = array<i64: 1, 32>}, {pipeline_mode = #tpu.pipeline_mode<synchronous>, transform_indices = @transform_5, window_bounds = array<i64: 32, 32>}, {pipeline_mode = #tpu.pipeline_mode<synchronous>, transform_indices = @transform_6, window_bounds = array<i64: 1, 32>}, {pipeline_mode = #tpu.pipeline_mode<synchronous>, transform_indices = @transform_7, window_bounds = array<i64: 9, 1, 32>}, {pipeline_mode = #tpu.pipeline_mode<synchronous>, transform_indices = @transform_8, window_bounds = array<i64: 1, 32>}, {pipeline_mode = #tpu.pipeline_mode<synchronous>, transform_indices = @transform_9, window_bounds = array<i64: 32, 64>}, {pipeline_mode = #tpu.pipeline_mode<synchronous>, transform_indices = @transform_10, window_bounds = array<i64: 32, 64>}, {pipeline_mode = #tpu.pipeline_mode<synchronous>, transform_indices = @transform_11, window_bounds = array<i64: 1, 64>}, {pipeline_mode = #tpu.pipeline_mode<synchronous>, transform_indices = @transform_12, window_bounds = array<i64: 64, 64>}, {pipeline_mode = #tpu.pipeline_mode<synchronous>, transform_indices = @transform_13, window_bounds = array<i64: 1, 64, 32>}, {pipeline_mode = #tpu.pipeline_mode<synchronous>, transform_indices = @transform_14, window_bounds = array<i64: 1, 1, 32>}, {pipeline_mode = #tpu.pipeline_mode<synchronous>, transform_indices = @transform_15, window_bounds = array<i64: 1, 9, 1, 32>}, {pipeline_mode = #tpu.pipeline_mode<synchronous>, transform_indices = @transform_16, window_bounds = array<i64: 1, 1, 32>}, {pipeline_mode = #tpu.pipeline_mode<synchronous>, transform_indices = @transform_17, window_bounds = array<i64: 1, 32, 64>}, {pipeline_mode = #tpu.pipeline_mode<synchronous>, transform_indices = @transform_18, window_bounds = array<i64: 1, 1, 64>}, {transform_indices = @transform_19, window_bounds = array<i64: 1, 3, 64>}]} {
    %c0 = arith.constant 0 : index
    %c0_0 = arith.constant 0 : index
    %c0_1 = arith.constant 0 : index
    %0 = vector.load %arg1[%c0, %c0_0, %c0_1] : memref<1x20x32xbf16, #tpu.memory_space<vmem>>, vector<1x20x32xbf16>
    %1 = vector.shape_cast %0 : vector<1x20x32xbf16> to vector<20x32xbf16>
    %c0_2 = arith.constant 0 : index
    %c0_3 = arith.constant 0 : index
    %2 = vector.load %arg6[%c0_2, %c0_3] : memref<32x32xbf16, #tpu.memory_space<vmem>>, vector<32x32xbf16>
    %cst = arith.constant dense<0.000000e+00> : vector<20x32xf32>
    %3 = tpu.matmul %1, %2, %cst {dimension_numbers = #tpu.dot_dimension_numbers<[1], [0], [0], [1], [0, 0, 1, 1], [], []>} : vector<20x32xbf16>, vector<32x32xbf16>, vector<20x32xf32> -> vector<20x32xf32>
    %c0_4 = arith.constant 0 : index
    %c0_5 = arith.constant 0 : index
    %4 = vector.load %arg7[%c0_4, %c0_5] : memref<1x32xf32, #tpu.memory_space<vmem>>, vector<1x32xf32>
    %5 = vector.broadcast %4 : vector<1x32xf32> to vector<20x32xf32>
    %6 = arith.addf %3, %5 : vector<20x32xf32>
    %cst_6 = arith.constant 0.000000e+00 : f32
    %7 = vector.broadcast %cst_6 : f32 to vector<20x32xf32>
    %8 = arith.maximumf %6, %7 : vector<20x32xf32>
    %c0_7 = arith.constant 0 : index
    %c0_8 = arith.constant 0 : index
    %9 = vector.load %arg2[%c0_7, %c0_8] : memref<20x1xf32, #tpu.memory_space<vmem>>, vector<20x1xf32>
    %10 = vector.broadcast %9 : vector<20x1xf32> to vector<20x32xf32>
    %11 = arith.mulf %8, %10 : vector<20x32xf32>
    %c0_9 = arith.constant 0 : index
    %c0_10 = arith.constant 0 : index
    %12 = vector.load %arg21[%c0_9, %c0_10] : memref<20x32xf32, #tpu.memory_space<vmem>>, vector<20x32xf32>
    tpu.vector_store %arg21[%c0_9, %c0_10], %11 {strides = array<i32>} : memref<20x32xf32, #tpu.memory_space<vmem>>, vector<20x32xf32>,
    %cst_11 = arith.constant 0.000000e+00 : f32
    %13 = vector.broadcast %cst_11 : f32 to vector<2x32xf32>
    %cst_12 = arith.constant 0.000000e+00 : f32
    %14 = vector.broadcast %cst_12 : f32 to vector<2x32xf32>
    %c0_13 = arith.constant 0 : index
    %c0_14 = arith.constant 0 : index
    %c0_15 = arith.constant 0 : index
    %15 = vector.load %arg1[%c0_13, %c0_14, %c0_15] : memref<1x20x32xbf16, #tpu.memory_space<vmem>>, vector<1x2x32xbf16>
    %16 = vector.shape_cast %15 : vector<1x2x32xbf16> to vector<2x32xbf16>
    %17 = arith.extf %16 : vector<2x32xbf16> to vector<2x32xf32>
    %c0_16 = arith.constant 0 : index
    %c0_17 = arith.constant 0 : index
    %c0_18 = arith.constant 0 : index
    %18 = vector.load %arg4[%c0_16, %c0_17, %c0_18] : memref<9x1x32xf32, #tpu.memory_space<vmem>>, vector<1x1x32xf32>
    %19 = vector.shape_cast %18 : vector<1x1x32xf32> to vector<1x32xf32>
    %20 = vector.broadcast %19 : vector<1x32xf32> to vector<2x32xf32>
    %21 = arith.mulf %17, %20 : vector<2x32xf32>
    %22 = arith.addf %13, %21 : vector<2x32xf32>
    %c0_19 = arith.constant 0 : index
    %c0_20 = arith.constant 0 : index
    %23 = vector.load %arg21[%c0_19, %c0_20] : memref<20x32xf32, #tpu.memory_space<vmem>>, vector<2x32xf32>
    %c0_21 = arith.constant 0 : index
    %c0_22 = arith.constant 0 : index
    %c0_23 = arith.constant 0 : index
    %24 = vector.load %arg8[%c0_21, %c0_22, %c0_23] : memref<9x1x32xf32, #tpu.memory_space<vmem>>, vector<1x1x32xf32>
    %25 = vector.shape_cast %24 : vector<1x1x32xf32> to vector<1x32xf32>
    %26 = vector.broadcast %25 : vector<1x32xf32> to vector<2x32xf32>
    %27 = arith.mulf %23, %26 : vector<2x32xf32>
    %28 = arith.addf %14, %27 : vector<2x32xf32>
    %c0_24 = arith.constant 0 : index
    %c5 = arith.constant 5 : index
    %c0_25 = arith.constant 0 : index
    %29 = vector.load %arg1[%c0_24, %c5, %c0_25] : memref<1x20x32xbf16, #tpu.memory_space<vmem>>, vector<1x2x32xbf16>
    %30 = vector.shape_cast %29 : vector<1x2x32xbf16> to vector<2x32xbf16>
    %31 = arith.extf %30 : vector<2x32xbf16> to vector<2x32xf32>
    %c1 = arith.constant 1 : index
    %c0_26 = arith.constant 0 : index
    %c0_27 = arith.constant 0 : index
    %32 = vector.load %arg4[%c1, %c0_26, %c0_27] : memref<9x1x32xf32, #tpu.memory_space<vmem>>, vector<1x1x32xf32>
    %33 = vector.shape_cast %32 : vector<1x1x32xf32> to vector<1x32xf32>
    %34 = vector.broadcast %33 : vector<1x32xf32> to vector<2x32xf32>
    %35 = arith.mulf %31, %34 : vector<2x32xf32>
    %36 = arith.addf %22, %35 : vector<2x32xf32>
    %c5_28 = arith.constant 5 : index
    %c0_29 = arith.constant 0 : index
    %37 = vector.load %arg21[%c5_28, %c0_29] : memref<20x32xf32, #tpu.memory_space<vmem>>, vector<2x32xf32>
    %c1_30 = arith.constant 1 : index
    %c0_31 = arith.constant 0 : index
    %c0_32 = arith.constant 0 : index
    %38 = vector.load %arg8[%c1_30, %c0_31, %c0_32] : memref<9x1x32xf32, #tpu.memory_space<vmem>>, vector<1x1x32xf32>
    %39 = vector.shape_cast %38 : vector<1x1x32xf32> to vector<1x32xf32>
    %40 = vector.broadcast %39 : vector<1x32xf32> to vector<2x32xf32>
    %41 = arith.mulf %37, %40 : vector<2x32xf32>
    %42 = arith.addf %28, %41 : vector<2x32xf32>
    %c0_33 = arith.constant 0 : index
    %c1_34 = arith.constant 1 : index
    %c0_35 = arith.constant 0 : index
    %43 = vector.load %arg1[%c0_33, %c1_34, %c0_35] : memref<1x20x32xbf16, #tpu.memory_space<vmem>>, vector<1x2x32xbf16>
    %44 = vector.shape_cast %43 : vector<1x2x32xbf16> to vector<2x32xbf16>
    %45 = arith.extf %44 : vector<2x32xbf16> to vector<2x32xf32>
    %c2 = arith.constant 2 : index
    %c0_36 = arith.constant 0 : index
    %c0_37 = arith.constant 0 : index
    %46 = vector.load %arg4[%c2, %c0_36, %c0_37] : memref<9x1x32xf32, #tpu.memory_space<vmem>>, vector<1x1x32xf32>
    %47 = vector.shape_cast %46 : vector<1x1x32xf32> to vector<1x32xf32>
    %48 = vector.broadcast %47 : vector<1x32xf32> to vector<2x32xf32>
    %49 = arith.mulf %45, %48 : vector<2x32xf32>
    %50 = arith.addf %36, %49 : vector<2x32xf32>
    %c1_38 = arith.constant 1 : index
    %c0_39 = arith.constant 0 : index
    %51 = vector.load %arg21[%c1_38, %c0_39] : memref<20x32xf32, #tpu.memory_space<vmem>>, vector<2x32xf32>
    %c2_40 = arith.constant 2 : index
    %c0_41 = arith.constant 0 : index
    %c0_42 = arith.constant 0 : index
    %52 = vector.load %arg8[%c2_40, %c0_41, %c0_42] : memref<9x1x32xf32, #tpu.memory_space<vmem>>, vector<1x1x32xf32>
    %53 = vector.shape_cast %52 : vector<1x1x32xf32> to vector<1x32xf32>
    %54 = vector.broadcast %53 : vector<1x32xf32> to vector<2x32xf32>
    %55 = arith.mulf %51, %54 : vector<2x32xf32>
    %56 = arith.addf %42, %55 : vector<2x32xf32>
    %c0_43 = arith.constant 0 : index
    %c10 = arith.constant 10 : index
    %c0_44 = arith.constant 0 : index
    %57 = vector.load %arg1[%c0_43, %c10, %c0_44] : memref<1x20x32xbf16, #tpu.memory_space<vmem>>, vector<1x2x32xbf16>
    %58 = vector.shape_cast %57 : vector<1x2x32xbf16> to vector<2x32xbf16>
    %59 = arith.extf %58 : vector<2x32xbf16> to vector<2x32xf32>
    %c3 = arith.constant 3 : index
    %c0_45 = arith.constant 0 : index
    %c0_46 = arith.constant 0 : index
    %60 = vector.load %arg4[%c3, %c0_45, %c0_46] : memref<9x1x32xf32, #tpu.memory_space<vmem>>, vector<1x1x32xf32>
    %61 = vector.shape_cast %60 : vector<1x1x32xf32> to vector<1x32xf32>
    %62 = vector.broadcast %61 : vector<1x32xf32> to vector<2x32xf32>
    %63 = arith.mulf %59, %62 : vector<2x32xf32>
    %64 = arith.addf %50, %63 : vector<2x32xf32>
    %c10_47 = arith.constant 10 : index
    %c0_48 = arith.constant 0 : index
    %65 = vector.load %arg21[%c10_47, %c0_48] : memref<20x32xf32, #tpu.memory_space<vmem>>, vector<2x32xf32>
    %c3_49 = arith.constant 3 : index
    %c0_50 = arith.constant 0 : index
    %c0_51 = arith.constant 0 : index
    %66 = vector.load %arg8[%c3_49, %c0_50, %c0_51] : memref<9x1x32xf32, #tpu.memory_space<vmem>>, vector<1x1x32xf32>
    %67 = vector.shape_cast %66 : vector<1x1x32xf32> to vector<1x32xf32>
    %68 = vector.broadcast %67 : vector<1x32xf32> to vector<2x32xf32>
    %69 = arith.mulf %65, %68 : vector<2x32xf32>
    %70 = arith.addf %56, %69 : vector<2x32xf32>
    %c0_52 = arith.constant 0 : index
    %c15 = arith.constant 15 : index
    %c0_53 = arith.constant 0 : index
    %71 = vector.load %arg1[%c0_52, %c15, %c0_53] : memref<1x20x32xbf16, #tpu.memory_space<vmem>>, vector<1x2x32xbf16>
    %72 = vector.shape_cast %71 : vector<1x2x32xbf16> to vector<2x32xbf16>
    %73 = arith.extf %72 : vector<2x32xbf16> to vector<2x32xf32>
    %c4 = arith.constant 4 : index
    %c0_54 = arith.constant 0 : index
    %c0_55 = arith.constant 0 : index
    %74 = vector.load %arg4[%c4, %c0_54, %c0_55] : memref<9x1x32xf32, #tpu.memory_space<vmem>>, vector<1x1x32xf32>
    %75 = vector.shape_cast %74 : vector<1x1x32xf32> to vector<1x32xf32>
    %76 = vector.broadcast %75 : vector<1x32xf32> to vector<2x32xf32>
    %77 = arith.mulf %73, %76 : vector<2x32xf32>
    %78 = arith.addf %64, %77 : vector<2x32xf32>
    %c15_56 = arith.constant 15 : index
    %c0_57 = arith.constant 0 : index
    %79 = vector.load %arg21[%c15_56, %c0_57] : memref<20x32xf32, #tpu.memory_space<vmem>>, vector<2x32xf32>
    %c4_58 = arith.constant 4 : index
    %c0_59 = arith.constant 0 : index
    %c0_60 = arith.constant 0 : index
    %80 = vector.load %arg8[%c4_58, %c0_59, %c0_60] : memref<9x1x32xf32, #tpu.memory_space<vmem>>, vector<1x1x32xf32>
    %81 = vector.shape_cast %80 : vector<1x1x32xf32> to vector<1x32xf32>
    %82 = vector.broadcast %81 : vector<1x32xf32> to vector<2x32xf32>
    %83 = arith.mulf %79, %82 : vector<2x32xf32>
    %84 = arith.addf %70, %83 : vector<2x32xf32>
    %c0_61 = arith.constant 0 : index
    %c11 = arith.constant 11 : index
    %c0_62 = arith.constant 0 : index
    %85 = vector.load %arg1[%c0_61, %c11, %c0_62] : memref<1x20x32xbf16, #tpu.memory_space<vmem>>, vector<1x2x32xbf16>
    %86 = vector.shape_cast %85 : vector<1x2x32xbf16> to vector<2x32xbf16>
    %87 = arith.extf %86 : vector<2x32xbf16> to vector<2x32xf32>
    %c5_63 = arith.constant 5 : index
    %c0_64 = arith.constant 0 : index
    %c0_65 = arith.constant 0 : index
    %88 = vector.load %arg4[%c5_63, %c0_64, %c0_65] : memref<9x1x32xf32, #tpu.memory_space<vmem>>, vector<1x1x32xf32>
    %89 = vector.shape_cast %88 : vector<1x1x32xf32> to vector<1x32xf32>
    %90 = vector.broadcast %89 : vector<1x32xf32> to vector<2x32xf32>
    %91 = arith.mulf %87, %90 : vector<2x32xf32>
    %92 = arith.addf %78, %91 : vector<2x32xf32>
    %c11_66 = arith.constant 11 : index
    %c0_67 = arith.constant 0 : index
    %93 = vector.load %arg21[%c11_66, %c0_67] : memref<20x32xf32, #tpu.memory_space<vmem>>, vector<2x32xf32>
    %c5_68 = arith.constant 5 : index
    %c0_69 = arith.constant 0 : index
    %c0_70 = arith.constant 0 : index
    %94 = vector.load %arg8[%c5_68, %c0_69, %c0_70] : memref<9x1x32xf32, #tpu.memory_space<vmem>>, vector<1x1x32xf32>
    %95 = vector.shape_cast %94 : vector<1x1x32xf32> to vector<1x32xf32>
    %96 = vector.broadcast %95 : vector<1x32xf32> to vector<2x32xf32>
    %97 = arith.mulf %93, %96 : vector<2x32xf32>
    %98 = arith.addf %84, %97 : vector<2x32xf32>
    %c0_71 = arith.constant 0 : index
    %c2_72 = arith.constant 2 : index
    %c0_73 = arith.constant 0 : index
    %99 = vector.load %arg1[%c0_71, %c2_72, %c0_73] : memref<1x20x32xbf16, #tpu.memory_space<vmem>>, vector<1x2x32xbf16>
    %100 = vector.shape_cast %99 : vector<1x2x32xbf16> to vector<2x32xbf16>
    %101 = arith.extf %100 : vector<2x32xbf16> to vector<2x32xf32>
    %c6 = arith.constant 6 : index
    %c0_74 = arith.constant 0 : index
    %c0_75 = arith.constant 0 : index
    %102 = vector.load %arg4[%c6, %c0_74, %c0_75] : memref<9x1x32xf32, #tpu.memory_space<vmem>>, vector<1x1x32xf32>
    %103 = vector.shape_cast %102 : vector<1x1x32xf32> to vector<1x32xf32>
    %104 = vector.broadcast %103 : vector<1x32xf32> to vector<2x32xf32>
    %105 = arith.mulf %101, %104 : vector<2x32xf32>
    %106 = arith.addf %92, %105 : vector<2x32xf32>
    %c2_76 = arith.constant 2 : index
    %c0_77 = arith.constant 0 : index
    %107 = vector.load %arg21[%c2_76, %c0_77] : memref<20x32xf32, #tpu.memory_space<vmem>>, vector<2x32xf32>
    %c6_78 = arith.constant 6 : index
    %c0_79 = arith.constant 0 : index
    %c0_80 = arith.constant 0 : index
    %108 = vector.load %arg8[%c6_78, %c0_79, %c0_80] : memref<9x1x32xf32, #tpu.memory_space<vmem>>, vector<1x1x32xf32>
    %109 = vector.shape_cast %108 : vector<1x1x32xf32> to vector<1x32xf32>
    %110 = vector.broadcast %109 : vector<1x32xf32> to vector<2x32xf32>
    %111 = arith.mulf %107, %110 : vector<2x32xf32>
    %112 = arith.addf %98, %111 : vector<2x32xf32>
    %c0_81 = arith.constant 0 : index
    %c7 = arith.constant 7 : index
    %c0_82 = arith.constant 0 : index
    %113 = vector.load %arg1[%c0_81, %c7, %c0_82] : memref<1x20x32xbf16, #tpu.memory_space<vmem>>, vector<1x2x32xbf16>
    %114 = vector.shape_cast %113 : vector<1x2x32xbf16> to vector<2x32xbf16>
    %115 = arith.extf %114 : vector<2x32xbf16> to vector<2x32xf32>
    %c7_83 = arith.constant 7 : index
    %c0_84 = arith.constant 0 : index
    %c0_85 = arith.constant 0 : index
    %116 = vector.load %arg4[%c7_83, %c0_84, %c0_85] : memref<9x1x32xf32, #tpu.memory_space<vmem>>, vector<1x1x32xf32>
    %117 = vector.shape_cast %116 : vector<1x1x32xf32> to vector<1x32xf32>
    %118 = vector.broadcast %117 : vector<1x32xf32> to vector<2x32xf32>
    %119 = arith.mulf %115, %118 : vector<2x32xf32>
    %120 = arith.addf %106, %119 : vector<2x32xf32>
    %c7_86 = arith.constant 7 : index
    %c0_87 = arith.constant 0 : index
    %121 = vector.load %arg21[%c7_86, %c0_87] : memref<20x32xf32, #tpu.memory_space<vmem>>, vector<2x32xf32>
    %c7_88 = arith.constant 7 : index
    %c0_89 = arith.constant 0 : index
    %c0_90 = arith.constant 0 : index
    %122 = vector.load %arg8[%c7_88, %c0_89, %c0_90] : memref<9x1x32xf32, #tpu.memory_space<vmem>>, vector<1x1x32xf32>
    %123 = vector.shape_cast %122 : vector<1x1x32xf32> to vector<1x32xf32>
    %124 = vector.broadcast %123 : vector<1x32xf32> to vector<2x32xf32>
    %125 = arith.mulf %121, %124 : vector<2x32xf32>
    %126 = arith.addf %112, %125 : vector<2x32xf32>
    %c0_91 = arith.constant 0 : index
    %c3_92 = arith.constant 3 : index
    %c0_93 = arith.constant 0 : index
    %127 = vector.load %arg1[%c0_91, %c3_92, %c0_93] : memref<1x20x32xbf16, #tpu.memory_space<vmem>>, vector<1x2x32xbf16>
    %128 = vector.shape_cast %127 : vector<1x2x32xbf16> to vector<2x32xbf16>
    %129 = arith.extf %128 : vector<2x32xbf16> to vector<2x32xf32>
    %c8 = arith.constant 8 : index
    %c0_94 = arith.constant 0 : index
    %c0_95 = arith.constant 0 : index
    %130 = vector.load %arg4[%c8, %c0_94, %c0_95] : memref<9x1x32xf32, #tpu.memory_space<vmem>>, vector<1x1x32xf32>
    %131 = vector.shape_cast %130 : vector<1x1x32xf32> to vector<1x32xf32>
    %132 = vector.broadcast %131 : vector<1x32xf32> to vector<2x32xf32>
    %133 = arith.mulf %129, %132 : vector<2x32xf32>
    %134 = arith.addf %120, %133 : vector<2x32xf32>
    %c3_96 = arith.constant 3 : index
    %c0_97 = arith.constant 0 : index
    %135 = vector.load %arg21[%c3_96, %c0_97] : memref<20x32xf32, #tpu.memory_space<vmem>>, vector<2x32xf32>
    %c8_98 = arith.constant 8 : index
    %c0_99 = arith.constant 0 : index
    %c0_100 = arith.constant 0 : index
    %136 = vector.load %arg8[%c8_98, %c0_99, %c0_100] : memref<9x1x32xf32, #tpu.memory_space<vmem>>, vector<1x1x32xf32>
    %137 = vector.shape_cast %136 : vector<1x1x32xf32> to vector<1x32xf32>
    %138 = vector.broadcast %137 : vector<1x32xf32> to vector<2x32xf32>
    %139 = arith.mulf %135, %138 : vector<2x32xf32>
    %140 = arith.addf %126, %139 : vector<2x32xf32>
    %c0_101 = arith.constant 0 : index
    %c0_102 = arith.constant 0 : index
    %141 = vector.load %arg5[%c0_101, %c0_102] : memref<1x32xf32, #tpu.memory_space<vmem>>, vector<1x32xf32>
    %142 = vector.broadcast %141 : vector<1x32xf32> to vector<2x32xf32>
    %143 = arith.addf %134, %142 : vector<2x32xf32>
    %c0_103 = arith.constant 0 : index
    %c0_104 = arith.constant 0 : index
    %144 = vector.load %arg9[%c0_103, %c0_104] : memref<1x32xf32, #tpu.memory_space<vmem>>, vector<1x32xf32>
    %145 = vector.broadcast %144 : vector<1x32xf32> to vector<2x32xf32>
    %146 = arith.addf %140, %145 : vector<2x32xf32>
    %147 = arith.truncf %143 : vector<2x32xf32> to vector<2x32xbf16>
    %c0_105 = arith.constant 0 : index
    %c0_106 = arith.constant 0 : index
    %148 = vector.load %arg10[%c0_105, %c0_106] : memref<32x64xbf16, #tpu.memory_space<vmem>>, vector<32x64xbf16>
    %cst_107 = arith.constant dense<0.000000e+00> : vector<2x64xf32>
    %149 = tpu.matmul %147, %148, %cst_107 {dimension_numbers = #tpu.dot_dimension_numbers<[1], [0], [0], [1], [0, 0, 1, 1], [], []>} : vector<2x32xbf16>, vector<32x64xbf16>, vector<2x64xf32> -> vector<2x64xf32>
    %150 = arith.truncf %146 : vector<2x32xf32> to vector<2x32xbf16>
    %c0_108 = arith.constant 0 : index
    %c0_109 = arith.constant 0 : index
    %151 = vector.load %arg11[%c0_108, %c0_109] : memref<32x64xbf16, #tpu.memory_space<vmem>>, vector<32x64xbf16>
    %cst_110 = arith.constant dense<0.000000e+00> : vector<2x64xf32>
    %152 = tpu.matmul %150, %151, %cst_110 {dimension_numbers = #tpu.dot_dimension_numbers<[1], [0], [0], [1], [0, 0, 1, 1], [], []>} : vector<2x32xbf16>, vector<32x64xbf16>, vector<2x64xf32> -> vector<2x64xf32>
    %153 = arith.addf %149, %152 : vector<2x64xf32>
    %c0_111 = arith.constant 0 : index
    %c0_112 = arith.constant 0 : index
    %154 = vector.load %arg12[%c0_111, %c0_112] : memref<1x64xf32, #tpu.memory_space<vmem>>, vector<1x64xf32>
    %155 = vector.broadcast %154 : vector<1x64xf32> to vector<2x64xf32>
    %156 = arith.addf %153, %155 : vector<2x64xf32>
    %cst_113 = arith.constant 0.000000e+00 : f32
    %157 = vector.broadcast %cst_113 : f32 to vector<2x64xf32>
    %158 = arith.maximumf %156, %157 : vector<2x64xf32>
    %cst_114 = arith.constant 0.000000e+00 : f32
    %159 = vector.broadcast %cst_114 : f32 to vector<11x64xf32>
    %c0_115 = arith.constant 0 : index
    %c0_116 = arith.constant 0 : index
    %160 = vector.load %arg22[%c0_115, %c0_116] : memref<11x64xf32, #tpu.memory_space<vmem>>, vector<11x64xf32>
    tpu.vector_store %arg22[%c0_115, %c0_116], %159 {strides = array<i32>} : memref<11x64xf32, #tpu.memory_space<vmem>>, vector<11x64xf32>,
    %161 = vector.extract_strided_slice %158 {offsets = [0, 0], sizes = [1, 64], strides = [1, 1]} : vector<2x64xf32> to vector<1x64xf32>
    %c5_117 = arith.constant 5 : index
    %c0_118 = arith.constant 0 : index
    %162 = vector.load %arg22[%c5_117, %c0_118] : memref<11x64xf32, #tpu.memory_space<vmem>>, vector<1x64xf32>
    tpu.vector_store %arg22[%c5_117, %c0_118], %161 {strides = array<i32>} : memref<11x64xf32, #tpu.memory_space<vmem>>, vector<1x64xf32>,
    %c0_119 = arith.constant 0 : index
    %c0_120 = arith.constant 0 : index
    %c0_121 = arith.constant 0 : index
    %163 = vector.load %arg14[%c0_119, %c0_120, %c0_121] : memref<1x64x32xbf16, #tpu.memory_space<vmem>>, vector<1x64x32xbf16>
    %164 = vector.shape_cast %163 : vector<1x64x32xbf16> to vector<64x32xbf16>
    %c0_122 = arith.constant 0 : index
    %c0_123 = arith.constant 0 : index
    %c0_124 = arith.constant 0 : index
    %165 = vector.load %arg15[%c0_122, %c0_123, %c0_124] : memref<1x1x32xf32, #tpu.memory_space<vmem>>, vector<1x1x32xf32>
    %166 = vector.shape_cast %165 : vector<1x1x32xf32> to vector<1x32xf32>
    %c0_125 = arith.constant 0 : index
    %c0_126 = arith.constant 0 : index
    %c0_127 = arith.constant 0 : index
    %c0_128 = arith.constant 0 : index
    %167 = vector.load %arg16[%c0_125, %c0_126, %c0_127, %c0_128] : memref<1x9x1x32xf32, #tpu.memory_space<vmem>>, vector<1x9x1x32xf32>
    %168 = vector.shape_cast %167 : vector<1x9x1x32xf32> to vector<9x1x32xf32>
    %c0_129 = arith.constant 0 : index
    %c0_130 = arith.constant 0 : index
    %c0_131 = arith.constant 0 : index
    %169 = vector.load %arg17[%c0_129, %c0_130, %c0_131] : memref<1x1x32xf32, #tpu.memory_space<vmem>>, vector<1x1x32xf32>
    %170 = vector.shape_cast %169 : vector<1x1x32xf32> to vector<1x32xf32>
    %c0_132 = arith.constant 0 : index
    %c0_133 = arith.constant 0 : index
    %c0_134 = arith.constant 0 : index
    %171 = vector.load %arg18[%c0_132, %c0_133, %c0_134] : memref<1x32x64xbf16, #tpu.memory_space<vmem>>, vector<1x32x64xbf16>
    %172 = vector.shape_cast %171 : vector<1x32x64xbf16> to vector<32x64xbf16>
    %c0_135 = arith.constant 0 : index
    %c0_136 = arith.constant 0 : index
    %c0_137 = arith.constant 0 : index
    %173 = vector.load %arg19[%c0_135, %c0_136, %c0_137] : memref<1x1x64xf32, #tpu.memory_space<vmem>>, vector<1x1x64xf32>
    %174 = vector.shape_cast %173 : vector<1x1x64xf32> to vector<1x64xf32>
    %c0_138 = arith.constant 0 : index
    %c0_139 = arith.constant 0 : index
    %175 = vector.load %arg22[%c0_138, %c0_139] : memref<11x64xf32, #tpu.memory_space<vmem>>, vector<11x64xf32>
    %176 = arith.truncf %175 : vector<11x64xf32> to vector<11x64xbf16>
    %cst_140 = arith.constant dense<0.000000e+00> : vector<11x32xf32>
    %177 = tpu.matmul %176, %164, %cst_140 {dimension_numbers = #tpu.dot_dimension_numbers<[1], [0], [0], [1], [0, 0, 1, 1], [], []>} : vector<11x64xbf16>, vector<64x32xbf16>, vector<11x32xf32> -> vector<11x32xf32>
    %178 = vector.broadcast %166 : vector<1x32xf32> to vector<11x32xf32>
    %179 = arith.addf %177, %178 : vector<11x32xf32>
    %cst_141 = arith.constant 0.000000e+00 : f32
    %180 = vector.broadcast %cst_141 : f32 to vector<11x32xf32>
    %181 = arith.maximumf %179, %180 : vector<11x32xf32>
    %c0_142 = arith.constant 0 : index
    %c0_143 = arith.constant 0 : index
    %182 = vector.load %arg3[%c0_142, %c0_143] : memref<11x1xf32, #tpu.memory_space<vmem>>, vector<11x1xf32>
    %183 = vector.broadcast %182 : vector<11x1xf32> to vector<11x32xf32>
    %184 = arith.mulf %181, %183 : vector<11x32xf32>
    %c0_144 = arith.constant 0 : index
    %c0_145 = arith.constant 0 : index
    %185 = vector.load %arg23[%c0_144, %c0_145] : memref<11x32xf32, #tpu.memory_space<vmem>>, vector<11x32xf32>
    tpu.vector_store %arg23[%c0_144, %c0_145], %184 {strides = array<i32>} : memref<11x32xf32, #tpu.memory_space<vmem>>, vector<11x32xf32>,
    %cst_146 = arith.constant 0.000000e+00 : f32
    %186 = vector.broadcast %cst_146 : f32 to vector<3x32xf32>
    %c0_147 = arith.constant 0 : index
    %c0_148 = arith.constant 0 : index
    %187 = vector.load %arg23[%c0_147, %c0_148] : memref<11x32xf32, #tpu.memory_space<vmem>>, vector<3x32xf32>
    %188 = vector.extract_strided_slice %168 {offsets = [0, 0, 0], sizes = [1, 1, 32], strides = [1, 1, 1]} : vector<9x1x32xf32> to vector<1x1x32xf32>
    %189 = vector.shape_cast %188 : vector<1x1x32xf32> to vector<1x32xf32>
    %190 = vector.broadcast %189 : vector<1x32xf32> to vector<3x32xf32>
    %191 = arith.mulf %187, %190 : vector<3x32xf32>
    %192 = arith.addf %186, %191 : vector<3x32xf32>
    %c1_149 = arith.constant 1 : index
    %c0_150 = arith.constant 0 : index
    %193 = vector.load %arg23[%c1_149, %c0_150] : memref<11x32xf32, #tpu.memory_space<vmem>>, vector<3x32xf32>
    %194 = vector.extract_strided_slice %168 {offsets = [1, 0, 0], sizes = [1, 1, 32], strides = [1, 1, 1]} : vector<9x1x32xf32> to vector<1x1x32xf32>
    %195 = vector.shape_cast %194 : vector<1x1x32xf32> to vector<1x32xf32>
    %196 = vector.broadcast %195 : vector<1x32xf32> to vector<3x32xf32>
    %197 = arith.mulf %193, %196 : vector<3x32xf32>
    %198 = arith.addf %192, %197 : vector<3x32xf32>
    %c2_151 = arith.constant 2 : index
    %c0_152 = arith.constant 0 : index
    %199 = vector.load %arg23[%c2_151, %c0_152] : memref<11x32xf32, #tpu.memory_space<vmem>>, vector<3x32xf32>
    %200 = vector.extract_strided_slice %168 {offsets = [2, 0, 0], sizes = [1, 1, 32], strides = [1, 1, 1]} : vector<9x1x32xf32> to vector<1x1x32xf32>
    %201 = vector.shape_cast %200 : vector<1x1x32xf32> to vector<1x32xf32>
    %202 = vector.broadcast %201 : vector<1x32xf32> to vector<3x32xf32>
    %203 = arith.mulf %199, %202 : vector<3x32xf32>
    %204 = arith.addf %198, %203 : vector<3x32xf32>
    %c3_153 = arith.constant 3 : index
    %c0_154 = arith.constant 0 : index
    %205 = vector.load %arg23[%c3_153, %c0_154] : memref<11x32xf32, #tpu.memory_space<vmem>>, vector<3x32xf32>
    %206 = vector.extract_strided_slice %168 {offsets = [3, 0, 0], sizes = [1, 1, 32], strides = [1, 1, 1]} : vector<9x1x32xf32> to vector<1x1x32xf32>
    %207 = vector.shape_cast %206 : vector<1x1x32xf32> to vector<1x32xf32>
    %208 = vector.broadcast %207 : vector<1x32xf32> to vector<3x32xf32>
    %209 = arith.mulf %205, %208 : vector<3x32xf32>
    %210 = arith.addf %204, %209 : vector<3x32xf32>
    %c4_155 = arith.constant 4 : index
    %c0_156 = arith.constant 0 : index
    %211 = vector.load %arg23[%c4_155, %c0_156] : memref<11x32xf32, #tpu.memory_space<vmem>>, vector<3x32xf32>
    %212 = vector.extract_strided_slice %168 {offsets = [4, 0, 0], sizes = [1, 1, 32], strides = [1, 1, 1]} : vector<9x1x32xf32> to vector<1x1x32xf32>
    %213 = vector.shape_cast %212 : vector<1x1x32xf32> to vector<1x32xf32>
    %214 = vector.broadcast %213 : vector<1x32xf32> to vector<3x32xf32>
    %215 = arith.mulf %211, %214 : vector<3x32xf32>
    %216 = arith.addf %210, %215 : vector<3x32xf32>
    %c5_157 = arith.constant 5 : index
    %c0_158 = arith.constant 0 : index
    %217 = vector.load %arg23[%c5_157, %c0_158] : memref<11x32xf32, #tpu.memory_space<vmem>>, vector<3x32xf32>
    %218 = vector.extract_strided_slice %168 {offsets = [5, 0, 0], sizes = [1, 1, 32], strides = [1, 1, 1]} : vector<9x1x32xf32> to vector<1x1x32xf32>
    %219 = vector.shape_cast %218 : vector<1x1x32xf32> to vector<1x32xf32>
    %220 = vector.broadcast %219 : vector<1x32xf32> to vector<3x32xf32>
    %221 = arith.mulf %217, %220 : vector<3x32xf32>
    %222 = arith.addf %216, %221 : vector<3x32xf32>
    %c6_159 = arith.constant 6 : index
    %c0_160 = arith.constant 0 : index
    %223 = vector.load %arg23[%c6_159, %c0_160] : memref<11x32xf32, #tpu.memory_space<vmem>>, vector<3x32xf32>
    %224 = vector.extract_strided_slice %168 {offsets = [6, 0, 0], sizes = [1, 1, 32], strides = [1, 1, 1]} : vector<9x1x32xf32> to vector<1x1x32xf32>
    %225 = vector.shape_cast %224 : vector<1x1x32xf32> to vector<1x32xf32>
    %226 = vector.broadcast %225 : vector<1x32xf32> to vector<3x32xf32>
    %227 = arith.mulf %223, %226 : vector<3x32xf32>
    %228 = arith.addf %222, %227 : vector<3x32xf32>
    %c7_161 = arith.constant 7 : index
    %c0_162 = arith.constant 0 : index
    %229 = vector.load %arg23[%c7_161, %c0_162] : memref<11x32xf32, #tpu.memory_space<vmem>>, vector<3x32xf32>
    %230 = vector.extract_strided_slice %168 {offsets = [7, 0, 0], sizes = [1, 1, 32], strides = [1, 1, 1]} : vector<9x1x32xf32> to vector<1x1x32xf32>
    %231 = vector.shape_cast %230 : vector<1x1x32xf32> to vector<1x32xf32>
    %232 = vector.broadcast %231 : vector<1x32xf32> to vector<3x32xf32>
    %233 = arith.mulf %229, %232 : vector<3x32xf32>
    %234 = arith.addf %228, %233 : vector<3x32xf32>
    %c8_163 = arith.constant 8 : index
    %c0_164 = arith.constant 0 : index
    %235 = vector.load %arg23[%c8_163, %c0_164] : memref<11x32xf32, #tpu.memory_space<vmem>>, vector<3x32xf32>
    %236 = vector.extract_strided_slice %168 {offsets = [8, 0, 0], sizes = [1, 1, 32], strides = [1, 1, 1]} : vector<9x1x32xf32> to vector<1x1x32xf32>
    %237 = vector.shape_cast %236 : vector<1x1x32xf32> to vector<1x32xf32>
    %238 = vector.broadcast %237 : vector<1x32xf32> to vector<3x32xf32>
    %239 = arith.mulf %235, %238 : vector<3x32xf32>
    %240 = arith.addf %234, %239 : vector<3x32xf32>
    %241 = vector.broadcast %170 : vector<1x32xf32> to vector<3x32xf32>
    %242 = arith.addf %240, %241 : vector<3x32xf32>
    %c4_165 = arith.constant 4 : index
    %c0_166 = arith.constant 0 : index
    %243 = vector.load %arg22[%c4_165, %c0_166] : memref<11x64xf32, #tpu.memory_space<vmem>>, vector<3x64xf32>
    %244 = arith.truncf %243 : vector<3x64xf32> to vector<3x64xbf16>
    %c0_167 = arith.constant 0 : index
    %c0_168 = arith.constant 0 : index
    %245 = vector.load %arg13[%c0_167, %c0_168] : memref<64x64xbf16, #tpu.memory_space<vmem>>, vector<64x64xbf16>
    %cst_169 = arith.constant dense<0.000000e+00> : vector<3x64xf32>
    %246 = tpu.matmul %244, %245, %cst_169 {dimension_numbers = #tpu.dot_dimension_numbers<[1], [0], [0], [1], [0, 0, 1, 1], [], []>} : vector<3x64xbf16>, vector<64x64xbf16>, vector<3x64xf32> -> vector<3x64xf32>
    %247 = arith.truncf %242 : vector<3x32xf32> to vector<3x32xbf16>
    %cst_170 = arith.constant dense<0.000000e+00> : vector<3x64xf32>
    %248 = tpu.matmul %247, %172, %cst_170 {dimension_numbers = #tpu.dot_dimension_numbers<[1], [0], [0], [1], [0, 0, 1, 1], [], []>} : vector<3x32xbf16>, vector<32x64xbf16>, vector<3x64xf32> -> vector<3x64xf32>
    %249 = arith.addf %246, %248 : vector<3x64xf32>
    %250 = vector.broadcast %174 : vector<1x64xf32> to vector<3x64xf32>
    %251 = arith.addf %249, %250 : vector<3x64xf32>
    %cst_171 = arith.constant 0.000000e+00 : f32
    %252 = vector.broadcast %cst_171 : f32 to vector<3x64xf32>
    %253 = arith.maximumf %251, %252 : vector<3x64xf32>
    %c4_172 = arith.constant 4 : index
    %c0_173 = arith.constant 0 : index
    %254 = vector.load %arg3[%c4_172, %c0_173] : memref<11x1xf32, #tpu.memory_space<vmem>>, vector<3x1xf32>
    %255 = vector.broadcast %254 : vector<3x1xf32> to vector<3x64xf32>
    %256 = arith.mulf %253, %255 : vector<3x64xf32>
    %c4_174 = arith.constant 4 : index
    %c0_175 = arith.constant 0 : index
    %257 = vector.load %arg22[%c4_174, %c0_175] : memref<11x64xf32, #tpu.memory_space<vmem>>, vector<3x64xf32>
    tpu.vector_store %arg22[%c4_174, %c0_175], %256 {strides = array<i32>} : memref<11x64xf32, #tpu.memory_space<vmem>>, vector<3x64xf32>,
    %c4_176 = arith.constant 4 : index
    %c0_177 = arith.constant 0 : index
    %258 = vector.load %arg22[%c4_176, %c0_177] : memref<11x64xf32, #tpu.memory_space<vmem>>, vector<3x64xf32>
    %259 = arith.truncf %258 : vector<3x64xf32> to vector<3x64xbf16>
    %c0_178 = arith.constant 0 : index
    %c0_179 = arith.constant 0 : index
    %c0_180 = arith.constant 0 : index
    %260 = vector.load %arg20[%c0_178, %c0_179, %c0_180] : memref<1x3x64xbf16, #tpu.memory_space<vmem>>, vector<1x3x64xbf16>
    %261 = vector.shape_cast %260 : vector<1x3x64xbf16> to vector<3x64xbf16>
    %262 = vector.shape_cast %259 : vector<3x64xbf16> to vector<1x3x64xbf16>
    tpu.vector_store %arg20[%c0_178, %c0_179, %c0_180], %262 {strides = array<i32>} : memref<1x3x64xbf16, #tpu.memory_space<vmem>>, vector<1x3x64xbf16>,
    return
  }
  func.func @transform_0(%arg0: i32) -> (i32, i32, i32) {
    %c0_i32 = arith.constant 0 : i32
    %c0_i32_0 = arith.constant 0 : i32
    %c0_i32_1 = arith.constant 0 : i32
    return %arg0, %c0_i32, %c0_i32_0 : i32, i32, i32
  }
  func.func @transform_1(%arg0: i32) -> (i32, i32) {
    %c0_i32 = arith.constant 0 : i32
    %c0_i32_0 = arith.constant 0 : i32
    %c0_i32_1 = arith.constant 0 : i32
    return %c0_i32, %c0_i32_0 : i32, i32
  }
  func.func @transform_2(%arg0: i32) -> (i32, i32) {
    %c0_i32 = arith.constant 0 : i32
    %c0_i32_0 = arith.constant 0 : i32
    %c0_i32_1 = arith.constant 0 : i32
    return %c0_i32, %c0_i32_0 : i32, i32
  }
  func.func @transform_3(%arg0: i32) -> (i32, i32, i32) {
    %c0_i32 = arith.constant 0 : i32
    %c0_i32_0 = arith.constant 0 : i32
    %c0_i32_1 = arith.constant 0 : i32
    %c0_i32_2 = arith.constant 0 : i32
    return %c0_i32, %c0_i32_0, %c0_i32_1 : i32, i32, i32
  }
  func.func @transform_4(%arg0: i32) -> (i32, i32) {
    %c0_i32 = arith.constant 0 : i32
    %c0_i32_0 = arith.constant 0 : i32
    %c0_i32_1 = arith.constant 0 : i32
    return %c0_i32, %c0_i32_0 : i32, i32
  }
  func.func @transform_5(%arg0: i32) -> (i32, i32) {
    %c0_i32 = arith.constant 0 : i32
    %c0_i32_0 = arith.constant 0 : i32
    %c0_i32_1 = arith.constant 0 : i32
    return %c0_i32, %c0_i32_0 : i32, i32
  }
  func.func @transform_6(%arg0: i32) -> (i32, i32) {
    %c0_i32 = arith.constant 0 : i32
    %c0_i32_0 = arith.constant 0 : i32
    %c0_i32_1 = arith.constant 0 : i32
    return %c0_i32, %c0_i32_0 : i32, i32
  }
  func.func @transform_7(%arg0: i32) -> (i32, i32, i32) {
    %c0_i32 = arith.constant 0 : i32
    %c0_i32_0 = arith.constant 0 : i32
    %c0_i32_1 = arith.constant 0 : i32
    %c0_i32_2 = arith.constant 0 : i32
    return %c0_i32, %c0_i32_0, %c0_i32_1 : i32, i32, i32
  }
  func.func @transform_8(%arg0: i32) -> (i32, i32) {
    %c0_i32 = arith.constant 0 : i32
    %c0_i32_0 = arith.constant 0 : i32
    %c0_i32_1 = arith.constant 0 : i32
    return %c0_i32, %c0_i32_0 : i32, i32
  }
  func.func @transform_9(%arg0: i32) -> (i32, i32) {
    %c0_i32 = arith.constant 0 : i32
    %c0_i32_0 = arith.constant 0 : i32
    %c0_i32_1 = arith.constant 0 : i32
    return %c0_i32, %c0_i32_0 : i32, i32
  }
  func.func @transform_10(%arg0: i32) -> (i32, i32) {
    %c0_i32 = arith.constant 0 : i32
    %c0_i32_0 = arith.constant 0 : i32
    %c0_i32_1 = arith.constant 0 : i32
    return %c0_i32, %c0_i32_0 : i32, i32
  }
  func.func @transform_11(%arg0: i32) -> (i32, i32) {
    %c0_i32 = arith.constant 0 : i32
    %c0_i32_0 = arith.constant 0 : i32
    %c0_i32_1 = arith.constant 0 : i32
    return %c0_i32, %c0_i32_0 : i32, i32
  }
  func.func @transform_12(%arg0: i32) -> (i32, i32) {
    %c0_i32 = arith.constant 0 : i32
    %c0_i32_0 = arith.constant 0 : i32
    %c0_i32_1 = arith.constant 0 : i32
    return %c0_i32, %c0_i32_0 : i32, i32
  }
  func.func @transform_13(%arg0: i32) -> (i32, i32, i32) {
    %c0_i32 = arith.constant 0 : i32
    %c0_i32_0 = arith.constant 0 : i32
    %c0_i32_1 = arith.constant 0 : i32
    %c0_i32_2 = arith.constant 0 : i32
    return %c0_i32, %c0_i32_0, %c0_i32_1 : i32, i32, i32
  }
  func.func @transform_14(%arg0: i32) -> (i32, i32, i32) {
    %c0_i32 = arith.constant 0 : i32
    %c0_i32_0 = arith.constant 0 : i32
    %c0_i32_1 = arith.constant 0 : i32
    %c0_i32_2 = arith.constant 0 : i32
    return %c0_i32, %c0_i32_0, %c0_i32_1 : i32, i32, i32
  }
  func.func @transform_15(%arg0: i32) -> (i32, i32, i32, i32) {
    %c0_i32 = arith.constant 0 : i32
    %c0_i32_0 = arith.constant 0 : i32
    %c0_i32_1 = arith.constant 0 : i32
    %c0_i32_2 = arith.constant 0 : i32
    %c0_i32_3 = arith.constant 0 : i32
    return %c0_i32, %c0_i32_0, %c0_i32_1, %c0_i32_2 : i32, i32, i32, i32
  }
  func.func @transform_16(%arg0: i32) -> (i32, i32, i32) {
    %c0_i32 = arith.constant 0 : i32
    %c0_i32_0 = arith.constant 0 : i32
    %c0_i32_1 = arith.constant 0 : i32
    %c0_i32_2 = arith.constant 0 : i32
    return %c0_i32, %c0_i32_0, %c0_i32_1 : i32, i32, i32
  }
  func.func @transform_17(%arg0: i32) -> (i32, i32, i32) {
    %c0_i32 = arith.constant 0 : i32
    %c0_i32_0 = arith.constant 0 : i32
    %c0_i32_1 = arith.constant 0 : i32
    %c0_i32_2 = arith.constant 0 : i32
    return %c0_i32, %c0_i32_0, %c0_i32_1 : i32, i32, i32
  }
  func.func @transform_18(%arg0: i32) -> (i32, i32, i32) {
    %c0_i32 = arith.constant 0 : i32
    %c0_i32_0 = arith.constant 0 : i32
    %c0_i32_1 = arith.constant 0 : i32
    %c0_i32_2 = arith.constant 0 : i32
    return %c0_i32, %c0_i32_0, %c0_i32_1 : i32, i32, i32
  }
  func.func @transform_19(%arg0: i32) -> (i32, i32, i32) {
    %c0_i32 = arith.constant 0 : i32
    %c0_i32_0 = arith.constant 0 : i32
    %c0_i32_1 = arith.constant 0 : i32
    return %arg0, %c0_i32, %c0_i32_0 : i32, i32, i32
  }
}

module attributes {stable_mosaic.version = 11 : i64} {
  func.func @head_kernel(%arg0: i32, %arg1: memref<1x1x64xbf16, #tpu.memory_space<vmem>>, %arg2: memref<64x128xbf16, #tpu.memory_space<vmem>>, %arg3: memref<1x128xf32, #tpu.memory_space<vmem>>, %arg4: memref<128x128xf32, #tpu.memory_space<vmem>>, %arg5: memref<1x128xf32, #tpu.memory_space<vmem>>, %arg6: memref<1x1x128xf32, #tpu.memory_space<vmem>>) attributes {dimension_semantics = [#tpu.dimension_semantics<parallel>], iteration_bounds = array<i64: 2>, scalar_prefetch = 0 : i64, scratch_operands = 0 : i64, tpu.core_type = #tpu.core_type<tc>, window_params = [{transform_indices = @transform_0, window_bounds = array<i64: 1, 1, 64>}, {pipeline_mode = #tpu.pipeline_mode<synchronous>, transform_indices = @transform_1, window_bounds = array<i64: 64, 128>}, {pipeline_mode = #tpu.pipeline_mode<synchronous>, transform_indices = @transform_2, window_bounds = array<i64: 1, 128>}, {pipeline_mode = #tpu.pipeline_mode<synchronous>, transform_indices = @transform_3, window_bounds = array<i64: 128, 128>}, {pipeline_mode = #tpu.pipeline_mode<synchronous>, transform_indices = @transform_4, window_bounds = array<i64: 1, 128>}, {transform_indices = @transform_5, window_bounds = array<i64: 1, 1, 128>}]} {
    %c0 = arith.constant 0 : index
    %c0_0 = arith.constant 0 : index
    %c0_1 = arith.constant 0 : index
    %0 = vector.load %arg1[%c0, %c0_0, %c0_1] : memref<1x1x64xbf16, #tpu.memory_space<vmem>>, vector<1x1x64xbf16>
    %1 = vector.shape_cast %0 : vector<1x1x64xbf16> to vector<1x64xbf16>
    %c0_2 = arith.constant 0 : index
    %c0_3 = arith.constant 0 : index
    %2 = vector.load %arg2[%c0_2, %c0_3] : memref<64x128xbf16, #tpu.memory_space<vmem>>, vector<64x128xbf16>
    %cst = arith.constant dense<0.000000e+00> : vector<1x128xf32>
    %3 = tpu.matmul %1, %2, %cst {dimension_numbers = #tpu.dot_dimension_numbers<[1], [0], [0], [1], [0, 0, 1, 1], [], []>} : vector<1x64xbf16>, vector<64x128xbf16>, vector<1x128xf32> -> vector<1x128xf32>
    %c0_4 = arith.constant 0 : index
    %c0_5 = arith.constant 0 : index
    %4 = vector.load %arg3[%c0_4, %c0_5] : memref<1x128xf32, #tpu.memory_space<vmem>>, vector<1x128xf32>
    %5 = arith.addf %3, %4 : vector<1x128xf32>
    %cst_6 = arith.constant 0.000000e+00 : f32
    %6 = vector.broadcast %cst_6 : f32 to vector<1x128xf32>
    %7 = arith.maximumf %5, %6 : vector<1x128xf32>
    %cst_7 = arith.constant dense<0.000000e+00> : vector<128xf32>
    %8 = vector.multi_reduction <add>, %7, %cst_7 [0] : vector<1x128xf32> to vector<128xf32>
    %9 = vector.shape_cast %8 : vector<128xf32> to vector<1x128xf32>
    %cst_8 = arith.constant 1.000000e+00 : f32
    %10 = vector.broadcast %cst_8 : f32 to vector<1x128xf32>
    %11 = arith.mulf %9, %10 : vector<1x128xf32>
    %c0_9 = arith.constant 0 : index
    %c0_10 = arith.constant 0 : index
    %12 = vector.load %arg4[%c0_9, %c0_10] : memref<128x128xf32, #tpu.memory_space<vmem>>, vector<128x128xf32>
    %cst_11 = arith.constant dense<0.000000e+00> : vector<1x128xf32>
    %13 = tpu.matmul %11, %12, %cst_11 {dimension_numbers = #tpu.dot_dimension_numbers<[1], [0], [0], [1], [0, 0, 1, 1], [], []>} : vector<1x128xf32>, vector<128x128xf32>, vector<1x128xf32> -> vector<1x128xf32>
    %c0_12 = arith.constant 0 : index
    %c0_13 = arith.constant 0 : index
    %14 = vector.load %arg5[%c0_12, %c0_13] : memref<1x128xf32, #tpu.memory_space<vmem>>, vector<1x128xf32>
    %15 = arith.addf %13, %14 : vector<1x128xf32>
    %c0_14 = arith.constant 0 : index
    %c0_15 = arith.constant 0 : index
    %c0_16 = arith.constant 0 : index
    %16 = vector.load %arg6[%c0_14, %c0_15, %c0_16] : memref<1x1x128xf32, #tpu.memory_space<vmem>>, vector<1x1x128xf32>
    %17 = vector.shape_cast %16 : vector<1x1x128xf32> to vector<1x128xf32>
    %18 = vector.shape_cast %15 : vector<1x128xf32> to vector<1x1x128xf32>
    tpu.vector_store %arg6[%c0_14, %c0_15, %c0_16], %18 {strides = array<i32>} : memref<1x1x128xf32, #tpu.memory_space<vmem>>, vector<1x1x128xf32>,
    return
  }
  func.func @transform_0(%arg0: i32) -> (i32, i32, i32) {
    %c0_i32 = arith.constant 0 : i32
    %c0_i32_0 = arith.constant 0 : i32
    %c0_i32_1 = arith.constant 0 : i32
    return %arg0, %c0_i32, %c0_i32_0 : i32, i32, i32
  }
  func.func @transform_1(%arg0: i32) -> (i32, i32) {
    %c0_i32 = arith.constant 0 : i32
    %c0_i32_0 = arith.constant 0 : i32
    %c0_i32_1 = arith.constant 0 : i32
    return %c0_i32, %c0_i32_0 : i32, i32
  }
  func.func @transform_2(%arg0: i32) -> (i32, i32) {
    %c0_i32 = arith.constant 0 : i32
    %c0_i32_0 = arith.constant 0 : i32
    %c0_i32_1 = arith.constant 0 : i32
    return %c0_i32, %c0_i32_0 : i32, i32
  }
  func.func @transform_3(%arg0: i32) -> (i32, i32) {
    %c0_i32 = arith.constant 0 : i32
    %c0_i32_0 = arith.constant 0 : i32
    %c0_i32_1 = arith.constant 0 : i32
    return %c0_i32, %c0_i32_0 : i32, i32
  }
  func.func @transform_4(%arg0: i32) -> (i32, i32) {
    %c0_i32 = arith.constant 0 : i32
    %c0_i32_0 = arith.constant 0 : i32
    %c0_i32_1 = arith.constant 0 : i32
    return %c0_i32, %c0_i32_0 : i32, i32
  }
  func.func @transform_5(%arg0: i32) -> (i32, i32, i32) {
    %c0_i32 = arith.constant 0 : i32
    %c0_i32_0 = arith.constant 0 : i32
    %c0_i32_1 = arith.constant 0 : i32
    return %arg0, %c0_i32, %c0_i32_0 : i32, i32, i32
  }
}

</mosaic_0001>

<llo_original>
// kernel: _lambda_.5
$region0: #{_lambda_.5}
  #allocation0 [shape = 'u32[]', space=smem, size = 0x4, offset = 0x4, fixed_abs, tag = 'smem constant byte address 0x4 - core index']
  #allocation1 [shape = 'u32[72,128]{1,0:T(1,128)}', space=vmem, size = 0x9000, scoped, tag = 'internal scratch']
  #allocation2 [shape = 'f32[328,8]{1,0:T(8,128)}', space=vmem, size = 0x29000, scoped, tag = 'scratch operand']
  %s0 = inlined_call_operand.vmem [shape: bf16[2,328,27], index: 0, kind: input, shape index: {}]
  %s1 = inlined_call_operand.vmem [shape: f32[328,1], index: 1, kind: input, shape index: {}]
  %s2 = inlined_call_operand.vmem [shape: bf16[27,8], index: 2, kind: input, shape index: {}]
  %s3 = inlined_call_operand.vmem [shape: f32[1,8], index: 3, kind: input, shape index: {}]
  %s4 = inlined_call_operand.vmem [shape: bf16[2,72,8], index: 4, kind: output, shape index: {}]
  %s5 = sld [smem:[#allocation0]]
  $region49: #{_lambda_.5} parent=0
    _
  %s7 = ssub.s32 1, %s5
  %s8 = scalar_select 0, %s7, %s5
  loop: start=0, step=1, limit=4
  $region2: #{_lambda_.5} parent=0 // loop_pre_header
    _
  $region3: #{_lambda_.5} parent=0 // loop_header
    %s10 = sphi 0, %s14
    %p11 = scmp.ge.s32.totalorder %s10, 4
    %s20 = sphi 0, %s22
    %s23 = sphi 0, %s20
    %s24 = sphi 0, %s23
    %s40 = sphi 0, %s24
    %s44 = sphi 0, %s44
    %s46 = sphi 0, %s44
    %s47 = sphi 0, %s46
    %s61 = sphi 0, %s47
    %s65 = sphi 0, %s65
    %s67 = sphi 0, %s65
    %s68 = sphi 0, %s67
    %s82 = sphi 0, %s68
    %s86 = sphi 0, %s86
    %s88 = sphi 0, %s86
    %s89 = sphi 0, %s88
    %s103 = sphi 0, %s89
    %s109 = sphi 0, %s111
    %s112 = sphi 0, %s109
    %s113 = sphi 0, %s112
    %s129 = sphi 0, %s113
  $region4: #{_lambda_.5} parent=0 // loop_header_branch
    %13 = sbr.rel (%p11) target = $region8
  $region5: #{_lambda_.5} parent=0 // loop_body
    %s15 = ssub.s32 %s10, 1
    %s16 = ssub.s32 %s10, 2
    %s17 = sadd.s32 %s10, 1
    %s18 = ssub.s32 %s10, %s17
    %p19 = scmp.eq.s32.totalorder %s18, 0
    %s21 = sadd.s32 %s20, 1
    %s22 = scalar_select %p19, %s20, %s21
    %p25 = pneg %p19
    %p26 = scmp.eq.s32.totalorder %s10, 1
    %p27 = por %p25, %p26
    %p28 = scmp.ne.s32.totalorder %s20, %s23
    %p29 = scmp.eq.s32.totalorder %s10, 0
    %p30 = por %p28, %p29
    %p31 = scmp.ne.s32.totalorder %s20, %s23
    %p32 = scmp.eq.s32.totalorder %s15, 1
    %p33 = por %p31, %p32
    %p34 = scmp.ne.s32.totalorder %s23, %s24
    %p35 = scmp.eq.s32.totalorder %s15, 0
    %p36 = por %p34, %p35
    %p37 = scmp.ne.s32.totalorder %s23, %s24
    %p38 = scmp.eq.s32.totalorder %s16, 1
    %p39 = por %p37, %p38
    %p41 = scmp.ne.s32.totalorder %s24, %s40
    %p42 = scmp.eq.s32.totalorder %s16, 0
    %p43 = por %p41, %p42
    %s45 = sadd.s32 %s44, 1
    %p48 = scmp.eq.s32.totalorder %s10, 1
    %p49 = scmp.ne.s32.totalorder %s44, %s46
    %p50 = scmp.eq.s32.totalorder %s10, 0
    %p51 = por %p49, %p50
    %p52 = scmp.ne.s32.totalorder %s44, %s46
    %p53 = scmp.eq.s32.totalorder %s15, 1
    %p54 = por %p52, %p53
    %p55 = scmp.ne.s32.totalorder %s46, %s47
    %p56 = scmp.eq.s32.totalorder %s15, 0
    %p57 = por %p55, %p56
    %p58 = scmp.ne.s32.totalorder %s46, %s47
    %p59 = scmp.eq.s32.totalorder %s16, 1
    %p60 = por %p58, %p59
    %p62 = scmp.ne.s32.totalorder %s47, %s61
    %p63 = scmp.eq.s32.totalorder %s16, 0
    %p64 = por %p62, %p63
    %s66 = sadd.s32 %s65, 1
    %p69 = scmp.eq.s32.totalorder %s10, 1
    %p70 = scmp.ne.s32.totalorder %s65, %s67
    %p71 = scmp.eq.s32.totalorder %s10, 0
    %p72 = por %p70, %p71
    %p73 = scmp.ne.s32.totalorder %s65, %s67
    %p74 = scmp.eq.s32.totalorder %s15, 1
    %p75 = por %p73, %p74
    %p76 = scmp.ne.s32.totalorder %s67, %s68
    %p77 = scmp.eq.s32.totalorder %s15, 0
    %p78 = por %p76, %p77
    %p79 = scmp.ne.s32.totalorder %s67, %s68
    %p80 = scmp.eq.s32.totalorder %s16, 1
    %p81 = por %p79, %p80
    %p83 = scmp.ne.s32.totalorder %s68, %s82
    %p84 = scmp.eq.s32.totalorder %s16, 0
    %p85 = por %p83, %p84
    %s87 = sadd.s32 %s86, 1
    %p90 = scmp.eq.s32.totalorder %s10, 1
    %p91 = scmp.ne.s32.totalorder %s86, %s88
    %p92 = scmp.eq.s32.totalorder %s10, 0
    %p93 = por %p91, %p92
    %p94 = scmp.ne.s32.totalorder %s86, %s88
    %p95 = scmp.eq.s32.totalorder %s15, 1
    %p96 = por %p94, %p95
    %p97 = scmp.ne.s32.totalorder %s88, %s89
    %p98 = scmp.eq.s32.totalorder %s15, 0
    %p99 = por %p97, %p98
    %p100 = scmp.ne.s32.totalorder %s88, %s89
    %p101 = scmp.eq.s32.totalorder %s16, 1
    %p102 = por %p100, %p101
    %p104 = scmp.ne.s32.totalorder %s89, %s103
    %p105 = scmp.eq.s32.totalorder %s16, 0
    %p106 = por %p104, %p105
    %s107 = ssub.s32 %s10, %s17
    %p108 = scmp.eq.s32.totalorder %s107, 0
    %s110 = sadd.s32 %s109, 1
    %s111 = scalar_select %p108, %s109, %s110
    %p114 = pneg %p108
    %p115 = scmp.eq.s32.totalorder %s10, 1
    %p116 = por %p114, %p115
    %p117 = scmp.ne.s32.totalorder %s109, %s112
    %p118 = scmp.eq.s32.totalorder %s10, 0
    %p119 = por %p117, %p118
    %p120 = scmp.ne.s32.totalorder %s109, %s112
    %p121 = scmp.eq.s32.totalorder %s15, 1
    %p122 = por %p120, %p121
    %p123 = scmp.ne.s32.totalorder %s112, %s113
    %p124 = scmp.eq.s32.totalorder %s15, 0
    %p125 = por %p123, %p124
    %p126 = scmp.ne.s32.totalorder %s112, %s113
    %p127 = scmp.eq.s32.totalorder %s16, 1
    %p128 = por %p126, %p127
    %p130 = scmp.ne.s32.totalorder %s113, %s129
    %p131 = scmp.eq.s32.totalorder %s16, 0
    %p132 = por %p130, %p131
    %p133 = scmp.le.s32.totalorder 1, %s10
    %p134 = scmp.lt.s32.totalorder %s10, 3
    %p135 = pnand %p133, %p134
    %p136 = pneg %p135
    // Predicated region
    $region9: #{_lambda_.5} parent=5 // pred_check
      _
    $region10: #{_lambda_.5} parent=5 // pred_check_branch
      %138 = sbr.rel (%p135) target = $region12
    $region11: #{_lambda_.5} parent=5 // pred_region
      %s139 = ssub.s32 %s10, 1
      // Predicated region
      $region13: #{_lambda_.5} parent=11 // pred_check
        %p140 = pneg %p57
      $region14: #{_lambda_.5} parent=11 // pred_check_branch
        %142 = sbr.rel (%p140) target = $region16
      $region15: #{_lambda_.5} parent=11 // pred_region
        _
      $region16: #{_lambda_.5} parent=11 // pred_fallthru
        _
      // Predicated region
      $region17: #{_lambda_.5} parent=11 // pred_check
        %p143 = pneg %p78
      $region18: #{_lambda_.5} parent=11 // pred_check_branch
        %145 = sbr.rel (%p143) target = $region20
      $region19: #{_lambda_.5} parent=11 // pred_region
        _
      $region20: #{_lambda_.5} parent=11 // pred_fallthru
        _
      // Predicated region
      $region21: #{_lambda_.5} parent=11 // pred_check
        %p146 = pneg %p99
      $region22: #{_lambda_.5} parent=11 // pred_check_branch
        %148 = sbr.rel (%p146) target = $region24
      $region23: #{_lambda_.5} parent=11 // pred_region
        _
      $region24: #{_lambda_.5} parent=11 // pred_fallthru
        _
    $region12: #{_lambda_.5} parent=5 // pred_fallthru
      _
    %p149 = scmp.lt.s32.totalorder %s10, 2
    // Predicated region
    $region25: #{_lambda_.5} parent=5 // pred_check
      %p150 = pneg %p149
    $region26: #{_lambda_.5} parent=5 // pred_check_branch
      %152 = sbr.rel (%p150) target = $region28
    $region27: #{_lambda_.5} parent=5 // pred_region
      // Predicated region
      $region29: #{_lambda_.5} parent=27 // pred_check
        %p153 = pneg %p30
      $region30: #{_lambda_.5} parent=27 // pred_check_branch
        %155 = sbr.rel (%p153) target = $region32
      $region31: #{_lambda_.5} parent=27 // pred_region
        %p156 = scmp.lt.s32.totalorder %s10, 1
        %s157 = scalar_select %p156, %s10, 1
        %s158 = smul.addr %s157, 41
        %s159 = smul.addr %s158, 4
        %s160 = scalar_lea.vmem %s0, %s159
      $region32: #{_lambda_.5} parent=27 // pred_fallthru
        _
    $region28: #{_lambda_.5} parent=5 // pred_fallthru
      _
    %p161 = scmp.le.s32.totalorder 1, %s10
    %p162 = scmp.lt.s32.totalorder %s10, 3
    %p163 = pnand %p161, %p162
    %p164 = pneg %p163
    // Predicated region
    $region33: #{_lambda_.5} parent=5 // pred_check
      _
    $region34: #{_lambda_.5} parent=5 // pred_check_branch
      %166 = sbr.rel (%p163) target = $region36
    $region35: #{_lambda_.5} parent=5 // pred_region
      %s167 = ssub.s32 %s10, 1
      %p168 = scmp.lt.s32.totalorder %s15, 1
      %s169 = scalar_select %p168, %s15, 1
      %s170 = smul.addr %s169, 41
      %s171 = smul.addr %s170, 4
      %s172 = scalar_lea.vmem %s0, %s171
      %p173 = pneg %p36
      %p174 = pneg %p33
      %p175 = pneg %p57
      %p176 = pneg %p54
      %p177 = pneg %p78
      %p178 = pneg %p75
      %p179 = pneg %p99
      %p180 = pneg %p96
      %p181 = pneg %p125
      %p182 = pneg %p122
      %p183 = scmp.lt.s32.totalorder %s15, 1
      %s184 = scalar_select %p183, %s15, 1
      %s185 = smul.addr %s184, 9
      %s186 = smul.addr %s185, 4
      %s187 = scalar_lea.vmem %s4, %s186
      %p188 = scmp.lt.s32.totalorder %s15, 1
      %s189 = scalar_select %p188, %s15, 1
      %s190 = smul.addr %s189, 41
      %s191 = smul.addr %s190, 4
      %s192 = scalar_lea.vmem %s0, %s191
      %p193 = scmp.lt.s32.totalorder %s15, 1
      %s194 = scalar_select %p193, %s15, 1
      %s195 = smul.addr %s194, 9
      %s196 = smul.addr %s195, 4
      %s197 = scalar_lea.vmem %s4, %s196
      %v199 = vld [vmem:[%s192] sm:$0xf]
      %v200 = vld [vmem:[%s192 + $0x4] sm:$0xf]
      %v201 = vld [vmem:[%s192 + $0x8] sm:$0xf]
      %v202 = vld [vmem:[%s192 + $0xc] sm:$0xf]
      %v203 = vld [vmem:[%s192 + $0x10] sm:$0xf]
      %v204 = vld [vmem:[%s192 + $0x14] sm:$0xf]
      %v205 = vld [vmem:[%s192 + $0x18] sm:$0xf]
      %v206 = vld [vmem:[%s192 + $0x1c] sm:$0xf]
      %v207 = vld [vmem:[%s192 + $0x20] sm:$0xf]
      %v208 = vld [vmem:[%s192 + $0x24] sm:$0xf]
      %v209 = vld [vmem:[%s192 + $0x28] sm:$0xf]
      %v210 = vld [vmem:[%s192 + $0x2c] sm:$0xf]
      %v211 = vld [vmem:[%s192 + $0x30] sm:$0xf]
      %v212 = vld [vmem:[%s192 + $0x34] sm:$0xf]
      %v213 = vld [vmem:[%s192 + $0x38] sm:$0xf]
      %v214 = vld [vmem:[%s192 + $0x3c] sm:$0xf]
      %v215 = vld [vmem:[%s192 + $0x40] sm:$0xf]
      %v216 = vld [vmem:[%s192 + $0x44] sm:$0xf]
      %v217 = vld [vmem:[%s192 + $0x48] sm:$0xf]
      %v218 = vld [vmem:[%s192 + $0x4c] sm:$0xf]
      %v219 = vld [vmem:[%s192 + $0x50] sm:$0xf]
      %v220 = vld [vmem:[%s192 + $0x54] sm:$0xf]
      %v221 = vld [vmem:[%s192 + $0x58] sm:$0xf]
      %v222 = vld [vmem:[%s192 + $0x5c] sm:$0xf]
      %v223 = vld [vmem:[%s192 + $0x60] sm:$0xf]
      %v224 = vld [vmem:[%s192 + $0x64] sm:$0xf]
      %v225 = vld [vmem:[%s192 + $0x68] sm:$0xf]
      %v226 = vld [vmem:[%s192 + $0x6c] sm:$0xf]
      %v227 = vld [vmem:[%s192 + $0x70] sm:$0xf]
      %v228 = vld [vmem:[%s192 + $0x74] sm:$0xf]
      %v229 = vld [vmem:[%s192 + $0x78] sm:$0xf]
      %v230 = vld [vmem:[%s192 + $0x7c] sm:$0xf]
      %v231 = vld [vmem:[%s192 + $0x80] sm:$0xf]
      %v232 = vld [vmem:[%s192 + $0x84] sm:$0xf]
      %v233 = vld [vmem:[%s192 + $0x88] sm:$0xf]
      %v234 = vld [vmem:[%s192 + $0x8c] sm:$0xf]
      %v235 = vld [vmem:[%s192 + $0x90] sm:$0xf]
      %v236 = vld [vmem:[%s192 + $0x94] sm:$0xf]
      %v237 = vld [vmem:[%s192 + $0x98] sm:$0xf]
      %v238 = vld [vmem:[%s192 + $0x9c] sm:$0xf]
      %v239 = vld [vmem:[%s192 + $0xa0] sm:$0xf]
      %v240 = vld [vmem:[%s2] sm:$0xf]
      %v241 = vld [vmem:[%s2 + $0x4] sm:$0xf]
      %v242 = vld [vmem:[%s2 + $0x8] sm:$0xf]
      %v243 = vld [vmem:[%s2 + $0xc] sm:$0x3]
      %v244 = vld [vmem:[%s3] sm:$0x1]
      %v246 = vperm.slane %v244, 0
      %v289 = vunpack.c.l.b16 %v199
      %v290 = vunpack.c.l.b16 %v200
      %v291 = vunpack.c.l.b16 %v201
      %v292 = vunpack.c.l.b16 %v202
      %v293 = vunpack.c.l.b16 %v203
      %v294 = vunpack.c.l.b16 %v204
      %v295 = vunpack.c.l.b16 %v205
      %v296 = vunpack.c.l.b16 %v206
      %v297 = vunpack.c.l.b16 %v207
      %v298 = vunpack.c.l.b16 %v208
      %v299 = vunpack.c.l.b16 %v209
      %v300 = vunpack.c.l.b16 %v210
      %v301 = vunpack.c.l.b16 %v211
      %v302 = vunpack.c.l.b16 %v212
      %v303 = vunpack.c.l.b16 %v213
      %v304 = vunpack.c.l.b16 %v214
      %v305 = vunpack.c.l.b16 %v215
      %v306 = vunpack.c.l.b16 %v216
      %v307 = vunpack.c.l.b16 %v217
      %v308 = vunpack.c.l.b16 %v218
      %v309 = vunpack.c.l.b16 %v219
      %v310 = vunpack.c.l.b16 %v220
      %v311 = vunpack.c.l.b16 %v221
      %v312 = vunpack.c.l.b16 %v222
      %v313 = vunpack.c.l.b16 %v223
      %v314 = vunpack.c.l.b16 %v224
      %v315 = vunpack.c.l.b16 %v225
      %v316 = vunpack.c.l.b16 %v226
      %v317 = vunpack.c.l.b16 %v227
      %v318 = vunpack.c.l.b16 %v228
      %v319 = vunpack.c.l.b16 %v229
      %v320 = vunpack.c.l.b16 %v230
      %v321 = vunpack.c.l.b16 %v231
      %v322 = vunpack.c.l.b16 %v232
      %v323 = vunpack.c.l.b16 %v233
      %v324 = vunpack.c.l.b16 %v234
      %v325 = vunpack.c.l.b16 %v235
      %v326 = vunpack.c.l.b16 %v236
      %v327 = vunpack.c.l.b16 %v237
      %v328 = vunpack.c.l.b16 %v238
      %v329 = vunpack.c.l.b16 %v239
      %v330 = vpack.c.b16 %v290, %v289
      %v331 = vpack.c.b16 %v292, %v291
      %v332 = vpack.c.b16 %v294, %v293
      %v333 = vpack.c.b16 %v296, %v295
      %v334 = vpack.c.b16 %v298, %v297
      %v335 = vpack.c.b16 %v300, %v299
      %v336 = vpack.c.b16 %v302, %v301
      %v337 = vpack.c.b16 %v304, %v303
      %v338 = vpack.c.b16 %v306, %v305
      %v339 = vpack.c.b16 %v308, %v307
      %v340 = vpack.c.b16 %v310, %v309
      %v341 = vpack.c.b16 %v312, %v311
      %v342 = vpack.c.b16 %v314, %v313
      %v343 = vpack.c.b16 %v316, %v315
      %v344 = vpack.c.b16 %v318, %v317
      %v345 = vpack.c.b16 %v320, %v319
      %v346 = vpack.c.b16 %v322, %v321
      %v347 = vpack.c.b16 %v324, %v323
      %v348 = vpack.c.b16 %v326, %v325
      %v349 = vpack.c.b16 %v328, %v327
      %v350 = vpack.c.b16 %v329, %v329
      %v355 = vunpack.c.l.b16 %v240
      %v356 = vunpack.c.l.b16 %v241
      %v357 = vunpack.c.l.b16 %v242
      %v358 = vunpack.c.l.b16 %v243
      %v359 = vpack.c.b16 %v356, %v355
      %v360 = vpack.c.b16 %v358, %v357
      %vm362 = vcmask 220160
      %v364 = vsel %vm362, %v330, 0
      %v367 = vsel %vm362, %v331, 0
      %v370 = vsel %vm362, %v332, 0
      %v373 = vsel %vm362, %v333, 0
      %v376 = vsel %vm362, %v334, 0
      %v379 = vsel %vm362, %v335, 0
      %v382 = vsel %vm362, %v336, 0
      %v385 = vsel %vm362, %v337, 0
      %v388 = vsel %vm362, %v338, 0
      %v391 = vsel %vm362, %v339, 0
      %v394 = vsel %vm362, %v340, 0
      %v397 = vsel %vm362, %v341, 0
      %v400 = vsel %vm362, %v342, 0
      %v403 = vsel %vm362, %v343, 0
      %v406 = vsel %vm362, %v344, 0
      %v409 = vsel %vm362, %v345, 0
      %v412 = vsel %vm362, %v346, 0
      %v415 = vsel %vm362, %v347, 0
      %v418 = vsel %vm362, %v348, 0
      %v421 = vsel %vm362, %v349, 0
      %v424 = vsel %vm362, %v350, 0
      %vm426 = vcmask 1044480
      %vm427 = vcmask 1045504
      %v428 = vsel %vm426, 4294967295, 65535
      %v429 = vsel %vm427, %v428, 0
      %v431 = vand.u32 %v360, %v429
      %433 = vmatpush.bf16.msra.mxu0 0
      %434 = vmatpush.bf16.msra.mxu0 0
      %435 = vmatpush.bf16.msra.mxu0 0
      %436 = vmatpush.bf16.msra.mxu0 0
      %437 = vmatpush.bf16.msra.mxu0 0
      %438 = vmatpush.bf16.msra.mxu0 0
      %439 = vmatpush.bf16.msra.mxu0 %v431
      %440 = vmatpush.bf16.msra.mxu0 %v359
      %441 = vmatmul.bf16.gmra.mxu0 %v364
      %v442 = vpop.f32.mrf.mxu0
      %v443 = vadd.f32 %v246, %v442
      %v444 = vpop.f32.mrf.mxu0
      %v445 = vadd.f32 %v246, %v444
      %446 = vmatmul.bf16.gmra.mxu0 %v367
      %v447 = vpop.f32.mrf.mxu0
      %v448 = vadd.f32 %v246, %v447
      %v449 = vpop.f32.mrf.mxu0
      %v450 = vadd.f32 %v246, %v449
      %451 = vmatmul.bf16.gmra.mxu0 %v370
      %v452 = vpop.f32.mrf.mxu0
      %v453 = vadd.f32 %v246, %v452
      %v454 = vpop.f32.mrf.mxu0
      %v455 = vadd.f32 %v246, %v454
      %456 = vmatmul.bf16.gmra.mxu0 %v373
      %v457 = vpop.f32.mrf.mxu0
      %v458 = vadd.f32 %v246, %v457
      %v459 = vpop.f32.mrf.mxu0
      %v460 = vadd.f32 %v246, %v459
      %461 = vmatmul.bf16.gmra.mxu0 %v376
      %v462 = vpop.f32.mrf.mxu0
      %v463 = vadd.f32 %v246, %v462
      %v464 = vpop.f32.mrf.mxu0
      %v465 = vadd.f32 %v246, %v464
      %466 = vmatmul.bf16.gmra.mxu0 %v379
      %v467 = vpop.f32.mrf.mxu0
      %v468 = vadd.f32 %v246, %v467
      %v469 = vpop.f32.mrf.mxu0
      %v470 = vadd.f32 %v246, %v469
      %471 = vmatmul.bf16.gmra.mxu0 %v382
      %v472 = vpop.f32.mrf.mxu0
      %v473 = vadd.f32 %v246, %v472
      %v474 = vpop.f32.mrf.mxu0
      %v475 = vadd.f32 %v246, %v474
      %476 = vmatmul.bf16.gmra.mxu0 %v385
      %v477 = vpop.f32.mrf.mxu0
      %v478 = vadd.f32 %v246, %v477
      %v479 = vpop.f32.mrf.mxu0
      %v480 = vadd.f32 %v246, %v479
      %481 = vmatmul.bf16.gmra.mxu0 %v388
      %v482 = vpop.f32.mrf.mxu0
      %v483 = vadd.f32 %v246, %v482
      %v484 = vpop.f32.mrf.mxu0
      %v485 = vadd.f32 %v246, %v484
      %486 = vmatmul.bf16.gmra.mxu0 %v391
      %v487 = vpop.f32.mrf.mxu0
      %v488 = vadd.f32 %v246, %v487
      %v489 = vpop.f32.mrf.mxu0
      %v490 = vadd.f32 %v246, %v489
      %491 = vmatmul.bf16.gmra.mxu0 %v394
      %v492 = vpop.f32.mrf.mxu0
      %v493 = vadd.f32 %v246, %v492
      %v494 = vpop.f32.mrf.mxu0
      %v495 = vadd.f32 %v246, %v494
      %496 = vmatmul.bf16.gmra.mxu0 %v397
      %v497 = vpop.f32.mrf.mxu0
      %v498 = vadd.f32 %v246, %v497
      %v499 = vpop.f32.mrf.mxu0
      %v500 = vadd.f32 %v246, %v499
      %501 = vmatmul.bf16.gmra.mxu0 %v400
      %v502 = vpop.f32.mrf.mxu0
      %v503 = vadd.f32 %v246, %v502
      %v504 = vpop.f32.mrf.mxu0
      %v505 = vadd.f32 %v246, %v504
      %506 = vmatmul.bf16.gmra.mxu0 %v403
      %v507 = vpop.f32.mrf.mxu0
      %v508 = vadd.f32 %v246, %v507
      %v509 = vpop.f32.mrf.mxu0
      %v510 = vadd.f32 %v246, %v509
      %511 = vmatmul.bf16.gmra.mxu0 %v406
      %v512 = vpop.f32.mrf.mxu0
      %v513 = vadd.f32 %v246, %v512
      %v514 = vpop.f32.mrf.mxu0
      %v515 = vadd.f32 %v246, %v514
      %516 = vmatmul.bf16.gmra.mxu0 %v409
      %v517 = vpop.f32.mrf.mxu0
      %v518 = vadd.f32 %v246, %v517
      %v519 = vpop.f32.mrf.mxu0
      %v520 = vadd.f32 %v246, %v519
      %521 = vmatmul.bf16.gmra.mxu0 %v412
      %v522 = vpop.f32.mrf.mxu0
      %v523 = vadd.f32 %v246, %v522
      %v524 = vpop.f32.mrf.mxu0
      %v525 = vadd.f32 %v246, %v524
      %526 = vmatmul.bf16.gmra.mxu0 %v415
      %v527 = vpop.f32.mrf.mxu0
      %v528 = vadd.f32 %v246, %v527
      %v529 = vpop.f32.mrf.mxu0
      %v530 = vadd.f32 %v246, %v529
      %531 = vmatmul.bf16.gmra.mxu0 %v418
      %v532 = vpop.f32.mrf.mxu0
      %v533 = vadd.f32 %v246, %v532
      %v534 = vpop.f32.mrf.mxu0
      %v535 = vadd.f32 %v246, %v534
      %536 = vmatmul.bf16.gmra.mxu0 %v421
      %v537 = vpop.f32.mrf.mxu0
      %v538 = vadd.f32 %v246, %v537
      %v539 = vpop.f32.mrf.mxu0
      %v540 = vadd.f32 %v246, %v539
      %541 = vmatmul.bf16.gmra.mxu0 %v424
      %v542 = vpop.f32.mrf.mxu0
      %v543 = vadd.f32 %v246, %v542
      %v544 = vpop.f32.mrf.mxu0
      %545 = vdwg.mxu0
      %v546 = vmax.f32 %v443, 0.0
      %v547 = vmax.f32 %v445, 0.0
      %v548 = vmax.f32 %v448, 0.0
      %v549 = vmax.f32 %v450, 0.0
      %v550 = vmax.f32 %v453, 0.0
      %v551 = vmax.f32 %v455, 0.0
      %v552 = vmax.f32 %v458, 0.0
      %v553 = vmax.f32 %v460, 0.0
      %v554 = vmax.f32 %v463, 0.0
      %v555 = vmax.f32 %v465, 0.0
      %v556 = vmax.f32 %v468, 0.0
      %v557 = vmax.f32 %v470, 0.0
      %v558 = vmax.f32 %v473, 0.0
      %v559 = vmax.f32 %v475, 0.0
      %v560 = vmax.f32 %v478, 0.0
      %v561 = vmax.f32 %v480, 0.0
      %v562 = vmax.f32 %v483, 0.0
      %v563 = vmax.f32 %v485, 0.0
      %v564 = vmax.f32 %v488, 0.0
      %v565 = vmax.f32 %v490, 0.0
      %v566 = vmax.f32 %v493, 0.0
      %v567 = vmax.f32 %v495, 0.0
      %v568 = vmax.f32 %v498, 0.0
      %v569 = vmax.f32 %v500, 0.0
      %v570 = vmax.f32 %v503, 0.0
      %v571 = vmax.f32 %v505, 0.0
      %v572 = vmax.f32 %v508, 0.0
      %v573 = vmax.f32 %v510, 0.0
      %v574 = vmax.f32 %v513, 0.0
      %v575 = vmax.f32 %v515, 0.0
      %v576 = vmax.f32 %v518, 0.0
      %v577 = vmax.f32 %v520, 0.0
      %v578 = vmax.f32 %v523, 0.0
      %v579 = vmax.f32 %v525, 0.0
      %v580 = vmax.f32 %v528, 0.0
      %v581 = vmax.f32 %v530, 0.0
      %v582 = vmax.f32 %v533, 0.0
      %v583 = vmax.f32 %v535, 0.0
      %v584 = vmax.f32 %v538, 0.0
      %v585 = vmax.f32 %v540, 0.0
      %v586 = vmax.f32 %v543, 0.0
      %v587 = vld [vmem:[%s1] sm:$0xff]
      %v588 = vld [vmem:[%s1 + $0x8] sm:$0xff]
      %v589 = vld [vmem:[%s1 + $0x10] sm:$0xff]
      %v590 = vld [vmem:[%s1 + $0x18] sm:$0xff]
      %v591 = vld [vmem:[%s1 + $0x20] sm:$0xff]
      %v592 = vld [vmem:[%s1 + $0x28] sm:$0xff]
      %v593 = vld [vmem:[%s1 + $0x30] sm:$0xff]
      %v594 = vld [vmem:[%s1 + $0x38] sm:$0xff]
      %v595 = vld [vmem:[%s1 + $0x40] sm:$0xff]
      %v596 = vld [vmem:[%s1 + $0x48] sm:$0xff]
      %v597 = vld [vmem:[%s1 + $0x50] sm:$0xff]
      %v598 = vld [vmem:[%s1 + $0x58] sm:$0xff]
      %v599 = vld [vmem:[%s1 + $0x60] sm:$0xff]
      %v600 = vld [vmem:[%s1 + $0x68] sm:$0xff]
      %v601 = vld [vmem:[%s1 + $0x70] sm:$0xff]
      %v602 = vld [vmem:[%s1 + $0x78] sm:$0xff]
      %v603 = vld [vmem:[%s1 + $0x80] sm:$0xff]
      %v604 = vld [vmem:[%s1 + $0x88] sm:$0xff]
      %v605 = vld [vmem:[%s1 + $0x90] sm:$0xff]
      %v606 = vld [vmem:[%s1 + $0x98] sm:$0xff]
      %v607 = vld [vmem:[%s1 + $0xa0] sm:$0xff]
      %v608 = vld [vmem:[%s1 + $0xa8] sm:$0xff]
      %v609 = vld [vmem:[%s1 + $0xb0] sm:$0xff]
      %v610 = vld [vmem:[%s1 + $0xb8] sm:$0xff]
      %v611 = vld [vmem:[%s1 + $0xc0] sm:$0xff]
      %v612 = vld [vmem:[%s1 + $0xc8] sm:$0xff]
      %v613 = vld [vmem:[%s1 + $0xd0] sm:$0xff]
      %v614 = vld [vmem:[%s1 + $0xd8] sm:$0xff]
      %v615 = vld [vmem:[%s1 + $0xe0] sm:$0xff]
      %v616 = vld [vmem:[%s1 + $0xe8] sm:$0xff]
      %v617 = vld [vmem:[%s1 + $0xf0] sm:$0xff]
      %v618 = vld [vmem:[%s1 + $0xf8] sm:$0xff]
      %v619 = vld [vmem:[%s1 + $0x100] sm:$0xff]
      %v620 = vld [vmem:[%s1 + $0x108] sm:$0xff]
      %v621 = vld [vmem:[%s1 + $0x110] sm:$0xff]
      %v622 = vld [vmem:[%s1 + $0x118] sm:$0xff]
      %v623 = vld [vmem:[%s1 + $0x120] sm:$0xff]
      %v624 = vld [vmem:[%s1 + $0x128] sm:$0xff]
      %v625 = vld [vmem:[%s1 + $0x130] sm:$0xff]
      %v626 = vld [vmem:[%s1 + $0x138] sm:$0xff]
      %v627 = vld [vmem:[%s1 + $0x140] sm:$0xff]
      %629 = vset.pattern.permute.xlu0 0
      %630 = vperm.xlu0 %629, %v587
      %v631 = vpop.permute.xlu0 %630
      %634 = vset.pattern.permute.xlu0 0
      %635 = vperm.xlu0 %634, %v588
      %v636 = vpop.permute.xlu0 %635
      %639 = vset.pattern.permute.xlu0 0
      %640 = vperm.xlu0 %639, %v589
      %v641 = vpop.permute.xlu0 %640
      %644 = vset.pattern.permute.xlu0 0
      %645 = vperm.xlu0 %644, %v590
      %v646 = vpop.permute.xlu0 %645
      %649 = vset.pattern.permute.xlu0 0
      %650 = vperm.xlu0 %649, %v591
      %v651 = vpop.permute.xlu0 %650
      %654 = vset.pattern.permute.xlu0 0
      %655 = vperm.xlu0 %654, %v592
      %v656 = vpop.permute.xlu0 %655
      %659 = vset.pattern.permute.xlu0 0
      %660 = vperm.xlu0 %659, %v593
      %v661 = vpop.permute.xlu0 %660
      %664 = vset.pattern.permute.xlu0 0
      %665 = vperm.xlu0 %664, %v594
      %v666 = vpop.permute.xlu0 %665
      %669 = vset.pattern.permute.xlu0 0
      %670 = vperm.xlu0 %669, %v595
      %v671 = vpop.permute.xlu0 %670
      %674 = vset.pattern.permute.xlu0 0
      %675 = vperm.xlu0 %674, %v596
      %v676 = vpop.permute.xlu0 %675
      %679 = vset.pattern.permute.xlu0 0
      %680 = vperm.xlu0 %679, %v597
      %v681 = vpop.permute.xlu0 %680
      %684 = vset.pattern.permute.xlu0 0
      %685 = vperm.xlu0 %684, %v598
      %v686 = vpop.permute.xlu0 %685
      %689 = vset.pattern.permute.xlu0 0
      %690 = vperm.xlu0 %689, %v599
      %v691 = vpop.permute.xlu0 %690
      %694 = vset.pattern.permute.xlu0 0
      %695 = vperm.xlu0 %694, %v600
      %v696 = vpop.permute.xlu0 %695
      %699 = vset.pattern.permute.xlu0 0
      %700 = vperm.xlu0 %699, %v601
      %v701 = vpop.permute.xlu0 %700
      %704 = vset.pattern.permute.xlu0 0
      %705 = vperm.xlu0 %704, %v602
      %v706 = vpop.permute.xlu0 %705
      %709 = vset.pattern.permute.xlu0 0
      %710 = vperm.xlu0 %709, %v603
      %v711 = vpop.permute.xlu0 %710
      %714 = vset.pattern.permute.xlu0 0
      %715 = vperm.xlu0 %714, %v604
      %v716 = vpop.permute.xlu0 %715
      %719 = vset.pattern.permute.xlu0 0
      %720 = vperm.xlu0 %719, %v605
      %v721 = vpop.permute.xlu0 %720
      %724 = vset.pattern.permute.xlu0 0
      %725 = vperm.xlu0 %724, %v606
      %v726 = vpop.permute.xlu0 %725
      %729 = vset.pattern.permute.xlu0 0
      %730 = vperm.xlu0 %729, %v607
      %v731 = vpop.permute.xlu0 %730
      %734 = vset.pattern.permute.xlu0 0
      %735 = vperm.xlu0 %734, %v608
      %v736 = vpop.permute.xlu0 %735
      %739 = vset.pattern.permute.xlu0 0
      %740 = vperm.xlu0 %739, %v609
      %v741 = vpop.permute.xlu0 %740
      %744 = vset.pattern.permute.xlu0 0
      %745 = vperm.xlu0 %744, %v610
      %v746 = vpop.permute.xlu0 %745
      %749 = vset.pattern.permute.xlu0 0
      %750 = vperm.xlu0 %749, %v611
      %v751 = vpop.permute.xlu0 %750
      %754 = vset.pattern.permute.xlu0 0
      %755 = vperm.xlu0 %754, %v612
      %v756 = vpop.permute.xlu0 %755
      %759 = vset.pattern.permute.xlu0 0
      %760 = vperm.xlu0 %759, %v613
      %v761 = vpop.permute.xlu0 %760
      %764 = vset.pattern.permute.xlu0 0
      %765 = vperm.xlu0 %764, %v614
      %v766 = vpop.permute.xlu0 %765
      %769 = vset.pattern.permute.xlu0 0
      %770 = vperm.xlu0 %769, %v615
      %v771 = vpop.permute.xlu0 %770
      %774 = vset.pattern.permute.xlu0 0
      %775 = vperm.xlu0 %774, %v616
      %v776 = vpop.permute.xlu0 %775
      %779 = vset.pattern.permute.xlu0 0
      %780 = vperm.xlu0 %779, %v617
      %v781 = vpop.permute.xlu0 %780
      %784 = vset.pattern.permute.xlu0 0
      %785 = vperm.xlu0 %784, %v618
      %v786 = vpop.permute.xlu0 %785
      %789 = vset.pattern.permute.xlu0 0
      %790 = vperm.xlu0 %789, %v619
      %v791 = vpop.permute.xlu0 %790
      %794 = vset.pattern.permute.xlu0 0
      %795 = vperm.xlu0 %794, %v620
      %v796 = vpop.permute.xlu0 %795
      %799 = vset.pattern.permute.xlu0 0
      %800 = vperm.xlu0 %799, %v621
      %v801 = vpop.permute.xlu0 %800
      %804 = vset.pattern.permute.xlu0 0
      %805 = vperm.xlu0 %804, %v622
      %v806 = vpop.permute.xlu0 %805
      %809 = vset.pattern.permute.xlu0 0
      %810 = vperm.xlu0 %809, %v623
      %v811 = vpop.permute.xlu0 %810
      %814 = vset.pattern.permute.xlu0 0
      %815 = vperm.xlu0 %814, %v624
      %v816 = vpop.permute.xlu0 %815
      %819 = vset.pattern.permute.xlu0 0
      %820 = vperm.xlu0 %819, %v625
      %v821 = vpop.permute.xlu0 %820
      %824 = vset.pattern.permute.xlu0 0
      %825 = vperm.xlu0 %824, %v626
      %v826 = vpop.permute.xlu0 %825
      %829 = vset.pattern.permute.xlu0 0
      %830 = vperm.xlu0 %829, %v627
      %v831 = vpop.permute.xlu0 %830
      %v833 = vmul.f32 %v546, %v631
      %v834 = vmul.f32 %v547, %v636
      %v835 = vmul.f32 %v548, %v641
      %v836 = vmul.f32 %v549, %v646
      %v837 = vmul.f32 %v550, %v651
      %v838 = vmul.f32 %v551, %v656
      %v839 = vmul.f32 %v552, %v661
      %v840 = vmul.f32 %v553, %v666
      %v841 = vmul.f32 %v554, %v671
      %v842 = vmul.f32 %v555, %v676
      %v843 = vmul.f32 %v556, %v681
      %v844 = vmul.f32 %v557, %v686
      %v845 = vmul.f32 %v558, %v691
      %v846 = vmul.f32 %v559, %v696
      %v847 = vmul.f32 %v560, %v701
      %v848 = vmul.f32 %v561, %v706
      %v849 = vmul.f32 %v562, %v711
      %v850 = vmul.f32 %v563, %v716
      %v851 = vmul.f32 %v564, %v721
      %v852 = vmul.f32 %v565, %v726
      %v853 = vmul.f32 %v566, %v731
      %v854 = vmul.f32 %v567, %v736
      %v855 = vmul.f32 %v568, %v741
      %v856 = vmul.f32 %v569, %v746
      %v857 = vmul.f32 %v570, %v751
      %v858 = vmul.f32 %v571, %v756
      %v859 = vmul.f32 %v572, %v761
      %v860 = vmul.f32 %v573, %v766
      %v861 = vmul.f32 %v574, %v771
      %v862 = vmul.f32 %v575, %v776
      %v863 = vmul.f32 %v576, %v781
      %v864 = vmul.f32 %v577, %v786
      %v865 = vmul.f32 %v578, %v791
      %v866 = vmul.f32 %v579, %v796
      %v867 = vmul.f32 %v580, %v801
      %v868 = vmul.f32 %v581, %v806
      %v869 = vmul.f32 %v582, %v811
      %v870 = vmul.f32 %v583, %v816
      %v871 = vmul.f32 %v584, %v821
      %v872 = vmul.f32 %v585, %v826
      %v873 = vmul.f32 %v586, %v831
      %v874 = vsub.f32 1.0, %v587
      %v875 = vsub.f32 1.0, %v588
      %v876 = vsub.f32 1.0, %v589
      %v877 = vsub.f32 1.0, %v590
      %v878 = vsub.f32 1.0, %v591
      %v879 = vsub.f32 1.0, %v592
      %v880 = vsub.f32 1.0, %v593
      %v881 = vsub.f32 1.0, %v594
      %v882 = vsub.f32 1.0, %v595
      %v883 = vsub.f32 1.0, %v596
      %v884 = vsub.f32 1.0, %v597
      %v885 = vsub.f32 1.0, %v598
      %v886 = vsub.f32 1.0, %v599
      %v887 = vsub.f32 1.0, %v600
      %v888 = vsub.f32 1.0, %v601
      %v889 = vsub.f32 1.0, %v602
      %v890 = vsub.f32 1.0, %v603
      %v891 = vsub.f32 1.0, %v604
      %v892 = vsub.f32 1.0, %v605
      %v893 = vsub.f32 1.0, %v606
      %v894 = vsub.f32 1.0, %v607
      %v895 = vsub.f32 1.0, %v608
      %v896 = vsub.f32 1.0, %v609
      %v897 = vsub.f32 1.0, %v610
      %v898 = vsub.f32 1.0, %v611
      %v899 = vsub.f32 1.0, %v612
      %v900 = vsub.f32 1.0, %v613
      %v901 = vsub.f32 1.0, %v614
      %v902 = vsub.f32 1.0, %v615
      %v903 = vsub.f32 1.0, %v616
      %v904 = vsub.f32 1.0, %v617
      %v905 = vsub.f32 1.0, %v618
      %v906 = vsub.f32 1.0, %v619
      %v907 = vsub.f32 1.0, %v620
      %v908 = vsub.f32 1.0, %v621
      %v909 = vsub.f32 1.0, %v622
      %v910 = vsub.f32 1.0, %v623
      %v911 = vsub.f32 1.0, %v624
      %v912 = vsub.f32 1.0, %v625
      %v913 = vsub.f32 1.0, %v626
      %v914 = vsub.f32 1.0, %v627
      %v915 = vmul.f32 %v874, 1e+30
      %v916 = vmul.f32 %v875, 1e+30
      %v917 = vmul.f32 %v876, 1e+30
      %v918 = vmul.f32 %v877, 1e+30
      %v919 = vmul.f32 %v878, 1e+30
      %v920 = vmul.f32 %v879, 1e+30
      %v921 = vmul.f32 %v880, 1e+30
      %v922 = vmul.f32 %v881, 1e+30
      %v923 = vmul.f32 %v882, 1e+30
      %v924 = vmul.f32 %v883, 1e+30
      %v925 = vmul.f32 %v884, 1e+30
      %v926 = vmul.f32 %v885, 1e+30
      %v927 = vmul.f32 %v886, 1e+30
      %v928 = vmul.f32 %v887, 1e+30
      %v929 = vmul.f32 %v888, 1e+30
      %v930 = vmul.f32 %v889, 1e+30
      %v931 = vmul.f32 %v890, 1e+30
      %v932 = vmul.f32 %v891, 1e+30
      %v933 = vmul.f32 %v892, 1e+30
      %v934 = vmul.f32 %v893, 1e+30
      %v935 = vmul.f32 %v894, 1e+30
      %v936 = vmul.f32 %v895, 1e+30
      %v937 = vmul.f32 %v896, 1e+30
      %v938 = vmul.f32 %v897, 1e+30
      %v939 = vmul.f32 %v898, 1e+30
      %v940 = vmul.f32 %v899, 1e+30
      %v941 = vmul.f32 %v900, 1e+30
      %v942 = vmul.f32 %v901, 1e+30
      %v943 = vmul.f32 %v902, 1e+30
      %v944 = vmul.f32 %v903, 1e+30
      %v945 = vmul.f32 %v904, 1e+30
      %v946 = vmul.f32 %v905, 1e+30
      %v947 = vmul.f32 %v906, 1e+30
      %v948 = vmul.f32 %v907, 1e+30
      %v949 = vmul.f32 %v908, 1e+30
      %v950 = vmul.f32 %v909, 1e+30
      %v951 = vmul.f32 %v910, 1e+30
      %v952 = vmul.f32 %v911, 1e+30
      %v953 = vmul.f32 %v912, 1e+30
      %v954 = vmul.f32 %v913, 1e+30
      %v955 = vmul.f32 %v914, 1e+30
      %957 = vset.pattern.permute.xlu0 0
      %958 = vperm.xlu0 %957, %v915
      %v959 = vpop.permute.xlu0 %958
      %962 = vset.pattern.permute.xlu0 0
      %963 = vperm.xlu0 %962, %v916
      %v964 = vpop.permute.xlu0 %963
      %967 = vset.pattern.permute.xlu0 0
      %968 = vperm.xlu0 %967, %v917
      %v969 = vpop.permute.xlu0 %968
      %972 = vset.pattern.permute.xlu0 0
      %973 = vperm.xlu0 %972, %v918
      %v974 = vpop.permute.xlu0 %973
      %977 = vset.pattern.permute.xlu0 0
      %978 = vperm.xlu0 %977, %v919
      %v979 = vpop.permute.xlu0 %978
      %982 = vset.pattern.permute.xlu0 0
      %983 = vperm.xlu0 %982, %v920
      %v984 = vpop.permute.xlu0 %983
      %987 = vset.pattern.permute.xlu0 0
      %988 = vperm.xlu0 %987, %v921
      %v989 = vpop.permute.xlu0 %988
      %992 = vset.pattern.permute.xlu0 0
      %993 = vperm.xlu0 %992, %v922
      %v994 = vpop.permute.xlu0 %993
      %997 = vset.pattern.permute.xlu0 0
      %998 = vperm.xlu0 %997, %v923
      %v999 = vpop.permute.xlu0 %998
      %1002 = vset.pattern.permute.xlu0 0
      %1003 = vperm.xlu0 %1002, %v924
      %v1004 = vpop.permute.xlu0 %1003
      %1007 = vset.pattern.permute.xlu0 0
      %1008 = vperm.xlu0 %1007, %v925
      %v1009 = vpop.permute.xlu0 %1008
      %1012 = vset.pattern.permute.xlu0 0
      %1013 = vperm.xlu0 %1012, %v926
      %v1014 = vpop.permute.xlu0 %1013
      %1017 = vset.pattern.permute.xlu0 0
      %1018 = vperm.xlu0 %1017, %v927
      %v1019 = vpop.permute.xlu0 %1018
      %1022 = vset.pattern.permute.xlu0 0
      %1023 = vperm.xlu0 %1022, %v928
      %v1024 = vpop.permute.xlu0 %1023
      %1027 = vset.pattern.permute.xlu0 0
      %1028 = vperm.xlu0 %1027, %v929
      %v1029 = vpop.permute.xlu0 %1028
      %1032 = vset.pattern.permute.xlu0 0
      %1033 = vperm.xlu0 %1032, %v930
      %v1034 = vpop.permute.xlu0 %1033
      %1037 = vset.pattern.permute.xlu0 0
      %1038 = vperm.xlu0 %1037, %v931
      %v1039 = vpop.permute.xlu0 %1038
      %1042 = vset.pattern.permute.xlu0 0
      %1043 = vperm.xlu0 %1042, %v932
      %v1044 = vpop.permute.xlu0 %1043
      %1047 = vset.pattern.permute.xlu0 0
      %1048 = vperm.xlu0 %1047, %v933
      %v1049 = vpop.permute.xlu0 %1048
      %1052 = vset.pattern.permute.xlu0 0
      %1053 = vperm.xlu0 %1052, %v934
      %v1054 = vpop.permute.xlu0 %1053
      %1057 = vset.pattern.permute.xlu0 0
      %1058 = vperm.xlu0 %1057, %v935
      %v1059 = vpop.permute.xlu0 %1058
      %1062 = vset.pattern.permute.xlu0 0
      %1063 = vperm.xlu0 %1062, %v936
      %v1064 = vpop.permute.xlu0 %1063
      %1067 = vset.pattern.permute.xlu0 0
      %1068 = vperm.xlu0 %1067, %v937
      %v1069 = vpop.permute.xlu0 %1068
      %1072 = vset.pattern.permute.xlu0 0
      %1073 = vperm.xlu0 %1072, %v938
      %v1074 = vpop.permute.xlu0 %1073
      %1077 = vset.pattern.permute.xlu0 0
      %1078 = vperm.xlu0 %1077, %v939
      %v1079 = vpop.permute.xlu0 %1078
      %1082 = vset.pattern.permute.xlu0 0
      %1083 = vperm.xlu0 %1082, %v940
      %v1084 = vpop.permute.xlu0 %1083
      %1087 = vset.pattern.permute.xlu0 0
      %1088 = vperm.xlu0 %1087, %v941
      %v1089 = vpop.permute.xlu0 %1088
      %1092 = vset.pattern.permute.xlu0 0
      %1093 = vperm.xlu0 %1092, %v942
      %v1094 = vpop.permute.xlu0 %1093
      %1097 = vset.pattern.permute.xlu0 0
      %1098 = vperm.xlu0 %1097, %v943
      %v1099 = vpop.permute.xlu0 %1098
      %1102 = vset.pattern.permute.xlu0 0
      %1103 = vperm.xlu0 %1102, %v944
      %v1104 = vpop.permute.xlu0 %1103
      %1107 = vset.pattern.permute.xlu0 0
      %1108 = vperm.xlu0 %1107, %v945
      %v1109 = vpop.permute.xlu0 %1108
      %1112 = vset.pattern.permute.xlu0 0
      %1113 = vperm.xlu0 %1112, %v946
      %v1114 = vpop.permute.xlu0 %1113
      %1117 = vset.pattern.permute.xlu0 0
      %1118 = vperm.xlu0 %1117, %v947
      %v1119 = vpop.permute.xlu0 %1118
      %1122 = vset.pattern.permute.xlu0 0
      %1123 = vperm.xlu0 %1122, %v948
      %v1124 = vpop.permute.xlu0 %1123
      %1127 = vset.pattern.permute.xlu0 0
      %1128 = vperm.xlu0 %1127, %v949
      %v1129 = vpop.permute.xlu0 %1128
      %1132 = vset.pattern.permute.xlu0 0
      %1133 = vperm.xlu0 %1132, %v950
      %v1134 = vpop.permute.xlu0 %1133
      %1137 = vset.pattern.permute.xlu0 0
      %1138 = vperm.xlu0 %1137, %v951
      %v1139 = vpop.permute.xlu0 %1138
      %1142 = vset.pattern.permute.xlu0 0
      %1143 = vperm.xlu0 %1142, %v952
      %v1144 = vpop.permute.xlu0 %1143
      %1147 = vset.pattern.permute.xlu0 0
      %1148 = vperm.xlu0 %1147, %v953
      %v1149 = vpop.permute.xlu0 %1148
      %1152 = vset.pattern.permute.xlu0 0
      %1153 = vperm.xlu0 %1152, %v954
      %v1154 = vpop.permute.xlu0 %1153
      %1157 = vset.pattern.permute.xlu0 0
      %1158 = vperm.xlu0 %1157, %v955
      %v1159 = vpop.permute.xlu0 %1158
      %v1161 = vsub.f32 %v833, %v959
      %v1162 = vsub.f32 %v834, %v964
      %v1163 = vsub.f32 %v835, %v969
      %v1164 = vsub.f32 %v836, %v974
      %v1165 = vsub.f32 %v837, %v979
      %v1166 = vsub.f32 %v838, %v984
      %v1167 = vsub.f32 %v839, %v989
      %v1168 = vsub.f32 %v840, %v994
      %v1169 = vsub.f32 %v841, %v999
      %v1170 = vsub.f32 %v842, %v1004
      %v1171 = vsub.f32 %v843, %v1009
      %v1172 = vsub.f32 %v844, %v1014
      %v1173 = vsub.f32 %v845, %v1019
      %v1174 = vsub.f32 %v846, %v1024
      %v1175 = vsub.f32 %v847, %v1029
      %v1176 = vsub.f32 %v848, %v1034
      %v1177 = vsub.f32 %v849, %v1039
      %v1178 = vsub.f32 %v850, %v1044
      %v1179 = vsub.f32 %v851, %v1049
      %v1180 = vsub.f32 %v852, %v1054
      %v1181 = vsub.f32 %v853, %v1059
      %v1182 = vsub.f32 %v854, %v1064
      %v1183 = vsub.f32 %v855, %v1069
      %v1184 = vsub.f32 %v856, %v1074
      %v1185 = vsub.f32 %v857, %v1079
      %v1186 = vsub.f32 %v858, %v1084
      %v1187 = vsub.f32 %v859, %v1089
      %v1188 = vsub.f32 %v860, %v1094
      %v1189 = vsub.f32 %v861, %v1099
      %v1190 = vsub.f32 %v862, %v1104
      %v1191 = vsub.f32 %v863, %v1109
      %v1192 = vsub.f32 %v864, %v1114
      %v1193 = vsub.f32 %v865, %v1119
      %v1194 = vsub.f32 %v866, %v1124
      %v1195 = vsub.f32 %v867, %v1129
      %v1196 = vsub.f32 %v868, %v1134
      %v1197 = vsub.f32 %v869, %v1139
      %v1198 = vsub.f32 %v870, %v1144
      %v1199 = vsub.f32 %v871, %v1149
      %v1200 = vsub.f32 %v872, %v1154
      %v1201 = vsub.f32 %v873, %v1159
      %vm1202 = vcmask 64512
      %1203 = vst.msk [vmem:[#allocation2] sm:$0xff] %vm1202, %v1161
      %1204 = vst.msk [vmem:[#allocation2 + $0x8] sm:$0xff] %vm1202, %v1162
      %1205 = vst.msk [vmem:[#allocation2 + $0x10] sm:$0xff] %vm1202, %v1163
      %1206 = vst.msk [vmem:[#allocation2 + $0x18] sm:$0xff] %vm1202, %v1164
      %1207 = vst.msk [vmem:[#allocation2 + $0x20] sm:$0xff] %vm1202, %v1165
      %1208 = vst.msk [vmem:[#allocation2 + $0x28] sm:$0xff] %vm1202, %v1166
      %1209 = vst.msk [vmem:[#allocation2 + $0x30] sm:$0xff] %vm1202, %v1167
      %1210 = vst.msk [vmem:[#allocation2 + $0x38] sm:$0xff] %vm1202, %v1168
      %1211 = vst.msk [vmem:[#allocation2 + $0x40] sm:$0xff] %vm1202, %v1169
      %1212 = vst.msk [vmem:[#allocation2 + $0x48] sm:$0xff] %vm1202, %v1170
      %1213 = vst.msk [vmem:[#allocation2 + $0x50] sm:$0xff] %vm1202, %v1171
      %1214 = vst.msk [vmem:[#allocation2 + $0x58] sm:$0xff] %vm1202, %v1172
      %1215 = vst.msk [vmem:[#allocation2 + $0x60] sm:$0xff] %vm1202, %v1173
      %1216 = vst.msk [vmem:[#allocation2 + $0x68] sm:$0xff] %vm1202, %v1174
      %1217 = vst.msk [vmem:[#allocation2 + $0x70] sm:$0xff] %vm1202, %v1175
      %1218 = vst.msk [vmem:[#allocation2 + $0x78] sm:$0xff] %vm1202, %v1176
      %1219 = vst.msk [vmem:[#allocation2 + $0x80] sm:$0xff] %vm1202, %v1177
      %1220 = vst.msk [vmem:[#allocation2 + $0x88] sm:$0xff] %vm1202, %v1178
      %1221 = vst.msk [vmem:[#allocation2 + $0x90] sm:$0xff] %vm1202, %v1179
      %1222 = vst.msk [vmem:[#allocation2 + $0x98] sm:$0xff] %vm1202, %v1180
      %1223 = vst.msk [vmem:[#allocation2 + $0xa0] sm:$0xff] %vm1202, %v1181
      %1224 = vst.msk [vmem:[#allocation2 + $0xa8] sm:$0xff] %vm1202, %v1182
      %1225 = vst.msk [vmem:[#allocation2 + $0xb0] sm:$0xff] %vm1202, %v1183
      %1226 = vst.msk [vmem:[#allocation2 + $0xb8] sm:$0xff] %vm1202, %v1184
      %1227 = vst.msk [vmem:[#allocation2 + $0xc0] sm:$0xff] %vm1202, %v1185
      %1228 = vst.msk [vmem:[#allocation2 + $0xc8] sm:$0xff] %vm1202, %v1186
      %1229 = vst.msk [vmem:[#allocation2 + $0xd0] sm:$0xff] %vm1202, %v1187
      %1230 = vst.msk [vmem:[#allocation2 + $0xd8] sm:$0xff] %vm1202, %v1188
      %1231 = vst.msk [vmem:[#allocation2 + $0xe0] sm:$0xff] %vm1202, %v1189
      %1232 = vst.msk [vmem:[#allocation2 + $0xe8] sm:$0xff] %vm1202, %v1190
      %1233 = vst.msk [vmem:[#allocation2 + $0xf0] sm:$0xff] %vm1202, %v1191
      %1234 = vst.msk [vmem:[#allocation2 + $0xf8] sm:$0xff] %vm1202, %v1192
      %1235 = vst.msk [vmem:[#allocation2 + $0x100] sm:$0xff] %vm1202, %v1193
      %1236 = vst.msk [vmem:[#allocation2 + $0x108] sm:$0xff] %vm1202, %v1194
      %1237 = vst.msk [vmem:[#allocation2 + $0x110] sm:$0xff] %vm1202, %v1195
      %1238 = vst.msk [vmem:[#allocation2 + $0x118] sm:$0xff] %vm1202, %v1196
      %1239 = vst.msk [vmem:[#allocation2 + $0x120] sm:$0xff] %vm1202, %v1197
      %1240 = vst.msk [vmem:[#allocation2 + $0x128] sm:$0xff] %vm1202, %v1198
      %1241 = vst.msk [vmem:[#allocation2 + $0x130] sm:$0xff] %vm1202, %v1199
      %1242 = vst.msk [vmem:[#allocation2 + $0x138] sm:$0xff] %vm1202, %v1200
      %1243 = vst.msk [vmem:[#allocation2 + $0x140] sm:$0xff] %vm1202, %v1201
      %v1244 = vld [vmem:[#allocation2] sm:$0xff]
      %v1245 = vld [vmem:[#allocation2 + $0x8] sm:$0xff]
      %v1246 = vld [vmem:[#allocation2 + $0x10] sm:$0xff]
      %v1247 = vld [vmem:[#allocation2 + $0x18] sm:$0xff]
      %v1248 = vld [vmem:[#allocation2 + $0x20] sm:$0xff]
      %v1249 = vld [vmem:[#allocation2 + $0x28] sm:$0xff]
      %v1250 = vld [vmem:[#allocation2 + $0x30] sm:$0xff]
      %v1251 = vld [vmem:[#allocation2 + $0x38] sm:$0xff]
      %v1252 = vld [vmem:[#allocation2 + $0x40] sm:$0xff]
      %v1253 = vld [vmem:[#allocation2 + $0x52] sm:$0xff]
      %v1254 = vld [vmem:[#allocation2 + $0x5a] sm:$0xff]
      %v1255 = vld [vmem:[#allocation2 + $0x62] sm:$0xff]
      %v1256 = vld [vmem:[#allocation2 + $0x6a] sm:$0xff]
      %v1257 = vld [vmem:[#allocation2 + $0x72] sm:$0xff]
      %v1258 = vld [vmem:[#allocation2 + $0x7a] sm:$0xff]
      %v1259 = vld [vmem:[#allocation2 + $0x82] sm:$0xff]
      %v1260 = vld [vmem:[#allocation2 + $0x8a] sm:$0xff]
      %v1261 = vld [vmem:[#allocation2 + $0x92] sm:$0xff]
      %v1262 = vmax.f32 %v1244, %v1253
      %v1263 = vmax.f32 %v1245, %v1254
      %v1264 = vmax.f32 %v1246, %v1255
      %v1265 = vmax.f32 %v1247, %v1256
      %v1266 = vmax.f32 %v1248, %v1257
      %v1267 = vmax.f32 %v1249, %v1258
      %v1268 = vmax.f32 %v1250, %v1259
      %v1269 = vmax.f32 %v1251, %v1260
      %v1270 = vmax.f32 %v1252, %v1261
      %v1271 = vld [vmem:[#allocation2 + $0x1] sm:$0xff]
      %v1272 = vld [vmem:[#allocation2 + $0x9] sm:$0xff]
      %v1273 = vld [vmem:[#allocation2 + $0x11] sm:$0xff]
      %v1274 = vld [vmem:[#allocation2 + $0x19] sm:$0xff]
      %v1275 = vld [vmem:[#allocation2 + $0x21] sm:$0xff]
      %v1276 = vld [vmem:[#allocation2 + $0x29] sm:$0xff]
      %v1277 = vld [vmem:[#allocation2 + $0x31] sm:$0xff]
      %v1278 = vld [vmem:[#allocation2 + $0x39] sm:$0xff]
      %v1279 = vld [vmem:[#allocation2 + $0x41] sm:$0xff]
      %v1280 = vmax.f32 %v1262, %v1271
      %v1281 = vmax.f32 %v1263, %v1272
      %v1282 = vmax.f32 %v1264, %v1273
      %v1283 = vmax.f32 %v1265, %v1274
      %v1284 = vmax.f32 %v1266, %v1275
      %v1285 = vmax.f32 %v1267, %v1276
      %v1286 = vmax.f32 %v1268, %v1277
      %v1287 = vmax.f32 %v1269, %v1278
      %v1288 = vmax.f32 %v1270, %v1279
      %v1289 = vld [vmem:[#allocation2 + $0xa4] sm:$0xff]
      %v1290 = vld [vmem:[#allocation2 + $0xac] sm:$0xff]
      %v1291 = vld [vmem:[#allocation2 + $0xb4] sm:$0xff]
      %v1292 = vld [vmem:[#allocation2 + $0xbc] sm:$0xff]
      %v1293 = vld [vmem:[#allocation2 + $0xc4] sm:$0xff]
      %v1294 = vld [vmem:[#allocation2 + $0xcc] sm:$0xff]
      %v1295 = vld [vmem:[#allocation2 + $0xd4] sm:$0xff]
      %v1296 = vld [vmem:[#allocation2 + $0xdc] sm:$0xff]
      %v1297 = vld [vmem:[#allocation2 + $0xe4] sm:$0xff]
      %v1298 = vmax.f32 %v1280, %v1289
      %v1299 = vmax.f32 %v1281, %v1290
      %v1300 = vmax.f32 %v1282, %v1291
      %v1301 = vmax.f32 %v1283, %v1292
      %v1302 = vmax.f32 %v1284, %v1293
      %v1303 = vmax.f32 %v1285, %v1294
      %v1304 = vmax.f32 %v1286, %v1295
      %v1305 = vmax.f32 %v1287, %v1296
      %v1306 = vmax.f32 %v1288, %v1297
      %v1307 = vld [vmem:[#allocation2 + $0xf6] sm:$0xff]
      %v1308 = vld [vmem:[#allocation2 + $0xfe] sm:$0xff]
      %v1309 = vld [vmem:[#allocation2 + $0x106] sm:$0xff]
      %v1310 = vld [vmem:[#allocation2 + $0x10e] sm:$0xff]
      %v1311 = vld [vmem:[#allocation2 + $0x116] sm:$0xff]
      %v1312 = vld [vmem:[#allocation2 + $0x11e] sm:$0xff]
      %v1313 = vld [vmem:[#allocation2 + $0x126] sm:$0xff]
      %v1314 = vld [vmem:[#allocation2 + $0x12e] sm:$0xff]
      %v1315 = vld [vmem:[#allocation2 + $0x136] sm:$0xff]
      %v1316 = vmax.f32 %v1298, %v1307
      %v1317 = vmax.f32 %v1299, %v1308
      %v1318 = vmax.f32 %v1300, %v1309
      %v1319 = vmax.f32 %v1301, %v1310
      %v1320 = vmax.f32 %v1302, %v1311
      %v1321 = vmax.f32 %v1303, %v1312
      %v1322 = vmax.f32 %v1304, %v1313
      %v1323 = vmax.f32 %v1305, %v1314
      %v1324 = vmax.f32 %v1306, %v1315
      %v1325 = vld [vmem:[#allocation2 + $0xa5] sm:$0xff]
      %v1326 = vld [vmem:[#allocation2 + $0xad] sm:$0xff]
      %v1327 = vld [vmem:[#allocation2 + $0xb5] sm:$0xff]
      %v1328 = vld [vmem:[#allocation2 + $0xbd] sm:$0xff]
      %v1329 = vld [vmem:[#allocation2 + $0xc5] sm:$0xff]
      %v1330 = vld [vmem:[#allocation2 + $0xcd] sm:$0xff]
      %v1331 = vld [vmem:[#allocation2 + $0xd5] sm:$0xff]
      %v1332 = vld [vmem:[#allocation2 + $0xdd] sm:$0xff]
      %v1333 = vld [vmem:[#allocation2 + $0xe5] sm:$0xff]
      %v1334 = vmax.f32 %v1316, %v1325
      %v1335 = vmax.f32 %v1317, %v1326
      %v1336 = vmax.f32 %v1318, %v1327
      %v1337 = vmax.f32 %v1319, %v1328
      %v1338 = vmax.f32 %v1320, %v1329
      %v1339 = vmax.f32 %v1321, %v1330
      %v1340 = vmax.f32 %v1322, %v1331
      %v1341 = vmax.f32 %v1323, %v1332
      %v1342 = vmax.f32 %v1324, %v1333
      %v1343 = vld [vmem:[#allocation2 + $0x49] sm:$0xff]
      %v1344 = vmax.f32 %v1334, %v1272
      %v1345 = vmax.f32 %v1335, %v1273
      %v1346 = vmax.f32 %v1336, %v1274
      %v1347 = vmax.f32 %v1337, %v1275
      %v1348 = vmax.f32 %v1338, %v1276
      %v1349 = vmax.f32 %v1339, %v1277
      %v1350 = vmax.f32 %v1340, %v1278
      %v1351 = vmax.f32 %v1341, %v1279
      %v1352 = vmax.f32 %v1342, %v1343
      %v1353 = vld [vmem:[#allocation2 + $0x5b] sm:$0xff]
      %v1354 = vld [vmem:[#allocation2 + $0x63] sm:$0xff]
      %v1355 = vld [vmem:[#allocation2 + $0x6b] sm:$0xff]
      %v1356 = vld [vmem:[#allocation2 + $0x73] sm:$0xff]
      %v1357 = vld [vmem:[#allocation2 + $0x7b] sm:$0xff]
      %v1358 = vld [vmem:[#allocation2 + $0x83] sm:$0xff]
      %v1359 = vld [vmem:[#allocation2 + $0x8b] sm:$0xff]
      %v1360 = vld [vmem:[#allocation2 + $0x93] sm:$0xff]
      %v1361 = vld [vmem:[#allocation2 + $0x9b] sm:$0xff]
      %v1362 = vmax.f32 %v1344, %v1353
      %v1363 = vmax.f32 %v1345, %v1354
      %v1364 = vmax.f32 %v1346, %v1355
      %v1365 = vmax.f32 %v1347, %v1356
      %v1366 = vmax.f32 %v1348, %v1357
      %v1367 = vmax.f32 %v1349, %v1358
      %v1368 = vmax.f32 %v1350, %v1359
      %v1369 = vmax.f32 %v1351, %v1360
      %v1370 = vmax.f32 %v1352, %v1361
      %v1371 = vld [vmem:[#allocation2 + $0xa] sm:$0xff]
      %v1372 = vld [vmem:[#allocation2 + $0x12] sm:$0xff]
      %v1373 = vld [vmem:[#allocation2 + $0x1a] sm:$0xff]
      %v1374 = vld [vmem:[#allocation2 + $0x22] sm:$0xff]
      %v1375 = vld [vmem:[#allocation2 + $0x2a] sm:$0xff]
      %v1376 = vld [vmem:[#allocation2 + $0x32] sm:$0xff]
      %v1377 = vld [vmem:[#allocation2 + $0x3a] sm:$0xff]
      %v1378 = vld [vmem:[#allocation2 + $0x42] sm:$0xff]
      %v1379 = vld [vmem:[#allocation2 + $0x4a] sm:$0xff]
      %v1380 = vmax.f32 %v1362, %v1371
      %v1381 = vmax.f32 %v1363, %v1372
      %v1382 = vmax.f32 %v1364, %v1373
      %v1383 = vmax.f32 %v1365, %v1374
      %v1384 = vmax.f32 %v1366, %v1375
      %v1385 = vmax.f32 %v1367, %v1376
      %v1386 = vmax.f32 %v1368, %v1377
      %v1387 = vmax.f32 %v1369, %v1378
      %v1388 = vmax.f32 %v1370, %v1379
      %v1389 = vpack.c.bf16 %v1380, %v1380
      %v1390 = vpack.c.bf16 %v1381, %v1381
      %v1391 = vpack.c.bf16 %v1382, %v1382
      %v1392 = vpack.c.bf16 %v1383, %v1383
      %v1393 = vpack.c.bf16 %v1384, %v1384
      %v1394 = vpack.c.bf16 %v1385, %v1385
      %v1395 = vpack.c.bf16 %v1386, %v1386
      %v1396 = vpack.c.bf16 %v1387, %v1387
      %v1397 = vpack.c.bf16 %v1388, %v1388
      %vm1398 = vcmask 60416
      %1399 = vst.msk [vmem:[%s197] sm:$0xf] %vm1398, %v1389
      %1400 = vst.msk [vmem:[%s197 + $0x4] sm:$0xf] %vm1398, %v1390
      %1401 = vst.msk [vmem:[%s197 + $0x8] sm:$0xf] %vm1398, %v1391
      %1402 = vst.msk [vmem:[%s197 + $0xc] sm:$0xf] %vm1398, %v1392
      %1403 = vst.msk [vmem:[%s197 + $0x10] sm:$0xf] %vm1398, %v1393
      %1404 = vst.msk [vmem:[%s197 + $0x14] sm:$0xf] %vm1398, %v1394
      %1405 = vst.msk [vmem:[%s197 + $0x18] sm:$0xf] %vm1398, %v1395
      %1406 = vst.msk [vmem:[%s197 + $0x1c] sm:$0xf] %vm1398, %v1396
      %1407 = vst.msk [vmem:[%s197 + $0x20] sm:$0xf] %vm1398, %v1397
      %p1408 = scmp.lt.s32.totalorder %s15, 1
      %s1409 = scalar_select %p1408, %s15, 1
      %s1410 = smul.addr %s1409, 9
      %s1411 = smul.addr %s1410, 4
      %s1412 = scalar_lea.vmem %s4, %s1411
      // Predicated region
      $region37: #{_lambda_.5} parent=35 // pred_check
        %p1413 = pneg %p122
      $region38: #{_lambda_.5} parent=35 // pred_check_branch
        %1415 = sbr.rel (%p1413) target = $region40
      $region39: #{_lambda_.5} parent=35 // pred_region
        _
      $region40: #{_lambda_.5} parent=35 // pred_fallthru
        _
    $region36: #{_lambda_.5} parent=5 // pred_fallthru
      _
    %p1416 = scmp.le.s32.totalorder 2, %s10
    // Predicated region
    $region41: #{_lambda_.5} parent=5 // pred_check
      %p1417 = pneg %p1416
    $region42: #{_lambda_.5} parent=5 // pred_check_branch
      %1419 = sbr.rel (%p1417) target = $region44
    $region43: #{_lambda_.5} parent=5 // pred_region
      %s1420 = ssub.s32 %s10, 2
      // Predicated region
      $region45: #{_lambda_.5} parent=43 // pred_check
        %p1421 = pneg %p128
      $region46: #{_lambda_.5} parent=43 // pred_check_branch
        %1423 = sbr.rel (%p1421) target = $region48
      $region47: #{_lambda_.5} parent=43 // pred_region
        %p1424 = scmp.lt.s32.totalorder %s16, 1
        %s1425 = scalar_select %p1424, %s16, 1
        %s1426 = smul.addr %s1425, 9
        %s1427 = smul.addr %s1426, 4
        %s1428 = scalar_lea.vmem %s4, %s1427
      $region48: #{_lambda_.5} parent=43 // pred_fallthru
        _
    $region44: #{_lambda_.5} parent=5 // pred_fallthru
      _
  $region6: #{_lambda_.5} parent=0 // loop_footer
    %s14 = sadd.s32 1, %s10
  $region7: #{_lambda_.5} parent=0 // loop_footer_branch
    %9 = sbr.rel target = $region3
  $region8: #{_lambda_.5} parent=0 // loop_exit
    _

// kernel: _lambda_.6
$region0: #{_lambda_.6}
  #allocation0 [shape = 'u32[]', space=smem, size = 0x4, offset = 0x4, fixed_abs, tag = 'smem constant byte address 0x4 - core index']
  #allocation1 [shape = 'u32[72,128]{1,0:T(1,128)}', space=vmem, size = 0x9000, scoped, tag = 'internal scratch']
  #allocation2 [shape = 'f32[104,8]{1,0:T(8,128)}', space=vmem, size = 0xd000, scoped, tag = 'scratch operand']
  #allocation3 [shape = 'f32[38,16]{1,0:T(8,128)}', space=vmem, size = 0x5000, scoped, tag = 'scratch operand']
  #allocation4 [shape = 'f32[38,8]{1,0:T(8,128)}', space=vmem, size = 0x5000, scoped, tag = 'scratch operand']
  %s0 = inlined_call_operand.vmem [shape: bf16[2,104,8], index: 0, kind: input, shape index: {}]
  %s1 = inlined_call_operand.vmem [shape: f32[104,1], index: 1, kind: input, shape index: {}]
  %s2 = inlined_call_operand.vmem [shape: f32[38,1], index: 2, kind: input, shape index: {}]
  %s3 = inlined_call_operand.vmem [shape: f32[9,1,8], index: 3, kind: input, shape index: {}]
  %s4 = inlined_call_operand.vmem [shape: f32[1,8], index: 4, kind: input, shape index: {}]
  %s5 = inlined_call_operand.vmem [shape: bf16[8,8], index: 5, kind: input, shape index: {}]
  %s6 = inlined_call_operand.vmem [shape: f32[1,8], index: 6, kind: input, shape index: {}]
  %s7 = inlined_call_operand.vmem [shape: f32[9,1,8], index: 7, kind: input, shape index: {}]
  %s8 = inlined_call_operand.vmem [shape: f32[1,8], index: 8, kind: input, shape index: {}]
  %s9 = inlined_call_operand.vmem [shape: bf16[8,16], index: 9, kind: input, shape index: {}]
  %s10 = inlined_call_operand.vmem [shape: bf16[8,16], index: 10, kind: input, shape index: {}]
  %s11 = inlined_call_operand.vmem [shape: f32[1,16], index: 11, kind: input, shape index: {}]
  %s12 = inlined_call_operand.vmem [shape: bf16[16,16], index: 12, kind: input, shape index: {}]
  %s13 = inlined_call_operand.vmem [shape: bf16[1,16,8], index: 13, kind: input, shape index: {}]
  %s14 = inlined_call_operand.vmem [shape: f32[1,1,8], index: 14, kind: input, shape index: {}]
  %s15 = inlined_call_operand.vmem [shape: f32[1,9,1,8], index: 15, kind: input, shape index: {}]
  %s16 = inlined_call_operand.vmem [shape: f32[1,1,8], index: 16, kind: input, shape index: {}]
  %s17 = inlined_call_operand.vmem [shape: bf16[1,8,16], index: 17, kind: input, shape index: {}]
  %s18 = inlined_call_operand.vmem [shape: f32[1,1,16], index: 18, kind: input, shape index: {}]
  %s19 = inlined_call_operand.vmem [shape: bf16[2,24,16], index: 19, kind: output, shape index: {}]
  %s20 = sld [smem:[#allocation0]]
  $region109: #{_lambda_.6} parent=0
    _
  %s22 = ssub.s32 1, %s20
  %s23 = scalar_select 0, %s22, %s20
  loop: start=0, step=1, limit=4
  $region2: #{_lambda_.6} parent=0 // loop_pre_header
    _
  $region3: #{_lambda_.6} parent=0 // loop_header
    %s25 = sphi 0, %s29
    %p26 = scmp.ge.s32.totalorder %s25, 4
    %s35 = sphi 0, %s37
    %s38 = sphi 0, %s35
    %s39 = sphi 0, %s38
    %s55 = sphi 0, %s39
    %s59 = sphi 0, %s59
    %s61 = sphi 0, %s59
    %s62 = sphi 0, %s61
    %s76 = sphi 0, %s62
    %s80 = sphi 0, %s80
    %s82 = sphi 0, %s80
    %s83 = sphi 0, %s82
    %s97 = sphi 0, %s83
    %s101 = sphi 0, %s101
    %s103 = sphi 0, %s101
    %s104 = sphi 0, %s103
    %s118 = sphi 0, %s104
    %s122 = sphi 0, %s122
    %s124 = sphi 0, %s122
    %s125 = sphi 0, %s124
    %s139 = sphi 0, %s125
    %s143 = sphi 0, %s143
    %s145 = sphi 0, %s143
    %s146 = sphi 0, %s145
    %s160 = sphi 0, %s146
    %s164 = sphi 0, %s164
    %s166 = sphi 0, %s164
    %s167 = sphi 0, %s166
    %s181 = sphi 0, %s167
    %s185 = sphi 0, %s185
    %s187 = sphi 0, %s185
    %s188 = sphi 0, %s187
    %s202 = sphi 0, %s188
    %s206 = sphi 0, %s206
    %s208 = sphi 0, %s206
    %s209 = sphi 0, %s208
    %s223 = sphi 0, %s209
    %s227 = sphi 0, %s227
    %s229 = sphi 0, %s227
    %s230 = sphi 0, %s229
    %s244 = sphi 0, %s230
    %s248 = sphi 0, %s248
    %s250 = sphi 0, %s248
    %s251 = sphi 0, %s250
    %s265 = sphi 0, %s251
    %s269 = sphi 0, %s269
    %s271 = sphi 0, %s269
    %s272 = sphi 0, %s271
    %s286 = sphi 0, %s272
    %s290 = sphi 0, %s290
    %s292 = sphi 0, %s290
    %s293 = sphi 0, %s292
    %s307 = sphi 0, %s293
    %s311 = sphi 0, %s311
    %s313 = sphi 0, %s311
    %s314 = sphi 0, %s313
    %s328 = sphi 0, %s314
    %s332 = sphi 0, %s332
    %s334 = sphi 0, %s332
    %s335 = sphi 0, %s334
    %s349 = sphi 0, %s335
    %s353 = sphi 0, %s353
    %s355 = sphi 0, %s353
    %s356 = sphi 0, %s355
    %s370 = sphi 0, %s356
    %s374 = sphi 0, %s374
    %s376 = sphi 0, %s374
    %s377 = sphi 0, %s376
    %s391 = sphi 0, %s377
    %s395 = sphi 0, %s395
    %s397 = sphi 0, %s395
    %s398 = sphi 0, %s397
    %s412 = sphi 0, %s398
    %s416 = sphi 0, %s416
    %s418 = sphi 0, %s416
    %s419 = sphi 0, %s418
    %s433 = sphi 0, %s419
    %s439 = sphi 0, %s441
    %s442 = sphi 0, %s439
    %s443 = sphi 0, %s442
    %s459 = sphi 0, %s443
  $region4: #{_lambda_.6} parent=0 // loop_header_branch
    %28 = sbr.rel (%p26) target = $region8
  $region5: #{_lambda_.6} parent=0 // loop_body
    %s30 = ssub.s32 %s25, 1
    %s31 = ssub.s32 %s25, 2
    %s32 = sadd.s32 %s25, 1
    %s33 = ssub.s32 %s25, %s32
    %p34 = scmp.eq.s32.totalorder %s33, 0
    %s36 = sadd.s32 %s35, 1
    %s37 = scalar_select %p34, %s35, %s36
    %p40 = pneg %p34
    %p41 = scmp.eq.s32.totalorder %s25, 1
    %p42 = por %p40, %p41
    %p43 = scmp.ne.s32.totalorder %s35, %s38
    %p44 = scmp.eq.s32.totalorder %s25, 0
    %p45 = por %p43, %p44
    %p46 = scmp.ne.s32.totalorder %s35, %s38
    %p47 = scmp.eq.s32.totalorder %s30, 1
    %p48 = por %p46, %p47
    %p49 = scmp.ne.s32.totalorder %s38, %s39
    %p50 = scmp.eq.s32.totalorder %s30, 0
    %p51 = por %p49, %p50
    %p52 = scmp.ne.s32.totalorder %s38, %s39
    %p53 = scmp.eq.s32.totalorder %s31, 1
    %p54 = por %p52, %p53
    %p56 = scmp.ne.s32.totalorder %s39, %s55
    %p57 = scmp.eq.s32.totalorder %s31, 0
    %p58 = por %p56, %p57
    %s60 = sadd.s32 %s59, 1
    %p63 = scmp.eq.s32.totalorder %s25, 1
    %p64 = scmp.ne.s32.totalorder %s59, %s61
    %p65 = scmp.eq.s32.totalorder %s25, 0
    %p66 = por %p64, %p65
    %p67 = scmp.ne.s32.totalorder %s59, %s61
    %p68 = scmp.eq.s32.totalorder %s30, 1
    %p69 = por %p67, %p68
    %p70 = scmp.ne.s32.totalorder %s61, %s62
    %p71 = scmp.eq.s32.totalorder %s30, 0
    %p72 = por %p70, %p71
    %p73 = scmp.ne.s32.totalorder %s61, %s62
    %p74 = scmp.eq.s32.totalorder %s31, 1
    %p75 = por %p73, %p74
    %p77 = scmp.ne.s32.totalorder %s62, %s76
    %p78 = scmp.eq.s32.totalorder %s31, 0
    %p79 = por %p77, %p78
    %s81 = sadd.s32 %s80, 1
    %p84 = scmp.eq.s32.totalorder %s25, 1
    %p85 = scmp.ne.s32.totalorder %s80, %s82
    %p86 = scmp.eq.s32.totalorder %s25, 0
    %p87 = por %p85, %p86
    %p88 = scmp.ne.s32.totalorder %s80, %s82
    %p89 = scmp.eq.s32.totalorder %s30, 1
    %p90 = por %p88, %p89
    %p91 = scmp.ne.s32.totalorder %s82, %s83
    %p92 = scmp.eq.s32.totalorder %s30, 0
    %p93 = por %p91, %p92
    %p94 = scmp.ne.s32.totalorder %s82, %s83
    %p95 = scmp.eq.s32.totalorder %s31, 1
    %p96 = por %p94, %p95
    %p98 = scmp.ne.s32.totalorder %s83, %s97
    %p99 = scmp.eq.s32.totalorder %s31, 0
    %p100 = por %p98, %p99
    %s102 = sadd.s32 %s101, 1
    %p105 = scmp.eq.s32.totalorder %s25, 1
    %p106 = scmp.ne.s32.totalorder %s101, %s103
    %p107 = scmp.eq.s32.totalorder %s25, 0
    %p108 = por %p106, %p107
    %p109 = scmp.ne.s32.totalorder %s101, %s103
    %p110 = scmp.eq.s32.totalorder %s30, 1
    %p111 = por %p109, %p110
    %p112 = scmp.ne.s32.totalorder %s103, %s104
    %p113 = scmp.eq.s32.totalorder %s30, 0
    %p114 = por %p112, %p113
    %p115 = scmp.ne.s32.totalorder %s103, %s104
    %p116 = scmp.eq.s32.totalorder %s31, 1
    %p117 = por %p115, %p116
    %p119 = scmp.ne.s32.totalorder %s104, %s118
    %p120 = scmp.eq.s32.totalorder %s31, 0
    %p121 = por %p119, %p120
    %s123 = sadd.s32 %s122, 1
    %p126 = scmp.eq.s32.totalorder %s25, 1
    %p127 = scmp.ne.s32.totalorder %s122, %s124
    %p128 = scmp.eq.s32.totalorder %s25, 0
    %p129 = por %p127, %p128
    %p130 = scmp.ne.s32.totalorder %s122, %s124
    %p131 = scmp.eq.s32.totalorder %s30, 1
    %p132 = por %p130, %p131
    %p133 = scmp.ne.s32.totalorder %s124, %s125
    %p134 = scmp.eq.s32.totalorder %s30, 0
    %p135 = por %p133, %p134
    %p136 = scmp.ne.s32.totalorder %s124, %s125
    %p137 = scmp.eq.s32.totalorder %s31, 1
    %p138 = por %p136, %p137
    %p140 = scmp.ne.s32.totalorder %s125, %s139
    %p141 = scmp.eq.s32.totalorder %s31, 0
    %p142 = por %p140, %p141
    %s144 = sadd.s32 %s143, 1
    %p147 = scmp.eq.s32.totalorder %s25, 1
    %p148 = scmp.ne.s32.totalorder %s143, %s145
    %p149 = scmp.eq.s32.totalorder %s25, 0
    %p150 = por %p148, %p149
    %p151 = scmp.ne.s32.totalorder %s143, %s145
    %p152 = scmp.eq.s32.totalorder %s30, 1
    %p153 = por %p151, %p152
    %p154 = scmp.ne.s32.totalorder %s145, %s146
    %p155 = scmp.eq.s32.totalorder %s30, 0
    %p156 = por %p154, %p155
    %p157 = scmp.ne.s32.totalorder %s145, %s146
    %p158 = scmp.eq.s32.totalorder %s31, 1
    %p159 = por %p157, %p158
    %p161 = scmp.ne.s32.totalorder %s146, %s160
    %p162 = scmp.eq.s32.totalorder %s31, 0
    %p163 = por %p161, %p162
    %s165 = sadd.s32 %s164, 1
    %p168 = scmp.eq.s32.totalorder %s25, 1
    %p169 = scmp.ne.s32.totalorder %s164, %s166
    %p170 = scmp.eq.s32.totalorder %s25, 0
    %p171 = por %p169, %p170
    %p172 = scmp.ne.s32.totalorder %s164, %s166
    %p173 = scmp.eq.s32.totalorder %s30, 1
    %p174 = por %p172, %p173
    %p175 = scmp.ne.s32.totalorder %s166, %s167
    %p176 = scmp.eq.s32.totalorder %s30, 0
    %p177 = por %p175, %p176
    %p178 = scmp.ne.s32.totalorder %s166, %s167
    %p179 = scmp.eq.s32.totalorder %s31, 1
    %p180 = por %p178, %p179
    %p182 = scmp.ne.s32.totalorder %s167, %s181
    %p183 = scmp.eq.s32.totalorder %s31, 0
    %p184 = por %p182, %p183
    %s186 = sadd.s32 %s185, 1
    %p189 = scmp.eq.s32.totalorder %s25, 1
    %p190 = scmp.ne.s32.totalorder %s185, %s187
    %p191 = scmp.eq.s32.totalorder %s25, 0
    %p192 = por %p190, %p191
    %p193 = scmp.ne.s32.totalorder %s185, %s187
    %p194 = scmp.eq.s32.totalorder %s30, 1
    %p195 = por %p193, %p194
    %p196 = scmp.ne.s32.totalorder %s187, %s188
    %p197 = scmp.eq.s32.totalorder %s30, 0
    %p198 = por %p196, %p197
    %p199 = scmp.ne.s32.totalorder %s187, %s188
    %p200 = scmp.eq.s32.totalorder %s31, 1
    %p201 = por %p199, %p200
    %p203 = scmp.ne.s32.totalorder %s188, %s202
    %p204 = scmp.eq.s32.totalorder %s31, 0
    %p205 = por %p203, %p204
    %s207 = sadd.s32 %s206, 1
    %p210 = scmp.eq.s32.totalorder %s25, 1
    %p211 = scmp.ne.s32.totalorder %s206, %s208
    %p212 = scmp.eq.s32.totalorder %s25, 0
    %p213 = por %p211, %p212
    %p214 = scmp.ne.s32.totalorder %s206, %s208
    %p215 = scmp.eq.s32.totalorder %s30, 1
    %p216 = por %p214, %p215
    %p217 = scmp.ne.s32.totalorder %s208, %s209
    %p218 = scmp.eq.s32.totalorder %s30, 0
    %p219 = por %p217, %p218
    %p220 = scmp.ne.s32.totalorder %s208, %s209
    %p221 = scmp.eq.s32.totalorder %s31, 1
    %p222 = por %p220, %p221
    %p224 = scmp.ne.s32.totalorder %s209, %s223
    %p225 = scmp.eq.s32.totalorder %s31, 0
    %p226 = por %p224, %p225
    %s228 = sadd.s32 %s227, 1
    %p231 = scmp.eq.s32.totalorder %s25, 1
    %p232 = scmp.ne.s32.totalorder %s227, %s229
    %p233 = scmp.eq.s32.totalorder %s25, 0
    %p234 = por %p232, %p233
    %p235 = scmp.ne.s32.totalorder %s227, %s229
    %p236 = scmp.eq.s32.totalorder %s30, 1
    %p237 = por %p235, %p236
    %p238 = scmp.ne.s32.totalorder %s229, %s230
    %p239 = scmp.eq.s32.totalorder %s30, 0
    %p240 = por %p238, %p239
    %p241 = scmp.ne.s32.totalorder %s229, %s230
    %p242 = scmp.eq.s32.totalorder %s31, 1
    %p243 = por %p241, %p242
    %p245 = scmp.ne.s32.totalorder %s230, %s244
    %p246 = scmp.eq.s32.totalorder %s31, 0
    %p247 = por %p245, %p246
    %s249 = sadd.s32 %s248, 1
    %p252 = scmp.eq.s32.totalorder %s25, 1
    %p253 = scmp.ne.s32.totalorder %s248, %s250
    %p254 = scmp.eq.s32.totalorder %s25, 0
    %p255 = por %p253, %p254
    %p256 = scmp.ne.s32.totalorder %s248, %s250
    %p257 = scmp.eq.s32.totalorder %s30, 1
    %p258 = por %p256, %p257
    %p259 = scmp.ne.s32.totalorder %s250, %s251
    %p260 = scmp.eq.s32.totalorder %s30, 0
    %p261 = por %p259, %p260
    %p262 = scmp.ne.s32.totalorder %s250, %s251
    %p263 = scmp.eq.s32.totalorder %s31, 1
    %p264 = por %p262, %p263
    %p266 = scmp.ne.s32.totalorder %s251, %s265
    %p267 = scmp.eq.s32.totalorder %s31, 0
    %p268 = por %p266, %p267
    %s270 = sadd.s32 %s269, 1
    %p273 = scmp.eq.s32.totalorder %s25, 1
    %p274 = scmp.ne.s32.totalorder %s269, %s271
    %p275 = scmp.eq.s32.totalorder %s25, 0
    %p276 = por %p274, %p275
    %p277 = scmp.ne.s32.totalorder %s269, %s271
    %p278 = scmp.eq.s32.totalorder %s30, 1
    %p279 = por %p277, %p278
    %p280 = scmp.ne.s32.totalorder %s271, %s272
    %p281 = scmp.eq.s32.totalorder %s30, 0
    %p282 = por %p280, %p281
    %p283 = scmp.ne.s32.totalorder %s271, %s272
    %p284 = scmp.eq.s32.totalorder %s31, 1
    %p285 = por %p283, %p284
    %p287 = scmp.ne.s32.totalorder %s272, %s286
    %p288 = scmp.eq.s32.totalorder %s31, 0
    %p289 = por %p287, %p288
    %s291 = sadd.s32 %s290, 1
    %p294 = scmp.eq.s32.totalorder %s25, 1
    %p295 = scmp.ne.s32.totalorder %s290, %s292
    %p296 = scmp.eq.s32.totalorder %s25, 0
    %p297 = por %p295, %p296
    %p298 = scmp.ne.s32.totalorder %s290, %s292
    %p299 = scmp.eq.s32.totalorder %s30, 1
    %p300 = por %p298, %p299
    %p301 = scmp.ne.s32.totalorder %s292, %s293
    %p302 = scmp.eq.s32.totalorder %s30, 0
    %p303 = por %p301, %p302
    %p304 = scmp.ne.s32.totalorder %s292, %s293
    %p305 = scmp.eq.s32.totalorder %s31, 1
    %p306 = por %p304, %p305
    %p308 = scmp.ne.s32.totalorder %s293, %s307
    %p309 = scmp.eq.s32.totalorder %s31, 0
    %p310 = por %p308, %p309
    %s312 = sadd.s32 %s311, 1
    %p315 = scmp.eq.s32.totalorder %s25, 1
    %p316 = scmp.ne.s32.totalorder %s311, %s313
    %p317 = scmp.eq.s32.totalorder %s25, 0
    %p318 = por %p316, %p317
    %p319 = scmp.ne.s32.totalorder %s311, %s313
    %p320 = scmp.eq.s32.totalorder %s30, 1
    %p321 = por %p319, %p320
    %p322 = scmp.ne.s32.totalorder %s313, %s314
    %p323 = scmp.eq.s32.totalorder %s30, 0
    %p324 = por %p322, %p323
    %p325 = scmp.ne.s32.totalorder %s313, %s314
    %p326 = scmp.eq.s32.totalorder %s31, 1
    %p327 = por %p325, %p326
    %p329 = scmp.ne.s32.totalorder %s314, %s328
    %p330 = scmp.eq.s32.totalorder %s31, 0
    %p331 = por %p329, %p330
    %s333 = sadd.s32 %s332, 1
    %p336 = scmp.eq.s32.totalorder %s25, 1
    %p337 = scmp.ne.s32.totalorder %s332, %s334
    %p338 = scmp.eq.s32.totalorder %s25, 0
    %p339 = por %p337, %p338
    %p340 = scmp.ne.s32.totalorder %s332, %s334
    %p341 = scmp.eq.s32.totalorder %s30, 1
    %p342 = por %p340, %p341
    %p343 = scmp.ne.s32.totalorder %s334, %s335
    %p344 = scmp.eq.s32.totalorder %s30, 0
    %p345 = por %p343, %p344
    %p346 = scmp.ne.s32.totalorder %s334, %s335
    %p347 = scmp.eq.s32.totalorder %s31, 1
    %p348 = por %p346, %p347
    %p350 = scmp.ne.s32.totalorder %s335, %s349
    %p351 = scmp.eq.s32.totalorder %s31, 0
    %p352 = por %p350, %p351
    %s354 = sadd.s32 %s353, 1
    %p357 = scmp.eq.s32.totalorder %s25, 1
    %p358 = scmp.ne.s32.totalorder %s353, %s355
    %p359 = scmp.eq.s32.totalorder %s25, 0
    %p360 = por %p358, %p359
    %p361 = scmp.ne.s32.totalorder %s353, %s355
    %p362 = scmp.eq.s32.totalorder %s30, 1
    %p363 = por %p361, %p362
    %p364 = scmp.ne.s32.totalorder %s355, %s356
    %p365 = scmp.eq.s32.totalorder %s30, 0
    %p366 = por %p364, %p365
    %p367 = scmp.ne.s32.totalorder %s355, %s356
    %p368 = scmp.eq.s32.totalorder %s31, 1
    %p369 = por %p367, %p368
    %p371 = scmp.ne.s32.totalorder %s356, %s370
    %p372 = scmp.eq.s32.totalorder %s31, 0
    %p373 = por %p371, %p372
    %s375 = sadd.s32 %s374, 1
    %p378 = scmp.eq.s32.totalorder %s25, 1
    %p379 = scmp.ne.s32.totalorder %s374, %s376
    %p380 = scmp.eq.s32.totalorder %s25, 0
    %p381 = por %p379, %p380
    %p382 = scmp.ne.s32.totalorder %s374, %s376
    %p383 = scmp.eq.s32.totalorder %s30, 1
    %p384 = por %p382, %p383
    %p385 = scmp.ne.s32.totalorder %s376, %s377
    %p386 = scmp.eq.s32.totalorder %s30, 0
    %p387 = por %p385, %p386
    %p388 = scmp.ne.s32.totalorder %s376, %s377
    %p389 = scmp.eq.s32.totalorder %s31, 1
    %p390 = por %p388, %p389
    %p392 = scmp.ne.s32.totalorder %s377, %s391
    %p393 = scmp.eq.s32.totalorder %s31, 0
    %p394 = por %p392, %p393
    %s396 = sadd.s32 %s395, 1
    %p399 = scmp.eq.s32.totalorder %s25, 1
    %p400 = scmp.ne.s32.totalorder %s395, %s397
    %p401 = scmp.eq.s32.totalorder %s25, 0
    %p402 = por %p400, %p401
    %p403 = scmp.ne.s32.totalorder %s395, %s397
    %p404 = scmp.eq.s32.totalorder %s30, 1
    %p405 = por %p403, %p404
    %p406 = scmp.ne.s32.totalorder %s397, %s398
    %p407 = scmp.eq.s32.totalorder %s30, 0
    %p408 = por %p406, %p407
    %p409 = scmp.ne.s32.totalorder %s397, %s398
    %p410 = scmp.eq.s32.totalorder %s31, 1
    %p411 = por %p409, %p410
    %p413 = scmp.ne.s32.totalorder %s398, %s412
    %p414 = scmp.eq.s32.totalorder %s31, 0
    %p415 = por %p413, %p414
    %s417 = sadd.s32 %s416, 1
    %p420 = scmp.eq.s32.totalorder %s25, 1
    %p421 = scmp.ne.s32.totalorder %s416, %s418
    %p422 = scmp.eq.s32.totalorder %s25, 0
    %p423 = por %p421, %p422
    %p424 = scmp.ne.s32.totalorder %s416, %s418
    %p425 = scmp.eq.s32.totalorder %s30, 1
    %p426 = por %p424, %p425
    %p427 = scmp.ne.s32.totalorder %s418, %s419
    %p428 = scmp.eq.s32.totalorder %s30, 0
    %p429 = por %p427, %p428
    %p430 = scmp.ne.s32.totalorder %s418, %s419
    %p431 = scmp.eq.s32.totalorder %s31, 1
    %p432 = por %p430, %p431
    %p434 = scmp.ne.s32.totalorder %s419, %s433
    %p435 = scmp.eq.s32.totalorder %s31, 0
    %p436 = por %p434, %p435
    %s437 = ssub.s32 %s25, %s32
    %p438 = scmp.eq.s32.totalorder %s437, 0
    %s440 = sadd.s32 %s439, 1
    %s441 = scalar_select %p438, %s439, %s440
    %p444 = pneg %p438
    %p445 = scmp.eq.s32.totalorder %s25, 1
    %p446 = por %p444, %p445
    %p447 = scmp.ne.s32.totalorder %s439, %s442
    %p448 = scmp.eq.s32.totalorder %s25, 0
    %p449 = por %p447, %p448
    %p450 = scmp.ne.s32.totalorder %s439, %s442
    %p451 = scmp.eq.s32.totalorder %s30, 1
    %p452 = por %p450, %p451
    %p453 = scmp.ne.s32.totalorder %s442, %s443
    %p454 = scmp.eq.s32.totalorder %s30, 0
    %p455 = por %p453, %p454
    %p456 = scmp.ne.s32.totalorder %s442, %s443
    %p457 = scmp.eq.s32.totalorder %s31, 1
    %p458 = por %p456, %p457
    %p460 = scmp.ne.s32.totalorder %s443, %s459
    %p461 = scmp.eq.s32.totalorder %s31, 0
    %p462 = por %p460, %p461
    %p463 = scmp.le.s32.totalorder 1, %s25
    %p464 = scmp.lt.s32.totalorder %s25, 3
    %p465 = pnand %p463, %p464
    %p466 = pneg %p465
    // Predicated region
    $region9: #{_lambda_.6} parent=5 // pred_check
      _
    $region10: #{_lambda_.6} parent=5 // pred_check_branch
      %468 = sbr.rel (%p465) target = $region12
    $region11: #{_lambda_.6} parent=5 // pred_region
      %s469 = ssub.s32 %s25, 1
      // Predicated region
      $region13: #{_lambda_.6} parent=11 // pred_check
        %p470 = pneg %p72
      $region14: #{_lambda_.6} parent=11 // pred_check_branch
        %472 = sbr.rel (%p470) target = $region16
      $region15: #{_lambda_.6} parent=11 // pred_region
        _
      $region16: #{_lambda_.6} parent=11 // pred_fallthru
        _
      // Predicated region
      $region17: #{_lambda_.6} parent=11 // pred_check
        %p473 = pneg %p93
      $region18: #{_lambda_.6} parent=11 // pred_check_branch
        %475 = sbr.rel (%p473) target = $region20
      $region19: #{_lambda_.6} parent=11 // pred_region
        _
      $region20: #{_lambda_.6} parent=11 // pred_fallthru
        _
      // Predicated region
      $region21: #{_lambda_.6} parent=11 // pred_check
        %p476 = pneg %p114
      $region22: #{_lambda_.6} parent=11 // pred_check_branch
        %478 = sbr.rel (%p476) target = $region24
      $region23: #{_lambda_.6} parent=11 // pred_region
        _
      $region24: #{_lambda_.6} parent=11 // pred_fallthru
        _
      // Predicated region
      $region25: #{_lambda_.6} parent=11 // pred_check
        %p479 = pneg %p135
      $region26: #{_lambda_.6} parent=11 // pred_check_branch
        %481 = sbr.rel (%p479) target = $region28
      $region27: #{_lambda_.6} parent=11 // pred_region
        _
      $region28: #{_lambda_.6} parent=11 // pred_fallthru
        _
      // Predicated region
      $region29: #{_lambda_.6} parent=11 // pred_check
        %p482 = pneg %p156
      $region30: #{_lambda_.6} parent=11 // pred_check_branch
        %484 = sbr.rel (%p482) target = $region32
      $region31: #{_lambda_.6} parent=11 // pred_region
        _
      $region32: #{_lambda_.6} parent=11 // pred_fallthru
        _
      // Predicated region
      $region33: #{_lambda_.6} parent=11 // pred_check
        %p485 = pneg %p177
      $region34: #{_lambda_.6} parent=11 // pred_check_branch
        %487 = sbr.rel (%p485) target = $region36
      $region35: #{_lambda_.6} parent=11 // pred_region
        _
      $region36: #{_lambda_.6} parent=11 // pred_fallthru
        _
      // Predicated region
      $region37: #{_lambda_.6} parent=11 // pred_check
        %p488 = pneg %p198
      $region38: #{_lambda_.6} parent=11 // pred_check_branch
        %490 = sbr.rel (%p488) target = $region40
      $region39: #{_lambda_.6} parent=11 // pred_region
        _
      $region40: #{_lambda_.6} parent=11 // pred_fallthru
        _
      // Predicated region
      $region41: #{_lambda_.6} parent=11 // pred_check
        %p491 = pneg %p219
      $region42: #{_lambda_.6} parent=11 // pred_check_branch
        %493 = sbr.rel (%p491) target = $region44
      $region43: #{_lambda_.6} parent=11 // pred_region
        _
      $region44: #{_lambda_.6} parent=11 // pred_fallthru
        _
      // Predicated region
      $region45: #{_lambda_.6} parent=11 // pred_check
        %p494 = pneg %p240
      $region46: #{_lambda_.6} parent=11 // pred_check_branch
        %496 = sbr.rel (%p494) target = $region48
      $region47: #{_lambda_.6} parent=11 // pred_region
        _
      $region48: #{_lambda_.6} parent=11 // pred_fallthru
        _
      // Predicated region
      $region49: #{_lambda_.6} parent=11 // pred_check
        %p497 = pneg %p261
      $region50: #{_lambda_.6} parent=11 // pred_check_branch
        %499 = sbr.rel (%p497) target = $region52
      $region51: #{_lambda_.6} parent=11 // pred_region
        _
      $region52: #{_lambda_.6} parent=11 // pred_fallthru
        _
      // Predicated region
      $region53: #{_lambda_.6} parent=11 // pred_check
        %p500 = pneg %p282
      $region54: #{_lambda_.6} parent=11 // pred_check_branch
        %502 = sbr.rel (%p500) target = $region56
      $region55: #{_lambda_.6} parent=11 // pred_region
        _
      $region56: #{_lambda_.6} parent=11 // pred_fallthru
        _
      // Predicated region
      $region57: #{_lambda_.6} parent=11 // pred_check
        %p503 = pneg %p303
      $region58: #{_lambda_.6} parent=11 // pred_check_branch
        %505 = sbr.rel (%p503) target = $region60
      $region59: #{_lambda_.6} parent=11 // pred_region
        _
      $region60: #{_lambda_.6} parent=11 // pred_fallthru
        _
      // Predicated region
      $region61: #{_lambda_.6} parent=11 // pred_check
        %p506 = pneg %p324
      $region62: #{_lambda_.6} parent=11 // pred_check_branch
        %508 = sbr.rel (%p506) target = $region64
      $region63: #{_lambda_.6} parent=11 // pred_region
        _
      $region64: #{_lambda_.6} parent=11 // pred_fallthru
        _
      // Predicated region
      $region65: #{_lambda_.6} parent=11 // pred_check
        %p509 = pneg %p345
      $region66: #{_lambda_.6} parent=11 // pred_check_branch
        %511 = sbr.rel (%p509) target = $region68
      $region67: #{_lambda_.6} parent=11 // pred_region
        _
      $region68: #{_lambda_.6} parent=11 // pred_fallthru
        _
      // Predicated region
      $region69: #{_lambda_.6} parent=11 // pred_check
        %p512 = pneg %p366
      $region70: #{_lambda_.6} parent=11 // pred_check_branch
        %514 = sbr.rel (%p512) target = $region72
      $region71: #{_lambda_.6} parent=11 // pred_region
        _
      $region72: #{_lambda_.6} parent=11 // pred_fallthru
        _
      // Predicated region
      $region73: #{_lambda_.6} parent=11 // pred_check
        %p515 = pneg %p387
      $region74: #{_lambda_.6} parent=11 // pred_check_branch
        %517 = sbr.rel (%p515) target = $region76
      $region75: #{_lambda_.6} parent=11 // pred_region
        _
      $region76: #{_lambda_.6} parent=11 // pred_fallthru
        _
      // Predicated region
      $region77: #{_lambda_.6} parent=11 // pred_check
        %p518 = pneg %p408
      $region78: #{_lambda_.6} parent=11 // pred_check_branch
        %520 = sbr.rel (%p518) target = $region80
      $region79: #{_lambda_.6} parent=11 // pred_region
        _
      $region80: #{_lambda_.6} parent=11 // pred_fallthru
        _
      // Predicated region
      $region81: #{_lambda_.6} parent=11 // pred_check
        %p521 = pneg %p429
      $region82: #{_lambda_.6} parent=11 // pred_check_branch
        %523 = sbr.rel (%p521) target = $region84
      $region83: #{_lambda_.6} parent=11 // pred_region
        _
      $region84: #{_lambda_.6} parent=11 // pred_fallthru
        _
    $region12: #{_lambda_.6} parent=5 // pred_fallthru
      _
    %p524 = scmp.lt.s32.totalorder %s25, 2
    // Predicated region
    $region85: #{_lambda_.6} parent=5 // pred_check
      %p525 = pneg %p524
    $region86: #{_lambda_.6} parent=5 // pred_check_branch
      %527 = sbr.rel (%p525) target = $region88
    $region87: #{_lambda_.6} parent=5 // pred_region
      // Predicated region
      $region89: #{_lambda_.6} parent=87 // pred_check
        %p528 = pneg %p45
      $region90: #{_lambda_.6} parent=87 // pred_check_branch
        %530 = sbr.rel (%p528) target = $region92
      $region91: #{_lambda_.6} parent=87 // pred_region
        %p531 = scmp.lt.s32.totalorder %s25, 1
        %s532 = scalar_select %p531, %s25, 1
        %s533 = smul.addr %s532, 13
        %s534 = smul.addr %s533, 4
        %s535 = scalar_lea.vmem %s0, %s534
      $region92: #{_lambda_.6} parent=87 // pred_fallthru
        _
    $region88: #{_lambda_.6} parent=5 // pred_fallthru
      _
    %p536 = scmp.le.s32.totalorder 1, %s25
    %p537 = scmp.lt.s32.totalorder %s25, 3
    %p538 = pnand %p536, %p537
    %p539 = pneg %p538
    // Predicated region
    $region93: #{_lambda_.6} parent=5 // pred_check
      _
    $region94: #{_lambda_.6} parent=5 // pred_check_branch
      %541 = sbr.rel (%p538) target = $region96
    $region95: #{_lambda_.6} parent=5 // pred_region
      %s542 = ssub.s32 %s25, 1
      %p543 = scmp.lt.s32.totalorder %s30, 1
      %s544 = scalar_select %p543, %s30, 1
      %s545 = smul.addr %s544, 13
      %s546 = smul.addr %s545, 4
      %s547 = scalar_lea.vmem %s0, %s546
      %p548 = pneg %p51
      %p549 = pneg %p48
      %p550 = pneg %p72
      %p551 = pneg %p69
      %p552 = pneg %p93
      %p553 = pneg %p90
      %p554 = pneg %p114
      %p555 = pneg %p111
      %p556 = pneg %p135
      %p557 = pneg %p132
      %p558 = pneg %p156
      %p559 = pneg %p153
      %p560 = pneg %p177
      %p561 = pneg %p174
      %p562 = pneg %p198
      %p563 = pneg %p195
      %p564 = pneg %p219
      %p565 = pneg %p216
      %p566 = pneg %p240
      %p567 = pneg %p237
      %p568 = pneg %p261
      %p569 = pneg %p258
      %p570 = pneg %p282
      %p571 = pneg %p279
      %p572 = pneg %p303
      %p573 = pneg %p300
      %p574 = pneg %p324
      %p575 = pneg %p321
      %p576 = pneg %p345
      %p577 = pneg %p342
      %p578 = pneg %p366
      %p579 = pneg %p363
      %p580 = pneg %p387
      %p581 = pneg %p384
      %p582 = pneg %p408
      %p583 = pneg %p405
      %p584 = pneg %p429
      %p585 = pneg %p426
      %p586 = pneg %p455
      %p587 = pneg %p452
      %p588 = scmp.lt.s32.totalorder %s30, 1
      %s589 = scalar_select %p588, %s30, 1
      %s590 = smul.addr %s589, 3
      %s591 = smul.addr %s590, 4
      %s592 = scalar_lea.vmem %s19, %s591
      %p593 = scmp.lt.s32.totalorder %s30, 1
      %s594 = scalar_select %p593, %s30, 1
      %s595 = smul.addr %s594, 13
      %s596 = smul.addr %s595, 4
      %s597 = scalar_lea.vmem %s0, %s596
      %p598 = scmp.lt.s32.totalorder %s30, 1
      %s599 = scalar_select %p598, %s30, 1
      %s600 = smul.addr %s599, 3
      %s601 = smul.addr %s600, 4
      %s602 = scalar_lea.vmem %s19, %s601
      %v604 = vld [vmem:[%s597] sm:$0xf]
      %v605 = vld [vmem:[%s597 + $0x4] sm:$0xf]
      %v606 = vld [vmem:[%s597 + $0x8] sm:$0xf]
      %v607 = vld [vmem:[%s597 + $0xc] sm:$0xf]
      %v608 = vld [vmem:[%s597 + $0x10] sm:$0xf]
      %v609 = vld [vmem:[%s597 + $0x14] sm:$0xf]
      %v610 = vld [vmem:[%s597 + $0x18] sm:$0xf]
      %v611 = vld [vmem:[%s597 + $0x1c] sm:$0xf]
      %v612 = vld [vmem:[%s597 + $0x20] sm:$0xf]
      %v613 = vld [vmem:[%s597 + $0x24] sm:$0xf]
      %v614 = vld [vmem:[%s597 + $0x28] sm:$0xf]
      %v615 = vld [vmem:[%s597 + $0x2c] sm:$0xf]
      %v616 = vld [vmem:[%s597 + $0x30] sm:$0xf]
      %v617 = vld [vmem:[%s5] sm:$0xf]
      %v618 = vld [vmem:[%s6] sm:$0x1]
      %v620 = vperm.slane %v618, 0
      %v635 = vunpack.c.l.b16 %v604
      %v636 = vunpack.c.l.b16 %v605
      %v637 = vunpack.c.l.b16 %v606
      %v638 = vunpack.c.l.b16 %v607
      %v639 = vunpack.c.l.b16 %v608
      %v640 = vunpack.c.l.b16 %v609
      %v641 = vunpack.c.l.b16 %v610
      %v642 = vunpack.c.l.b16 %v611
      %v643 = vunpack.c.l.b16 %v612
      %v644 = vunpack.c.l.b16 %v613
      %v645 = vunpack.c.l.b16 %v614
      %v646 = vunpack.c.l.b16 %v615
      %v647 = vunpack.c.l.b16 %v616
      %v648 = vpack.c.b16 %v636, %v635
      %v649 = vpack.c.b16 %v638, %v637
      %v650 = vpack.c.b16 %v640, %v639
      %v651 = vpack.c.b16 %v642, %v641
      %v652 = vpack.c.b16 %v644, %v643
      %v653 = vpack.c.b16 %v646, %v645
      %v654 = vpack.c.b16 %v647, %v647
      %vm655 = vcmask 64512
      %v657 = vsel %vm655, %v648, 0
      %v660 = vsel %vm655, %v649, 0
      %v663 = vsel %vm655, %v650, 0
      %v666 = vsel %vm655, %v651, 0
      %v669 = vsel %vm655, %v652, 0
      %v672 = vsel %vm655, %v653, 0
      %v675 = vsel %vm655, %v654, 0
      %vm677 = vcmask 1043456
      %v679 = vsel %vm677, %v617, 0
      %681 = vmatpush.bf16.msra.mxu0 0
      %682 = vmatpush.bf16.msra.mxu0 0
      %683 = vmatpush.bf16.msra.mxu0 0
      %684 = vmatpush.bf16.msra.mxu0 0
      %685 = vmatpush.bf16.msra.mxu0 0
      %686 = vmatpush.bf16.msra.mxu0 0
      %687 = vmatpush.bf16.msra.mxu0 0
      %688 = vmatpush.bf16.msra.mxu0 %v679
      %689 = vmatmul.bf16.gmra.mxu0 %v657
      %v690 = vpop.f32.mrf.mxu0
      %v691 = vadd.f32 %v620, %v690
      %v692 = vpop.f32.mrf.mxu0
      %v693 = vadd.f32 %v620, %v692
      %694 = vmatmul.bf16.gmra.mxu0 %v660
      %v695 = vpop.f32.mrf.mxu0
      %v696 = vadd.f32 %v620, %v695
      %v697 = vpop.f32.mrf.mxu0
      %v698 = vadd.f32 %v620, %v697
      %699 = vmatmul.bf16.gmra.mxu0 %v663
      %v700 = vpop.f32.mrf.mxu0
      %v701 = vadd.f32 %v620, %v700
      %v702 = vpop.f32.mrf.mxu0
      %v703 = vadd.f32 %v620, %v702
      %704 = vmatmul.bf16.gmra.mxu0 %v666
      %v705 = vpop.f32.mrf.mxu0
      %v706 = vadd.f32 %v620, %v705
      %v707 = vpop.f32.mrf.mxu0
      %v708 = vadd.f32 %v620, %v707
      %709 = vmatmul.bf16.gmra.mxu0 %v669
      %v710 = vpop.f32.mrf.mxu0
      %v711 = vadd.f32 %v620, %v710
      %v712 = vpop.f32.mrf.mxu0
      %v713 = vadd.f32 %v620, %v712
      %714 = vmatmul.bf16.gmra.mxu0 %v672
      %v715 = vpop.f32.mrf.mxu0
      %v716 = vadd.f32 %v620, %v715
      %v717 = vpop.f32.mrf.mxu0
      %v718 = vadd.f32 %v620, %v717
      %719 = vmatmul.bf16.gmra.mxu0 %v675
      %v720 = vpop.f32.mrf.mxu0
      %v721 = vadd.f32 %v620, %v720
      %v722 = vpop.f32.mrf.mxu0
      %723 = vdwg.mxu0
      %v724 = vmax.f32 %v691, 0.0
      %v725 = vmax.f32 %v693, 0.0
      %v726 = vmax.f32 %v696, 0.0
      %v727 = vmax.f32 %v698, 0.0
      %v728 = vmax.f32 %v701, 0.0
      %v729 = vmax.f32 %v703, 0.0
      %v730 = vmax.f32 %v706, 0.0
      %v731 = vmax.f32 %v708, 0.0
      %v732 = vmax.f32 %v711, 0.0
      %v733 = vmax.f32 %v713, 0.0
      %v734 = vmax.f32 %v716, 0.0
      %v735 = vmax.f32 %v718, 0.0
      %v736 = vmax.f32 %v721, 0.0
      %v737 = vld [vmem:[%s1] sm:$0xff]
      %v738 = vld [vmem:[%s1 + $0x8] sm:$0xff]
      %v739 = vld [vmem:[%s1 + $0x10] sm:$0xff]
      %v740 = vld [vmem:[%s1 + $0x18] sm:$0xff]
      %v741 = vld [vmem:[%s1 + $0x20] sm:$0xff]
      %v742 = vld [vmem:[%s1 + $0x28] sm:$0xff]
      %v743 = vld [vmem:[%s1 + $0x30] sm:$0xff]
      %v744 = vld [vmem:[%s1 + $0x38] sm:$0xff]
      %v745 = vld [vmem:[%s1 + $0x40] sm:$0xff]
      %v746 = vld [vmem:[%s1 + $0x48] sm:$0xff]
      %v747 = vld [vmem:[%s1 + $0x50] sm:$0xff]
      %v748 = vld [vmem:[%s1 + $0x58] sm:$0xff]
      %v749 = vld [vmem:[%s1 + $0x60] sm:$0xff]
      %751 = vset.pattern.permute.xlu0 0
      %752 = vperm.xlu0 %751, %v737
      %v753 = vpop.permute.xlu0 %752
      %756 = vset.pattern.permute.xlu0 0
      %757 = vperm.xlu0 %756, %v738
      %v758 = vpop.permute.xlu0 %757
      %761 = vset.pattern.permute.xlu0 0
      %762 = vperm.xlu0 %761, %v739
      %v763 = vpop.permute.xlu0 %762
      %766 = vset.pattern.permute.xlu0 0
      %767 = vperm.xlu0 %766, %v740
      %v768 = vpop.permute.xlu0 %767
      %771 = vset.pattern.permute.xlu0 0
      %772 = vperm.xlu0 %771, %v741
      %v773 = vpop.permute.xlu0 %772
      %776 = vset.pattern.permute.xlu0 0
      %777 = vperm.xlu0 %776, %v742
      %v778 = vpop.permute.xlu0 %777
      %781 = vset.pattern.permute.xlu0 0
      %782 = vperm.xlu0 %781, %v743
      %v783 = vpop.permute.xlu0 %782
      %786 = vset.pattern.permute.xlu0 0
      %787 = vperm.xlu0 %786, %v744
      %v788 = vpop.permute.xlu0 %787
      %791 = vset.pattern.permute.xlu0 0
      %792 = vperm.xlu0 %791, %v745
      %v793 = vpop.permute.xlu0 %792
      %796 = vset.pattern.permute.xlu0 0
      %797 = vperm.xlu0 %796, %v746
      %v798 = vpop.permute.xlu0 %797
      %801 = vset.pattern.permute.xlu0 0
      %802 = vperm.xlu0 %801, %v747
      %v803 = vpop.permute.xlu0 %802
      %806 = vset.pattern.permute.xlu0 0
      %807 = vperm.xlu0 %806, %v748
      %v808 = vpop.permute.xlu0 %807
      %811 = vset.pattern.permute.xlu0 0
      %812 = vperm.xlu0 %811, %v749
      %v813 = vpop.permute.xlu0 %812
      %v815 = vmul.f32 %v724, %v753
      %v816 = vmul.f32 %v725, %v758
      %v817 = vmul.f32 %v726, %v763
      %v818 = vmul.f32 %v727, %v768
      %v819 = vmul.f32 %v728, %v773
      %v820 = vmul.f32 %v729, %v778
      %v821 = vmul.f32 %v730, %v783
      %v822 = vmul.f32 %v731, %v788
      %v823 = vmul.f32 %v732, %v793
      %v824 = vmul.f32 %v733, %v798
      %v825 = vmul.f32 %v734, %v803
      %v826 = vmul.f32 %v735, %v808
      %v827 = vmul.f32 %v736, %v813
      %828 = vst.msk [vmem:[#allocation2] sm:$0xff] %vm655, %v815
      %829 = vst.msk [vmem:[#allocation2 + $0x8] sm:$0xff] %vm655, %v816
      %830 = vst.msk [vmem:[#allocation2 + $0x10] sm:$0xff] %vm655, %v817
      %831 = vst.msk [vmem:[#allocation2 + $0x18] sm:$0xff] %vm655, %v818
      %832 = vst.msk [vmem:[#allocation2 + $0x20] sm:$0xff] %vm655, %v819
      %833 = vst.msk [vmem:[#allocation2 + $0x28] sm:$0xff] %vm655, %v820
      %834 = vst.msk [vmem:[#allocation2 + $0x30] sm:$0xff] %vm655, %v821
      %835 = vst.msk [vmem:[#allocation2 + $0x38] sm:$0xff] %vm655, %v822
      %836 = vst.msk [vmem:[#allocation2 + $0x40] sm:$0xff] %vm655, %v823
      %837 = vst.msk [vmem:[#allocation2 + $0x48] sm:$0xff] %vm655, %v824
      %838 = vst.msk [vmem:[#allocation2 + $0x50] sm:$0xff] %vm655, %v825
      %839 = vst.msk [vmem:[#allocation2 + $0x58] sm:$0xff] %vm655, %v826
      %840 = vst.msk [vmem:[#allocation2 + $0x60] sm:$0xff] %vm655, %v827
      %v841 = vld [vmem:[%s597] sm:$0xf]
      %v842 = vld [vmem:[%s597 + $0x4] sm:$0xf]
      %v843 = vld [vmem:[%s597 + $0x8] sm:$0x3]
      %v844 = vunpack.c.l.bf16 %v841
      %v845 = vunpack.c.l.bf16 %v842
      %v846 = vunpack.c.l.bf16 %v843
      %v847 = vld [vmem:[%s3] sm:$0x1]
      %v849 = vperm.slane %v847, 0
      %v851 = vmul.f32 %v844, %v849
      %v852 = vmul.f32 %v845, %v849
      %v853 = vmul.f32 %v846, %v849
      %v854 = vadd.f32 %v851, 0.0
      %v855 = vadd.f32 %v852, 0.0
      %v856 = vadd.f32 %v853, 0.0
      %v857 = vld [vmem:[#allocation2] sm:$0xff]
      %v858 = vld [vmem:[#allocation2 + $0x8] sm:$0xff]
      %v859 = vld [vmem:[#allocation2 + $0x10] sm:$0xf]
      %v860 = vld [vmem:[%s7] sm:$0x1]
      %v862 = vperm.slane %v860, 0
      %v864 = vmul.f32 %v857, %v862
      %v865 = vmul.f32 %v858, %v862
      %v866 = vmul.f32 %v859, %v862
      %v867 = vadd.f32 %v864, 0.0
      %v868 = vadd.f32 %v865, 0.0
      %v869 = vadd.f32 %v866, 0.0
      %v870 = vld [vmem:[%s597 + $0xc] sm:$0xe]
      %v871 = vld [vmem:[%s597 + $0x10] sm:$0xf]
      %v872 = vld [vmem:[%s597 + $0x14] sm:$0x7]
      %v873 = vunpack.c.l.bf16 %v870
      %v874 = vunpack.c.l.bf16 %v871
      %v875 = vunpack.c.l.bf16 %v872
      %s876 = scalar_lea.vmem %s3, 1
      %v877 = vld [vmem:[%s876] sm:$0x1]
      %v879 = vperm.slane %v877, 0
      %v881 = vmul.f32 %v873, %v879
      %v882 = vmul.f32 %v874, %v879
      %v883 = vmul.f32 %v875, %v879
      %vm887 = vcmask 1045504
      %v888 = vrot.slane %v881, 2
      %v889 = vrot.slane %v882, 2
      %v890 = vsel %vm887, %v888, %v889
      %v891 = vrot.slane %v883, 2
      %v892 = vsel %vm887, %v889, %v891
      %v896 = vadd.f32 %v854, %v890
      %v897 = vadd.f32 %v855, %v892
      %v898 = vadd.f32 %v856, %v891
      %v899 = vld [vmem:[#allocation2 + $0x1a] sm:$0xff]
      %v900 = vld [vmem:[#allocation2 + $0x22] sm:$0xff]
      %v901 = vld [vmem:[#allocation2 + $0x2a] sm:$0xf]
      %s902 = scalar_lea.vmem %s7, 1
      %v903 = vld [vmem:[%s902] sm:$0x1]
      %v905 = vperm.slane %v903, 0
      %v907 = vmul.f32 %v899, %v905
      %v908 = vmul.f32 %v900, %v905
      %v909 = vmul.f32 %v901, %v905
      %v910 = vadd.f32 %v867, %v907
      %v911 = vadd.f32 %v868, %v908
      %v912 = vadd.f32 %v869, %v909
      %v913 = vld [vmem:[%s597 + $0x8] sm:$0x7]
      %v914 = vunpack.c.l.bf16 %v913
      %s915 = scalar_lea.vmem %s3, 2
      %v916 = vld [vmem:[%s915] sm:$0x1]
      %v918 = vperm.slane %v916, 0
      %v920 = vmul.f32 %v844, %v918
      %v921 = vmul.f32 %v845, %v918
      %v922 = vmul.f32 %v914, %v918
      %vm926 = vcmask 1046528
      %v927 = vrot.slane %v920, 1
      %v928 = vrot.slane %v921, 1
      %v929 = vsel %vm926, %v927, %v928
      %v930 = vrot.slane %v922, 1
      %v931 = vsel %vm926, %v928, %v930
      %v935 = vadd.f32 %v896, %v929
      %v936 = vadd.f32 %v897, %v931
      %v937 = vadd.f32 %v898, %v930
      %v938 = vld [vmem:[#allocation2 + $0x1] sm:$0xff]
      %v939 = vld [vmem:[#allocation2 + $0x9] sm:$0xff]
      %v940 = vld [vmem:[#allocation2 + $0x11] sm:$0xf]
      %s941 = scalar_lea.vmem %s7, 2
      %v942 = vld [vmem:[%s941] sm:$0x1]
      %v944 = vperm.slane %v942, 0
      %v946 = vmul.f32 %v938, %v944
      %v947 = vmul.f32 %v939, %v944
      %v948 = vmul.f32 %v940, %v944
      %v949 = vadd.f32 %v910, %v946
      %v950 = vadd.f32 %v911, %v947
      %v951 = vadd.f32 %v912, %v948
      %v952 = vld [vmem:[%s597 + $0x18] sm:$0xc]
      %v953 = vld [vmem:[%s597 + $0x1c] sm:$0xf]
      %v954 = vld [vmem:[%s597 + $0x20] sm:$0xf]
      %v955 = vunpack.c.l.bf16 %v952
      %v956 = vunpack.c.l.bf16 %v953
      %v957 = vunpack.c.l.bf16 %v954
      %s958 = scalar_lea.vmem %s3, 3
      %v959 = vld [vmem:[%s958] sm:$0x1]
      %v961 = vperm.slane %v959, 0
      %v963 = vmul.f32 %v955, %v961
      %v964 = vmul.f32 %v956, %v961
      %v965 = vmul.f32 %v957, %v961
      %v969 = vrot.slane %v963, 4
      %v970 = vrot.slane %v964, 4
      %v971 = vsel %vm677, %v969, %v970
      %v972 = vrot.slane %v965, 4
      %v973 = vsel %vm677, %v970, %v972
      %v977 = vadd.f32 %v935, %v971
      %v978 = vadd.f32 %v936, %v973
      %v979 = vadd.f32 %v937, %v972
      %v980 = vld [vmem:[#allocation2 + $0x34] sm:$0xff]
      %v981 = vld [vmem:[#allocation2 + $0x3c] sm:$0xff]
      %v982 = vld [vmem:[#allocation2 + $0x44] sm:$0xf]
      %s983 = scalar_lea.vmem %s7, 3
      %v984 = vld [vmem:[%s983] sm:$0x1]
      %v986 = vperm.slane %v984, 0
      %v988 = vmul.f32 %v980, %v986
      %v989 = vmul.f32 %v981, %v986
      %v990 = vmul.f32 %v982, %v986
      %v991 = vadd.f32 %v949, %v988
      %v992 = vadd.f32 %v950, %v989
      %v993 = vadd.f32 %v951, %v990
      %v994 = vld [vmem:[%s597 + $0x24] sm:$0x8]
      %v995 = vld [vmem:[%s597 + $0x28] sm:$0xf]
      %v996 = vld [vmem:[%s597 + $0x2c] sm:$0xf]
      %v997 = vld [vmem:[%s597 + $0x30] sm:$0x1]
      %v998 = vunpack.c.l.bf16 %v994
      %v999 = vunpack.c.l.bf16 %v995
      %v1000 = vunpack.c.l.bf16 %v996
      %v1001 = vunpack.c.l.bf16 %v997
      %s1002 = scalar_lea.vmem %s3, 4
      %v1003 = vld [vmem:[%s1002] sm:$0x1]
      %v1005 = vperm.slane %v1003, 0
      %v1007 = vmul.f32 %v998, %v1005
      %v1008 = vmul.f32 %v999, %v1005
      %v1009 = vmul.f32 %v1000, %v1005
      %v1010 = vmul.f32 %v1001, %v1005
      %vm1015 = vcmask 1041408
      %v1016 = vrot.slane %v1007, 6
      %v1017 = vrot.slane %v1008, 6
      %v1018 = vsel %vm1015, %v1016, %v1017
      %v1019 = vrot.slane %v1009, 6
      %v1020 = vsel %vm1015, %v1017, %v1019
      %v1021 = vrot.slane %v1010, 6
      %v1022 = vsel %vm1015, %v1019, %v1021
      %v1026 = vadd.f32 %v977, %v1018
      %v1027 = vadd.f32 %v978, %v1020
      %v1028 = vadd.f32 %v979, %v1022
      %v1029 = vld [vmem:[#allocation2 + $0x4e] sm:$0xff]
      %v1030 = vld [vmem:[#allocation2 + $0x56] sm:$0xff]
      %v1031 = vld [vmem:[#allocation2 + $0x5e] sm:$0xf]
      %s1032 = scalar_lea.vmem %s7, 4
      %v1033 = vld [vmem:[%s1032] sm:$0x1]
      %v1035 = vperm.slane %v1033, 0
      %v1037 = vmul.f32 %v1029, %v1035
      %v1038 = vmul.f32 %v1030, %v1035
      %v1039 = vmul.f32 %v1031, %v1035
      %v1040 = vadd.f32 %v991, %v1037
      %v1041 = vadd.f32 %v992, %v1038
      %v1042 = vadd.f32 %v993, %v1039
      %v1043 = vld [vmem:[%s597 + $0x24] sm:$0x1]
      %v1044 = vunpack.c.l.bf16 %v1043
      %s1045 = scalar_lea.vmem %s3, 5
      %v1046 = vld [vmem:[%s1045] sm:$0x1]
      %v1048 = vperm.slane %v1046, 0
      %v1050 = vmul.f32 %v955, %v1048
      %v1051 = vmul.f32 %v956, %v1048
      %v1052 = vmul.f32 %v957, %v1048
      %v1053 = vmul.f32 %v1044, %v1048
      %vm1058 = vcmask 1042432
      %v1059 = vrot.slane %v1050, 5
      %v1060 = vrot.slane %v1051, 5
      %v1061 = vsel %vm1058, %v1059, %v1060
      %v1062 = vrot.slane %v1052, 5
      %v1063 = vsel %vm1058, %v1060, %v1062
      %v1064 = vrot.slane %v1053, 5
      %v1065 = vsel %vm1058, %v1062, %v1064
      %v1069 = vadd.f32 %v1026, %v1061
      %v1070 = vadd.f32 %v1027, %v1063
      %v1071 = vadd.f32 %v1028, %v1065
      %v1072 = vld [vmem:[#allocation2 + $0x35] sm:$0xff]
      %v1073 = vld [vmem:[#allocation2 + $0x3d] sm:$0xff]
      %v1074 = vld [vmem:[#allocation2 + $0x45] sm:$0xf]
      %s1075 = scalar_lea.vmem %s7, 5
      %v1076 = vld [vmem:[%s1075] sm:$0x1]
      %v1078 = vperm.slane %v1076, 0
      %v1080 = vmul.f32 %v1072, %v1078
      %v1081 = vmul.f32 %v1073, %v1078
      %v1082 = vmul.f32 %v1074, %v1078
      %v1083 = vadd.f32 %v1040, %v1080
      %v1084 = vadd.f32 %v1041, %v1081
      %v1085 = vadd.f32 %v1042, %v1082
      %v1086 = vld [vmem:[%s597] sm:$0xc]
      %v1087 = vld [vmem:[%s597 + $0x8] sm:$0xf]
      %v1088 = vld [vmem:[%s597 + $0xc] sm:$0x1]
      %v1089 = vunpack.c.l.bf16 %v1086
      %v1090 = vunpack.c.l.bf16 %v1087
      %v1091 = vunpack.c.l.bf16 %v1088
      %s1092 = scalar_lea.vmem %s3, 6
      %v1093 = vld [vmem:[%s1092] sm:$0x1]
      %v1095 = vperm.slane %v1093, 0
      %v1097 = vmul.f32 %v1089, %v1095
      %v1098 = vmul.f32 %v845, %v1095
      %v1099 = vmul.f32 %v1090, %v1095
      %v1100 = vmul.f32 %v1091, %v1095
      %v1105 = vrot.slane %v1097, 5
      %v1106 = vrot.slane %v1098, 5
      %v1107 = vsel %vm1058, %v1105, %v1106
      %v1108 = vrot.slane %v1099, 5
      %v1109 = vsel %vm1058, %v1106, %v1108
      %v1110 = vrot.slane %v1100, 5
      %v1111 = vsel %vm1058, %v1108, %v1110
      %v1115 = vadd.f32 %v1069, %v1107
      %v1116 = vadd.f32 %v1070, %v1109
      %v1117 = vadd.f32 %v1071, %v1111
      %v1118 = vld [vmem:[#allocation2 + $0x5] sm:$0xff]
      %v1119 = vld [vmem:[#allocation2 + $0xd] sm:$0xff]
      %v1120 = vld [vmem:[#allocation2 + $0x15] sm:$0xf]
      %s1121 = scalar_lea.vmem %s7, 6
      %v1122 = vld [vmem:[%s1121] sm:$0x1]
      %v1124 = vperm.slane %v1122, 0
      %v1126 = vmul.f32 %v1118, %v1124
      %v1127 = vmul.f32 %v1119, %v1124
      %v1128 = vmul.f32 %v1120, %v1124
      %v1129 = vadd.f32 %v1083, %v1126
      %v1130 = vadd.f32 %v1084, %v1127
      %v1131 = vadd.f32 %v1085, %v1128
      %v1132 = vld [vmem:[%s597 + $0xc] sm:$0x8]
      %v1133 = vld [vmem:[%s597 + $0x14] sm:$0xf]
      %v1134 = vld [vmem:[%s597 + $0x18] sm:$0x3]
      %v1135 = vunpack.c.l.bf16 %v1132
      %v1136 = vunpack.c.l.bf16 %v1133
      %v1137 = vunpack.c.l.bf16 %v1134
      %s1138 = scalar_lea.vmem %s3, 7
      %v1139 = vld [vmem:[%s1138] sm:$0x1]
      %v1141 = vperm.slane %v1139, 0
      %v1143 = vmul.f32 %v1135, %v1141
      %v1144 = vmul.f32 %v874, %v1141
      %v1145 = vmul.f32 %v1136, %v1141
      %v1146 = vmul.f32 %v1137, %v1141
      %vm1151 = vcmask 1040384
      %v1152 = vrot.slane %v1143, 7
      %v1153 = vrot.slane %v1144, 7
      %v1154 = vsel %vm1151, %v1152, %v1153
      %v1155 = vrot.slane %v1145, 7
      %v1156 = vsel %vm1151, %v1153, %v1155
      %v1157 = vrot.slane %v1146, 7
      %v1158 = vsel %vm1151, %v1155, %v1157
      %v1162 = vadd.f32 %v1115, %v1154
      %v1163 = vadd.f32 %v1116, %v1156
      %v1164 = vadd.f32 %v1117, %v1158
      %v1165 = vld [vmem:[#allocation2 + $0x1f] sm:$0xff]
      %v1166 = vld [vmem:[#allocation2 + $0x27] sm:$0xff]
      %v1167 = vld [vmem:[#allocation2 + $0x2f] sm:$0xf]
      %s1168 = scalar_lea.vmem %s7, 7
      %v1169 = vld [vmem:[%s1168] sm:$0x1]
      %v1171 = vperm.slane %v1169, 0
      %v1173 = vmul.f32 %v1165, %v1171
      %v1174 = vmul.f32 %v1166, %v1171
      %v1175 = vmul.f32 %v1167, %v1171
      %v1176 = vadd.f32 %v1129, %v1173
      %v1177 = vadd.f32 %v1130, %v1174
      %v1178 = vadd.f32 %v1131, %v1175
      %v1179 = vld [vmem:[%s597] sm:$0x8]
      %v1180 = vunpack.c.l.bf16 %v1179
      %s1181 = scalar_lea.vmem %s3, 8
      %v1182 = vld [vmem:[%s1181] sm:$0x1]
      %v1184 = vperm.slane %v1182, 0
      %v1186 = vmul.f32 %v1180, %v1184
      %v1187 = vmul.f32 %v845, %v1184
      %v1188 = vmul.f32 %v1090, %v1184
      %v1189 = vmul.f32 %v1091, %v1184
      %v1194 = vrot.slane %v1186, 6
      %v1195 = vrot.slane %v1187, 6
      %v1196 = vsel %vm1015, %v1194, %v1195
      %v1197 = vrot.slane %v1188, 6
      %v1198 = vsel %vm1015, %v1195, %v1197
      %v1199 = vrot.slane %v1189, 6
      %v1200 = vsel %vm1015, %v1197, %v1199
      %v1204 = vadd.f32 %v1162, %v1196
      %v1205 = vadd.f32 %v1163, %v1198
      %v1206 = vadd.f32 %v1164, %v1200
      %v1207 = vld [vmem:[#allocation2 + $0x6] sm:$0xff]
      %v1208 = vld [vmem:[#allocation2 + $0xe] sm:$0xff]
      %v1209 = vld [vmem:[#allocation2 + $0x16] sm:$0xf]
      %s1210 = scalar_lea.vmem %s7, 8
      %v1211 = vld [vmem:[%s1210] sm:$0x1]
      %v1213 = vperm.slane %v1211, 0
      %v1215 = vmul.f32 %v1207, %v1213
      %v1216 = vmul.f32 %v1208, %v1213
      %v1217 = vmul.f32 %v1209, %v1213
      %v1218 = vadd.f32 %v1176, %v1215
      %v1219 = vadd.f32 %v1177, %v1216
      %v1220 = vadd.f32 %v1178, %v1217
      %v1221 = vld [vmem:[%s4] sm:$0x1]
      %v1223 = vperm.slane %v1221, 0
      %v1225 = vadd.f32 %v1204, %v1223
      %v1226 = vadd.f32 %v1205, %v1223
      %v1227 = vadd.f32 %v1206, %v1223
      %v1228 = vld [vmem:[%s8] sm:$0x1]
      %v1230 = vperm.slane %v1228, 0
      %v1232 = vadd.f32 %v1218, %v1230
      %v1233 = vadd.f32 %v1219, %v1230
      %v1234 = vadd.f32 %v1220, %v1230
      %v1235 = vpack.c.bf16 %v1226, %v1225
      %v1236 = vpack.c.bf16 %v1227, %v1227
      %v1237 = vld [vmem:[%s9] sm:$0xf]
      %v1238 = vpack.c.bf16 %v1233, %v1232
      %v1239 = vpack.c.bf16 %v1234, %v1234
      %v1240 = vld [vmem:[%s10] sm:$0xf]
      %v1242 = vsel %vm655, %v1238, 0
      %v1245 = vsel %vm655, %v1239, 0
      %v1248 = vsel %vm677, %v1240, 0
      %1250 = vmatpush.bf16.msra.mxu0 0
      %1251 = vmatpush.bf16.msra.mxu0 0
      %1252 = vmatpush.bf16.msra.mxu0 0
      %1253 = vmatpush.bf16.msra.mxu0 0
      %1254 = vmatpush.bf16.msra.mxu0 0
      %1255 = vmatpush.bf16.msra.mxu0 0
      %1256 = vmatpush.bf16.msra.mxu0 0
      %1257 = vmatpush.bf16.msra.mxu0 %v1248
      %1258 = vmatmul.bf16.gmra.mxu0 %v1242
      %v1259 = vpop.f32.mrf.mxu0
      %v1260 = vadd.f32 0.0, %v1259
      %v1261 = vpop.f32.mrf.mxu0
      %v1262 = vadd.f32 0.0, %v1261
      %1263 = vmatmul.bf16.gmra.mxu0 %v1245
      %v1264 = vpop.f32.mrf.mxu0
      %v1265 = vadd.f32 0.0, %v1264
      %v1266 = vpop.f32.mrf.mxu0
      %1267 = vdwg.mxu0
      %v1269 = vsel %vm655, %v1235, 0
      %v1272 = vsel %vm655, %v1236, 0
      %v1275 = vsel %vm677, %v1237, 0
      %1277 = vmatpush.bf16.msra.mxu0 0
      %1278 = vmatpush.bf16.msra.mxu0 0
      %1279 = vmatpush.bf16.msra.mxu0 0
      %1280 = vmatpush.bf16.msra.mxu0 0
      %1281 = vmatpush.bf16.msra.mxu0 0
      %1282 = vmatpush.bf16.msra.mxu0 0
      %1283 = vmatpush.bf16.msra.mxu0 0
      %1284 = vmatpush.bf16.msra.mxu0 %v1275
      %1285 = vmatmul.bf16.gmra.mxu0 %v1269
      %v1286 = vpop.f32.mrf.mxu0
      %v1287 = vadd.f32 %v1260, %v1286
      %v1288 = vpop.f32.mrf.mxu0
      %v1289 = vadd.f32 %v1262, %v1288
      %1290 = vmatmul.bf16.gmra.mxu0 %v1272
      %v1291 = vpop.f32.mrf.mxu0
      %v1292 = vadd.f32 %v1265, %v1291
      %v1293 = vpop.f32.mrf.mxu0
      %1294 = vdwg.mxu0
      %v1295 = vld [vmem:[%s11] sm:$0x1]
      %v1297 = vperm.slane %v1295, 0
      %v1299 = vadd.f32 %v1287, %v1297
      %v1300 = vadd.f32 %v1289, %v1297
      %v1301 = vadd.f32 %v1292, %v1297
      %v1302 = vmax.f32 %v1299, 0.0
      %v1303 = vmax.f32 %v1300, 0.0
      %v1304 = vmax.f32 %v1301, 0.0
      %vm1305 = vcmask 130048
      %1306 = vst.msk [vmem:[#allocation3] sm:$0xff] %vm1305, 0.0
      %1307 = vst.msk [vmem:[#allocation3 + $0x8] sm:$0xff] %vm1305, 0.0
      %1308 = vst.msk [vmem:[#allocation3 + $0x10] sm:$0xff] %vm1305, 0.0
      %1309 = vst.msk [vmem:[#allocation3 + $0x18] sm:$0xff] %vm1305, 0.0
      %vm1310 = vcmask 128000
      %1311 = vst.msk [vmem:[#allocation3 + $0x20] sm:$0x3f] %vm1310, 0.0
      %vm1312 = vcmask 125952
      %1313 = vst.msk [vmem:[#allocation3 + $0x8] sm:$0xf] %vm1312, %v1302
      %vm1314 = vcmask 130053
      %1315 = vst.msk [vmem:[#allocation3 + $0x9] sm:$0xe0] %vm1314, %v1302
      %vm1316 = vcmask 122880
      %1317 = vst.msk [vmem:[#allocation3 + $0x11] sm:$0x1] %vm1316, %v1303
      %vm1318 = vcmask 128002
      %1319 = vst.msk [vmem:[#allocation3 + $0x12] sm:$0x3c] %vm1318, %v1303
      %vm1320 = vcmask 130055
      %1321 = vst.msk [vmem:[#allocation3 + $0x13] sm:$0x80] %vm1320, %v1303
      %vm1322 = vcmask 124928
      %1323 = vst.msk [vmem:[#allocation3 + $0x1b] sm:$0x7] %vm1322, %v1304
      %v1324 = vld [vmem:[%s13] sm:$0xf]
      %v1325 = vld [vmem:[%s13 + $0x4] sm:$0xf]
      %v1326 = vld [vmem:[%s14] sm:$0x1]
      %v1327 = vld [vmem:[%s15] sm:$0x1]
      %v1328 = vld [vmem:[%s15 + $0x1] sm:$0x1]
      %v1329 = vld [vmem:[%s15 + $0x2] sm:$0x1]
      %v1330 = vld [vmem:[%s15 + $0x3] sm:$0x1]
      %v1331 = vld [vmem:[%s15 + $0x4] sm:$0x1]
      %v1332 = vld [vmem:[%s15 + $0x5] sm:$0x1]
      %v1333 = vld [vmem:[%s15 + $0x6] sm:$0x1]
      %v1334 = vld [vmem:[%s15 + $0x7] sm:$0x1]
      %v1335 = vld [vmem:[%s15 + $0x8] sm:$0x1]
      %v1336 = vld [vmem:[%s16] sm:$0x1]
      %v1337 = vld [vmem:[%s17] sm:$0xf]
      %v1338 = vld [vmem:[%s18] sm:$0x1]
      %v1339 = vld [vmem:[#allocation3] sm:$0xff]
      %v1340 = vld [vmem:[#allocation3 + $0x8] sm:$0xff]
      %v1341 = vld [vmem:[#allocation3 + $0x10] sm:$0xff]
      %v1342 = vld [vmem:[#allocation3 + $0x18] sm:$0xff]
      %v1343 = vld [vmem:[#allocation3 + $0x20] sm:$0x3f]
      %v1344 = vpack.c.bf16 %v1340, %v1339
      %v1345 = vpack.c.bf16 %v1342, %v1341
      %v1346 = vpack.c.bf16 %v1343, %v1343
      %v1348 = vperm.slane %v1326, 0
      %v1352 = vunpack.c.l.b16 %v1324
      %v1353 = vunpack.c.l.b16 %v1325
      %v1354 = vpack.c.b16 %v1353, %v1352
      %v1357 = vsel %vm1305, %v1344, 0
      %v1360 = vsel %vm1305, %v1345, 0
      %v1363 = vsel %vm1305, %v1346, 0
      %1365 = vmatpush.bf16.msra.mxu0 0
      %1366 = vmatpush.bf16.msra.mxu0 0
      %1367 = vmatpush.bf16.msra.mxu0 0
      %1368 = vmatpush.bf16.msra.mxu0 0
      %1369 = vmatpush.bf16.msra.mxu0 0
      %1370 = vmatpush.bf16.msra.mxu0 0
      %1371 = vmatpush.bf16.msra.mxu0 0
      %1372 = vmatpush.bf16.msra.mxu0 %v1354
      %1373 = vmatmul.bf16.gmra.mxu0 %v1357
      %v1374 = vpop.f32.mrf.mxu0
      %v1375 = vadd.f32 %v1348, %v1374
      %v1376 = vpop.f32.mrf.mxu0
      %v1377 = vadd.f32 %v1348, %v1376
      %1378 = vmatmul.bf16.gmra.mxu0 %v1360
      %v1379 = vpop.f32.mrf.mxu0
      %v1380 = vadd.f32 %v1348, %v1379
      %v1381 = vpop.f32.mrf.mxu0
      %v1382 = vadd.f32 %v1348, %v1381
      %1383 = vmatmul.bf16.gmra.mxu0 %v1363
      %v1384 = vpop.f32.mrf.mxu0
      %v1385 = vadd.f32 %v1348, %v1384
      %v1386 = vpop.f32.mrf.mxu0
      %1387 = vdwg.mxu0
      %v1388 = vmax.f32 %v1375, 0.0
      %v1389 = vmax.f32 %v1377, 0.0
      %v1390 = vmax.f32 %v1380, 0.0
      %v1391 = vmax.f32 %v1382, 0.0
      %v1392 = vmax.f32 %v1385, 0.0
      %v1393 = vld [vmem:[%s2] sm:$0xff]
      %v1394 = vld [vmem:[%s2 + $0x8] sm:$0xff]
      %v1395 = vld [vmem:[%s2 + $0x10] sm:$0xff]
      %v1396 = vld [vmem:[%s2 + $0x18] sm:$0xff]
      %v1397 = vld [vmem:[%s2 + $0x20] sm:$0x3f]
      %1399 = vset.pattern.permute.xlu0 0
      %1400 = vperm.xlu0 %1399, %v1393
      %v1401 = vpop.permute.xlu0 %1400
      %1404 = vset.pattern.permute.xlu0 0
      %1405 = vperm.xlu0 %1404, %v1394
      %v1406 = vpop.permute.xlu0 %1405
      %1409 = vset.pattern.permute.xlu0 0
      %1410 = vperm.xlu0 %1409, %v1395
      %v1411 = vpop.permute.xlu0 %1410
      %1414 = vset.pattern.permute.xlu0 0
      %1415 = vperm.xlu0 %1414, %v1396
      %v1416 = vpop.permute.xlu0 %1415
      %1419 = vset.pattern.permute.xlu0 0
      %1420 = vperm.xlu0 %1419, %v1397
      %v1421 = vpop.permute.xlu0 %1420
      %v1423 = vmul.f32 %v1388, %v1401
      %v1424 = vmul.f32 %v1389, %v1406
      %v1425 = vmul.f32 %v1390, %v1411
      %v1426 = vmul.f32 %v1391, %v1416
      %v1427 = vmul.f32 %v1392, %v1421
      %1428 = vst.msk [vmem:[#allocation4] sm:$0xff] %vm655, %v1423
      %1429 = vst.msk [vmem:[#allocation4 + $0x8] sm:$0xff] %vm655, %v1424
      %1430 = vst.msk [vmem:[#allocation4 + $0x10] sm:$0xff] %vm655, %v1425
      %1431 = vst.msk [vmem:[#allocation4 + $0x18] sm:$0xff] %vm655, %v1426
      %vm1432 = vcmask 62464
      %1433 = vst.msk [vmem:[#allocation4 + $0x20] sm:$0x3f] %vm1432, %v1427
      %v1434 = vld [vmem:[#allocation4] sm:$0xff]
      %v1435 = vld [vmem:[#allocation4 + $0x8] sm:$0xff]
      %v1436 = vld [vmem:[#allocation4 + $0x10] sm:$0xff]
      %v1438 = vperm.slane %v1327, 0
      %v1440 = vmul.f32 %v1434, %v1438
      %v1441 = vmul.f32 %v1435, %v1438
      %v1442 = vmul.f32 %v1436, %v1438
      %v1443 = vadd.f32 %v1440, 0.0
      %v1444 = vadd.f32 %v1441, 0.0
      %v1445 = vadd.f32 %v1442, 0.0
      %v1446 = vld [vmem:[#allocation4 + $0x1] sm:$0xff]
      %v1447 = vld [vmem:[#allocation4 + $0x9] sm:$0xff]
      %v1448 = vld [vmem:[#allocation4 + $0x11] sm:$0xff]
      %v1450 = vperm.slane %v1328, 0
      %v1452 = vmul.f32 %v1446, %v1450
      %v1453 = vmul.f32 %v1447, %v1450
      %v1454 = vmul.f32 %v1448, %v1450
      %v1455 = vadd.f32 %v1443, %v1452
      %v1456 = vadd.f32 %v1444, %v1453
      %v1457 = vadd.f32 %v1445, %v1454
      %v1458 = vld [vmem:[#allocation4 + $0x2] sm:$0xff]
      %v1459 = vld [vmem:[#allocation4 + $0xa] sm:$0xff]
      %v1460 = vld [vmem:[#allocation4 + $0x12] sm:$0xff]
      %v1462 = vperm.slane %v1329, 0
      %v1464 = vmul.f32 %v1458, %v1462
      %v1465 = vmul.f32 %v1459, %v1462
      %v1466 = vmul.f32 %v1460, %v1462
      %v1467 = vadd.f32 %v1455, %v1464
      %v1468 = vadd.f32 %v1456, %v1465
      %v1469 = vadd.f32 %v1457, %v1466
      %v1470 = vld [vmem:[#allocation4 + $0x6] sm:$0xff]
      %v1471 = vld [vmem:[#allocation4 + $0xe] sm:$0xff]
      %v1472 = vld [vmem:[#allocation4 + $0x16] sm:$0xff]
      %v1474 = vperm.slane %v1330, 0
      %v1476 = vmul.f32 %v1470, %v1474
      %v1477 = vmul.f32 %v1471, %v1474
      %v1478 = vmul.f32 %v1472, %v1474
      %v1479 = vadd.f32 %v1467, %v1476
      %v1480 = vadd.f32 %v1468, %v1477
      %v1481 = vadd.f32 %v1469, %v1478
      %v1482 = vld [vmem:[#allocation4 + $0x7] sm:$0xff]
      %v1483 = vld [vmem:[#allocation4 + $0xf] sm:$0xff]
      %v1484 = vld [vmem:[#allocation4 + $0x17] sm:$0xff]
      %v1486 = vperm.slane %v1331, 0
      %v1488 = vmul.f32 %v1482, %v1486
      %v1489 = vmul.f32 %v1483, %v1486
      %v1490 = vmul.f32 %v1484, %v1486
      %v1491 = vadd.f32 %v1479, %v1488
      %v1492 = vadd.f32 %v1480, %v1489
      %v1493 = vadd.f32 %v1481, %v1490
      %v1494 = vld [vmem:[#allocation4 + $0x18] sm:$0xff]
      %v1496 = vperm.slane %v1332, 0
      %v1498 = vmul.f32 %v1435, %v1496
      %v1499 = vmul.f32 %v1436, %v1496
      %v1500 = vmul.f32 %v1494, %v1496
      %v1501 = vadd.f32 %v1491, %v1498
      %v1502 = vadd.f32 %v1492, %v1499
      %v1503 = vadd.f32 %v1493, %v1500
      %v1504 = vld [vmem:[#allocation4 + $0xc] sm:$0xff]
      %v1505 = vld [vmem:[#allocation4 + $0x14] sm:$0xff]
      %v1506 = vld [vmem:[#allocation4 + $0x1c] sm:$0xff]
      %v1508 = vperm.slane %v1333, 0
      %v1510 = vmul.f32 %v1504, %v1508
      %v1511 = vmul.f32 %v1505, %v1508
      %v1512 = vmul.f32 %v1506, %v1508
      %v1513 = vadd.f32 %v1501, %v1510
      %v1514 = vadd.f32 %v1502, %v1511
      %v1515 = vadd.f32 %v1503, %v1512
      %v1516 = vld [vmem:[#allocation4 + $0xd] sm:$0xff]
      %v1517 = vld [vmem:[#allocation4 + $0x15] sm:$0xff]
      %v1518 = vld [vmem:[#allocation4 + $0x1d] sm:$0xff]
      %v1520 = vperm.slane %v1334, 0
      %v1522 = vmul.f32 %v1516, %v1520
      %v1523 = vmul.f32 %v1517, %v1520
      %v1524 = vmul.f32 %v1518, %v1520
      %v1525 = vadd.f32 %v1513, %v1522
      %v1526 = vadd.f32 %v1514, %v1523
      %v1527 = vadd.f32 %v1515, %v1524
      %v1528 = vld [vmem:[#allocation4 + $0x1e] sm:$0xff]
      %v1530 = vperm.slane %v1335, 0
      %v1532 = vmul.f32 %v1471, %v1530
      %v1533 = vmul.f32 %v1472, %v1530
      %v1534 = vmul.f32 %v1528, %v1530
      %v1535 = vadd.f32 %v1525, %v1532
      %v1536 = vadd.f32 %v1526, %v1533
      %v1537 = vadd.f32 %v1527, %v1534
      %v1539 = vperm.slane %v1336, 0
      %v1541 = vadd.f32 %v1535, %v1539
      %v1542 = vadd.f32 %v1536, %v1539
      %v1543 = vadd.f32 %v1537, %v1539
      %v1544 = vld [vmem:[#allocation3 + $0x7] sm:$0xff]
      %v1545 = vld [vmem:[#allocation3 + $0xf] sm:$0xff]
      %v1546 = vld [vmem:[#allocation3 + $0x17] sm:$0xff]
      %v1547 = vpack.c.bf16 %v1545, %v1544
      %v1548 = vpack.c.bf16 %v1546, %v1546
      %v1549 = vld [vmem:[%s12] sm:$0xf]
      %v1550 = vld [vmem:[%s12 + $0x4] sm:$0xf]
      %v1551 = vpack.c.bf16 %v1542, %v1541
      %v1552 = vpack.c.bf16 %v1543, %v1543
      %v1554 = vsel %vm655, %v1551, 0
      %v1557 = vsel %vm655, %v1552, 0
      %v1560 = vsel %vm677, %v1337, 0
      %1562 = vmatpush.bf16.msra.mxu0 0
      %1563 = vmatpush.bf16.msra.mxu0 0
      %1564 = vmatpush.bf16.msra.mxu0 0
      %1565 = vmatpush.bf16.msra.mxu0 0
      %1566 = vmatpush.bf16.msra.mxu0 0
      %1567 = vmatpush.bf16.msra.mxu0 0
      %1568 = vmatpush.bf16.msra.mxu0 0
      %1569 = vmatpush.bf16.msra.mxu0 %v1560
      %1570 = vmatmul.bf16.gmra.mxu0 %v1554
      %v1571 = vpop.f32.mrf.mxu0
      %v1572 = vadd.f32 0.0, %v1571
      %v1573 = vpop.f32.mrf.mxu0
      %v1574 = vadd.f32 0.0, %v1573
      %1575 = vmatmul.bf16.gmra.mxu0 %v1557
      %v1576 = vpop.f32.mrf.mxu0
      %v1577 = vadd.f32 0.0, %v1576
      %v1578 = vpop.f32.mrf.mxu0
      %1579 = vdwg.mxu0
      %v1582 = vunpack.c.l.b16 %v1549
      %v1583 = vunpack.c.l.b16 %v1550
      %v1584 = vpack.c.b16 %v1583, %v1582
      %v1587 = vsel %vm1305, %v1547, 0
      %v1590 = vsel %vm1305, %v1548, 0
      %1592 = vmatpush.bf16.msra.mxu0 0
      %1593 = vmatpush.bf16.msra.mxu0 0
      %1594 = vmatpush.bf16.msra.mxu0 0
      %1595 = vmatpush.bf16.msra.mxu0 0
      %1596 = vmatpush.bf16.msra.mxu0 0
      %1597 = vmatpush.bf16.msra.mxu0 0
      %1598 = vmatpush.bf16.msra.mxu0 0
      %1599 = vmatpush.bf16.msra.mxu0 %v1584
      %1600 = vmatmul.bf16.gmra.mxu0 %v1587
      %v1601 = vpop.f32.mrf.mxu0
      %v1602 = vadd.f32 %v1572, %v1601
      %v1603 = vpop.f32.mrf.mxu0
      %v1604 = vadd.f32 %v1574, %v1603
      %1605 = vmatmul.bf16.gmra.mxu0 %v1590
      %v1606 = vpop.f32.mrf.mxu0
      %v1607 = vadd.f32 %v1577, %v1606
      %v1608 = vpop.f32.mrf.mxu0
      %1609 = vdwg.mxu0
      %v1611 = vperm.slane %v1338, 0
      %v1613 = vadd.f32 %v1602, %v1611
      %v1614 = vadd.f32 %v1604, %v1611
      %v1615 = vadd.f32 %v1607, %v1611
      %v1616 = vmax.f32 %v1613, 0.0
      %v1617 = vmax.f32 %v1614, 0.0
      %v1618 = vmax.f32 %v1615, 0.0
      %v1619 = vld [vmem:[%s2 + $0x7] sm:$0xff]
      %v1620 = vld [vmem:[%s2 + $0xf] sm:$0xff]
      %v1621 = vld [vmem:[%s2 + $0x17] sm:$0xff]
      %1623 = vset.pattern.permute.xlu0 0
      %1624 = vperm.xlu0 %1623, %v1619
      %v1625 = vpop.permute.xlu0 %1624
      %1628 = vset.pattern.permute.xlu0 0
      %1629 = vperm.xlu0 %1628, %v1620
      %v1630 = vpop.permute.xlu0 %1629
      %1633 = vset.pattern.permute.xlu0 0
      %1634 = vperm.xlu0 %1633, %v1621
      %v1635 = vpop.permute.xlu0 %1634
      %v1637 = vmul.f32 %v1616, %v1625
      %v1638 = vmul.f32 %v1617, %v1630
      %v1639 = vmul.f32 %v1618, %v1635
      %1640 = vst.msk [vmem:[#allocation3 + $0x7] sm:$0xff] %vm1305, %v1637
      %1641 = vst.msk [vmem:[#allocation3 + $0xf] sm:$0xff] %vm1305, %v1638
      %1642 = vst.msk [vmem:[#allocation3 + $0x17] sm:$0xff] %vm1305, %v1639
      %v1643 = vld [vmem:[#allocation3 + $0x7] sm:$0xff]
      %v1644 = vld [vmem:[#allocation3 + $0xf] sm:$0xff]
      %v1645 = vld [vmem:[#allocation3 + $0x17] sm:$0xff]
      %v1646 = vpack.c.bf16 %v1643, %v1643
      %v1647 = vpack.c.bf16 %v1644, %v1644
      %v1648 = vpack.c.bf16 %v1645, %v1645
      %1649 = vst.msk [vmem:[%s602] sm:$0xf] %vm1312, %v1646
      %1650 = vst.msk [vmem:[%s602 + $0x4] sm:$0xf] %vm1312, %v1647
      %1651 = vst.msk [vmem:[%s602 + $0x8] sm:$0xf] %vm1312, %v1648
      %p1652 = scmp.lt.s32.totalorder %s30, 1
      %s1653 = scalar_select %p1652, %s30, 1
      %s1654 = smul.addr %s1653, 3
      %s1655 = smul.addr %s1654, 4
      %s1656 = scalar_lea.vmem %s19, %s1655
      // Predicated region
      $region97: #{_lambda_.6} parent=95 // pred_check
        %p1657 = pneg %p452
      $region98: #{_lambda_.6} parent=95 // pred_check_branch
        %1659 = sbr.rel (%p1657) target = $region100
      $region99: #{_lambda_.6} parent=95 // pred_region
        _
      $region100: #{_lambda_.6} parent=95 // pred_fallthru
        _
    $region96: #{_lambda_.6} parent=5 // pred_fallthru
      _
    %p1660 = scmp.le.s32.totalorder 2, %s25
    // Predicated region
    $region101: #{_lambda_.6} parent=5 // pred_check
      %p1661 = pneg %p1660
    $region102: #{_lambda_.6} parent=5 // pred_check_branch
      %1663 = sbr.rel (%p1661) target = $region104
    $region103: #{_lambda_.6} parent=5 // pred_region
      %s1664 = ssub.s32 %s25, 2
      // Predicated region
      $region105: #{_lambda_.6} parent=103 // pred_check
        %p1665 = pneg %p458
      $region106: #{_lambda_.6} parent=103 // pred_check_branch
        %1667 = sbr.rel (%p1665) target = $region108
      $region107: #{_lambda_.6} parent=103 // pred_region
        %p1668 = scmp.lt.s32.totalorder %s31, 1
        %s1669 = scalar_select %p1668, %s31, 1
        %s1670 = smul.addr %s1669, 3
        %s1671 = smul.addr %s1670, 4
        %s1672 = scalar_lea.vmem %s19, %s1671
      $region108: #{_lambda_.6} parent=103 // pred_fallthru
        _
    $region104: #{_lambda_.6} parent=5 // pred_fallthru
      _
  $region6: #{_lambda_.6} parent=0 // loop_footer
    %s29 = sadd.s32 1, %s25
  $region7: #{_lambda_.6} parent=0 // loop_footer_branch
    %24 = sbr.rel target = $region3
  $region8: #{_lambda_.6} parent=0 // loop_exit
    _

// kernel: _lambda_.9
$region0: #{_lambda_.9}
  #allocation0 [shape = 'u32[]', space=smem, size = 0x4, offset = 0x4, fixed_abs, tag = 'smem constant byte address 0x4 - core index']
  #allocation1 [shape = 'u32[72,128]{1,0:T(1,128)}', space=vmem, size = 0x9000, scoped, tag = 'internal scratch']
  %s0 = inlined_call_operand.vmem [shape: bf16[2,1,64], index: 0, kind: input, shape index: {}]
  %s1 = inlined_call_operand.vmem [shape: bf16[64,128], index: 1, kind: input, shape index: {}]
  %s2 = inlined_call_operand.vmem [shape: f32[1,128], index: 2, kind: input, shape index: {}]
  %s3 = inlined_call_operand.vmem [shape: f32[128,128], index: 3, kind: input, shape index: {}]
  %s4 = inlined_call_operand.vmem [shape: f32[1,128], index: 4, kind: input, shape index: {}]
  %s5 = inlined_call_operand.hbm [shape: f32[2,1,128], index: 5, kind: output, shape index: {}]
  %s6 = sld [smem:[#allocation0]]
  $region53: #{_lambda_.9} parent=0
    _
  %s8 = ssub.s32 1, %s6
  %s9 = scalar_select 0, %s8, %s6
  $region1: #{_lambda_.9} parent=0
    #allocation2 [shape = 'u8[1024]{0}', space=vmem, size = 0x400, scoped, tag = 'output window, operand 0']
    #allocation3 [shape = 's32[2]{0}', space=sflag, size = 0x8, scoped, tag = 'scoped memory for _lambda_.9']
    %10 = vsyncpa [#allocation3], 0
    %s11 = scalar_lea.sflag [#allocation3], 1
    %12 = vsyncpa %s11, 0
    loop: start=0, step=1, limit=4
    $region2: #{_lambda_.9} parent=1 // loop_pre_header
      _
    $region3: #{_lambda_.9} parent=1 // loop_header
      %s14 = sphi 0, %s18
      %p15 = scmp.ge.s32.totalorder %s14, 4
      %s24 = sphi 0, %s26
      %s27 = sphi 0, %s24
      %s28 = sphi 0, %s27
      %s44 = sphi 0, %s28
      %s48 = sphi 0, %s48
      %s50 = sphi 0, %s48
      %s51 = sphi 0, %s50
      %s65 = sphi 0, %s51
      %s69 = sphi 0, %s69
      %s71 = sphi 0, %s69
      %s72 = sphi 0, %s71
      %s86 = sphi 0, %s72
      %s90 = sphi 0, %s90
      %s92 = sphi 0, %s90
      %s93 = sphi 0, %s92
      %s107 = sphi 0, %s93
      %s111 = sphi 0, %s111
      %s113 = sphi 0, %s111
      %s114 = sphi 0, %s113
      %s128 = sphi 0, %s114
      %s134 = sphi 0, %s136
      %s137 = sphi 0, %s134
      %s138 = sphi 0, %s137
      %s154 = sphi 0, %s138
    $region4: #{_lambda_.9} parent=1 // loop_header_branch
      %17 = sbr.rel (%p15) target = $region8
    $region5: #{_lambda_.9} parent=1 // loop_body
      %s19 = ssub.s32 %s14, 1
      %s20 = ssub.s32 %s14, 2
      %s21 = sadd.s32 %s14, 1
      %s22 = ssub.s32 %s14, %s21
      %p23 = scmp.eq.s32.totalorder %s22, 0
      %s25 = sadd.s32 %s24, 1
      %s26 = scalar_select %p23, %s24, %s25
      %p29 = pneg %p23
      %p30 = scmp.eq.s32.totalorder %s14, 1
      %p31 = por %p29, %p30
      %p32 = scmp.ne.s32.totalorder %s24, %s27
      %p33 = scmp.eq.s32.totalorder %s14, 0
      %p34 = por %p32, %p33
      %p35 = scmp.ne.s32.totalorder %s24, %s27
      %p36 = scmp.eq.s32.totalorder %s19, 1
      %p37 = por %p35, %p36
      %p38 = scmp.ne.s32.totalorder %s27, %s28
      %p39 = scmp.eq.s32.totalorder %s19, 0
      %p40 = por %p38, %p39
      %p41 = scmp.ne.s32.totalorder %s27, %s28
      %p42 = scmp.eq.s32.totalorder %s20, 1
      %p43 = por %p41, %p42
      %p45 = scmp.ne.s32.totalorder %s28, %s44
      %p46 = scmp.eq.s32.totalorder %s20, 0
      %p47 = por %p45, %p46
      %s49 = sadd.s32 %s48, 1
      %p52 = scmp.eq.s32.totalorder %s14, 1
      %p53 = scmp.ne.s32.totalorder %s48, %s50
      %p54 = scmp.eq.s32.totalorder %s14, 0
      %p55 = por %p53, %p54
      %p56 = scmp.ne.s32.totalorder %s48, %s50
      %p57 = scmp.eq.s32.totalorder %s19, 1
      %p58 = por %p56, %p57
      %p59 = scmp.ne.s32.totalorder %s50, %s51
      %p60 = scmp.eq.s32.totalorder %s19, 0
      %p61 = por %p59, %p60
      %p62 = scmp.ne.s32.totalorder %s50, %s51
      %p63 = scmp.eq.s32.totalorder %s20, 1
      %p64 = por %p62, %p63
      %p66 = scmp.ne.s32.totalorder %s51, %s65
      %p67 = scmp.eq.s32.totalorder %s20, 0
      %p68 = por %p66, %p67
      %s70 = sadd.s32 %s69, 1
      %p73 = scmp.eq.s32.totalorder %s14, 1
      %p74 = scmp.ne.s32.totalorder %s69, %s71
      %p75 = scmp.eq.s32.totalorder %s14, 0
      %p76 = por %p74, %p75
      %p77 = scmp.ne.s32.totalorder %s69, %s71
      %p78 = scmp.eq.s32.totalorder %s19, 1
      %p79 = por %p77, %p78
      %p80 = scmp.ne.s32.totalorder %s71, %s72
      %p81 = scmp.eq.s32.totalorder %s19, 0
      %p82 = por %p80, %p81
      %p83 = scmp.ne.s32.totalorder %s71, %s72
      %p84 = scmp.eq.s32.totalorder %s20, 1
      %p85 = por %p83, %p84
      %p87 = scmp.ne.s32.totalorder %s72, %s86
      %p88 = scmp.eq.s32.totalorder %s20, 0
      %p89 = por %p87, %p88
      %s91 = sadd.s32 %s90, 1
      %p94 = scmp.eq.s32.totalorder %s14, 1
      %p95 = scmp.ne.s32.totalorder %s90, %s92
      %p96 = scmp.eq.s32.totalorder %s14, 0
      %p97 = por %p95, %p96
      %p98 = scmp.ne.s32.totalorder %s90, %s92
      %p99 = scmp.eq.s32.totalorder %s19, 1
      %p100 = por %p98, %p99
      %p101 = scmp.ne.s32.totalorder %s92, %s93
      %p102 = scmp.eq.s32.totalorder %s19, 0
      %p103 = por %p101, %p102
      %p104 = scmp.ne.s32.totalorder %s92, %s93
      %p105 = scmp.eq.s32.totalorder %s20, 1
      %p106 = por %p104, %p105
      %p108 = scmp.ne.s32.totalorder %s93, %s107
      %p109 = scmp.eq.s32.totalorder %s20, 0
      %p110 = por %p108, %p109
      %s112 = sadd.s32 %s111, 1
      %p115 = scmp.eq.s32.totalorder %s14, 1
      %p116 = scmp.ne.s32.totalorder %s111, %s113
      %p117 = scmp.eq.s32.totalorder %s14, 0
      %p118 = por %p116, %p117
      %p119 = scmp.ne.s32.totalorder %s111, %s113
      %p120 = scmp.eq.s32.totalorder %s19, 1
      %p121 = por %p119, %p120
      %p122 = scmp.ne.s32.totalorder %s113, %s114
      %p123 = scmp.eq.s32.totalorder %s19, 0
      %p124 = por %p122, %p123
      %p125 = scmp.ne.s32.totalorder %s113, %s114
      %p126 = scmp.eq.s32.totalorder %s20, 1
      %p127 = por %p125, %p126
      %p129 = scmp.ne.s32.totalorder %s114, %s128
      %p130 = scmp.eq.s32.totalorder %s20, 0
      %p131 = por %p129, %p130
      %s132 = ssub.s32 %s14, %s21
      %p133 = scmp.eq.s32.totalorder %s132, 0
      %s135 = sadd.s32 %s134, 1
      %s136 = scalar_select %p133, %s134, %s135
      %p139 = pneg %p133
      %p140 = scmp.eq.s32.totalorder %s14, 1
      %p141 = por %p139, %p140
      %p142 = scmp.ne.s32.totalorder %s134, %s137
      %p143 = scmp.eq.s32.totalorder %s14, 0
      %p144 = por %p142, %p143
      %p145 = scmp.ne.s32.totalorder %s134, %s137
      %p146 = scmp.eq.s32.totalorder %s19, 1
      %p147 = por %p145, %p146
      %p148 = scmp.ne.s32.totalorder %s137, %s138
      %p149 = scmp.eq.s32.totalorder %s19, 0
      %p150 = por %p148, %p149
      %p151 = scmp.ne.s32.totalorder %s137, %s138
      %p152 = scmp.eq.s32.totalorder %s20, 1
      %p153 = por %p151, %p152
      %p155 = scmp.ne.s32.totalorder %s138, %s154
      %p156 = scmp.eq.s32.totalorder %s20, 0
      %p157 = por %p155, %p156
      %p158 = scmp.le.s32.totalorder 1, %s14
      %p159 = scmp.lt.s32.totalorder %s14, 3
      %p160 = pnand %p158, %p159
      %p161 = pneg %p160
      // Predicated region
      $region9: #{_lambda_.9} parent=5 // pred_check
        _
      $region10: #{_lambda_.9} parent=5 // pred_check_branch
        %163 = sbr.rel (%p160) target = $region12
      $region11: #{_lambda_.9} parent=5 // pred_region
        %s164 = ssub.s32 %s14, 1
        // Predicated region
        $region13: #{_lambda_.9} parent=11 // pred_check
          %p165 = pneg %p61
        $region14: #{_lambda_.9} parent=11 // pred_check_branch
          %167 = sbr.rel (%p165) target = $region16
        $region15: #{_lambda_.9} parent=11 // pred_region
          _
        $region16: #{_lambda_.9} parent=11 // pred_fallthru
          _
        // Predicated region
        $region17: #{_lambda_.9} parent=11 // pred_check
          %p168 = pneg %p82
        $region18: #{_lambda_.9} parent=11 // pred_check_branch
          %170 = sbr.rel (%p168) target = $region20
        $region19: #{_lambda_.9} parent=11 // pred_region
          _
        $region20: #{_lambda_.9} parent=11 // pred_fallthru
          _
        // Predicated region
        $region21: #{_lambda_.9} parent=11 // pred_check
          %p171 = pneg %p103
        $region22: #{_lambda_.9} parent=11 // pred_check_branch
          %173 = sbr.rel (%p171) target = $region24
        $region23: #{_lambda_.9} parent=11 // pred_region
          _
        $region24: #{_lambda_.9} parent=11 // pred_fallthru
          _
        // Predicated region
        $region25: #{_lambda_.9} parent=11 // pred_check
          %p174 = pneg %p124
        $region26: #{_lambda_.9} parent=11 // pred_check_branch
          %176 = sbr.rel (%p174) target = $region28
        $region27: #{_lambda_.9} parent=11 // pred_region
          _
        $region28: #{_lambda_.9} parent=11 // pred_fallthru
          _
      $region12: #{_lambda_.9} parent=5 // pred_fallthru
        _
      %p177 = scmp.lt.s32.totalorder %s14, 2
      // Predicated region
      $region29: #{_lambda_.9} parent=5 // pred_check
        %p178 = pneg %p177
      $region30: #{_lambda_.9} parent=5 // pred_check_branch
        %180 = sbr.rel (%p178) target = $region32
      $region31: #{_lambda_.9} parent=5 // pred_region
        // Predicated region
        $region33: #{_lambda_.9} parent=31 // pred_check
          %p181 = pneg %p34
        $region34: #{_lambda_.9} parent=31 // pred_check_branch
          %183 = sbr.rel (%p181) target = $region36
        $region35: #{_lambda_.9} parent=31 // pred_region
          %p184 = scmp.lt.s32.totalorder %s14, 1
          %s185 = scalar_select %p184, %s14, 1
          %s186 = scalar_lea.vmem %s0, %s185
        $region36: #{_lambda_.9} parent=31 // pred_fallthru
          _
      $region32: #{_lambda_.9} parent=5 // pred_fallthru
        _
      %p187 = scmp.le.s32.totalorder 1, %s14
      %p188 = scmp.lt.s32.totalorder %s14, 3
      %p189 = pnand %p187, %p188
      %p190 = pneg %p189
      // Predicated region
      $region37: #{_lambda_.9} parent=5 // pred_check
        _
      $region38: #{_lambda_.9} parent=5 // pred_check_branch
        %192 = sbr.rel (%p189) target = $region40
      $region39: #{_lambda_.9} parent=5 // pred_region
        %s193 = ssub.s32 %s14, 1
        %p194 = scmp.lt.s32.totalorder %s19, 1
        %s195 = scalar_select %p194, %s19, 1
        %s196 = scalar_lea.vmem %s0, %s195
        %p197 = pneg %p40
        %p198 = pneg %p37
        %p199 = pneg %p61
        %p200 = pneg %p58
        %p201 = pneg %p82
        %p202 = pneg %p79
        %p203 = pneg %p103
        %p204 = pneg %p100
        %p205 = pneg %p124
        %p206 = pneg %p121
        %p207 = pneg %p150
        %p208 = pneg %p147
        %s209 = sand.u32 %s137, 1
        %s210 = scalar_lea.sflag [#allocation3], %s209
        %s211 = sand.u32 %s137, 1
        %s212 = scalar_lea.vmem [#allocation2], %s211
        %p213 = scmp.lt.s32.totalorder %s19, 1
        %s214 = scalar_select %p213, %s19, 1
        %s215 = scalar_lea.vmem %s0, %s214
        %v217 = vld [vmem:[%s215] sm:$0x1]
        %v218 = vld [vmem:[%s1] sm:$0xf]
        %v219 = vld [vmem:[%s1 + $0x4] sm:$0xf]
        %v220 = vld [vmem:[%s1 + $0x8] sm:$0xf]
        %v221 = vld [vmem:[%s1 + $0xc] sm:$0xf]
        %v222 = vld [vmem:[%s1 + $0x10] sm:$0xf]
        %v223 = vld [vmem:[%s1 + $0x14] sm:$0xf]
        %v224 = vld [vmem:[%s1 + $0x18] sm:$0xf]
        %v225 = vld [vmem:[%s1 + $0x1c] sm:$0xf]
        %v226 = vld [vmem:[%s2] sm:$0x1]
        %v235 = vunpack.c.l.b16 %v218
        %v236 = vunpack.c.l.b16 %v219
        %v237 = vunpack.c.l.b16 %v220
        %v238 = vunpack.c.l.b16 %v221
        %v239 = vunpack.c.l.b16 %v222
        %v240 = vunpack.c.l.b16 %v223
        %v241 = vunpack.c.l.b16 %v224
        %v242 = vunpack.c.l.b16 %v225
        %v243 = vpack.c.b16 %v236, %v235
        %v244 = vpack.c.b16 %v238, %v237
        %v245 = vpack.c.b16 %v240, %v239
        %v246 = vpack.c.b16 %v242, %v241
        %vm251 = vcmask 523264
        %v253 = vsel %vm251, %v217, 0
        %255 = vmatpush.bf16.msra.mxu0 0
        %256 = vmatpush.bf16.msra.mxu0 0
        %257 = vmatpush.bf16.msra.mxu0 0
        %258 = vmatpush.bf16.msra.mxu0 0
        %259 = vmatpush.bf16.msra.mxu0 %v246
        %260 = vmatpush.bf16.msra.mxu0 %v245
        %261 = vmatpush.bf16.msra.mxu0 %v244
        %262 = vmatpush.bf16.msra.mxu0 %v243
        %263 = vmatmul.bf16.gmra.mxu0 %v253
        %v264 = vpop.f32.mrf.mxu0
        %v265 = vadd.f32 %v226, %v264
        %v266 = vpop.f32.mrf.mxu0
        %267 = vdwg.mxu0
        %v268 = vmax.f32 %v265, 0.0
        %v269 = vadd.f32 %v268, 0.0
        %v270 = vld [vmem:[%s3] sm:$0xff]
        %v271 = vld [vmem:[%s3 + $0x8] sm:$0xff]
        %v272 = vld [vmem:[%s3 + $0x10] sm:$0xff]
        %v273 = vld [vmem:[%s3 + $0x18] sm:$0xff]
        %v274 = vld [vmem:[%s3 + $0x20] sm:$0xff]
        %v275 = vld [vmem:[%s3 + $0x28] sm:$0xff]
        %v276 = vld [vmem:[%s3 + $0x30] sm:$0xff]
        %v277 = vld [vmem:[%s3 + $0x38] sm:$0xff]
        %v278 = vld [vmem:[%s3 + $0x40] sm:$0xff]
        %v279 = vld [vmem:[%s3 + $0x48] sm:$0xff]
        %v280 = vld [vmem:[%s3 + $0x50] sm:$0xff]
        %v281 = vld [vmem:[%s3 + $0x58] sm:$0xff]
        %v282 = vld [vmem:[%s3 + $0x60] sm:$0xff]
        %v283 = vld [vmem:[%s3 + $0x68] sm:$0xff]
        %v284 = vld [vmem:[%s3 + $0x70] sm:$0xff]
        %v285 = vld [vmem:[%s3 + $0x78] sm:$0xff]
        %v286 = vld [vmem:[%s4] sm:$0x1]
        %287 = vmatpush.msra.mxu0 %v285
        %288 = vmatpush.msra.mxu0 %v284
        %289 = vmatpush.msra.mxu0 %v283
        %290 = vmatpush.msra.mxu0 %v282
        %291 = vmatpush.msra.mxu0 %v281
        %292 = vmatpush.msra.mxu0 %v280
        %293 = vmatpush.msra.mxu0 %v279
        %294 = vmatpush.msra.mxu0 %v278
        %295 = vmatpush.msra.mxu0 %v277
        %296 = vmatpush.msra.mxu0 %v276
        %297 = vmatpush.msra.mxu0 %v275
        %298 = vmatpush.msra.mxu0 %v274
        %299 = vmatpush.msra.mxu0 %v273
        %300 = vmatpush.msra.mxu0 %v272
        %301 = vmatpush.msra.mxu0 %v271
        %302 = vmatpush.msra.mxu0 %v270
        %303 = vmatmul.f32.gmra.mxu0 %v269
        %v304 = vpop.f32.mrf.mxu0
        %v305 = vadd.f32 %v286, %v304
        %306 = vdwg.mxu0
        %307 = vst [vmem:[%s212] sm:$0x1] %v305
        %s308 = sand.u32 %s137, 1
        %s309 = scalar_lea.sflag [#allocation3], %s308
        %s310 = sand.u32 %s137, 1
        %s311 = scalar_lea.vmem [#allocation2], %s310
        // Predicated region
        $region41: #{_lambda_.9} parent=39 // pred_check
          %p312 = pneg %p147
        $region42: #{_lambda_.9} parent=39 // pred_check_branch
          %314 = sbr.rel (%p312) target = $region44
        $region43: #{_lambda_.9} parent=39 // pred_region
          %316 = vsyncadd %s309, 0
          %s317 = scalar_lea.hbm %s5, %s19
          %s319 = sshll.u32 %s311, 4
          %s320 = int_to_ptr.vmem [resolvable:$true] %s319
          %s321 = sshll.u32 %s317, 4
          %s322 = int_to_ptr.hbm [resolvable:$true] %s321
          %324 = dma.vmem_to_hbm [thread:$0]  %s320, 16, %s322, %s309
        $region44: #{_lambda_.9} parent=39 // pred_fallthru
          _
      $region40: #{_lambda_.9} parent=5 // pred_fallthru
        _
      %p325 = scmp.le.s32.totalorder 2, %s14
      // Predicated region
      $region45: #{_lambda_.9} parent=5 // pred_check
        %p326 = pneg %p325
      $region46: #{_lambda_.9} parent=5 // pred_check_branch
        %328 = sbr.rel (%p326) target = $region48
      $region47: #{_lambda_.9} parent=5 // pred_region
        %s329 = ssub.s32 %s14, 2
        // Predicated region
        $region49: #{_lambda_.9} parent=47 // pred_check
          %p330 = pneg %p153
        $region50: #{_lambda_.9} parent=47 // pred_check_branch
          %332 = sbr.rel (%p330) target = $region52
        $region51: #{_lambda_.9} parent=47 // pred_region
          %s333 = sand.u32 %s138, 1
          %s334 = scalar_lea.sflag [#allocation3], %s333
          %s335 = sand.u32 %s138, 1
          %s336 = scalar_lea.vmem [#allocation2], %s335
          %338 = dma.done %s334, 16
        $region52: #{_lambda_.9} parent=47 // pred_fallthru
          _
      $region48: #{_lambda_.9} parent=5 // pred_fallthru
        _
    $region6: #{_lambda_.9} parent=1 // loop_footer
      %s18 = sadd.s32 1, %s14
    $region7: #{_lambda_.9} parent=1 // loop_footer_branch
      %13 = sbr.rel target = $region3
    $region8: #{_lambda_.9} parent=1 // loop_exit
      _
    %339 = vsyncpa [#allocation3], 1
    %s340 = scalar_lea.sflag [#allocation3], 1
    %341 = vsyncpa %s340, 1

// kernel: _lambda_.7
$region0: #{_lambda_.7}
  #allocation0 [shape = 'u32[]', space=smem, size = 0x4, offset = 0x4, fixed_abs, tag = 'smem constant byte address 0x4 - core index']
  #allocation1 [shape = 'u32[72,128]{1,0:T(1,128)}', space=vmem, size = 0x9000, scoped, tag = 'internal scratch']
  #allocation2 [shape = 'f32[40,16]{1,0:T(8,128)}', space=vmem, size = 0x5000, scoped, tag = 'scratch operand']
  #allocation3 [shape = 'f32[18,32]{1,0:T(8,128)}', space=vmem, size = 0x3000, scoped, tag = 'scratch operand']
  #allocation4 [shape = 'f32[18,16]{1,0:T(8,128)}', space=vmem, size = 0x3000, scoped, tag = 'scratch operand']
  %s0 = inlined_call_operand.vmem [shape: bf16[2,40,16], index: 0, kind: input, shape index: {}]
  %s1 = inlined_call_operand.vmem [shape: f32[40,1], index: 1, kind: input, shape index: {}]
  %s2 = inlined_call_operand.vmem [shape: f32[18,1], index: 2, kind: input, shape index: {}]
  %s3 = inlined_call_operand.vmem [shape: f32[9,1,16], index: 3, kind: input, shape index: {}]
  %s4 = inlined_call_operand.vmem [shape: f32[1,16], index: 4, kind: input, shape index: {}]
  %s5 = inlined_call_operand.vmem [shape: bf16[16,16], index: 5, kind: input, shape index: {}]
  %s6 = inlined_call_operand.vmem [shape: f32[1,16], index: 6, kind: input, shape index: {}]
  %s7 = inlined_call_operand.vmem [shape: f32[9,1,16], index: 7, kind: input, shape index: {}]
  %s8 = inlined_call_operand.vmem [shape: f32[1,16], index: 8, kind: input, shape index: {}]
  %s9 = inlined_call_operand.vmem [shape: bf16[16,32], index: 9, kind: input, shape index: {}]
  %s10 = inlined_call_operand.vmem [shape: bf16[16,32], index: 10, kind: input, shape index: {}]
  %s11 = inlined_call_operand.vmem [shape: f32[1,32], index: 11, kind: input, shape index: {}]
  %s12 = inlined_call_operand.vmem [shape: bf16[32,32], index: 12, kind: input, shape index: {}]
  %s13 = inlined_call_operand.vmem [shape: bf16[1,32,16], index: 13, kind: input, shape index: {}]
  %s14 = inlined_call_operand.vmem [shape: f32[1,1,16], index: 14, kind: input, shape index: {}]
  %s15 = inlined_call_operand.vmem [shape: f32[1,9,1,16], index: 15, kind: input, shape index: {}]
  %s16 = inlined_call_operand.vmem [shape: f32[1,1,16], index: 16, kind: input, shape index: {}]
  %s17 = inlined_call_operand.vmem [shape: bf16[1,16,32], index: 17, kind: input, shape index: {}]
  %s18 = inlined_call_operand.vmem [shape: f32[1,1,32], index: 18, kind: input, shape index: {}]
  %s19 = inlined_call_operand.vmem [shape: bf16[2,8,32], index: 19, kind: output, shape index: {}]
  %s20 = sld [smem:[#allocation0]]
  $region109: #{_lambda_.7} parent=0
    _
  %s22 = ssub.s32 1, %s20
  %s23 = scalar_select 0, %s22, %s20
  loop: start=0, step=1, limit=4
  $region2: #{_lambda_.7} parent=0 // loop_pre_header
    _
  $region3: #{_lambda_.7} parent=0 // loop_header
    %s25 = sphi 0, %s29
    %p26 = scmp.ge.s32.totalorder %s25, 4
    %s35 = sphi 0, %s37
    %s38 = sphi 0, %s35
    %s39 = sphi 0, %s38
    %s55 = sphi 0, %s39
    %s59 = sphi 0, %s59
    %s61 = sphi 0, %s59
    %s62 = sphi 0, %s61
    %s76 = sphi 0, %s62
    %s80 = sphi 0, %s80
    %s82 = sphi 0, %s80
    %s83 = sphi 0, %s82
    %s97 = sphi 0, %s83
    %s101 = sphi 0, %s101
    %s103 = sphi 0, %s101
    %s104 = sphi 0, %s103
    %s118 = sphi 0, %s104
    %s122 = sphi 0, %s122
    %s124 = sphi 0, %s122
    %s125 = sphi 0, %s124
    %s139 = sphi 0, %s125
    %s143 = sphi 0, %s143
    %s145 = sphi 0, %s143
    %s146 = sphi 0, %s145
    %s160 = sphi 0, %s146
    %s164 = sphi 0, %s164
    %s166 = sphi 0, %s164
    %s167 = sphi 0, %s166
    %s181 = sphi 0, %s167
    %s185 = sphi 0, %s185
    %s187 = sphi 0, %s185
    %s188 = sphi 0, %s187
    %s202 = sphi 0, %s188
    %s206 = sphi 0, %s206
    %s208 = sphi 0, %s206
    %s209 = sphi 0, %s208
    %s223 = sphi 0, %s209
    %s227 = sphi 0, %s227
    %s229 = sphi 0, %s227
    %s230 = sphi 0, %s229
    %s244 = sphi 0, %s230
    %s248 = sphi 0, %s248
    %s250 = sphi 0, %s248
    %s251 = sphi 0, %s250
    %s265 = sphi 0, %s251
    %s269 = sphi 0, %s269
    %s271 = sphi 0, %s269
    %s272 = sphi 0, %s271
    %s286 = sphi 0, %s272
    %s290 = sphi 0, %s290
    %s292 = sphi 0, %s290
    %s293 = sphi 0, %s292
    %s307 = sphi 0, %s293
    %s311 = sphi 0, %s311
    %s313 = sphi 0, %s311
    %s314 = sphi 0, %s313
    %s328 = sphi 0, %s314
    %s332 = sphi 0, %s332
    %s334 = sphi 0, %s332
    %s335 = sphi 0, %s334
    %s349 = sphi 0, %s335
    %s353 = sphi 0, %s353
    %s355 = sphi 0, %s353
    %s356 = sphi 0, %s355
    %s370 = sphi 0, %s356
    %s374 = sphi 0, %s374
    %s376 = sphi 0, %s374
    %s377 = sphi 0, %s376
    %s391 = sphi 0, %s377
    %s395 = sphi 0, %s395
    %s397 = sphi 0, %s395
    %s398 = sphi 0, %s397
    %s412 = sphi 0, %s398
    %s416 = sphi 0, %s416
    %s418 = sphi 0, %s416
    %s419 = sphi 0, %s418
    %s433 = sphi 0, %s419
    %s439 = sphi 0, %s441
    %s442 = sphi 0, %s439
    %s443 = sphi 0, %s442
    %s459 = sphi 0, %s443
  $region4: #{_lambda_.7} parent=0 // loop_header_branch
    %28 = sbr.rel (%p26) target = $region8
  $region5: #{_lambda_.7} parent=0 // loop_body
    %s30 = ssub.s32 %s25, 1
    %s31 = ssub.s32 %s25, 2
    %s32 = sadd.s32 %s25, 1
    %s33 = ssub.s32 %s25, %s32
    %p34 = scmp.eq.s32.totalorder %s33, 0
    %s36 = sadd.s32 %s35, 1
    %s37 = scalar_select %p34, %s35, %s36
    %p40 = pneg %p34
    %p41 = scmp.eq.s32.totalorder %s25, 1
    %p42 = por %p40, %p41
    %p43 = scmp.ne.s32.totalorder %s35, %s38
    %p44 = scmp.eq.s32.totalorder %s25, 0
    %p45 = por %p43, %p44
    %p46 = scmp.ne.s32.totalorder %s35, %s38
    %p47 = scmp.eq.s32.totalorder %s30, 1
    %p48 = por %p46, %p47
    %p49 = scmp.ne.s32.totalorder %s38, %s39
    %p50 = scmp.eq.s32.totalorder %s30, 0
    %p51 = por %p49, %p50
    %p52 = scmp.ne.s32.totalorder %s38, %s39
    %p53 = scmp.eq.s32.totalorder %s31, 1
    %p54 = por %p52, %p53
    %p56 = scmp.ne.s32.totalorder %s39, %s55
    %p57 = scmp.eq.s32.totalorder %s31, 0
    %p58 = por %p56, %p57
    %s60 = sadd.s32 %s59, 1
    %p63 = scmp.eq.s32.totalorder %s25, 1
    %p64 = scmp.ne.s32.totalorder %s59, %s61
    %p65 = scmp.eq.s32.totalorder %s25, 0
    %p66 = por %p64, %p65
    %p67 = scmp.ne.s32.totalorder %s59, %s61
    %p68 = scmp.eq.s32.totalorder %s30, 1
    %p69 = por %p67, %p68
    %p70 = scmp.ne.s32.totalorder %s61, %s62
    %p71 = scmp.eq.s32.totalorder %s30, 0
    %p72 = por %p70, %p71
    %p73 = scmp.ne.s32.totalorder %s61, %s62
    %p74 = scmp.eq.s32.totalorder %s31, 1
    %p75 = por %p73, %p74
    %p77 = scmp.ne.s32.totalorder %s62, %s76
    %p78 = scmp.eq.s32.totalorder %s31, 0
    %p79 = por %p77, %p78
    %s81 = sadd.s32 %s80, 1
    %p84 = scmp.eq.s32.totalorder %s25, 1
    %p85 = scmp.ne.s32.totalorder %s80, %s82
    %p86 = scmp.eq.s32.totalorder %s25, 0
    %p87 = por %p85, %p86
    %p88 = scmp.ne.s32.totalorder %s80, %s82
    %p89 = scmp.eq.s32.totalorder %s30, 1
    %p90 = por %p88, %p89
    %p91 = scmp.ne.s32.totalorder %s82, %s83
    %p92 = scmp.eq.s32.totalorder %s30, 0
    %p93 = por %p91, %p92
    %p94 = scmp.ne.s32.totalorder %s82, %s83
    %p95 = scmp.eq.s32.totalorder %s31, 1
    %p96 = por %p94, %p95
    %p98 = scmp.ne.s32.totalorder %s83, %s97
    %p99 = scmp.eq.s32.totalorder %s31, 0
    %p100 = por %p98, %p99
    %s102 = sadd.s32 %s101, 1
    %p105 = scmp.eq.s32.totalorder %s25, 1
    %p106 = scmp.ne.s32.totalorder %s101, %s103
    %p107 = scmp.eq.s32.totalorder %s25, 0
    %p108 = por %p106, %p107
    %p109 = scmp.ne.s32.totalorder %s101, %s103
    %p110 = scmp.eq.s32.totalorder %s30, 1
    %p111 = por %p109, %p110
    %p112 = scmp.ne.s32.totalorder %s103, %s104
    %p113 = scmp.eq.s32.totalorder %s30, 0
    %p114 = por %p112, %p113
    %p115 = scmp.ne.s32.totalorder %s103, %s104
    %p116 = scmp.eq.s32.totalorder %s31, 1
    %p117 = por %p115, %p116
    %p119 = scmp.ne.s32.totalorder %s104, %s118
    %p120 = scmp.eq.s32.totalorder %s31, 0
    %p121 = por %p119, %p120
    %s123 = sadd.s32 %s122, 1
    %p126 = scmp.eq.s32.totalorder %s25, 1
    %p127 = scmp.ne.s32.totalorder %s122, %s124
    %p128 = scmp.eq.s32.totalorder %s25, 0
    %p129 = por %p127, %p128
    %p130 = scmp.ne.s32.totalorder %s122, %s124
    %p131 = scmp.eq.s32.totalorder %s30, 1
    %p132 = por %p130, %p131
    %p133 = scmp.ne.s32.totalorder %s124, %s125
    %p134 = scmp.eq.s32.totalorder %s30, 0
    %p135 = por %p133, %p134
    %p136 = scmp.ne.s32.totalorder %s124, %s125
    %p137 = scmp.eq.s32.totalorder %s31, 1
    %p138 = por %p136, %p137
    %p140 = scmp.ne.s32.totalorder %s125, %s139
    %p141 = scmp.eq.s32.totalorder %s31, 0
    %p142 = por %p140, %p141
    %s144 = sadd.s32 %s143, 1
    %p147 = scmp.eq.s32.totalorder %s25, 1
    %p148 = scmp.ne.s32.totalorder %s143, %s145
    %p149 = scmp.eq.s32.totalorder %s25, 0
    %p150 = por %p148, %p149
    %p151 = scmp.ne.s32.totalorder %s143, %s145
    %p152 = scmp.eq.s32.totalorder %s30, 1
    %p153 = por %p151, %p152
    %p154 = scmp.ne.s32.totalorder %s145, %s146
    %p155 = scmp.eq.s32.totalorder %s30, 0
    %p156 = por %p154, %p155
    %p157 = scmp.ne.s32.totalorder %s145, %s146
    %p158 = scmp.eq.s32.totalorder %s31, 1
    %p159 = por %p157, %p158
    %p161 = scmp.ne.s32.totalorder %s146, %s160
    %p162 = scmp.eq.s32.totalorder %s31, 0
    %p163 = por %p161, %p162
    %s165 = sadd.s32 %s164, 1
    %p168 = scmp.eq.s32.totalorder %s25, 1
    %p169 = scmp.ne.s32.totalorder %s164, %s166
    %p170 = scmp.eq.s32.totalorder %s25, 0
    %p171 = por %p169, %p170
    %p172 = scmp.ne.s32.totalorder %s164, %s166
    %p173 = scmp.eq.s32.totalorder %s30, 1
    %p174 = por %p172, %p173
    %p175 = scmp.ne.s32.totalorder %s166, %s167
    %p176 = scmp.eq.s32.totalorder %s30, 0
    %p177 = por %p175, %p176
    %p178 = scmp.ne.s32.totalorder %s166, %s167
    %p179 = scmp.eq.s32.totalorder %s31, 1
    %p180 = por %p178, %p179
    %p182 = scmp.ne.s32.totalorder %s167, %s181
    %p183 = scmp.eq.s32.totalorder %s31, 0
    %p184 = por %p182, %p183
    %s186 = sadd.s32 %s185, 1
    %p189 = scmp.eq.s32.totalorder %s25, 1
    %p190 = scmp.ne.s32.totalorder %s185, %s187
    %p191 = scmp.eq.s32.totalorder %s25, 0
    %p192 = por %p190, %p191
    %p193 = scmp.ne.s32.totalorder %s185, %s187
    %p194 = scmp.eq.s32.totalorder %s30, 1
    %p195 = por %p193, %p194
    %p196 = scmp.ne.s32.totalorder %s187, %s188
    %p197 = scmp.eq.s32.totalorder %s30, 0
    %p198 = por %p196, %p197
    %p199 = scmp.ne.s32.totalorder %s187, %s188
    %p200 = scmp.eq.s32.totalorder %s31, 1
    %p201 = por %p199, %p200
    %p203 = scmp.ne.s32.totalorder %s188, %s202
    %p204 = scmp.eq.s32.totalorder %s31, 0
    %p205 = por %p203, %p204
    %s207 = sadd.s32 %s206, 1
    %p210 = scmp.eq.s32.totalorder %s25, 1
    %p211 = scmp.ne.s32.totalorder %s206, %s208
    %p212 = scmp.eq.s32.totalorder %s25, 0
    %p213 = por %p211, %p212
    %p214 = scmp.ne.s32.totalorder %s206, %s208
    %p215 = scmp.eq.s32.totalorder %s30, 1
    %p216 = por %p214, %p215
    %p217 = scmp.ne.s32.totalorder %s208, %s209
    %p218 = scmp.eq.s32.totalorder %s30, 0
    %p219 = por %p217, %p218
    %p220 = scmp.ne.s32.totalorder %s208, %s209
    %p221 = scmp.eq.s32.totalorder %s31, 1
    %p222 = por %p220, %p221
    %p224 = scmp.ne.s32.totalorder %s209, %s223
    %p225 = scmp.eq.s32.totalorder %s31, 0
    %p226 = por %p224, %p225
    %s228 = sadd.s32 %s227, 1
    %p231 = scmp.eq.s32.totalorder %s25, 1
    %p232 = scmp.ne.s32.totalorder %s227, %s229
    %p233 = scmp.eq.s32.totalorder %s25, 0
    %p234 = por %p232, %p233
    %p235 = scmp.ne.s32.totalorder %s227, %s229
    %p236 = scmp.eq.s32.totalorder %s30, 1
    %p237 = por %p235, %p236
    %p238 = scmp.ne.s32.totalorder %s229, %s230
    %p239 = scmp.eq.s32.totalorder %s30, 0
    %p240 = por %p238, %p239
    %p241 = scmp.ne.s32.totalorder %s229, %s230
    %p242 = scmp.eq.s32.totalorder %s31, 1
    %p243 = por %p241, %p242
    %p245 = scmp.ne.s32.totalorder %s230, %s244
    %p246 = scmp.eq.s32.totalorder %s31, 0
    %p247 = por %p245, %p246
    %s249 = sadd.s32 %s248, 1
    %p252 = scmp.eq.s32.totalorder %s25, 1
    %p253 = scmp.ne.s32.totalorder %s248, %s250
    %p254 = scmp.eq.s32.totalorder %s25, 0
    %p255 = por %p253, %p254
    %p256 = scmp.ne.s32.totalorder %s248, %s250
    %p257 = scmp.eq.s32.totalorder %s30, 1
    %p258 = por %p256, %p257
    %p259 = scmp.ne.s32.totalorder %s250, %s251
    %p260 = scmp.eq.s32.totalorder %s30, 0
    %p261 = por %p259, %p260
    %p262 = scmp.ne.s32.totalorder %s250, %s251
    %p263 = scmp.eq.s32.totalorder %s31, 1
    %p264 = por %p262, %p263
    %p266 = scmp.ne.s32.totalorder %s251, %s265
    %p267 = scmp.eq.s32.totalorder %s31, 0
    %p268 = por %p266, %p267
    %s270 = sadd.s32 %s269, 1
    %p273 = scmp.eq.s32.totalorder %s25, 1
    %p274 = scmp.ne.s32.totalorder %s269, %s271
    %p275 = scmp.eq.s32.totalorder %s25, 0
    %p276 = por %p274, %p275
    %p277 = scmp.ne.s32.totalorder %s269, %s271
    %p278 = scmp.eq.s32.totalorder %s30, 1
    %p279 = por %p277, %p278
    %p280 = scmp.ne.s32.totalorder %s271, %s272
    %p281 = scmp.eq.s32.totalorder %s30, 0
    %p282 = por %p280, %p281
    %p283 = scmp.ne.s32.totalorder %s271, %s272
    %p284 = scmp.eq.s32.totalorder %s31, 1
    %p285 = por %p283, %p284
    %p287 = scmp.ne.s32.totalorder %s272, %s286
    %p288 = scmp.eq.s32.totalorder %s31, 0
    %p289 = por %p287, %p288
    %s291 = sadd.s32 %s290, 1
    %p294 = scmp.eq.s32.totalorder %s25, 1
    %p295 = scmp.ne.s32.totalorder %s290, %s292
    %p296 = scmp.eq.s32.totalorder %s25, 0
    %p297 = por %p295, %p296
    %p298 = scmp.ne.s32.totalorder %s290, %s292
    %p299 = scmp.eq.s32.totalorder %s30, 1
    %p300 = por %p298, %p299
    %p301 = scmp.ne.s32.totalorder %s292, %s293
    %p302 = scmp.eq.s32.totalorder %s30, 0
    %p303 = por %p301, %p302
    %p304 = scmp.ne.s32.totalorder %s292, %s293
    %p305 = scmp.eq.s32.totalorder %s31, 1
    %p306 = por %p304, %p305
    %p308 = scmp.ne.s32.totalorder %s293, %s307
    %p309 = scmp.eq.s32.totalorder %s31, 0
    %p310 = por %p308, %p309
    %s312 = sadd.s32 %s311, 1
    %p315 = scmp.eq.s32.totalorder %s25, 1
    %p316 = scmp.ne.s32.totalorder %s311, %s313
    %p317 = scmp.eq.s32.totalorder %s25, 0
    %p318 = por %p316, %p317
    %p319 = scmp.ne.s32.totalorder %s311, %s313
    %p320 = scmp.eq.s32.totalorder %s30, 1
    %p321 = por %p319, %p320
    %p322 = scmp.ne.s32.totalorder %s313, %s314
    %p323 = scmp.eq.s32.totalorder %s30, 0
    %p324 = por %p322, %p323
    %p325 = scmp.ne.s32.totalorder %s313, %s314
    %p326 = scmp.eq.s32.totalorder %s31, 1
    %p327 = por %p325, %p326
    %p329 = scmp.ne.s32.totalorder %s314, %s328
    %p330 = scmp.eq.s32.totalorder %s31, 0
    %p331 = por %p329, %p330
    %s333 = sadd.s32 %s332, 1
    %p336 = scmp.eq.s32.totalorder %s25, 1
    %p337 = scmp.ne.s32.totalorder %s332, %s334
    %p338 = scmp.eq.s32.totalorder %s25, 0
    %p339 = por %p337, %p338
    %p340 = scmp.ne.s32.totalorder %s332, %s334
    %p341 = scmp.eq.s32.totalorder %s30, 1
    %p342 = por %p340, %p341
    %p343 = scmp.ne.s32.totalorder %s334, %s335
    %p344 = scmp.eq.s32.totalorder %s30, 0
    %p345 = por %p343, %p344
    %p346 = scmp.ne.s32.totalorder %s334, %s335
    %p347 = scmp.eq.s32.totalorder %s31, 1
    %p348 = por %p346, %p347
    %p350 = scmp.ne.s32.totalorder %s335, %s349
    %p351 = scmp.eq.s32.totalorder %s31, 0
    %p352 = por %p350, %p351
    %s354 = sadd.s32 %s353, 1
    %p357 = scmp.eq.s32.totalorder %s25, 1
    %p358 = scmp.ne.s32.totalorder %s353, %s355
    %p359 = scmp.eq.s32.totalorder %s25, 0
    %p360 = por %p358, %p359
    %p361 = scmp.ne.s32.totalorder %s353, %s355
    %p362 = scmp.eq.s32.totalorder %s30, 1
    %p363 = por %p361, %p362
    %p364 = scmp.ne.s32.totalorder %s355, %s356
    %p365 = scmp.eq.s32.totalorder %s30, 0
    %p366 = por %p364, %p365
    %p367 = scmp.ne.s32.totalorder %s355, %s356
    %p368 = scmp.eq.s32.totalorder %s31, 1
    %p369 = por %p367, %p368
    %p371 = scmp.ne.s32.totalorder %s356, %s370
    %p372 = scmp.eq.s32.totalorder %s31, 0
    %p373 = por %p371, %p372
    %s375 = sadd.s32 %s374, 1
    %p378 = scmp.eq.s32.totalorder %s25, 1
    %p379 = scmp.ne.s32.totalorder %s374, %s376
    %p380 = scmp.eq.s32.totalorder %s25, 0
    %p381 = por %p379, %p380
    %p382 = scmp.ne.s32.totalorder %s374, %s376
    %p383 = scmp.eq.s32.totalorder %s30, 1
    %p384 = por %p382, %p383
    %p385 = scmp.ne.s32.totalorder %s376, %s377
    %p386 = scmp.eq.s32.totalorder %s30, 0
    %p387 = por %p385, %p386
    %p388 = scmp.ne.s32.totalorder %s376, %s377
    %p389 = scmp.eq.s32.totalorder %s31, 1
    %p390 = por %p388, %p389
    %p392 = scmp.ne.s32.totalorder %s377, %s391
    %p393 = scmp.eq.s32.totalorder %s31, 0
    %p394 = por %p392, %p393
    %s396 = sadd.s32 %s395, 1
    %p399 = scmp.eq.s32.totalorder %s25, 1
    %p400 = scmp.ne.s32.totalorder %s395, %s397
    %p401 = scmp.eq.s32.totalorder %s25, 0
    %p402 = por %p400, %p401
    %p403 = scmp.ne.s32.totalorder %s395, %s397
    %p404 = scmp.eq.s32.totalorder %s30, 1
    %p405 = por %p403, %p404
    %p406 = scmp.ne.s32.totalorder %s397, %s398
    %p407 = scmp.eq.s32.totalorder %s30, 0
    %p408 = por %p406, %p407
    %p409 = scmp.ne.s32.totalorder %s397, %s398
    %p410 = scmp.eq.s32.totalorder %s31, 1
    %p411 = por %p409, %p410
    %p413 = scmp.ne.s32.totalorder %s398, %s412
    %p414 = scmp.eq.s32.totalorder %s31, 0
    %p415 = por %p413, %p414
    %s417 = sadd.s32 %s416, 1
    %p420 = scmp.eq.s32.totalorder %s25, 1
    %p421 = scmp.ne.s32.totalorder %s416, %s418
    %p422 = scmp.eq.s32.totalorder %s25, 0
    %p423 = por %p421, %p422
    %p424 = scmp.ne.s32.totalorder %s416, %s418
    %p425 = scmp.eq.s32.totalorder %s30, 1
    %p426 = por %p424, %p425
    %p427 = scmp.ne.s32.totalorder %s418, %s419
    %p428 = scmp.eq.s32.totalorder %s30, 0
    %p429 = por %p427, %p428
    %p430 = scmp.ne.s32.totalorder %s418, %s419
    %p431 = scmp.eq.s32.totalorder %s31, 1
    %p432 = por %p430, %p431
    %p434 = scmp.ne.s32.totalorder %s419, %s433
    %p435 = scmp.eq.s32.totalorder %s31, 0
    %p436 = por %p434, %p435
    %s437 = ssub.s32 %s25, %s32
    %p438 = scmp.eq.s32.totalorder %s437, 0
    %s440 = sadd.s32 %s439, 1
    %s441 = scalar_select %p438, %s439, %s440
    %p444 = pneg %p438
    %p445 = scmp.eq.s32.totalorder %s25, 1
    %p446 = por %p444, %p445
    %p447 = scmp.ne.s32.totalorder %s439, %s442
    %p448 = scmp.eq.s32.totalorder %s25, 0
    %p449 = por %p447, %p448
    %p450 = scmp.ne.s32.totalorder %s439, %s442
    %p451 = scmp.eq.s32.totalorder %s30, 1
    %p452 = por %p450, %p451
    %p453 = scmp.ne.s32.totalorder %s442, %s443
    %p454 = scmp.eq.s32.totalorder %s30, 0
    %p455 = por %p453, %p454
    %p456 = scmp.ne.s32.totalorder %s442, %s443
    %p457 = scmp.eq.s32.totalorder %s31, 1
    %p458 = por %p456, %p457
    %p460 = scmp.ne.s32.totalorder %s443, %s459
    %p461 = scmp.eq.s32.totalorder %s31, 0
    %p462 = por %p460, %p461
    %p463 = scmp.le.s32.totalorder 1, %s25
    %p464 = scmp.lt.s32.totalorder %s25, 3
    %p465 = pnand %p463, %p464
    %p466 = pneg %p465
    // Predicated region
    $region9: #{_lambda_.7} parent=5 // pred_check
      _
    $region10: #{_lambda_.7} parent=5 // pred_check_branch
      %468 = sbr.rel (%p465) target = $region12
    $region11: #{_lambda_.7} parent=5 // pred_region
      %s469 = ssub.s32 %s25, 1
      // Predicated region
      $region13: #{_lambda_.7} parent=11 // pred_check
        %p470 = pneg %p72
      $region14: #{_lambda_.7} parent=11 // pred_check_branch
        %472 = sbr.rel (%p470) target = $region16
      $region15: #{_lambda_.7} parent=11 // pred_region
        _
      $region16: #{_lambda_.7} parent=11 // pred_fallthru
        _
      // Predicated region
      $region17: #{_lambda_.7} parent=11 // pred_check
        %p473 = pneg %p93
      $region18: #{_lambda_.7} parent=11 // pred_check_branch
        %475 = sbr.rel (%p473) target = $region20
      $region19: #{_lambda_.7} parent=11 // pred_region
        _
      $region20: #{_lambda_.7} parent=11 // pred_fallthru
        _
      // Predicated region
      $region21: #{_lambda_.7} parent=11 // pred_check
        %p476 = pneg %p114
      $region22: #{_lambda_.7} parent=11 // pred_check_branch
        %478 = sbr.rel (%p476) target = $region24
      $region23: #{_lambda_.7} parent=11 // pred_region
        _
      $region24: #{_lambda_.7} parent=11 // pred_fallthru
        _
      // Predicated region
      $region25: #{_lambda_.7} parent=11 // pred_check
        %p479 = pneg %p135
      $region26: #{_lambda_.7} parent=11 // pred_check_branch
        %481 = sbr.rel (%p479) target = $region28
      $region27: #{_lambda_.7} parent=11 // pred_region
        _
      $region28: #{_lambda_.7} parent=11 // pred_fallthru
        _
      // Predicated region
      $region29: #{_lambda_.7} parent=11 // pred_check
        %p482 = pneg %p156
      $region30: #{_lambda_.7} parent=11 // pred_check_branch
        %484 = sbr.rel (%p482) target = $region32
      $region31: #{_lambda_.7} parent=11 // pred_region
        _
      $region32: #{_lambda_.7} parent=11 // pred_fallthru
        _
      // Predicated region
      $region33: #{_lambda_.7} parent=11 // pred_check
        %p485 = pneg %p177
      $region34: #{_lambda_.7} parent=11 // pred_check_branch
        %487 = sbr.rel (%p485) target = $region36
      $region35: #{_lambda_.7} parent=11 // pred_region
        _
      $region36: #{_lambda_.7} parent=11 // pred_fallthru
        _
      // Predicated region
      $region37: #{_lambda_.7} parent=11 // pred_check
        %p488 = pneg %p198
      $region38: #{_lambda_.7} parent=11 // pred_check_branch
        %490 = sbr.rel (%p488) target = $region40
      $region39: #{_lambda_.7} parent=11 // pred_region
        _
      $region40: #{_lambda_.7} parent=11 // pred_fallthru
        _
      // Predicated region
      $region41: #{_lambda_.7} parent=11 // pred_check
        %p491 = pneg %p219
      $region42: #{_lambda_.7} parent=11 // pred_check_branch
        %493 = sbr.rel (%p491) target = $region44
      $region43: #{_lambda_.7} parent=11 // pred_region
        _
      $region44: #{_lambda_.7} parent=11 // pred_fallthru
        _
      // Predicated region
      $region45: #{_lambda_.7} parent=11 // pred_check
        %p494 = pneg %p240
      $region46: #{_lambda_.7} parent=11 // pred_check_branch
        %496 = sbr.rel (%p494) target = $region48
      $region47: #{_lambda_.7} parent=11 // pred_region
        _
      $region48: #{_lambda_.7} parent=11 // pred_fallthru
        _
      // Predicated region
      $region49: #{_lambda_.7} parent=11 // pred_check
        %p497 = pneg %p261
      $region50: #{_lambda_.7} parent=11 // pred_check_branch
        %499 = sbr.rel (%p497) target = $region52
      $region51: #{_lambda_.7} parent=11 // pred_region
        _
      $region52: #{_lambda_.7} parent=11 // pred_fallthru
        _
      // Predicated region
      $region53: #{_lambda_.7} parent=11 // pred_check
        %p500 = pneg %p282
      $region54: #{_lambda_.7} parent=11 // pred_check_branch
        %502 = sbr.rel (%p500) target = $region56
      $region55: #{_lambda_.7} parent=11 // pred_region
        _
      $region56: #{_lambda_.7} parent=11 // pred_fallthru
        _
      // Predicated region
      $region57: #{_lambda_.7} parent=11 // pred_check
        %p503 = pneg %p303
      $region58: #{_lambda_.7} parent=11 // pred_check_branch
        %505 = sbr.rel (%p503) target = $region60
      $region59: #{_lambda_.7} parent=11 // pred_region
        _
      $region60: #{_lambda_.7} parent=11 // pred_fallthru
        _
      // Predicated region
      $region61: #{_lambda_.7} parent=11 // pred_check
        %p506 = pneg %p324
      $region62: #{_lambda_.7} parent=11 // pred_check_branch
        %508 = sbr.rel (%p506) target = $region64
      $region63: #{_lambda_.7} parent=11 // pred_region
        _
      $region64: #{_lambda_.7} parent=11 // pred_fallthru
        _
      // Predicated region
      $region65: #{_lambda_.7} parent=11 // pred_check
        %p509 = pneg %p345
      $region66: #{_lambda_.7} parent=11 // pred_check_branch
        %511 = sbr.rel (%p509) target = $region68
      $region67: #{_lambda_.7} parent=11 // pred_region
        _
      $region68: #{_lambda_.7} parent=11 // pred_fallthru
        _
      // Predicated region
      $region69: #{_lambda_.7} parent=11 // pred_check
        %p512 = pneg %p366
      $region70: #{_lambda_.7} parent=11 // pred_check_branch
        %514 = sbr.rel (%p512) target = $region72
      $region71: #{_lambda_.7} parent=11 // pred_region
        _
      $region72: #{_lambda_.7} parent=11 // pred_fallthru
        _
      // Predicated region
      $region73: #{_lambda_.7} parent=11 // pred_check
        %p515 = pneg %p387
      $region74: #{_lambda_.7} parent=11 // pred_check_branch
        %517 = sbr.rel (%p515) target = $region76
      $region75: #{_lambda_.7} parent=11 // pred_region
        _
      $region76: #{_lambda_.7} parent=11 // pred_fallthru
        _
      // Predicated region
      $region77: #{_lambda_.7} parent=11 // pred_check
        %p518 = pneg %p408
      $region78: #{_lambda_.7} parent=11 // pred_check_branch
        %520 = sbr.rel (%p518) target = $region80
      $region79: #{_lambda_.7} parent=11 // pred_region
        _
      $region80: #{_lambda_.7} parent=11 // pred_fallthru
        _
      // Predicated region
      $region81: #{_lambda_.7} parent=11 // pred_check
        %p521 = pneg %p429
      $region82: #{_lambda_.7} parent=11 // pred_check_branch
        %523 = sbr.rel (%p521) target = $region84
      $region83: #{_lambda_.7} parent=11 // pred_region
        _
      $region84: #{_lambda_.7} parent=11 // pred_fallthru
        _
    $region12: #{_lambda_.7} parent=5 // pred_fallthru
      _
    %p524 = scmp.lt.s32.totalorder %s25, 2
    // Predicated region
    $region85: #{_lambda_.7} parent=5 // pred_check
      %p525 = pneg %p524
    $region86: #{_lambda_.7} parent=5 // pred_check_branch
      %527 = sbr.rel (%p525) target = $region88
    $region87: #{_lambda_.7} parent=5 // pred_region
      // Predicated region
      $region89: #{_lambda_.7} parent=87 // pred_check
        %p528 = pneg %p45
      $region90: #{_lambda_.7} parent=87 // pred_check_branch
        %530 = sbr.rel (%p528) target = $region92
      $region91: #{_lambda_.7} parent=87 // pred_region
        %p531 = scmp.lt.s32.totalorder %s25, 1
        %s532 = scalar_select %p531, %s25, 1
        %s533 = smul.addr %s532, 5
        %s534 = smul.addr %s533, 4
        %s535 = scalar_lea.vmem %s0, %s534
      $region92: #{_lambda_.7} parent=87 // pred_fallthru
        _
    $region88: #{_lambda_.7} parent=5 // pred_fallthru
      _
    %p536 = scmp.le.s32.totalorder 1, %s25
    %p537 = scmp.lt.s32.totalorder %s25, 3
    %p538 = pnand %p536, %p537
    %p539 = pneg %p538
    // Predicated region
    $region93: #{_lambda_.7} parent=5 // pred_check
      _
    $region94: #{_lambda_.7} parent=5 // pred_check_branch
      %541 = sbr.rel (%p538) target = $region96
    $region95: #{_lambda_.7} parent=5 // pred_region
      %s542 = ssub.s32 %s25, 1
      %p543 = scmp.lt.s32.totalorder %s30, 1
      %s544 = scalar_select %p543, %s30, 1
      %s545 = smul.addr %s544, 5
      %s546 = smul.addr %s545, 4
      %s547 = scalar_lea.vmem %s0, %s546
      %p548 = pneg %p51
      %p549 = pneg %p48
      %p550 = pneg %p72
      %p551 = pneg %p69
      %p552 = pneg %p93
      %p553 = pneg %p90
      %p554 = pneg %p114
      %p555 = pneg %p111
      %p556 = pneg %p135
      %p557 = pneg %p132
      %p558 = pneg %p156
      %p559 = pneg %p153
      %p560 = pneg %p177
      %p561 = pneg %p174
      %p562 = pneg %p198
      %p563 = pneg %p195
      %p564 = pneg %p219
      %p565 = pneg %p216
      %p566 = pneg %p240
      %p567 = pneg %p237
      %p568 = pneg %p261
      %p569 = pneg %p258
      %p570 = pneg %p282
      %p571 = pneg %p279
      %p572 = pneg %p303
      %p573 = pneg %p300
      %p574 = pneg %p324
      %p575 = pneg %p321
      %p576 = pneg %p345
      %p577 = pneg %p342
      %p578 = pneg %p366
      %p579 = pneg %p363
      %p580 = pneg %p387
      %p581 = pneg %p384
      %p582 = pneg %p408
      %p583 = pneg %p405
      %p584 = pneg %p429
      %p585 = pneg %p426
      %p586 = pneg %p455
      %p587 = pneg %p452
      %p588 = scmp.lt.s32.totalorder %s30, 1
      %s589 = scalar_select %p588, %s30, 1
      %s590 = smul.addr %s589, 4
      %s591 = scalar_lea.vmem %s19, %s590
      %p592 = scmp.lt.s32.totalorder %s30, 1
      %s593 = scalar_select %p592, %s30, 1
      %s594 = smul.addr %s593, 5
      %s595 = smul.addr %s594, 4
      %s596 = scalar_lea.vmem %s0, %s595
      %p597 = scmp.lt.s32.totalorder %s30, 1
      %s598 = scalar_select %p597, %s30, 1
      %s599 = smul.addr %s598, 4
      %s600 = scalar_lea.vmem %s19, %s599
      %v602 = vld [vmem:[%s596] sm:$0xf]
      %v603 = vld [vmem:[%s596 + $0x4] sm:$0xf]
      %v604 = vld [vmem:[%s596 + $0x8] sm:$0xf]
      %v605 = vld [vmem:[%s596 + $0xc] sm:$0xf]
      %v606 = vld [vmem:[%s596 + $0x10] sm:$0xf]
      %v607 = vld [vmem:[%s5] sm:$0xf]
      %v608 = vld [vmem:[%s5 + $0x4] sm:$0xf]
      %v609 = vld [vmem:[%s6] sm:$0x1]
      %v611 = vperm.slane %v609, 0
      %v618 = vunpack.c.l.b16 %v602
      %v619 = vunpack.c.l.b16 %v603
      %v620 = vunpack.c.l.b16 %v604
      %v621 = vunpack.c.l.b16 %v605
      %v622 = vunpack.c.l.b16 %v606
      %v623 = vpack.c.b16 %v619, %v618
      %v624 = vpack.c.b16 %v621, %v620
      %v625 = vpack.c.b16 %v622, %v622
      %v628 = vunpack.c.l.b16 %v607
      %v629 = vunpack.c.l.b16 %v608
      %v630 = vpack.c.b16 %v629, %v628
      %vm632 = vcmask 130048
      %v634 = vsel %vm632, %v623, 0
      %v637 = vsel %vm632, %v624, 0
      %v640 = vsel %vm632, %v625, 0
      %642 = vmatpush.bf16.msra.mxu0 0
      %643 = vmatpush.bf16.msra.mxu0 0
      %644 = vmatpush.bf16.msra.mxu0 0
      %645 = vmatpush.bf16.msra.mxu0 0
      %646 = vmatpush.bf16.msra.mxu0 0
      %647 = vmatpush.bf16.msra.mxu0 0
      %648 = vmatpush.bf16.msra.mxu0 0
      %649 = vmatpush.bf16.msra.mxu0 %v630
      %650 = vmatmul.bf16.gmra.mxu0 %v634
      %v651 = vpop.f32.mrf.mxu0
      %v652 = vadd.f32 %v611, %v651
      %v653 = vpop.f32.mrf.mxu0
      %v654 = vadd.f32 %v611, %v653
      %655 = vmatmul.bf16.gmra.mxu0 %v637
      %v656 = vpop.f32.mrf.mxu0
      %v657 = vadd.f32 %v611, %v656
      %v658 = vpop.f32.mrf.mxu0
      %v659 = vadd.f32 %v611, %v658
      %660 = vmatmul.bf16.gmra.mxu0 %v640
      %v661 = vpop.f32.mrf.mxu0
      %v662 = vadd.f32 %v611, %v661
      %v663 = vpop.f32.mrf.mxu0
      %664 = vdwg.mxu0
      %v665 = vmax.f32 %v652, 0.0
      %v666 = vmax.f32 %v654, 0.0
      %v667 = vmax.f32 %v657, 0.0
      %v668 = vmax.f32 %v659, 0.0
      %v669 = vmax.f32 %v662, 0.0
      %v670 = vld [vmem:[%s1] sm:$0xff]
      %v671 = vld [vmem:[%s1 + $0x8] sm:$0xff]
      %v672 = vld [vmem:[%s1 + $0x10] sm:$0xff]
      %v673 = vld [vmem:[%s1 + $0x18] sm:$0xff]
      %v674 = vld [vmem:[%s1 + $0x20] sm:$0xff]
      %676 = vset.pattern.permute.xlu0 0
      %677 = vperm.xlu0 %676, %v670
      %v678 = vpop.permute.xlu0 %677
      %681 = vset.pattern.permute.xlu0 0
      %682 = vperm.xlu0 %681, %v671
      %v683 = vpop.permute.xlu0 %682
      %686 = vset.pattern.permute.xlu0 0
      %687 = vperm.xlu0 %686, %v672
      %v688 = vpop.permute.xlu0 %687
      %691 = vset.pattern.permute.xlu0 0
      %692 = vperm.xlu0 %691, %v673
      %v693 = vpop.permute.xlu0 %692
      %696 = vset.pattern.permute.xlu0 0
      %697 = vperm.xlu0 %696, %v674
      %v698 = vpop.permute.xlu0 %697
      %v700 = vmul.f32 %v665, %v678
      %v701 = vmul.f32 %v666, %v683
      %v702 = vmul.f32 %v667, %v688
      %v703 = vmul.f32 %v668, %v693
      %v704 = vmul.f32 %v669, %v698
      %705 = vst.msk [vmem:[#allocation2] sm:$0xff] %vm632, %v700
      %706 = vst.msk [vmem:[#allocation2 + $0x8] sm:$0xff] %vm632, %v701
      %707 = vst.msk [vmem:[#allocation2 + $0x10] sm:$0xff] %vm632, %v702
      %708 = vst.msk [vmem:[#allocation2 + $0x18] sm:$0xff] %vm632, %v703
      %709 = vst.msk [vmem:[#allocation2 + $0x20] sm:$0xff] %vm632, %v704
      %v710 = vld [vmem:[%s596] sm:$0x7]
      %v711 = vunpack.c.l.bf16 %v710
      %v712 = vld [vmem:[%s3] sm:$0x1]
      %v714 = vperm.slane %v712, 0
      %v716 = vmul.f32 %v711, %v714
      %v717 = vadd.f32 %v716, 0.0
      %v718 = vld [vmem:[#allocation2] sm:$0x3f]
      %v719 = vld [vmem:[%s7] sm:$0x1]
      %v721 = vperm.slane %v719, 0
      %v723 = vmul.f32 %v718, %v721
      %v724 = vadd.f32 %v723, 0.0
      %v725 = vld [vmem:[%s596 + $0x4] sm:$0xe]
      %v726 = vunpack.c.l.bf16 %v725
      %s727 = scalar_lea.vmem %s3, 1
      %v728 = vld [vmem:[%s727] sm:$0x1]
      %v730 = vperm.slane %v728, 0
      %v732 = vmul.f32 %v726, %v730
      %v734 = vrot.slane %v732, 2
      %v736 = vadd.f32 %v717, %v734
      %v737 = vld [vmem:[#allocation2 + $0xa] sm:$0x3f]
      %s738 = scalar_lea.vmem %s7, 1
      %v739 = vld [vmem:[%s738] sm:$0x1]
      %v741 = vperm.slane %v739, 0
      %v743 = vmul.f32 %v737, %v741
      %v744 = vadd.f32 %v724, %v743
      %v745 = vld [vmem:[%s596] sm:$0xf]
      %v746 = vunpack.c.l.bf16 %v745
      %s747 = scalar_lea.vmem %s3, 2
      %v748 = vld [vmem:[%s747] sm:$0x1]
      %v750 = vperm.slane %v748, 0
      %v752 = vmul.f32 %v746, %v750
      %v754 = vrot.slane %v752, 1
      %v756 = vadd.f32 %v736, %v754
      %v757 = vld [vmem:[#allocation2 + $0x1] sm:$0x3f]
      %s758 = scalar_lea.vmem %s7, 2
      %v759 = vld [vmem:[%s758] sm:$0x1]
      %v761 = vperm.slane %v759, 0
      %v763 = vmul.f32 %v757, %v761
      %v764 = vadd.f32 %v744, %v763
      %v765 = vld [vmem:[%s596 + $0x8] sm:$0xc]
      %v766 = vld [vmem:[%s596 + $0xc] sm:$0x1]
      %v767 = vunpack.c.l.bf16 %v765
      %v768 = vunpack.c.l.bf16 %v766
      %s769 = scalar_lea.vmem %s3, 3
      %v770 = vld [vmem:[%s769] sm:$0x1]
      %v772 = vperm.slane %v770, 0
      %v774 = vmul.f32 %v767, %v772
      %v775 = vmul.f32 %v768, %v772
      %vm778 = vcmask 1043456
      %v779 = vrot.slane %v774, 4
      %v780 = vrot.slane %v775, 4
      %v781 = vsel %vm778, %v779, %v780
      %v783 = vadd.f32 %v756, %v781
      %v784 = vld [vmem:[#allocation2 + $0x14] sm:$0x3f]
      %s785 = scalar_lea.vmem %s7, 3
      %v786 = vld [vmem:[%s785] sm:$0x1]
      %v788 = vperm.slane %v786, 0
      %v790 = vmul.f32 %v784, %v788
      %v791 = vadd.f32 %v764, %v790
      %v792 = vld [vmem:[%s596 + $0xc] sm:$0x8]
      %v793 = vld [vmem:[%s596 + $0x10] sm:$0x3]
      %v794 = vunpack.c.l.bf16 %v792
      %v795 = vunpack.c.l.bf16 %v793
      %s796 = scalar_lea.vmem %s3, 4
      %v797 = vld [vmem:[%s796] sm:$0x1]
      %v799 = vperm.slane %v797, 0
      %v801 = vmul.f32 %v794, %v799
      %v802 = vmul.f32 %v795, %v799
      %vm805 = vcmask 1041408
      %v806 = vrot.slane %v801, 6
      %v807 = vrot.slane %v802, 6
      %v808 = vsel %vm805, %v806, %v807
      %v810 = vadd.f32 %v783, %v808
      %v811 = vld [vmem:[#allocation2 + $0x1e] sm:$0x3f]
      %s812 = scalar_lea.vmem %s7, 4
      %v813 = vld [vmem:[%s812] sm:$0x1]
      %v815 = vperm.slane %v813, 0
      %v817 = vmul.f32 %v811, %v815
      %v818 = vadd.f32 %v791, %v817
      %v819 = vld [vmem:[%s596 + $0xc] sm:$0x3]
      %v820 = vunpack.c.l.bf16 %v819
      %s821 = scalar_lea.vmem %s3, 5
      %v822 = vld [vmem:[%s821] sm:$0x1]
      %v824 = vperm.slane %v822, 0
      %v826 = vmul.f32 %v767, %v824
      %v827 = vmul.f32 %v820, %v824
      %vm830 = vcmask 1042432
      %v831 = vrot.slane %v826, 5
      %v832 = vrot.slane %v827, 5
      %v833 = vsel %vm830, %v831, %v832
      %v835 = vadd.f32 %v810, %v833
      %v836 = vld [vmem:[#allocation2 + $0x15] sm:$0x3f]
      %s837 = scalar_lea.vmem %s7, 5
      %v838 = vld [vmem:[%s837] sm:$0x1]
      %v840 = vperm.slane %v838, 0
      %v842 = vmul.f32 %v836, %v840
      %v843 = vadd.f32 %v818, %v842
      %v844 = vld [vmem:[%s596] sm:$0xe]
      %v845 = vld [vmem:[%s596 + $0x4] sm:$0x1]
      %v846 = vunpack.c.l.bf16 %v844
      %v847 = vunpack.c.l.bf16 %v845
      %s848 = scalar_lea.vmem %s3, 6
      %v849 = vld [vmem:[%s848] sm:$0x1]
      %v851 = vperm.slane %v849, 0
      %v853 = vmul.f32 %v846, %v851
      %v854 = vmul.f32 %v847, %v851
      %vm857 = vcmask 1044480
      %v858 = vrot.slane %v853, 3
      %v859 = vrot.slane %v854, 3
      %v860 = vsel %vm857, %v858, %v859
      %v862 = vadd.f32 %v835, %v860
      %v863 = vld [vmem:[#allocation2 + $0x3] sm:$0x3f]
      %s864 = scalar_lea.vmem %s7, 6
      %v865 = vld [vmem:[%s864] sm:$0x1]
      %v867 = vperm.slane %v865, 0
      %v869 = vmul.f32 %v863, %v867
      %v870 = vadd.f32 %v843, %v869
      %v871 = vld [vmem:[%s596 + $0x4] sm:$0xc]
      %v872 = vld [vmem:[%s596 + $0x8] sm:$0x3]
      %v873 = vunpack.c.l.bf16 %v871
      %v874 = vunpack.c.l.bf16 %v872
      %s875 = scalar_lea.vmem %s3, 7
      %v876 = vld [vmem:[%s875] sm:$0x1]
      %v878 = vperm.slane %v876, 0
      %v880 = vmul.f32 %v873, %v878
      %v881 = vmul.f32 %v874, %v878
      %v884 = vrot.slane %v880, 5
      %v885 = vrot.slane %v881, 5
      %v886 = vsel %vm830, %v884, %v885
      %v888 = vadd.f32 %v862, %v886
      %v889 = vld [vmem:[#allocation2 + $0xd] sm:$0x3f]
      %s890 = scalar_lea.vmem %s7, 7
      %v891 = vld [vmem:[%s890] sm:$0x1]
      %v893 = vperm.slane %v891, 0
      %v895 = vmul.f32 %v889, %v893
      %v896 = vadd.f32 %v870, %v895
      %v897 = vld [vmem:[%s596] sm:$0xc]
      %v898 = vunpack.c.l.bf16 %v897
      %s899 = scalar_lea.vmem %s3, 8
      %v900 = vld [vmem:[%s899] sm:$0x1]
      %v902 = vperm.slane %v900, 0
      %v904 = vmul.f32 %v898, %v902
      %v905 = vmul.f32 %v847, %v902
      %v908 = vrot.slane %v904, 4
      %v909 = vrot.slane %v905, 4
      %v910 = vsel %vm778, %v908, %v909
      %v912 = vadd.f32 %v888, %v910
      %v913 = vld [vmem:[#allocation2 + $0x4] sm:$0x3f]
      %s914 = scalar_lea.vmem %s7, 8
      %v915 = vld [vmem:[%s914] sm:$0x1]
      %v917 = vperm.slane %v915, 0
      %v919 = vmul.f32 %v913, %v917
      %v920 = vadd.f32 %v896, %v919
      %v921 = vld [vmem:[%s4] sm:$0x1]
      %v923 = vperm.slane %v921, 0
      %v925 = vadd.f32 %v912, %v923
      %v926 = vld [vmem:[%s8] sm:$0x1]
      %v928 = vperm.slane %v926, 0
      %v930 = vadd.f32 %v920, %v928
      %v931 = vpack.c.bf16 %v925, %v925
      %v932 = vld [vmem:[%s9] sm:$0xf]
      %v933 = vld [vmem:[%s9 + $0x4] sm:$0xf]
      %v934 = vpack.c.bf16 %v930, %v930
      %v935 = vld [vmem:[%s10] sm:$0xf]
      %v936 = vld [vmem:[%s10 + $0x4] sm:$0xf]
      %v939 = vunpack.c.l.b16 %v935
      %v940 = vunpack.c.l.b16 %v936
      %v941 = vpack.c.b16 %v940, %v939
      %v944 = vsel %vm632, %v934, 0
      %946 = vmatpush.bf16.msra.mxu0 0
      %947 = vmatpush.bf16.msra.mxu0 0
      %948 = vmatpush.bf16.msra.mxu0 0
      %949 = vmatpush.bf16.msra.mxu0 0
      %950 = vmatpush.bf16.msra.mxu0 0
      %951 = vmatpush.bf16.msra.mxu0 0
      %952 = vmatpush.bf16.msra.mxu0 0
      %953 = vmatpush.bf16.msra.mxu0 %v941
      %954 = vmatmul.bf16.gmra.mxu0 %v944
      %v955 = vpop.f32.mrf.mxu0
      %v956 = vadd.f32 0.0, %v955
      %v957 = vpop.f32.mrf.mxu0
      %958 = vdwg.mxu0
      %v961 = vunpack.c.l.b16 %v932
      %v962 = vunpack.c.l.b16 %v933
      %v963 = vpack.c.b16 %v962, %v961
      %v966 = vsel %vm632, %v931, 0
      %968 = vmatpush.bf16.msra.mxu0 0
      %969 = vmatpush.bf16.msra.mxu0 0
      %970 = vmatpush.bf16.msra.mxu0 0
      %971 = vmatpush.bf16.msra.mxu0 0
      %972 = vmatpush.bf16.msra.mxu0 0
      %973 = vmatpush.bf16.msra.mxu0 0
      %974 = vmatpush.bf16.msra.mxu0 0
      %975 = vmatpush.bf16.msra.mxu0 %v963
      %976 = vmatmul.bf16.gmra.mxu0 %v966
      %v977 = vpop.f32.mrf.mxu0
      %v978 = vadd.f32 %v956, %v977
      %v979 = vpop.f32.mrf.mxu0
      %980 = vdwg.mxu0
      %v981 = vld [vmem:[%s11] sm:$0x1]
      %v983 = vperm.slane %v981, 0
      %v985 = vadd.f32 %v978, %v983
      %v986 = vmax.f32 %v985, 0.0
      %vm987 = vcmask 261120
      %988 = vst.msk [vmem:[#allocation3] sm:$0xff] %vm987, 0.0
      %989 = vst.msk [vmem:[#allocation3 + $0x8] sm:$0xff] %vm987, 0.0
      %vm990 = vcmask 254976
      %991 = vst.msk [vmem:[#allocation3 + $0x10] sm:$0x3] %vm990, 0.0
      %992 = vst.msk [vmem:[#allocation3 + $0x6] sm:$0x3] %vm990, %v986
      %vm993 = vcmask 258051
      %994 = vst.msk [vmem:[#allocation3 + $0x7] sm:$0x18] %vm993, %v986
      %v995 = vld [vmem:[%s13] sm:$0xf]
      %v996 = vld [vmem:[%s13 + $0x4] sm:$0xf]
      %v997 = vld [vmem:[%s13 + $0x8] sm:$0xf]
      %v998 = vld [vmem:[%s13 + $0xc] sm:$0xf]
      %v999 = vld [vmem:[%s14] sm:$0x1]
      %v1000 = vld [vmem:[%s15] sm:$0x1]
      %v1001 = vld [vmem:[%s15 + $0x1] sm:$0x1]
      %v1002 = vld [vmem:[%s15 + $0x2] sm:$0x1]
      %v1003 = vld [vmem:[%s15 + $0x3] sm:$0x1]
      %v1004 = vld [vmem:[%s15 + $0x4] sm:$0x1]
      %v1005 = vld [vmem:[%s15 + $0x5] sm:$0x1]
      %v1006 = vld [vmem:[%s15 + $0x6] sm:$0x1]
      %v1007 = vld [vmem:[%s15 + $0x7] sm:$0x1]
      %v1008 = vld [vmem:[%s15 + $0x8] sm:$0x1]
      %v1009 = vld [vmem:[%s16] sm:$0x1]
      %v1010 = vld [vmem:[%s17] sm:$0xf]
      %v1011 = vld [vmem:[%s17 + $0x4] sm:$0xf]
      %v1012 = vld [vmem:[%s18] sm:$0x1]
      %v1013 = vld [vmem:[#allocation3] sm:$0xff]
      %v1014 = vld [vmem:[#allocation3 + $0x8] sm:$0xff]
      %v1015 = vld [vmem:[#allocation3 + $0x10] sm:$0x3]
      %v1016 = vpack.c.bf16 %v1014, %v1013
      %v1017 = vpack.c.bf16 %v1015, %v1015
      %v1019 = vperm.slane %v999, 0
      %v1025 = vunpack.c.l.b16 %v995
      %v1026 = vunpack.c.l.b16 %v996
      %v1027 = vunpack.c.l.b16 %v997
      %v1028 = vunpack.c.l.b16 %v998
      %v1029 = vpack.c.b16 %v1026, %v1025
      %v1030 = vpack.c.b16 %v1028, %v1027
      %v1034 = vsel %vm987, %v1016, 0
      %v1037 = vsel %vm987, %v1017, 0
      %1039 = vmatpush.bf16.msra.mxu0 0
      %1040 = vmatpush.bf16.msra.mxu0 0
      %1041 = vmatpush.bf16.msra.mxu0 0
      %1042 = vmatpush.bf16.msra.mxu0 0
      %1043 = vmatpush.bf16.msra.mxu0 0
      %1044 = vmatpush.bf16.msra.mxu0 0
      %1045 = vmatpush.bf16.msra.mxu0 %v1030
      %1046 = vmatpush.bf16.msra.mxu0 %v1029
      %1047 = vmatmul.bf16.gmra.mxu0 %v1034
      %v1048 = vpop.f32.mrf.mxu0
      %v1049 = vadd.f32 %v1019, %v1048
      %v1050 = vpop.f32.mrf.mxu0
      %v1051 = vadd.f32 %v1019, %v1050
      %1052 = vmatmul.bf16.gmra.mxu0 %v1037
      %v1053 = vpop.f32.mrf.mxu0
      %v1054 = vadd.f32 %v1019, %v1053
      %v1055 = vpop.f32.mrf.mxu0
      %1056 = vdwg.mxu0
      %v1057 = vmax.f32 %v1049, 0.0
      %v1058 = vmax.f32 %v1051, 0.0
      %v1059 = vmax.f32 %v1054, 0.0
      %v1060 = vld [vmem:[%s2] sm:$0xff]
      %v1061 = vld [vmem:[%s2 + $0x8] sm:$0xff]
      %v1062 = vld [vmem:[%s2 + $0x10] sm:$0x3]
      %1064 = vset.pattern.permute.xlu0 0
      %1065 = vperm.xlu0 %1064, %v1060
      %v1066 = vpop.permute.xlu0 %1065
      %1069 = vset.pattern.permute.xlu0 0
      %1070 = vperm.xlu0 %1069, %v1061
      %v1071 = vpop.permute.xlu0 %1070
      %1074 = vset.pattern.permute.xlu0 0
      %1075 = vperm.xlu0 %1074, %v1062
      %v1076 = vpop.permute.xlu0 %1075
      %v1078 = vmul.f32 %v1057, %v1066
      %v1079 = vmul.f32 %v1058, %v1071
      %v1080 = vmul.f32 %v1059, %v1076
      %1081 = vst.msk [vmem:[#allocation4] sm:$0xff] %vm632, %v1078
      %1082 = vst.msk [vmem:[#allocation4 + $0x8] sm:$0xff] %vm632, %v1079
      %vm1083 = vcmask 123904
      %1084 = vst.msk [vmem:[#allocation4 + $0x10] sm:$0x3] %vm1083, %v1080
      %v1085 = vld [vmem:[#allocation4] sm:$0xff]
      %v1087 = vperm.slane %v1000, 0
      %v1089 = vmul.f32 %v1085, %v1087
      %v1090 = vadd.f32 %v1089, 0.0
      %v1091 = vld [vmem:[#allocation4 + $0x1] sm:$0xff]
      %v1093 = vperm.slane %v1001, 0
      %v1095 = vmul.f32 %v1091, %v1093
      %v1096 = vadd.f32 %v1090, %v1095
      %v1097 = vld [vmem:[#allocation4 + $0x2] sm:$0xff]
      %v1099 = vperm.slane %v1002, 0
      %v1101 = vmul.f32 %v1097, %v1099
      %v1102 = vadd.f32 %v1096, %v1101
      %v1103 = vld [vmem:[#allocation4 + $0x4] sm:$0xff]
      %v1105 = vperm.slane %v1003, 0
      %v1107 = vmul.f32 %v1103, %v1105
      %v1108 = vadd.f32 %v1102, %v1107
      %v1109 = vld [vmem:[#allocation4 + $0x5] sm:$0xff]
      %v1111 = vperm.slane %v1004, 0
      %v1113 = vmul.f32 %v1109, %v1111
      %v1114 = vadd.f32 %v1108, %v1113
      %v1115 = vld [vmem:[#allocation4 + $0x6] sm:$0xff]
      %v1117 = vperm.slane %v1005, 0
      %v1119 = vmul.f32 %v1115, %v1117
      %v1120 = vadd.f32 %v1114, %v1119
      %v1121 = vld [vmem:[#allocation4 + $0x8] sm:$0xff]
      %v1123 = vperm.slane %v1006, 0
      %v1125 = vmul.f32 %v1121, %v1123
      %v1126 = vadd.f32 %v1120, %v1125
      %v1127 = vld [vmem:[#allocation4 + $0x9] sm:$0xff]
      %v1129 = vperm.slane %v1007, 0
      %v1131 = vmul.f32 %v1127, %v1129
      %v1132 = vadd.f32 %v1126, %v1131
      %v1133 = vld [vmem:[#allocation4 + $0xa] sm:$0xff]
      %v1135 = vperm.slane %v1008, 0
      %v1137 = vmul.f32 %v1133, %v1135
      %v1138 = vadd.f32 %v1132, %v1137
      %v1140 = vperm.slane %v1009, 0
      %v1142 = vadd.f32 %v1138, %v1140
      %v1143 = vld [vmem:[#allocation3 + $0x5] sm:$0xff]
      %v1144 = vpack.c.bf16 %v1143, %v1143
      %v1145 = vld [vmem:[%s12] sm:$0xf]
      %v1146 = vld [vmem:[%s12 + $0x4] sm:$0xf]
      %v1147 = vld [vmem:[%s12 + $0x8] sm:$0xf]
      %v1148 = vld [vmem:[%s12 + $0xc] sm:$0xf]
      %v1149 = vpack.c.bf16 %v1142, %v1142
      %v1152 = vunpack.c.l.b16 %v1010
      %v1153 = vunpack.c.l.b16 %v1011
      %v1154 = vpack.c.b16 %v1153, %v1152
      %v1157 = vsel %vm632, %v1149, 0
      %1159 = vmatpush.bf16.msra.mxu0 0
      %1160 = vmatpush.bf16.msra.mxu0 0
      %1161 = vmatpush.bf16.msra.mxu0 0
      %1162 = vmatpush.bf16.msra.mxu0 0
      %1163 = vmatpush.bf16.msra.mxu0 0
      %1164 = vmatpush.bf16.msra.mxu0 0
      %1165 = vmatpush.bf16.msra.mxu0 0
      %1166 = vmatpush.bf16.msra.mxu0 %v1154
      %1167 = vmatmul.bf16.gmra.mxu0 %v1157
      %v1168 = vpop.f32.mrf.mxu0
      %v1169 = vadd.f32 0.0, %v1168
      %v1170 = vpop.f32.mrf.mxu0
      %1171 = vdwg.mxu0
      %v1176 = vunpack.c.l.b16 %v1145
      %v1177 = vunpack.c.l.b16 %v1146
      %v1178 = vunpack.c.l.b16 %v1147
      %v1179 = vunpack.c.l.b16 %v1148
      %v1180 = vpack.c.b16 %v1177, %v1176
      %v1181 = vpack.c.b16 %v1179, %v1178
      %v1185 = vsel %vm987, %v1144, 0
      %1187 = vmatpush.bf16.msra.mxu0 0
      %1188 = vmatpush.bf16.msra.mxu0 0
      %1189 = vmatpush.bf16.msra.mxu0 0
      %1190 = vmatpush.bf16.msra.mxu0 0
      %1191 = vmatpush.bf16.msra.mxu0 0
      %1192 = vmatpush.bf16.msra.mxu0 0
      %1193 = vmatpush.bf16.msra.mxu0 %v1181
      %1194 = vmatpush.bf16.msra.mxu0 %v1180
      %1195 = vmatmul.bf16.gmra.mxu0 %v1185
      %v1196 = vpop.f32.mrf.mxu0
      %v1197 = vadd.f32 %v1169, %v1196
      %v1198 = vpop.f32.mrf.mxu0
      %1199 = vdwg.mxu0
      %v1201 = vperm.slane %v1012, 0
      %v1203 = vadd.f32 %v1197, %v1201
      %v1204 = vmax.f32 %v1203, 0.0
      %v1205 = vld [vmem:[%s2 + $0x5] sm:$0xff]
      %1207 = vset.pattern.permute.xlu0 0
      %1208 = vperm.xlu0 %1207, %v1205
      %v1209 = vpop.permute.xlu0 %1208
      %v1211 = vmul.f32 %v1204, %v1209
      %1212 = vst.msk [vmem:[#allocation3 + $0x5] sm:$0xff] %vm987, %v1211
      %v1213 = vld [vmem:[#allocation3 + $0x5] sm:$0xff]
      %v1214 = vpack.c.bf16 %v1213, %v1213
      %vm1215 = vcmask 257024
      %1216 = vst.msk [vmem:[%s600] sm:$0xf] %vm1215, %v1214
      %p1217 = scmp.lt.s32.totalorder %s30, 1
      %s1218 = scalar_select %p1217, %s30, 1
      %s1219 = smul.addr %s1218, 4
      %s1220 = scalar_lea.vmem %s19, %s1219
      // Predicated region
      $region97: #{_lambda_.7} parent=95 // pred_check
        %p1221 = pneg %p452
      $region98: #{_lambda_.7} parent=95 // pred_check_branch
        %1223 = sbr.rel (%p1221) target = $region100
      $region99: #{_lambda_.7} parent=95 // pred_region
        _
      $region100: #{_lambda_.7} parent=95 // pred_fallthru
        _
    $region96: #{_lambda_.7} parent=5 // pred_fallthru
      _
    %p1224 = scmp.le.s32.totalorder 2, %s25
    // Predicated region
    $region101: #{_lambda_.7} parent=5 // pred_check
      %p1225 = pneg %p1224
    $region102: #{_lambda_.7} parent=5 // pred_check_branch
      %1227 = sbr.rel (%p1225) target = $region104
    $region103: #{_lambda_.7} parent=5 // pred_region
      %s1228 = ssub.s32 %s25, 2
      // Predicated region
      $region105: #{_lambda_.7} parent=103 // pred_check
        %p1229 = pneg %p458
      $region106: #{_lambda_.7} parent=103 // pred_check_branch
        %1231 = sbr.rel (%p1229) target = $region108
      $region107: #{_lambda_.7} parent=103 // pred_region
        %p1232 = scmp.lt.s32.totalorder %s31, 1
        %s1233 = scalar_select %p1232, %s31, 1
        %s1234 = smul.addr %s1233, 4
        %s1235 = scalar_lea.vmem %s19, %s1234
      $region108: #{_lambda_.7} parent=103 // pred_fallthru
        _
    $region104: #{_lambda_.7} parent=5 // pred_fallthru
      _
  $region6: #{_lambda_.7} parent=0 // loop_footer
    %s29 = sadd.s32 1, %s25
  $region7: #{_lambda_.7} parent=0 // loop_footer_branch
    %24 = sbr.rel target = $region3
  $region8: #{_lambda_.7} parent=0 // loop_exit
    _

// kernel: _lambda_.8
$region0: #{_lambda_.8}
  #allocation0 [shape = 'u32[]', space=smem, size = 0x4, offset = 0x4, fixed_abs, tag = 'smem constant byte address 0x4 - core index']
  #allocation1 [shape = 'u32[72,128]{1,0:T(1,128)}', space=vmem, size = 0x9000, scoped, tag = 'internal scratch']
  #allocation2 [shape = 'f32[20,32]{1,0:T(8,128)}', space=vmem, size = 0x3000, scoped, tag = 'scratch operand']
  #allocation3 [shape = 'f32[11,64]{1,0:T(8,128)}', space=vmem, size = 0x2000, scoped, tag = 'scratch operand']
  #allocation4 [shape = 'f32[11,32]{1,0:T(8,128)}', space=vmem, size = 0x2000, scoped, tag = 'scratch operand']
  %s0 = inlined_call_operand.vmem [shape: bf16[2,20,32], index: 0, kind: input, shape index: {}]
  %s1 = inlined_call_operand.vmem [shape: f32[20,1], index: 1, kind: input, shape index: {}]
  %s2 = inlined_call_operand.vmem [shape: f32[11,1], index: 2, kind: input, shape index: {}]
  %s3 = inlined_call_operand.vmem [shape: f32[9,1,32], index: 3, kind: input, shape index: {}]
  %s4 = inlined_call_operand.vmem [shape: f32[1,32], index: 4, kind: input, shape index: {}]
  %s5 = inlined_call_operand.vmem [shape: bf16[32,32], index: 5, kind: input, shape index: {}]
  %s6 = inlined_call_operand.vmem [shape: f32[1,32], index: 6, kind: input, shape index: {}]
  %s7 = inlined_call_operand.vmem [shape: f32[9,1,32], index: 7, kind: input, shape index: {}]
  %s8 = inlined_call_operand.vmem [shape: f32[1,32], index: 8, kind: input, shape index: {}]
  %s9 = inlined_call_operand.vmem [shape: bf16[32,64], index: 9, kind: input, shape index: {}]
  %s10 = inlined_call_operand.vmem [shape: bf16[32,64], index: 10, kind: input, shape index: {}]
  %s11 = inlined_call_operand.vmem [shape: f32[1,64], index: 11, kind: input, shape index: {}]
  %s12 = inlined_call_operand.vmem [shape: bf16[64,64], index: 12, kind: input, shape index: {}]
  %s13 = inlined_call_operand.vmem [shape: bf16[1,64,32], index: 13, kind: input, shape index: {}]
  %s14 = inlined_call_operand.vmem [shape: f32[1,1,32], index: 14, kind: input, shape index: {}]
  %s15 = inlined_call_operand.vmem [shape: f32[1,9,1,32], index: 15, kind: input, shape index: {}]
  %s16 = inlined_call_operand.vmem [shape: f32[1,1,32], index: 16, kind: input, shape index: {}]
  %s17 = inlined_call_operand.vmem [shape: bf16[1,32,64], index: 17, kind: input, shape index: {}]
  %s18 = inlined_call_operand.vmem [shape: f32[1,1,64], index: 18, kind: input, shape index: {}]
  %s19 = inlined_call_operand.vmem [shape: bf16[2,3,64], index: 19, kind: output, shape index: {}]
  %s20 = sld [smem:[#allocation0]]
  $region109: #{_lambda_.8} parent=0
    _
  %s22 = ssub.s32 1, %s20
  %s23 = scalar_select 0, %s22, %s20
  loop: start=0, step=1, limit=4
  $region2: #{_lambda_.8} parent=0 // loop_pre_header
    _
  $region3: #{_lambda_.8} parent=0 // loop_header
    %s25 = sphi 0, %s29
    %p26 = scmp.ge.s32.totalorder %s25, 4
    %s35 = sphi 0, %s37
    %s38 = sphi 0, %s35
    %s39 = sphi 0, %s38
    %s55 = sphi 0, %s39
    %s59 = sphi 0, %s59
    %s61 = sphi 0, %s59
    %s62 = sphi 0, %s61
    %s76 = sphi 0, %s62
    %s80 = sphi 0, %s80
    %s82 = sphi 0, %s80
    %s83 = sphi 0, %s82
    %s97 = sphi 0, %s83
    %s101 = sphi 0, %s101
    %s103 = sphi 0, %s101
    %s104 = sphi 0, %s103
    %s118 = sphi 0, %s104
    %s122 = sphi 0, %s122
    %s124 = sphi 0, %s122
    %s125 = sphi 0, %s124
    %s139 = sphi 0, %s125
    %s143 = sphi 0, %s143
    %s145 = sphi 0, %s143
    %s146 = sphi 0, %s145
    %s160 = sphi 0, %s146
    %s164 = sphi 0, %s164
    %s166 = sphi 0, %s164
    %s167 = sphi 0, %s166
    %s181 = sphi 0, %s167
    %s185 = sphi 0, %s185
    %s187 = sphi 0, %s185
    %s188 = sphi 0, %s187
    %s202 = sphi 0, %s188
    %s206 = sphi 0, %s206
    %s208 = sphi 0, %s206
    %s209 = sphi 0, %s208
    %s223 = sphi 0, %s209
    %s227 = sphi 0, %s227
    %s229 = sphi 0, %s227
    %s230 = sphi 0, %s229
    %s244 = sphi 0, %s230
    %s248 = sphi 0, %s248
    %s250 = sphi 0, %s248
    %s251 = sphi 0, %s250
    %s265 = sphi 0, %s251
    %s269 = sphi 0, %s269
    %s271 = sphi 0, %s269
    %s272 = sphi 0, %s271
    %s286 = sphi 0, %s272
    %s290 = sphi 0, %s290
    %s292 = sphi 0, %s290
    %s293 = sphi 0, %s292
    %s307 = sphi 0, %s293
    %s311 = sphi 0, %s311
    %s313 = sphi 0, %s311
    %s314 = sphi 0, %s313
    %s328 = sphi 0, %s314
    %s332 = sphi 0, %s332
    %s334 = sphi 0, %s332
    %s335 = sphi 0, %s334
    %s349 = sphi 0, %s335
    %s353 = sphi 0, %s353
    %s355 = sphi 0, %s353
    %s356 = sphi 0, %s355
    %s370 = sphi 0, %s356
    %s374 = sphi 0, %s374
    %s376 = sphi 0, %s374
    %s377 = sphi 0, %s376
    %s391 = sphi 0, %s377
    %s395 = sphi 0, %s395
    %s397 = sphi 0, %s395
    %s398 = sphi 0, %s397
    %s412 = sphi 0, %s398
    %s416 = sphi 0, %s416
    %s418 = sphi 0, %s416
    %s419 = sphi 0, %s418
    %s433 = sphi 0, %s419
    %s439 = sphi 0, %s441
    %s442 = sphi 0, %s439
    %s443 = sphi 0, %s442
    %s459 = sphi 0, %s443
  $region4: #{_lambda_.8} parent=0 // loop_header_branch
    %28 = sbr.rel (%p26) target = $region8
  $region5: #{_lambda_.8} parent=0 // loop_body
    %s30 = ssub.s32 %s25, 1
    %s31 = ssub.s32 %s25, 2
    %s32 = sadd.s32 %s25, 1
    %s33 = ssub.s32 %s25, %s32
    %p34 = scmp.eq.s32.totalorder %s33, 0
    %s36 = sadd.s32 %s35, 1
    %s37 = scalar_select %p34, %s35, %s36
    %p40 = pneg %p34
    %p41 = scmp.eq.s32.totalorder %s25, 1
    %p42 = por %p40, %p41
    %p43 = scmp.ne.s32.totalorder %s35, %s38
    %p44 = scmp.eq.s32.totalorder %s25, 0
    %p45 = por %p43, %p44
    %p46 = scmp.ne.s32.totalorder %s35, %s38
    %p47 = scmp.eq.s32.totalorder %s30, 1
    %p48 = por %p46, %p47
    %p49 = scmp.ne.s32.totalorder %s38, %s39
    %p50 = scmp.eq.s32.totalorder %s30, 0
    %p51 = por %p49, %p50
    %p52 = scmp.ne.s32.totalorder %s38, %s39
    %p53 = scmp.eq.s32.totalorder %s31, 1
    %p54 = por %p52, %p53
    %p56 = scmp.ne.s32.totalorder %s39, %s55
    %p57 = scmp.eq.s32.totalorder %s31, 0
    %p58 = por %p56, %p57
    %s60 = sadd.s32 %s59, 1
    %p63 = scmp.eq.s32.totalorder %s25, 1
    %p64 = scmp.ne.s32.totalorder %s59, %s61
    %p65 = scmp.eq.s32.totalorder %s25, 0
    %p66 = por %p64, %p65
    %p67 = scmp.ne.s32.totalorder %s59, %s61
    %p68 = scmp.eq.s32.totalorder %s30, 1
    %p69 = por %p67, %p68
    %p70 = scmp.ne.s32.totalorder %s61, %s62
    %p71 = scmp.eq.s32.totalorder %s30, 0
    %p72 = por %p70, %p71
    %p73 = scmp.ne.s32.totalorder %s61, %s62
    %p74 = scmp.eq.s32.totalorder %s31, 1
    %p75 = por %p73, %p74
    %p77 = scmp.ne.s32.totalorder %s62, %s76
    %p78 = scmp.eq.s32.totalorder %s31, 0
    %p79 = por %p77, %p78
    %s81 = sadd.s32 %s80, 1
    %p84 = scmp.eq.s32.totalorder %s25, 1
    %p85 = scmp.ne.s32.totalorder %s80, %s82
    %p86 = scmp.eq.s32.totalorder %s25, 0
    %p87 = por %p85, %p86
    %p88 = scmp.ne.s32.totalorder %s80, %s82
    %p89 = scmp.eq.s32.totalorder %s30, 1
    %p90 = por %p88, %p89
    %p91 = scmp.ne.s32.totalorder %s82, %s83
    %p92 = scmp.eq.s32.totalorder %s30, 0
    %p93 = por %p91, %p92
    %p94 = scmp.ne.s32.totalorder %s82, %s83
    %p95 = scmp.eq.s32.totalorder %s31, 1
    %p96 = por %p94, %p95
    %p98 = scmp.ne.s32.totalorder %s83, %s97
    %p99 = scmp.eq.s32.totalorder %s31, 0
    %p100 = por %p98, %p99
    %s102 = sadd.s32 %s101, 1
    %p105 = scmp.eq.s32.totalorder %s25, 1
    %p106 = scmp.ne.s32.totalorder %s101, %s103
    %p107 = scmp.eq.s32.totalorder %s25, 0
    %p108 = por %p106, %p107
    %p109 = scmp.ne.s32.totalorder %s101, %s103
    %p110 = scmp.eq.s32.totalorder %s30, 1
    %p111 = por %p109, %p110
    %p112 = scmp.ne.s32.totalorder %s103, %s104
    %p113 = scmp.eq.s32.totalorder %s30, 0
    %p114 = por %p112, %p113
    %p115 = scmp.ne.s32.totalorder %s103, %s104
    %p116 = scmp.eq.s32.totalorder %s31, 1
    %p117 = por %p115, %p116
    %p119 = scmp.ne.s32.totalorder %s104, %s118
    %p120 = scmp.eq.s32.totalorder %s31, 0
    %p121 = por %p119, %p120
    %s123 = sadd.s32 %s122, 1
    %p126 = scmp.eq.s32.totalorder %s25, 1
    %p127 = scmp.ne.s32.totalorder %s122, %s124
    %p128 = scmp.eq.s32.totalorder %s25, 0
    %p129 = por %p127, %p128
    %p130 = scmp.ne.s32.totalorder %s122, %s124
    %p131 = scmp.eq.s32.totalorder %s30, 1
    %p132 = por %p130, %p131
    %p133 = scmp.ne.s32.totalorder %s124, %s125
    %p134 = scmp.eq.s32.totalorder %s30, 0
    %p135 = por %p133, %p134
    %p136 = scmp.ne.s32.totalorder %s124, %s125
    %p137 = scmp.eq.s32.totalorder %s31, 1
    %p138 = por %p136, %p137
    %p140 = scmp.ne.s32.totalorder %s125, %s139
    %p141 = scmp.eq.s32.totalorder %s31, 0
    %p142 = por %p140, %p141
    %s144 = sadd.s32 %s143, 1
    %p147 = scmp.eq.s32.totalorder %s25, 1
    %p148 = scmp.ne.s32.totalorder %s143, %s145
    %p149 = scmp.eq.s32.totalorder %s25, 0
    %p150 = por %p148, %p149
    %p151 = scmp.ne.s32.totalorder %s143, %s145
    %p152 = scmp.eq.s32.totalorder %s30, 1
    %p153 = por %p151, %p152
    %p154 = scmp.ne.s32.totalorder %s145, %s146
    %p155 = scmp.eq.s32.totalorder %s30, 0
    %p156 = por %p154, %p155
    %p157 = scmp.ne.s32.totalorder %s145, %s146
    %p158 = scmp.eq.s32.totalorder %s31, 1
    %p159 = por %p157, %p158
    %p161 = scmp.ne.s32.totalorder %s146, %s160
    %p162 = scmp.eq.s32.totalorder %s31, 0
    %p163 = por %p161, %p162
    %s165 = sadd.s32 %s164, 1
    %p168 = scmp.eq.s32.totalorder %s25, 1
    %p169 = scmp.ne.s32.totalorder %s164, %s166
    %p170 = scmp.eq.s32.totalorder %s25, 0
    %p171 = por %p169, %p170
    %p172 = scmp.ne.s32.totalorder %s164, %s166
    %p173 = scmp.eq.s32.totalorder %s30, 1
    %p174 = por %p172, %p173
    %p175 = scmp.ne.s32.totalorder %s166, %s167
    %p176 = scmp.eq.s32.totalorder %s30, 0
    %p177 = por %p175, %p176
    %p178 = scmp.ne.s32.totalorder %s166, %s167
    %p179 = scmp.eq.s32.totalorder %s31, 1
    %p180 = por %p178, %p179
    %p182 = scmp.ne.s32.totalorder %s167, %s181
    %p183 = scmp.eq.s32.totalorder %s31, 0
    %p184 = por %p182, %p183
    %s186 = sadd.s32 %s185, 1
    %p189 = scmp.eq.s32.totalorder %s25, 1
    %p190 = scmp.ne.s32.totalorder %s185, %s187
    %p191 = scmp.eq.s32.totalorder %s25, 0
    %p192 = por %p190, %p191
    %p193 = scmp.ne.s32.totalorder %s185, %s187
    %p194 = scmp.eq.s32.totalorder %s30, 1
    %p195 = por %p193, %p194
    %p196 = scmp.ne.s32.totalorder %s187, %s188
    %p197 = scmp.eq.s32.totalorder %s30, 0
    %p198 = por %p196, %p197
    %p199 = scmp.ne.s32.totalorder %s187, %s188
    %p200 = scmp.eq.s32.totalorder %s31, 1
    %p201 = por %p199, %p200
    %p203 = scmp.ne.s32.totalorder %s188, %s202
    %p204 = scmp.eq.s32.totalorder %s31, 0
    %p205 = por %p203, %p204
    %s207 = sadd.s32 %s206, 1
    %p210 = scmp.eq.s32.totalorder %s25, 1
    %p211 = scmp.ne.s32.totalorder %s206, %s208
    %p212 = scmp.eq.s32.totalorder %s25, 0
    %p213 = por %p211, %p212
    %p214 = scmp.ne.s32.totalorder %s206, %s208
    %p215 = scmp.eq.s32.totalorder %s30, 1
    %p216 = por %p214, %p215
    %p217 = scmp.ne.s32.totalorder %s208, %s209
    %p218 = scmp.eq.s32.totalorder %s30, 0
    %p219 = por %p217, %p218
    %p220 = scmp.ne.s32.totalorder %s208, %s209
    %p221 = scmp.eq.s32.totalorder %s31, 1
    %p222 = por %p220, %p221
    %p224 = scmp.ne.s32.totalorder %s209, %s223
    %p225 = scmp.eq.s32.totalorder %s31, 0
    %p226 = por %p224, %p225
    %s228 = sadd.s32 %s227, 1
    %p231 = scmp.eq.s32.totalorder %s25, 1
    %p232 = scmp.ne.s32.totalorder %s227, %s229
    %p233 = scmp.eq.s32.totalorder %s25, 0
    %p234 = por %p232, %p233
    %p235 = scmp.ne.s32.totalorder %s227, %s229
    %p236 = scmp.eq.s32.totalorder %s30, 1
    %p237 = por %p235, %p236
    %p238 = scmp.ne.s32.totalorder %s229, %s230
    %p239 = scmp.eq.s32.totalorder %s30, 0
    %p240 = por %p238, %p239
    %p241 = scmp.ne.s32.totalorder %s229, %s230
    %p242 = scmp.eq.s32.totalorder %s31, 1
    %p243 = por %p241, %p242
    %p245 = scmp.ne.s32.totalorder %s230, %s244
    %p246 = scmp.eq.s32.totalorder %s31, 0
    %p247 = por %p245, %p246
    %s249 = sadd.s32 %s248, 1
    %p252 = scmp.eq.s32.totalorder %s25, 1
    %p253 = scmp.ne.s32.totalorder %s248, %s250
    %p254 = scmp.eq.s32.totalorder %s25, 0
    %p255 = por %p253, %p254
    %p256 = scmp.ne.s32.totalorder %s248, %s250
    %p257 = scmp.eq.s32.totalorder %s30, 1
    %p258 = por %p256, %p257
    %p259 = scmp.ne.s32.totalorder %s250, %s251
    %p260 = scmp.eq.s32.totalorder %s30, 0
    %p261 = por %p259, %p260
    %p262 = scmp.ne.s32.totalorder %s250, %s251
    %p263 = scmp.eq.s32.totalorder %s31, 1
    %p264 = por %p262, %p263
    %p266 = scmp.ne.s32.totalorder %s251, %s265
    %p267 = scmp.eq.s32.totalorder %s31, 0
    %p268 = por %p266, %p267
    %s270 = sadd.s32 %s269, 1
    %p273 = scmp.eq.s32.totalorder %s25, 1
    %p274 = scmp.ne.s32.totalorder %s269, %s271
    %p275 = scmp.eq.s32.totalorder %s25, 0
    %p276 = por %p274, %p275
    %p277 = scmp.ne.s32.totalorder %s269, %s271
    %p278 = scmp.eq.s32.totalorder %s30, 1
    %p279 = por %p277, %p278
    %p280 = scmp.ne.s32.totalorder %s271, %s272
    %p281 = scmp.eq.s32.totalorder %s30, 0
    %p282 = por %p280, %p281
    %p283 = scmp.ne.s32.totalorder %s271, %s272
    %p284 = scmp.eq.s32.totalorder %s31, 1
    %p285 = por %p283, %p284
    %p287 = scmp.ne.s32.totalorder %s272, %s286
    %p288 = scmp.eq.s32.totalorder %s31, 0
    %p289 = por %p287, %p288
    %s291 = sadd.s32 %s290, 1
    %p294 = scmp.eq.s32.totalorder %s25, 1
    %p295 = scmp.ne.s32.totalorder %s290, %s292
    %p296 = scmp.eq.s32.totalorder %s25, 0
    %p297 = por %p295, %p296
    %p298 = scmp.ne.s32.totalorder %s290, %s292
    %p299 = scmp.eq.s32.totalorder %s30, 1
    %p300 = por %p298, %p299
    %p301 = scmp.ne.s32.totalorder %s292, %s293
    %p302 = scmp.eq.s32.totalorder %s30, 0
    %p303 = por %p301, %p302
    %p304 = scmp.ne.s32.totalorder %s292, %s293
    %p305 = scmp.eq.s32.totalorder %s31, 1
    %p306 = por %p304, %p305
    %p308 = scmp.ne.s32.totalorder %s293, %s307
    %p309 = scmp.eq.s32.totalorder %s31, 0
    %p310 = por %p308, %p309
    %s312 = sadd.s32 %s311, 1
    %p315 = scmp.eq.s32.totalorder %s25, 1
    %p316 = scmp.ne.s32.totalorder %s311, %s313
    %p317 = scmp.eq.s32.totalorder %s25, 0
    %p318 = por %p316, %p317
    %p319 = scmp.ne.s32.totalorder %s311, %s313
    %p320 = scmp.eq.s32.totalorder %s30, 1
    %p321 = por %p319, %p320
    %p322 = scmp.ne.s32.totalorder %s313, %s314
    %p323 = scmp.eq.s32.totalorder %s30, 0
    %p324 = por %p322, %p323
    %p325 = scmp.ne.s32.totalorder %s313, %s314
    %p326 = scmp.eq.s32.totalorder %s31, 1
    %p327 = por %p325, %p326
    %p329 = scmp.ne.s32.totalorder %s314, %s328
    %p330 = scmp.eq.s32.totalorder %s31, 0
    %p331 = por %p329, %p330
    %s333 = sadd.s32 %s332, 1
    %p336 = scmp.eq.s32.totalorder %s25, 1
    %p337 = scmp.ne.s32.totalorder %s332, %s334
    %p338 = scmp.eq.s32.totalorder %s25, 0
    %p339 = por %p337, %p338
    %p340 = scmp.ne.s32.totalorder %s332, %s334
    %p341 = scmp.eq.s32.totalorder %s30, 1
    %p342 = por %p340, %p341
    %p343 = scmp.ne.s32.totalorder %s334, %s335
    %p344 = scmp.eq.s32.totalorder %s30, 0
    %p345 = por %p343, %p344
    %p346 = scmp.ne.s32.totalorder %s334, %s335
    %p347 = scmp.eq.s32.totalorder %s31, 1
    %p348 = por %p346, %p347
    %p350 = scmp.ne.s32.totalorder %s335, %s349
    %p351 = scmp.eq.s32.totalorder %s31, 0
    %p352 = por %p350, %p351
    %s354 = sadd.s32 %s353, 1
    %p357 = scmp.eq.s32.totalorder %s25, 1
    %p358 = scmp.ne.s32.totalorder %s353, %s355
    %p359 = scmp.eq.s32.totalorder %s25, 0
    %p360 = por %p358, %p359
    %p361 = scmp.ne.s32.totalorder %s353, %s355
    %p362 = scmp.eq.s32.totalorder %s30, 1
    %p363 = por %p361, %p362
    %p364 = scmp.ne.s32.totalorder %s355, %s356
    %p365 = scmp.eq.s32.totalorder %s30, 0
    %p366 = por %p364, %p365
    %p367 = scmp.ne.s32.totalorder %s355, %s356
    %p368 = scmp.eq.s32.totalorder %s31, 1
    %p369 = por %p367, %p368
    %p371 = scmp.ne.s32.totalorder %s356, %s370
    %p372 = scmp.eq.s32.totalorder %s31, 0
    %p373 = por %p371, %p372
    %s375 = sadd.s32 %s374, 1
    %p378 = scmp.eq.s32.totalorder %s25, 1
    %p379 = scmp.ne.s32.totalorder %s374, %s376
    %p380 = scmp.eq.s32.totalorder %s25, 0
    %p381 = por %p379, %p380
    %p382 = scmp.ne.s32.totalorder %s374, %s376
    %p383 = scmp.eq.s32.totalorder %s30, 1
    %p384 = por %p382, %p383
    %p385 = scmp.ne.s32.totalorder %s376, %s377
    %p386 = scmp.eq.s32.totalorder %s30, 0
    %p387 = por %p385, %p386
    %p388 = scmp.ne.s32.totalorder %s376, %s377
    %p389 = scmp.eq.s32.totalorder %s31, 1
    %p390 = por %p388, %p389
    %p392 = scmp.ne.s32.totalorder %s377, %s391
    %p393 = scmp.eq.s32.totalorder %s31, 0
    %p394 = por %p392, %p393
    %s396 = sadd.s32 %s395, 1
    %p399 = scmp.eq.s32.totalorder %s25, 1
    %p400 = scmp.ne.s32.totalorder %s395, %s397
    %p401 = scmp.eq.s32.totalorder %s25, 0
    %p402 = por %p400, %p401
    %p403 = scmp.ne.s32.totalorder %s395, %s397
    %p404 = scmp.eq.s32.totalorder %s30, 1
    %p405 = por %p403, %p404
    %p406 = scmp.ne.s32.totalorder %s397, %s398
    %p407 = scmp.eq.s32.totalorder %s30, 0
    %p408 = por %p406, %p407
    %p409 = scmp.ne.s32.totalorder %s397, %s398
    %p410 = scmp.eq.s32.totalorder %s31, 1
    %p411 = por %p409, %p410
    %p413 = scmp.ne.s32.totalorder %s398, %s412
    %p414 = scmp.eq.s32.totalorder %s31, 0
    %p415 = por %p413, %p414
    %s417 = sadd.s32 %s416, 1
    %p420 = scmp.eq.s32.totalorder %s25, 1
    %p421 = scmp.ne.s32.totalorder %s416, %s418
    %p422 = scmp.eq.s32.totalorder %s25, 0
    %p423 = por %p421, %p422
    %p424 = scmp.ne.s32.totalorder %s416, %s418
    %p425 = scmp.eq.s32.totalorder %s30, 1
    %p426 = por %p424, %p425
    %p427 = scmp.ne.s32.totalorder %s418, %s419
    %p428 = scmp.eq.s32.totalorder %s30, 0
    %p429 = por %p427, %p428
    %p430 = scmp.ne.s32.totalorder %s418, %s419
    %p431 = scmp.eq.s32.totalorder %s31, 1
    %p432 = por %p430, %p431
    %p434 = scmp.ne.s32.totalorder %s419, %s433
    %p435 = scmp.eq.s32.totalorder %s31, 0
    %p436 = por %p434, %p435
    %s437 = ssub.s32 %s25, %s32
    %p438 = scmp.eq.s32.totalorder %s437, 0
    %s440 = sadd.s32 %s439, 1
    %s441 = scalar_select %p438, %s439, %s440
    %p444 = pneg %p438
    %p445 = scmp.eq.s32.totalorder %s25, 1
    %p446 = por %p444, %p445
    %p447 = scmp.ne.s32.totalorder %s439, %s442
    %p448 = scmp.eq.s32.totalorder %s25, 0
    %p449 = por %p447, %p448
    %p450 = scmp.ne.s32.totalorder %s439, %s442
    %p451 = scmp.eq.s32.totalorder %s30, 1
    %p452 = por %p450, %p451
    %p453 = scmp.ne.s32.totalorder %s442, %s443
    %p454 = scmp.eq.s32.totalorder %s30, 0
    %p455 = por %p453, %p454
    %p456 = scmp.ne.s32.totalorder %s442, %s443
    %p457 = scmp.eq.s32.totalorder %s31, 1
    %p458 = por %p456, %p457
    %p460 = scmp.ne.s32.totalorder %s443, %s459
    %p461 = scmp.eq.s32.totalorder %s31, 0
    %p462 = por %p460, %p461
    %p463 = scmp.le.s32.totalorder 1, %s25
    %p464 = scmp.lt.s32.totalorder %s25, 3
    %p465 = pnand %p463, %p464
    %p466 = pneg %p465
    // Predicated region
    $region9: #{_lambda_.8} parent=5 // pred_check
      _
    $region10: #{_lambda_.8} parent=5 // pred_check_branch
      %468 = sbr.rel (%p465) target = $region12
    $region11: #{_lambda_.8} parent=5 // pred_region
      %s469 = ssub.s32 %s25, 1
      // Predicated region
      $region13: #{_lambda_.8} parent=11 // pred_check
        %p470 = pneg %p72
      $region14: #{_lambda_.8} parent=11 // pred_check_branch
        %472 = sbr.rel (%p470) target = $region16
      $region15: #{_lambda_.8} parent=11 // pred_region
        _
      $region16: #{_lambda_.8} parent=11 // pred_fallthru
        _
      // Predicated region
      $region17: #{_lambda_.8} parent=11 // pred_check
        %p473 = pneg %p93
      $region18: #{_lambda_.8} parent=11 // pred_check_branch
        %475 = sbr.rel (%p473) target = $region20
      $region19: #{_lambda_.8} parent=11 // pred_region
        _
      $region20: #{_lambda_.8} parent=11 // pred_fallthru
        _
      // Predicated region
      $region21: #{_lambda_.8} parent=11 // pred_check
        %p476 = pneg %p114
      $region22: #{_lambda_.8} parent=11 // pred_check_branch
        %478 = sbr.rel (%p476) target = $region24
      $region23: #{_lambda_.8} parent=11 // pred_region
        _
      $region24: #{_lambda_.8} parent=11 // pred_fallthru
        _
      // Predicated region
      $region25: #{_lambda_.8} parent=11 // pred_check
        %p479 = pneg %p135
      $region26: #{_lambda_.8} parent=11 // pred_check_branch
        %481 = sbr.rel (%p479) target = $region28
      $region27: #{_lambda_.8} parent=11 // pred_region
        _
      $region28: #{_lambda_.8} parent=11 // pred_fallthru
        _
      // Predicated region
      $region29: #{_lambda_.8} parent=11 // pred_check
        %p482 = pneg %p156
      $region30: #{_lambda_.8} parent=11 // pred_check_branch
        %484 = sbr.rel (%p482) target = $region32
      $region31: #{_lambda_.8} parent=11 // pred_region
        _
      $region32: #{_lambda_.8} parent=11 // pred_fallthru
        _
      // Predicated region
      $region33: #{_lambda_.8} parent=11 // pred_check
        %p485 = pneg %p177
      $region34: #{_lambda_.8} parent=11 // pred_check_branch
        %487 = sbr.rel (%p485) target = $region36
      $region35: #{_lambda_.8} parent=11 // pred_region
        _
      $region36: #{_lambda_.8} parent=11 // pred_fallthru
        _
      // Predicated region
      $region37: #{_lambda_.8} parent=11 // pred_check
        %p488 = pneg %p198
      $region38: #{_lambda_.8} parent=11 // pred_check_branch
        %490 = sbr.rel (%p488) target = $region40
      $region39: #{_lambda_.8} parent=11 // pred_region
        _
      $region40: #{_lambda_.8} parent=11 // pred_fallthru
        _
      // Predicated region
      $region41: #{_lambda_.8} parent=11 // pred_check
        %p491 = pneg %p219
      $region42: #{_lambda_.8} parent=11 // pred_check_branch
        %493 = sbr.rel (%p491) target = $region44
      $region43: #{_lambda_.8} parent=11 // pred_region
        _
      $region44: #{_lambda_.8} parent=11 // pred_fallthru
        _
      // Predicated region
      $region45: #{_lambda_.8} parent=11 // pred_check
        %p494 = pneg %p240
      $region46: #{_lambda_.8} parent=11 // pred_check_branch
        %496 = sbr.rel (%p494) target = $region48
      $region47: #{_lambda_.8} parent=11 // pred_region
        _
      $region48: #{_lambda_.8} parent=11 // pred_fallthru
        _
      // Predicated region
      $region49: #{_lambda_.8} parent=11 // pred_check
        %p497 = pneg %p261
      $region50: #{_lambda_.8} parent=11 // pred_check_branch
        %499 = sbr.rel (%p497) target = $region52
      $region51: #{_lambda_.8} parent=11 // pred_region
        _
      $region52: #{_lambda_.8} parent=11 // pred_fallthru
        _
      // Predicated region
      $region53: #{_lambda_.8} parent=11 // pred_check
        %p500 = pneg %p282
      $region54: #{_lambda_.8} parent=11 // pred_check_branch
        %502 = sbr.rel (%p500) target = $region56
      $region55: #{_lambda_.8} parent=11 // pred_region
        _
      $region56: #{_lambda_.8} parent=11 // pred_fallthru
        _
      // Predicated region
      $region57: #{_lambda_.8} parent=11 // pred_check
        %p503 = pneg %p303
      $region58: #{_lambda_.8} parent=11 // pred_check_branch
        %505 = sbr.rel (%p503) target = $region60
      $region59: #{_lambda_.8} parent=11 // pred_region
        _
      $region60: #{_lambda_.8} parent=11 // pred_fallthru
        _
      // Predicated region
      $region61: #{_lambda_.8} parent=11 // pred_check
        %p506 = pneg %p324
      $region62: #{_lambda_.8} parent=11 // pred_check_branch
        %508 = sbr.rel (%p506) target = $region64
      $region63: #{_lambda_.8} parent=11 // pred_region
        _
      $region64: #{_lambda_.8} parent=11 // pred_fallthru
        _
      // Predicated region
      $region65: #{_lambda_.8} parent=11 // pred_check
        %p509 = pneg %p345
      $region66: #{_lambda_.8} parent=11 // pred_check_branch
        %511 = sbr.rel (%p509) target = $region68
      $region67: #{_lambda_.8} parent=11 // pred_region
        _
      $region68: #{_lambda_.8} parent=11 // pred_fallthru
        _
      // Predicated region
      $region69: #{_lambda_.8} parent=11 // pred_check
        %p512 = pneg %p366
      $region70: #{_lambda_.8} parent=11 // pred_check_branch
        %514 = sbr.rel (%p512) target = $region72
      $region71: #{_lambda_.8} parent=11 // pred_region
        _
      $region72: #{_lambda_.8} parent=11 // pred_fallthru
        _
      // Predicated region
      $region73: #{_lambda_.8} parent=11 // pred_check
        %p515 = pneg %p387
      $region74: #{_lambda_.8} parent=11 // pred_check_branch
        %517 = sbr.rel (%p515) target = $region76
      $region75: #{_lambda_.8} parent=11 // pred_region
        _
      $region76: #{_lambda_.8} parent=11 // pred_fallthru
        _
      // Predicated region
      $region77: #{_lambda_.8} parent=11 // pred_check
        %p518 = pneg %p408
      $region78: #{_lambda_.8} parent=11 // pred_check_branch
        %520 = sbr.rel (%p518) target = $region80
      $region79: #{_lambda_.8} parent=11 // pred_region
        _
      $region80: #{_lambda_.8} parent=11 // pred_fallthru
        _
      // Predicated region
      $region81: #{_lambda_.8} parent=11 // pred_check
        %p521 = pneg %p429
      $region82: #{_lambda_.8} parent=11 // pred_check_branch
        %523 = sbr.rel (%p521) target = $region84
      $region83: #{_lambda_.8} parent=11 // pred_region
        _
      $region84: #{_lambda_.8} parent=11 // pred_fallthru
        _
    $region12: #{_lambda_.8} parent=5 // pred_fallthru
      _
    %p524 = scmp.lt.s32.totalorder %s25, 2
    // Predicated region
    $region85: #{_lambda_.8} parent=5 // pred_check
      %p525 = pneg %p524
    $region86: #{_lambda_.8} parent=5 // pred_check_branch
      %527 = sbr.rel (%p525) target = $region88
    $region87: #{_lambda_.8} parent=5 // pred_region
      // Predicated region
      $region89: #{_lambda_.8} parent=87 // pred_check
        %p528 = pneg %p45
      $region90: #{_lambda_.8} parent=87 // pred_check_branch
        %530 = sbr.rel (%p528) target = $region92
      $region91: #{_lambda_.8} parent=87 // pred_region
        %p531 = scmp.lt.s32.totalorder %s25, 1
        %s532 = scalar_select %p531, %s25, 1
        %s533 = smul.addr %s532, 3
        %s534 = smul.addr %s533, 4
        %s535 = scalar_lea.vmem %s0, %s534
      $region92: #{_lambda_.8} parent=87 // pred_fallthru
        _
    $region88: #{_lambda_.8} parent=5 // pred_fallthru
      _
    %p536 = scmp.le.s32.totalorder 1, %s25
    %p537 = scmp.lt.s32.totalorder %s25, 3
    %p538 = pnand %p536, %p537
    %p539 = pneg %p538
    // Predicated region
    $region93: #{_lambda_.8} parent=5 // pred_check
      _
    $region94: #{_lambda_.8} parent=5 // pred_check_branch
      %541 = sbr.rel (%p538) target = $region96
    $region95: #{_lambda_.8} parent=5 // pred_region
      %s542 = ssub.s32 %s25, 1
      %p543 = scmp.lt.s32.totalorder %s30, 1
      %s544 = scalar_select %p543, %s30, 1
      %s545 = smul.addr %s544, 3
      %s546 = smul.addr %s545, 4
      %s547 = scalar_lea.vmem %s0, %s546
      %p548 = pneg %p51
      %p549 = pneg %p48
      %p550 = pneg %p72
      %p551 = pneg %p69
      %p552 = pneg %p93
      %p553 = pneg %p90
      %p554 = pneg %p114
      %p555 = pneg %p111
      %p556 = pneg %p135
      %p557 = pneg %p132
      %p558 = pneg %p156
      %p559 = pneg %p153
      %p560 = pneg %p177
      %p561 = pneg %p174
      %p562 = pneg %p198
      %p563 = pneg %p195
      %p564 = pneg %p219
      %p565 = pneg %p216
      %p566 = pneg %p240
      %p567 = pneg %p237
      %p568 = pneg %p261
      %p569 = pneg %p258
      %p570 = pneg %p282
      %p571 = pneg %p279
      %p572 = pneg %p303
      %p573 = pneg %p300
      %p574 = pneg %p324
      %p575 = pneg %p321
      %p576 = pneg %p345
      %p577 = pneg %p342
      %p578 = pneg %p366
      %p579 = pneg %p363
      %p580 = pneg %p387
      %p581 = pneg %p384
      %p582 = pneg %p408
      %p583 = pneg %p405
      %p584 = pneg %p429
      %p585 = pneg %p426
      %p586 = pneg %p455
      %p587 = pneg %p452
      %p588 = scmp.lt.s32.totalorder %s30, 1
      %s589 = scalar_select %p588, %s30, 1
      %s590 = smul.addr %s589, 2
      %s591 = scalar_lea.vmem %s19, %s590
      %p592 = scmp.lt.s32.totalorder %s30, 1
      %s593 = scalar_select %p592, %s30, 1
      %s594 = smul.addr %s593, 3
      %s595 = smul.addr %s594, 4
      %s596 = scalar_lea.vmem %s0, %s595
      %p597 = scmp.lt.s32.totalorder %s30, 1
      %s598 = scalar_select %p597, %s30, 1
      %s599 = smul.addr %s598, 2
      %s600 = scalar_lea.vmem %s19, %s599
      %v602 = vld [vmem:[%s596] sm:$0xf]
      %v603 = vld [vmem:[%s596 + $0x4] sm:$0xf]
      %v604 = vld [vmem:[%s596 + $0x8] sm:$0x3]
      %v605 = vld [vmem:[%s5] sm:$0xf]
      %v606 = vld [vmem:[%s5 + $0x4] sm:$0xf]
      %v607 = vld [vmem:[%s5 + $0x8] sm:$0xf]
      %v608 = vld [vmem:[%s5 + $0xc] sm:$0xf]
      %v609 = vld [vmem:[%s6] sm:$0x1]
      %v611 = vperm.slane %v609, 0
      %v616 = vunpack.c.l.b16 %v602
      %v617 = vunpack.c.l.b16 %v603
      %v618 = vunpack.c.l.b16 %v604
      %v619 = vpack.c.b16 %v617, %v616
      %v620 = vpack.c.b16 %v618, %v618
      %v625 = vunpack.c.l.b16 %v605
      %v626 = vunpack.c.l.b16 %v606
      %v627 = vunpack.c.l.b16 %v607
      %v628 = vunpack.c.l.b16 %v608
      %v629 = vpack.c.b16 %v626, %v625
      %v630 = vpack.c.b16 %v628, %v627
      %vm633 = vcmask 261120
      %v635 = vsel %vm633, %v619, 0
      %v638 = vsel %vm633, %v620, 0
      %640 = vmatpush.bf16.msra.mxu0 0
      %641 = vmatpush.bf16.msra.mxu0 0
      %642 = vmatpush.bf16.msra.mxu0 0
      %643 = vmatpush.bf16.msra.mxu0 0
      %644 = vmatpush.bf16.msra.mxu0 0
      %645 = vmatpush.bf16.msra.mxu0 0
      %646 = vmatpush.bf16.msra.mxu0 %v630
      %647 = vmatpush.bf16.msra.mxu0 %v629
      %648 = vmatmul.bf16.gmra.mxu0 %v635
      %v649 = vpop.f32.mrf.mxu0
      %v650 = vadd.f32 %v611, %v649
      %v651 = vpop.f32.mrf.mxu0
      %v652 = vadd.f32 %v611, %v651
      %653 = vmatmul.bf16.gmra.mxu0 %v638
      %v654 = vpop.f32.mrf.mxu0
      %v655 = vadd.f32 %v611, %v654
      %v656 = vpop.f32.mrf.mxu0
      %657 = vdwg.mxu0
      %v658 = vmax.f32 %v650, 0.0
      %v659 = vmax.f32 %v652, 0.0
      %v660 = vmax.f32 %v655, 0.0
      %v661 = vld [vmem:[%s1] sm:$0xff]
      %v662 = vld [vmem:[%s1 + $0x8] sm:$0xff]
      %v663 = vld [vmem:[%s1 + $0x10] sm:$0xf]
      %665 = vset.pattern.permute.xlu0 0
      %666 = vperm.xlu0 %665, %v661
      %v667 = vpop.permute.xlu0 %666
      %670 = vset.pattern.permute.xlu0 0
      %671 = vperm.xlu0 %670, %v662
      %v672 = vpop.permute.xlu0 %671
      %675 = vset.pattern.permute.xlu0 0
      %676 = vperm.xlu0 %675, %v663
      %v677 = vpop.permute.xlu0 %676
      %v679 = vmul.f32 %v658, %v667
      %v680 = vmul.f32 %v659, %v672
      %v681 = vmul.f32 %v660, %v677
      %682 = vst.msk [vmem:[#allocation2] sm:$0xff] %vm633, %v679
      %683 = vst.msk [vmem:[#allocation2 + $0x8] sm:$0xff] %vm633, %v680
      %vm684 = vcmask 257024
      %685 = vst.msk [vmem:[#allocation2 + $0x10] sm:$0xf] %vm684, %v681
      %v686 = vld [vmem:[%s596] sm:$0x1]
      %v687 = vunpack.c.l.bf16 %v686
      %v688 = vld [vmem:[%s3] sm:$0x1]
      %v690 = vperm.slane %v688, 0
      %v692 = vmul.f32 %v687, %v690
      %v693 = vadd.f32 %v692, 0.0
      %v694 = vld [vmem:[#allocation2] sm:$0x3]
      %v695 = vld [vmem:[%s7] sm:$0x1]
      %v697 = vperm.slane %v695, 0
      %v699 = vmul.f32 %v694, %v697
      %v700 = vadd.f32 %v699, 0.0
      %v701 = vld [vmem:[%s596] sm:$0xc]
      %v702 = vunpack.c.l.bf16 %v701
      %s703 = scalar_lea.vmem %s3, 1
      %v704 = vld [vmem:[%s703] sm:$0x1]
      %v706 = vperm.slane %v704, 0
      %v708 = vmul.f32 %v702, %v706
      %v710 = vrot.slane %v708, 5
      %v712 = vadd.f32 %v693, %v710
      %v713 = vld [vmem:[#allocation2 + $0x5] sm:$0x3]
      %s714 = scalar_lea.vmem %s7, 1
      %v715 = vld [vmem:[%s714] sm:$0x1]
      %v717 = vperm.slane %v715, 0
      %v719 = vmul.f32 %v713, %v717
      %v720 = vadd.f32 %v700, %v719
      %v721 = vld [vmem:[%s596] sm:$0x3]
      %v722 = vunpack.c.l.bf16 %v721
      %s723 = scalar_lea.vmem %s3, 2
      %v724 = vld [vmem:[%s723] sm:$0x1]
      %v726 = vperm.slane %v724, 0
      %v728 = vmul.f32 %v722, %v726
      %v730 = vrot.slane %v728, 1
      %v732 = vadd.f32 %v712, %v730
      %v733 = vld [vmem:[#allocation2 + $0x1] sm:$0x3]
      %s734 = scalar_lea.vmem %s7, 2
      %v735 = vld [vmem:[%s734] sm:$0x1]
      %v737 = vperm.slane %v735, 0
      %v739 = vmul.f32 %v733, %v737
      %v740 = vadd.f32 %v720, %v739
      %v741 = vld [vmem:[%s596 + $0x4] sm:$0x2]
      %v742 = vunpack.c.l.bf16 %v741
      %s743 = scalar_lea.vmem %s3, 3
      %v744 = vld [vmem:[%s743] sm:$0x1]
      %v746 = vperm.slane %v744, 0
      %v748 = vmul.f32 %v742, %v746
      %v750 = vrot.slane %v748, 2
      %v752 = vadd.f32 %v732, %v750
      %v753 = vld [vmem:[#allocation2 + $0xa] sm:$0x3]
      %s754 = scalar_lea.vmem %s7, 3
      %v755 = vld [vmem:[%s754] sm:$0x1]
      %v757 = vperm.slane %v755, 0
      %v759 = vmul.f32 %v753, %v757
      %v760 = vadd.f32 %v740, %v759
      %v761 = vld [vmem:[%s596 + $0x4] sm:$0x8]
      %v762 = vld [vmem:[%s596 + $0x8] sm:$0x1]
      %v763 = vunpack.c.l.bf16 %v761
      %v764 = vunpack.c.l.bf16 %v762
      %s765 = scalar_lea.vmem %s3, 4
      %v766 = vld [vmem:[%s765] sm:$0x1]
      %v768 = vperm.slane %v766, 0
      %v770 = vmul.f32 %v763, %v768
      %v771 = vmul.f32 %v764, %v768
      %vm774 = vcmask 1040384
      %v775 = vrot.slane %v770, 7
      %v776 = vrot.slane %v771, 7
      %v777 = vsel %vm774, %v775, %v776
      %v779 = vadd.f32 %v752, %v777
      %v780 = vld [vmem:[#allocation2 + $0xf] sm:$0x3]
      %s781 = scalar_lea.vmem %s7, 4
      %v782 = vld [vmem:[%s781] sm:$0x1]
      %v784 = vperm.slane %v782, 0
      %v786 = vmul.f32 %v780, %v784
      %v787 = vadd.f32 %v760, %v786
      %v788 = vld [vmem:[%s596 + $0x4] sm:$0x6]
      %v789 = vunpack.c.l.bf16 %v788
      %s790 = scalar_lea.vmem %s3, 5
      %v791 = vld [vmem:[%s790] sm:$0x1]
      %v793 = vperm.slane %v791, 0
      %v795 = vmul.f32 %v789, %v793
      %v797 = vrot.slane %v795, 3
      %v799 = vadd.f32 %v779, %v797
      %v800 = vld [vmem:[#allocation2 + $0xb] sm:$0x3]
      %s801 = scalar_lea.vmem %s7, 5
      %v802 = vld [vmem:[%s801] sm:$0x1]
      %v804 = vperm.slane %v802, 0
      %v806 = vmul.f32 %v800, %v804
      %v807 = vadd.f32 %v787, %v806
      %v808 = vld [vmem:[%s596] sm:$0x2]
      %v809 = vunpack.c.l.bf16 %v808
      %s810 = scalar_lea.vmem %s3, 6
      %v811 = vld [vmem:[%s810] sm:$0x1]
      %v813 = vperm.slane %v811, 0
      %v815 = vmul.f32 %v809, %v813
      %v817 = vrot.slane %v815, 2
      %v819 = vadd.f32 %v799, %v817
      %v820 = vld [vmem:[#allocation2 + $0x2] sm:$0x3]
      %s821 = scalar_lea.vmem %s7, 6
      %v822 = vld [vmem:[%s821] sm:$0x1]
      %v824 = vperm.slane %v822, 0
      %v826 = vmul.f32 %v820, %v824
      %v827 = vadd.f32 %v807, %v826
      %v828 = vld [vmem:[%s596] sm:$0x8]
      %v829 = vld [vmem:[%s596 + $0x4] sm:$0x1]
      %v830 = vunpack.c.l.bf16 %v828
      %v831 = vunpack.c.l.bf16 %v829
      %s832 = scalar_lea.vmem %s3, 7
      %v833 = vld [vmem:[%s832] sm:$0x1]
      %v835 = vperm.slane %v833, 0
      %v837 = vmul.f32 %v830, %v835
      %v838 = vmul.f32 %v831, %v835
      %v841 = vrot.slane %v837, 7
      %v842 = vrot.slane %v838, 7
      %v843 = vsel %vm774, %v841, %v842
      %v845 = vadd.f32 %v819, %v843
      %v846 = vld [vmem:[#allocation2 + $0x7] sm:$0x3]
      %s847 = scalar_lea.vmem %s7, 7
      %v848 = vld [vmem:[%s847] sm:$0x1]
      %v850 = vperm.slane %v848, 0
      %v852 = vmul.f32 %v846, %v850
      %v853 = vadd.f32 %v827, %v852
      %v854 = vld [vmem:[%s596] sm:$0x6]
      %v855 = vunpack.c.l.bf16 %v854
      %s856 = scalar_lea.vmem %s3, 8
      %v857 = vld [vmem:[%s856] sm:$0x1]
      %v859 = vperm.slane %v857, 0
      %v861 = vmul.f32 %v855, %v859
      %v863 = vrot.slane %v861, 3
      %v865 = vadd.f32 %v845, %v863
      %v866 = vld [vmem:[#allocation2 + $0x3] sm:$0x3]
      %s867 = scalar_lea.vmem %s7, 8
      %v868 = vld [vmem:[%s867] sm:$0x1]
      %v870 = vperm.slane %v868, 0
      %v872 = vmul.f32 %v866, %v870
      %v873 = vadd.f32 %v853, %v872
      %v874 = vld [vmem:[%s4] sm:$0x1]
      %v876 = vperm.slane %v874, 0
      %v878 = vadd.f32 %v865, %v876
      %v879 = vld [vmem:[%s8] sm:$0x1]
      %v881 = vperm.slane %v879, 0
      %v883 = vadd.f32 %v873, %v881
      %v884 = vpack.c.bf16 %v878, %v878
      %v885 = vld [vmem:[%s9] sm:$0xf]
      %v886 = vld [vmem:[%s9 + $0x4] sm:$0xf]
      %v887 = vld [vmem:[%s9 + $0x8] sm:$0xf]
      %v888 = vld [vmem:[%s9 + $0xc] sm:$0xf]
      %v889 = vpack.c.bf16 %v883, %v883
      %v890 = vld [vmem:[%s10] sm:$0xf]
      %v891 = vld [vmem:[%s10 + $0x4] sm:$0xf]
      %v892 = vld [vmem:[%s10 + $0x8] sm:$0xf]
      %v893 = vld [vmem:[%s10 + $0xc] sm:$0xf]
      %v898 = vunpack.c.l.b16 %v890
      %v899 = vunpack.c.l.b16 %v891
      %v900 = vunpack.c.l.b16 %v892
      %v901 = vunpack.c.l.b16 %v893
      %v902 = vpack.c.b16 %v899, %v898
      %v903 = vpack.c.b16 %v901, %v900
      %v907 = vsel %vm633, %v889, 0
      %909 = vmatpush.bf16.msra.mxu0 0
      %910 = vmatpush.bf16.msra.mxu0 0
      %911 = vmatpush.bf16.msra.mxu0 0
      %912 = vmatpush.bf16.msra.mxu0 0
      %913 = vmatpush.bf16.msra.mxu0 0
      %914 = vmatpush.bf16.msra.mxu0 0
      %915 = vmatpush.bf16.msra.mxu0 %v903
      %916 = vmatpush.bf16.msra.mxu0 %v902
      %917 = vmatmul.bf16.gmra.mxu0 %v907
      %v918 = vpop.f32.mrf.mxu0
      %v919 = vadd.f32 0.0, %v918
      %v920 = vpop.f32.mrf.mxu0
      %921 = vdwg.mxu0
      %v926 = vunpack.c.l.b16 %v885
      %v927 = vunpack.c.l.b16 %v886
      %v928 = vunpack.c.l.b16 %v887
      %v929 = vunpack.c.l.b16 %v888
      %v930 = vpack.c.b16 %v927, %v926
      %v931 = vpack.c.b16 %v929, %v928
      %v935 = vsel %vm633, %v884, 0
      %937 = vmatpush.bf16.msra.mxu0 0
      %938 = vmatpush.bf16.msra.mxu0 0
      %939 = vmatpush.bf16.msra.mxu0 0
      %940 = vmatpush.bf16.msra.mxu0 0
      %941 = vmatpush.bf16.msra.mxu0 0
      %942 = vmatpush.bf16.msra.mxu0 0
      %943 = vmatpush.bf16.msra.mxu0 %v931
      %944 = vmatpush.bf16.msra.mxu0 %v930
      %945 = vmatmul.bf16.gmra.mxu0 %v935
      %v946 = vpop.f32.mrf.mxu0
      %v947 = vadd.f32 %v919, %v946
      %v948 = vpop.f32.mrf.mxu0
      %949 = vdwg.mxu0
      %v950 = vld [vmem:[%s11] sm:$0x1]
      %v952 = vperm.slane %v950, 0
      %v954 = vadd.f32 %v947, %v952
      %v955 = vmax.f32 %v954, 0.0
      %vm956 = vcmask 523264
      %957 = vst.msk [vmem:[#allocation3] sm:$0xff] %vm956, 0.0
      %vm958 = vcmask 518144
      %959 = vst.msk [vmem:[#allocation3 + $0x8] sm:$0x7] %vm958, 0.0
      %vm960 = vcmask 516096
      %961 = vst.msk [vmem:[#allocation3 + $0x5] sm:$0x1] %vm960, %v955
      %v962 = vld [vmem:[%s13] sm:$0xf]
      %v963 = vld [vmem:[%s13 + $0x4] sm:$0xf]
      %v964 = vld [vmem:[%s13 + $0x8] sm:$0xf]
      %v965 = vld [vmem:[%s13 + $0xc] sm:$0xf]
      %v966 = vld [vmem:[%s13 + $0x10] sm:$0xf]
      %v967 = vld [vmem:[%s13 + $0x14] sm:$0xf]
      %v968 = vld [vmem:[%s13 + $0x18] sm:$0xf]
      %v969 = vld [vmem:[%s13 + $0x1c] sm:$0xf]
      %v970 = vld [vmem:[%s14] sm:$0x1]
      %v971 = vld [vmem:[%s15] sm:$0x1]
      %v972 = vld [vmem:[%s15 + $0x1] sm:$0x1]
      %v973 = vld [vmem:[%s15 + $0x2] sm:$0x1]
      %v974 = vld [vmem:[%s15 + $0x3] sm:$0x1]
      %v975 = vld [vmem:[%s15 + $0x4] sm:$0x1]
      %v976 = vld [vmem:[%s15 + $0x5] sm:$0x1]
      %v977 = vld [vmem:[%s15 + $0x6] sm:$0x1]
      %v978 = vld [vmem:[%s15 + $0x7] sm:$0x1]
      %v979 = vld [vmem:[%s15 + $0x8] sm:$0x1]
      %v980 = vld [vmem:[%s16] sm:$0x1]
      %v981 = vld [vmem:[%s17] sm:$0xf]
      %v982 = vld [vmem:[%s17 + $0x4] sm:$0xf]
      %v983 = vld [vmem:[%s17 + $0x8] sm:$0xf]
      %v984 = vld [vmem:[%s17 + $0xc] sm:$0xf]
      %v985 = vld [vmem:[%s18] sm:$0x1]
      %v986 = vld [vmem:[#allocation3] sm:$0xff]
      %v987 = vld [vmem:[#allocation3 + $0x8] sm:$0x7]
      %v988 = vpack.c.bf16 %v987, %v986
      %v990 = vperm.slane %v970, 0
      %v1000 = vunpack.c.l.b16 %v962
      %v1001 = vunpack.c.l.b16 %v963
      %v1002 = vunpack.c.l.b16 %v964
      %v1003 = vunpack.c.l.b16 %v965
      %v1004 = vunpack.c.l.b16 %v966
      %v1005 = vunpack.c.l.b16 %v967
      %v1006 = vunpack.c.l.b16 %v968
      %v1007 = vunpack.c.l.b16 %v969
      %v1008 = vpack.c.b16 %v1001, %v1000
      %v1009 = vpack.c.b16 %v1003, %v1002
      %v1010 = vpack.c.b16 %v1005, %v1004
      %v1011 = vpack.c.b16 %v1007, %v1006
      %v1017 = vsel %vm956, %v988, 0
      %1019 = vmatpush.bf16.msra.mxu0 0
      %1020 = vmatpush.bf16.msra.mxu0 0
      %1021 = vmatpush.bf16.msra.mxu0 0
      %1022 = vmatpush.bf16.msra.mxu0 0
      %1023 = vmatpush.bf16.msra.mxu0 %v1011
      %1024 = vmatpush.bf16.msra.mxu0 %v1010
      %1025 = vmatpush.bf16.msra.mxu0 %v1009
      %1026 = vmatpush.bf16.msra.mxu0 %v1008
      %1027 = vmatmul.bf16.gmra.mxu0 %v1017
      %v1028 = vpop.f32.mrf.mxu0
      %v1029 = vadd.f32 %v990, %v1028
      %v1030 = vpop.f32.mrf.mxu0
      %v1031 = vadd.f32 %v990, %v1030
      %1032 = vdwg.mxu0
      %v1033 = vmax.f32 %v1029, 0.0
      %v1034 = vmax.f32 %v1031, 0.0
      %v1035 = vld [vmem:[%s2] sm:$0xff]
      %v1036 = vld [vmem:[%s2 + $0x8] sm:$0x7]
      %1038 = vset.pattern.permute.xlu0 0
      %1039 = vperm.xlu0 %1038, %v1035
      %v1040 = vpop.permute.xlu0 %1039
      %1043 = vset.pattern.permute.xlu0 0
      %1044 = vperm.xlu0 %1043, %v1036
      %v1045 = vpop.permute.xlu0 %1044
      %v1047 = vmul.f32 %v1033, %v1040
      %v1048 = vmul.f32 %v1034, %v1045
      %1049 = vst.msk [vmem:[#allocation4] sm:$0xff] %vm633, %v1047
      %vm1050 = vcmask 256000
      %1051 = vst.msk [vmem:[#allocation4 + $0x8] sm:$0x7] %vm1050, %v1048
      %v1052 = vld [vmem:[#allocation4] sm:$0x7]
      %v1054 = vperm.slane %v971, 0
      %v1056 = vmul.f32 %v1052, %v1054
      %v1057 = vadd.f32 %v1056, 0.0
      %v1058 = vld [vmem:[#allocation4 + $0x1] sm:$0x7]
      %v1060 = vperm.slane %v972, 0
      %v1062 = vmul.f32 %v1058, %v1060
      %v1063 = vadd.f32 %v1057, %v1062
      %v1064 = vld [vmem:[#allocation4 + $0x2] sm:$0x7]
      %v1066 = vperm.slane %v973, 0
      %v1068 = vmul.f32 %v1064, %v1066
      %v1069 = vadd.f32 %v1063, %v1068
      %v1070 = vld [vmem:[#allocation4 + $0x3] sm:$0x7]
      %v1072 = vperm.slane %v974, 0
      %v1074 = vmul.f32 %v1070, %v1072
      %v1075 = vadd.f32 %v1069, %v1074
      %v1076 = vld [vmem:[#allocation4 + $0x4] sm:$0x7]
      %v1078 = vperm.slane %v975, 0
      %v1080 = vmul.f32 %v1076, %v1078
      %v1081 = vadd.f32 %v1075, %v1080
      %v1082 = vld [vmem:[#allocation4 + $0x5] sm:$0x7]
      %v1084 = vperm.slane %v976, 0
      %v1086 = vmul.f32 %v1082, %v1084
      %v1087 = vadd.f32 %v1081, %v1086
      %v1088 = vld [vmem:[#allocation4 + $0x6] sm:$0x7]
      %v1090 = vperm.slane %v977, 0
      %v1092 = vmul.f32 %v1088, %v1090
      %v1093 = vadd.f32 %v1087, %v1092
      %v1094 = vld [vmem:[#allocation4 + $0x7] sm:$0x7]
      %v1096 = vperm.slane %v978, 0
      %v1098 = vmul.f32 %v1094, %v1096
      %v1099 = vadd.f32 %v1093, %v1098
      %v1100 = vld [vmem:[#allocation4 + $0x8] sm:$0x7]
      %v1102 = vperm.slane %v979, 0
      %v1104 = vmul.f32 %v1100, %v1102
      %v1105 = vadd.f32 %v1099, %v1104
      %v1107 = vperm.slane %v980, 0
      %v1109 = vadd.f32 %v1105, %v1107
      %v1110 = vld [vmem:[#allocation3 + $0x4] sm:$0x7]
      %v1111 = vpack.c.bf16 %v1110, %v1110
      %v1112 = vld [vmem:[%s12] sm:$0xf]
      %v1113 = vld [vmem:[%s12 + $0x4] sm:$0xf]
      %v1114 = vld [vmem:[%s12 + $0x8] sm:$0xf]
      %v1115 = vld [vmem:[%s12 + $0xc] sm:$0xf]
      %v1116 = vld [vmem:[%s12 + $0x10] sm:$0xf]
      %v1117 = vld [vmem:[%s12 + $0x14] sm:$0xf]
      %v1118 = vld [vmem:[%s12 + $0x18] sm:$0xf]
      %v1119 = vld [vmem:[%s12 + $0x1c] sm:$0xf]
      %v1120 = vpack.c.bf16 %v1109, %v1109
      %v1125 = vunpack.c.l.b16 %v981
      %v1126 = vunpack.c.l.b16 %v982
      %v1127 = vunpack.c.l.b16 %v983
      %v1128 = vunpack.c.l.b16 %v984
      %v1129 = vpack.c.b16 %v1126, %v1125
      %v1130 = vpack.c.b16 %v1128, %v1127
      %v1134 = vsel %vm633, %v1120, 0
      %1136 = vmatpush.bf16.msra.mxu0 0
      %1137 = vmatpush.bf16.msra.mxu0 0
      %1138 = vmatpush.bf16.msra.mxu0 0
      %1139 = vmatpush.bf16.msra.mxu0 0
      %1140 = vmatpush.bf16.msra.mxu0 0
      %1141 = vmatpush.bf16.msra.mxu0 0
      %1142 = vmatpush.bf16.msra.mxu0 %v1130
      %1143 = vmatpush.bf16.msra.mxu0 %v1129
      %1144 = vmatmul.bf16.gmra.mxu0 %v1134
      %v1145 = vpop.f32.mrf.mxu0
      %v1146 = vadd.f32 0.0, %v1145
      %v1147 = vpop.f32.mrf.mxu0
      %1148 = vdwg.mxu0
      %v1157 = vunpack.c.l.b16 %v1112
      %v1158 = vunpack.c.l.b16 %v1113
      %v1159 = vunpack.c.l.b16 %v1114
      %v1160 = vunpack.c.l.b16 %v1115
      %v1161 = vunpack.c.l.b16 %v1116
      %v1162 = vunpack.c.l.b16 %v1117
      %v1163 = vunpack.c.l.b16 %v1118
      %v1164 = vunpack.c.l.b16 %v1119
      %v1165 = vpack.c.b16 %v1158, %v1157
      %v1166 = vpack.c.b16 %v1160, %v1159
      %v1167 = vpack.c.b16 %v1162, %v1161
      %v1168 = vpack.c.b16 %v1164, %v1163
      %v1174 = vsel %vm956, %v1111, 0
      %1176 = vmatpush.bf16.msra.mxu0 0
      %1177 = vmatpush.bf16.msra.mxu0 0
      %1178 = vmatpush.bf16.msra.mxu0 0
      %1179 = vmatpush.bf16.msra.mxu0 0
      %1180 = vmatpush.bf16.msra.mxu0 %v1168
      %1181 = vmatpush.bf16.msra.mxu0 %v1167
      %1182 = vmatpush.bf16.msra.mxu0 %v1166
      %1183 = vmatpush.bf16.msra.mxu0 %v1165
      %1184 = vmatmul.bf16.gmra.mxu0 %v1174
      %v1185 = vpop.f32.mrf.mxu0
      %v1186 = vadd.f32 %v1146, %v1185
      %v1187 = vpop.f32.mrf.mxu0
      %1188 = vdwg.mxu0
      %v1190 = vperm.slane %v985, 0
      %v1192 = vadd.f32 %v1186, %v1190
      %v1193 = vmax.f32 %v1192, 0.0
      %v1194 = vld [vmem:[%s2 + $0x4] sm:$0x7]
      %1196 = vset.pattern.permute.xlu0 0
      %1197 = vperm.xlu0 %1196, %v1194
      %v1198 = vpop.permute.xlu0 %1197
      %v1200 = vmul.f32 %v1193, %v1198
      %1201 = vst.msk [vmem:[#allocation3 + $0x4] sm:$0x7] %vm958, %v1200
      %v1202 = vld [vmem:[#allocation3 + $0x4] sm:$0x7]
      %v1203 = vpack.c.bf16 %v1202, %v1202
      %vm1204 = vcmask 517120
      %vm1205 = vsmask.f32 1280
      %vm1206 = vmand %vm1204, %vm1205
      %v1207 = vld [vmem:[%s600] sm:$0x3]
      %v1208 = vsel %vm1206, %v1203, %v1207
      %1209 = vst [vmem:[%s600] sm:$0x3] %v1208
      %p1210 = scmp.lt.s32.totalorder %s30, 1
      %s1211 = scalar_select %p1210, %s30, 1
      %s1212 = smul.addr %s1211, 2
      %s1213 = scalar_lea.vmem %s19, %s1212
      // Predicated region
      $region97: #{_lambda_.8} parent=95 // pred_check
        %p1214 = pneg %p452
      $region98: #{_lambda_.8} parent=95 // pred_check_branch
        %1216 = sbr.rel (%p1214) target = $region100
      $region99: #{_lambda_.8} parent=95 // pred_region
        _
      $region100: #{_lambda_.8} parent=95 // pred_fallthru
        _
    $region96: #{_lambda_.8} parent=5 // pred_fallthru
      _
    %p1217 = scmp.le.s32.totalorder 2, %s25
    // Predicated region
    $region101: #{_lambda_.8} parent=5 // pred_check
      %p1218 = pneg %p1217
    $region102: #{_lambda_.8} parent=5 // pred_check_branch
      %1220 = sbr.rel (%p1218) target = $region104
    $region103: #{_lambda_.8} parent=5 // pred_region
      %s1221 = ssub.s32 %s25, 2
      // Predicated region
      $region105: #{_lambda_.8} parent=103 // pred_check
        %p1222 = pneg %p458
      $region106: #{_lambda_.8} parent=103 // pred_check_branch
        %1224 = sbr.rel (%p1222) target = $region108
      $region107: #{_lambda_.8} parent=103 // pred_region
        %p1225 = scmp.lt.s32.totalorder %s31, 1
        %s1226 = scalar_select %p1225, %s31, 1
        %s1227 = smul.addr %s1226, 2
        %s1228 = scalar_lea.vmem %s19, %s1227
      $region108: #{_lambda_.8} parent=103 // pred_fallthru
        _
    $region104: #{_lambda_.8} parent=5 // pred_fallthru
      _
  $region6: #{_lambda_.8} parent=0 // loop_footer
    %s29 = sadd.s32 1, %s25
  $region7: #{_lambda_.8} parent=0 // loop_footer_branch
    %24 = sbr.rel target = $region3
  $region8: #{_lambda_.8} parent=0 // loop_exit
    _

</llo_original>
